<compile_context>
chip_gen: v5e
topology: v5e:2x2
jax: 0.10.0
libtpu: 0.0.40
codegen_flags: <defaults>
</compile_context>

<pallas_src>
import functools
import math

import jax
import jax.numpy as jnp
from jax.experimental import pallas as pl
from jax.experimental.pallas import tpu as pltpu

_BN_EPS = 1e-5


# ----------------------------------------------------------------------------------
# Pallas kernels
# ----------------------------------------------------------------------------------
def conv_row_kernel(x_ref, w_ref, b_ref, o_ref, acc_ref, *, k, wo, activation):
    """Implicit-im2col stride-1 conv.

    Grid = (B, Ho, k).  Per step: one padded input row (shifted by the kernel-row tap
    via the BlockSpec index_map) and one kernel-row of weights; the k kernel-column
    taps are unrolled statically.  Accumulates into an f32 VMEM scratch and stores the
    finished output row (+bias, +optional tanh) on the last tap.
    """
    t = pl.program_id(2)  # kernel-row offset (di)

    @pl.when(t == 0)
    def _init():
        acc_ref[...] = jnp.zeros_like(acc_ref)

    row = x_ref[0, 0]  # (Wp, Cin) bf16
    part = None
    for dj in range(k):  # static unroll over kernel columns
        contrib = jnp.dot(
            row[dj:dj + wo, :],
            w_ref[t * k + dj],
            preferred_element_type=jnp.float32,
        )
        part = contrib if part is None else part + contrib
    acc_ref[...] += part

    @pl.when(t == k - 1)
    def _store():
        y = acc_ref[...] + b_ref[...]  # (Wo, Cout) + (1, Cout)
        if activation == "tanh":
            y = jnp.tanh(y)
        o_ref[0, 0] = y.astype(o_ref.dtype)


def bn_stats_kernel(x_ref, sum_ref, sq_ref):
    """Pass 1: tiled per-channel sum / sum-of-squares reduction (f32 accumulation)."""
    @pl.when(pl.program_id(0) == 0)
    def _init():
        sum_ref[...] = jnp.zeros_like(sum_ref)
        sq_ref[...] = jnp.zeros_like(sq_ref)

    x = x_ref[...].astype(jnp.float32)
    sum_ref[...] += jnp.sum(x, axis=0, keepdims=True)
    sq_ref[...] += jnp.sum(x * x, axis=0, keepdims=True)


def bn_apply_kernel(x_ref, s_ref, q_ref, g_ref, b_ref, *rest, count, relu, has_res):
    """Pass 2: tiled normalize + affine, fused with ReLU or the residual add."""
    if has_res:
        res_ref, o_ref = rest
    else:
        (o_ref,) = rest
    inv = 1.0 / count
    mean = s_ref[...] * inv
    var = jnp.maximum(q_ref[...] * inv - mean * mean, 0.0)
    scale = g_ref[...] * jax.lax.rsqrt(var + _BN_EPS)
    shift = b_ref[...] - mean * scale
    y = x_ref[...].astype(jnp.float32) * scale + shift
    if relu:
        y = jnp.maximum(y, 0.0)
    if has_res:
        y = y + res_ref[...].astype(jnp.float32)
    o_ref[...] = y.astype(o_ref.dtype)


# ----------------------------------------------------------------------------------
# Pallas wrappers
# ----------------------------------------------------------------------------------
def conv_taps(xp, w_taps, bias=None, *, activation=None, out_dtype=jnp.bfloat16):
    """k x k stride-1 conv on an already-padded NHWC (bf16) input.

    w_taps: (k*k, Cin, Cout) bf16, tap index = di*k + dj (weights are resident in VMEM
    for the whole call: constant index_map => fetched once).
    """
    B, Hp, Wp, Cin = xp.shape
    kk, cin_w, Cout = w_taps.shape
    k = math.isqrt(kk)
    assert k * k == kk and cin_w == Cin
    Ho, Wo = Hp - k + 1, Wp - k + 1
    if bias is None:
        bias = jnp.zeros((1, Cout), jnp.float32)

    kernel = functools.partial(conv_row_kernel, k=k, wo=Wo, activation=activation)
    return pl.pallas_call(
        kernel,
        out_shape=jax.ShapeDtypeStruct((B, Ho, Wo, Cout), out_dtype),
        grid=(B, Ho, k),
        in_specs=[
            # one padded input row, shifted by the kernel-row tap
            pl.BlockSpec((1, 1, Wp, Cin), lambda b, h, t: (b, h + t, 0, 0)),
            # full weight tensor, resident across the whole grid
            pl.BlockSpec((kk, Cin, Cout), lambda b, h, t: (0, 0, 0)),
            pl.BlockSpec((1, Cout), lambda b, h, t: (0, 0)),
        ],
        out_specs=pl.BlockSpec((1, 1, Wo, Cout), lambda b, h, t: (b, h, 0, 0)),
        scratch_shapes=[pltpu.VMEM((Wo, Cout), jnp.float32)],
        compiler_params=pltpu.CompilerParams(
            dimension_semantics=("parallel", "parallel", "arbitrary")),
    )(xp, w_taps, bias)


def _pick_tile(m, candidates=(1024, 512, 256, 128, 64, 32, 16, 8)):
    for t in candidates:
        if m % t == 0:
            return t
    return m


def pallas_bn(x_nhwc, gamma, beta, *, relu, residual=None, out_dtype=jnp.bfloat16):
    """BatchNorm2d (training-mode batch stats) as two tiled Pallas passes."""
    B, H, W, C = x_nhwc.shape
    M = B * H * W
    x2 = x_nhwc.reshape(M, C)
    tm = _pick_tile(M)
    grid = (M // tm,)

    # pass 1: per-channel sum / sumsq (reduction over M, accumulator outputs)
    s, sq = pl.pallas_call(
        bn_stats_kernel,
        out_shape=(jax.ShapeDtypeStruct((1, C), jnp.float32),
                   jax.ShapeDtypeStruct((1, C), jnp.float32)),
        grid=grid,
        in_specs=[pl.BlockSpec((tm, C), lambda i: (i, 0))],
        out_specs=(pl.BlockSpec((1, C), lambda i: (0, 0)),
                   pl.BlockSpec((1, C), lambda i: (0, 0))),
        compiler_params=pltpu.CompilerParams(dimension_semantics=("arbitrary",)),
    )(x2)

    # pass 2: normalize + affine, fused with ReLU / residual add
    inputs = [x2, s, sq, gamma, beta]
    in_specs = [
        pl.BlockSpec((tm, C), lambda i: (i, 0)),
        pl.BlockSpec((1, C), lambda i: (0, 0)),
        pl.BlockSpec((1, C), lambda i: (0, 0)),
        pl.BlockSpec((1, C), lambda i: (0, 0)),
        pl.BlockSpec((1, C), lambda i: (0, 0)),
    ]
    if residual is not None:
        inputs.append(residual.reshape(M, C))
        in_specs.append(pl.BlockSpec((tm, C), lambda i: (i, 0)))

    kernel = functools.partial(bn_apply_kernel, count=float(M), relu=relu,
                               has_res=residual is not None)
    y = pl.pallas_call(
        kernel,
        out_shape=jax.ShapeDtypeStruct((M, C), out_dtype),
        grid=grid,
        in_specs=in_specs,
        out_specs=pl.BlockSpec((tm, C), lambda i: (i, 0)),
        compiler_params=pltpu.CompilerParams(dimension_semantics=("parallel",)),
    )(*inputs)
    return y.reshape(B, H, W, C)


# ----------------------------------------------------------------------------------
# JAX glue: padding and the 2x2 space/depth rearrangements (pure layout, ~1x bytes)
# ----------------------------------------------------------------------------------
def _pad2d(x, pad, mode):
    if pad == 0:
        return x
    return jnp.pad(x, ((0, 0), (pad, pad), (pad, pad), (0, 0)), mode=mode)


def space_to_depth2(x):
    B, H, W, C = x.shape
    x = x.reshape(B, H // 2, 2, W // 2, 2, C)
    x = jnp.transpose(x, (0, 1, 3, 2, 4, 5))
    return x.reshape(B, H // 2, W // 2, 4 * C)


def depth_to_space2(y):
    B, H, W, C4 = y.shape
    c = C4 // 4
    y = y.reshape(B, H, W, 2, 2, c)
    y = jnp.transpose(y, (0, 1, 3, 2, 4, 5))
    return y.reshape(B, 2 * H, 2 * W, c)


# ----------------------------------------------------------------------------------
# ResnetGenerator forward (NCHW public interface, NHWC/bf16 internally)
# ----------------------------------------------------------------------------------
def resnet_generator_forward(x_nchw, params, *, ngf, n_blocks):
    del ngf  # channel counts come from the prepared weight shapes
    x = jnp.transpose(x_nchw, (0, 2, 3, 1)).astype(jnp.bfloat16)  # NCHW -> NHWC bf16

    # ReflectionPad2d(3) + Conv 7x7 (no bias) + BN + ReLU
    y = conv_taps(_pad2d(x, 3, "reflect"), params["c0_w"])
    x = pallas_bn(y, params["c0_g"], params["c0_b"], relu=True)

    # 2x downsampling: Conv 3x3 stride 2 (zero pad 1) as s2d + 2x2 stride-1 conv
    for i in range(2):
        xs = space_to_depth2(_pad2d(x, 1, "constant"))
        y = conv_taps(xs, params[f"down{i}_w"])
        x = pallas_bn(y, params[f"down{i}_g"], params[f"down{i}_b"], relu=True)

    # Resnet blocks (padding_type='reflect', use_dropout=False)
    for i in range(n_blocks):
        res = x
        y = conv_taps(_pad2d(x, 1, "reflect"), params[f"rb{i}_w1"])
        y = pallas_bn(y, params[f"rb{i}_g1"], params[f"rb{i}_b1"], relu=True)
        y = conv_taps(_pad2d(y, 1, "reflect"), params[f"rb{i}_w2"])
        x = pallas_bn(y, params[f"rb{i}_g2"], params[f"rb{i}_b2"], relu=False, residual=res)

    # 2x upsampling: ConvTranspose(3, s=2, p=1, op=1) as subpixel 2x2 conv + d2s
    for i in range(2):
        xp = jnp.pad(x, ((0, 0), (0, 1), (0, 1), (0, 0)))
        y4 = conv_taps(xp, params[f"up{i}_w"])           # (B, H, W, 4*Cout) parities
        y = depth_to_space2(y4)                          # (B, 2H, 2W, Cout)
        x = pallas_bn(y, params[f"up{i}_g"], params[f"up{i}_b"], relu=True)

    # ReflectionPad2d(3) + Conv 7x7 (with bias) + Tanh (fused in the conv epilogue)
    y = conv_taps(_pad2d(x, 3, "reflect"), params["cf_w"], params["cf_bias"],
                  activation="tanh", out_dtype=jnp.float32)
    return jnp.transpose(y, (0, 3, 1, 2))  # NHWC -> NCHW


# ----------------------------------------------------------------------------------
# Parameters: PyTorch-layout init + hoisted kernel-layout preparation
# ----------------------------------------------------------------------------------
def init_params(key, input_nc, output_nc, ngf, n_blocks):
    """Parameters in the PyTorch module's native layouts (OIHW / IOHW)."""
    keys = iter(jax.random.split(key, 64))
    nrm = lambda k, s: 0.05 * jax.random.normal(k, s, jnp.float32)
    p = {}
    p["c0_w"] = nrm(next(keys), (ngf, input_nc, 7, 7))
    p["c0_g"], p["c0_b"] = jnp.ones((ngf,), jnp.float32), jnp.zeros((ngf,), jnp.float32)
    for i in range(2):
        cin, cout = ngf * 2 ** i, ngf * 2 ** (i + 1)
        p[f"down{i}_w"] = nrm(next(keys), (cout, cin, 3, 3))
        p[f"down{i}_g"] = jnp.ones((cout,), jnp.float32)
        p[f"down{i}_b"] = jnp.zeros((cout,), jnp.float32)
    dim = ngf * 4
    for i in range(n_blocks):
        p[f"rb{i}_w1"] = nrm(next(keys), (dim, dim, 3, 3))
        p[f"rb{i}_g1"] = jnp.ones((dim,), jnp.float32)
        p[f"rb{i}_b1"] = jnp.zeros((dim,), jnp.float32)
        p[f"rb{i}_w2"] = nrm(next(keys), (dim, dim, 3, 3))
        p[f"rb{i}_g2"] = jnp.ones((dim,), jnp.float32)
        p[f"rb{i}_b2"] = jnp.zeros((dim,), jnp.float32)
    for i in range(2):
        cin = ngf * 2 ** (2 - i)
        cout = cin // 2
        p[f"up{i}_w"] = nrm(next(keys), (cin, cout, 3, 3))  # ConvTranspose: (Cin, Cout, k, k)
        p[f"up{i}_g"] = jnp.ones((cout,), jnp.float32)
        p[f"up{i}_b"] = jnp.zeros((cout,), jnp.float32)
    p["cf_w"] = nrm(next(keys), (output_nc, ngf, 7, 7))
    p["cf_b"] = nrm(next(keys), (output_nc,))
    return p
    # TODO(synk): nn.Dropout is skipped (use_dropout defaults to False); BatchNorm
    # running-stat buffer updates are not reproduced (they do not affect the forward
    # output in train mode).


def _conv_w_to_taps(w_oihw):
    cout, cin, k, _ = w_oihw.shape
    return jnp.transpose(w_oihw, (2, 3, 1, 0)).reshape(k * k, cin, cout)


def _down_w_to_taps(w_oihw):
    """Stride-2 3x3 conv (pad 1) folded into a stride-1 2x2 conv over the s2d input."""
    cout, cin, k, _ = w_oihw.shape  # k == 3
    w = jnp.transpose(w_oihw, (2, 3, 1, 0))          # (3, 3, cin, cout)
    w2 = jnp.zeros((2, 2, 4, cin, cout), jnp.float32)
    for di in range(k):
        for dj in range(k):
            w2 = w2.at[di // 2, dj // 2, (di % 2) * 2 + (dj % 2)].set(w[di, dj])
    return w2.reshape(4, 4 * cin, cout)


def _up_w_to_taps(w_iohw):
    """ConvTranspose(3, s=2, p=1, op=1) folded into a stride-1 2x2 subpixel conv
    producing the 4 output parities as 4*cout channels."""
    cin, cout, k, _ = w_iohw.shape  # k == 3
    w = jnp.transpose(w_iohw, (2, 3, 0, 1))          # (kh, kw, cin, cout)
    w2 = jnp.zeros((2, 2, cin, 4, cout), jnp.float32)
    for py in range(2):
        for px in range(2):
            for a in range(2):
                for b in range(2):
                    kh, kw = py - 2 * a + 1, px - 2 * b + 1
                    if 0 <= kh < k and 0 <= kw < k:
                        w2 = w2.at[a, b, :, py * 2 + px, :].set(w[kh, kw])
    return w2.reshape(4, cin, 4 * cout)


def prepare_params(p, *, n_blocks):
    """Hoist all weight re-layouts (tap-major, s2d/subpixel folding) and bf16 casts
    out of the forward pass."""
    bf16 = jnp.bfloat16
    q = {}
    q["c0_w"] = _conv_w_to_taps(p["c0_w"]).astype(bf16)
    q["c0_g"], q["c0_b"] = p["c0_g"].reshape(1, -1), p["c0_b"].reshape(1, -1)
    for i in range(2):
        q[f"down{i}_w"] = _down_w_to_taps(p[f"down{i}_w"]).astype(bf16)
        q[f"down{i}_g"] = p[f"down{i}_g"].reshape(1, -1)
        q[f"down{i}_b"] = p[f"down{i}_b"].reshape(1, -1)
    for i in range(n_blocks):
        q[f"rb{i}_w1"] = _conv_w_to_taps(p[f"rb{i}_w1"]).astype(bf16)
        q[f"rb{i}_w2"] = _conv_w_to_taps(p[f"rb{i}_w2"]).astype(bf16)
        for nm in ("g1", "b1", "g2", "b2"):
            q[f"rb{i}_{nm}"] = p[f"rb{i}_{nm}"].reshape(1, -1)
    for i in range(2):
        q[f"up{i}_w"] = _up_w_to_taps(p[f"up{i}_w"]).astype(bf16)
        q[f"up{i}_g"] = p[f"up{i}_g"].reshape(1, -1)
        q[f"up{i}_b"] = p[f"up{i}_b"].reshape(1, -1)
    q["cf_w"] = _conv_w_to_taps(p["cf_w"]).astype(bf16)
    q["cf_bias"] = p["cf_b"].reshape(1, -1).astype(jnp.float32)
    return q
    # TODO(synk): a further lever (not applied at these tiny channel counts) is padding
    # the channel/lane dims up to 128 for fully lane-dense stores.


# ----------------------------------------------------------------------------------
if __name__ == "__main__":
    INPUT_NC, OUTPUT_NC, NGF, N_BLOCKS = 3, 3, 8, 2
    B, H, W = 2, 16, 16

    key = jax.random.PRNGKey(0)
    kx, kp = jax.random.split(key)
    x = jax.random.normal(kx, (B, INPUT_NC, H, W), jnp.float32)
    params = prepare_params(init_params(kp, INPUT_NC, OUTPUT_NC, NGF, N_BLOCKS),
                            n_blocks=N_BLOCKS)

    fwd = jax.jit(functools.partial(resnet_generator_forward, ngf=NGF, n_blocks=N_BLOCKS))
    out = jax.block_until_ready(fwd(x, params))

    assert out.shape == (B, OUTPUT_NC, H, W), out.shape
    assert bool(jnp.all(jnp.isfinite(out)))
    assert bool(jnp.all(jnp.abs(out) <= 1.0))  # tanh output range
    print("KERNEL_OK")
</pallas_src>

<mosaic_0001>
module attributes {stable_mosaic.version = 11 : i64} {
  func.func @conv_row_kernel(%arg0: i32, %arg1: i32, %arg2: i32, %arg3: memref<1x1x22x3xbf16, #tpu.memory_space<vmem>>, %arg4: memref<49x3x8xbf16, #tpu.memory_space<vmem>>, %arg5: memref<1x8xf32, #tpu.memory_space<vmem>>, %arg6: memref<1x1x16x8xbf16, #tpu.memory_space<vmem>>, %arg7: memref<16x8xf32, #tpu.memory_space<vmem>>) attributes {dimension_semantics = [#tpu.dimension_semantics<parallel>, #tpu.dimension_semantics<parallel>, #tpu.dimension_semantics<arbitrary>], iteration_bounds = array<i64: 2, 16, 7>, scalar_prefetch = 0 : i64, scratch_operands = 1 : i64, tpu.core_type = #tpu.core_type<tc>, window_params = [{transform_indices = @transform_0, window_bounds = array<i64: 1, 1, 22, 3>}, {pipeline_mode = #tpu.pipeline_mode<synchronous>, transform_indices = @transform_1, window_bounds = array<i64: 49, 3, 8>}, {pipeline_mode = #tpu.pipeline_mode<synchronous>, transform_indices = @transform_2, window_bounds = array<i64: 1, 8>}, {transform_indices = @transform_3, window_bounds = array<i64: 1, 1, 16, 8>}]} {
    %c0_i32 = arith.constant 0 : i32
    %0 = arith.cmpi eq, %arg2, %c0_i32 : i32
    %1 = arith.extui %0 : i1 to i32
    %c0_i32_0 = arith.constant 0 : i32
    %2 = arith.cmpi ne, %1, %c0_i32_0 : i32
    scf.if %2 {
      %cst_37 = arith.constant 0.000000e+00 : f32
      %66 = vector.broadcast %cst_37 : f32 to vector<16x8xf32>
      %c0_38 = arith.constant 0 : index
      %c0_39 = arith.constant 0 : index
      %67 = vector.load %arg7[%c0_38, %c0_39] : memref<16x8xf32, #tpu.memory_space<vmem>>, vector<16x8xf32>
      tpu.vector_store %arg7[%c0_38, %c0_39], %66 {strides = array<i32>} : memref<16x8xf32, #tpu.memory_space<vmem>>, vector<16x8xf32>,
    } else {
    }
    %c0 = arith.constant 0 : index
    %c0_1 = arith.constant 0 : index
    %c0_2 = arith.constant 0 : index
    %c0_3 = arith.constant 0 : index
    %3 = vector.load %arg3[%c0, %c0_1, %c0_2, %c0_3] : memref<1x1x22x3xbf16, #tpu.memory_space<vmem>>, vector<1x1x22x3xbf16>
    %4 = vector.shape_cast %3 : vector<1x1x22x3xbf16> to vector<22x3xbf16>
    %5 = vector.extract_strided_slice %4 {offsets = [0, 0], sizes = [16, 3], strides = [1, 1]} : vector<22x3xbf16> to vector<16x3xbf16>
    %c7_i32 = arith.constant 7 : i32
    %6 = arith.muli %arg2, %c7_i32 : i32
    %c0_i32_4 = arith.constant 0 : i32
    %7 = arith.addi %6, %c0_i32_4 : i32
    %8 = arith.index_cast %7 : i32 to index
    %c0_5 = arith.constant 0 : index
    %c0_6 = arith.constant 0 : index
    %9 = vector.load %arg4[%8, %c0_5, %c0_6] : memref<49x3x8xbf16, #tpu.memory_space<vmem>>, vector<1x3x8xbf16>
    %10 = vector.shape_cast %9 : vector<1x3x8xbf16> to vector<3x8xbf16>
    %cst = arith.constant dense<0.000000e+00> : vector<16x8xf32>
    %11 = tpu.matmul %5, %10, %cst {dimension_numbers = #tpu.dot_dimension_numbers<[1], [0], [0], [1], [0, 0, 1, 1], [], []>} : vector<16x3xbf16>, vector<3x8xbf16>, vector<16x8xf32> -> vector<16x8xf32>
    %12 = vector.extract_strided_slice %4 {offsets = [1, 0], sizes = [16, 3], strides = [1, 1]} : vector<22x3xbf16> to vector<16x3xbf16>
    %c7_i32_7 = arith.constant 7 : i32
    %13 = arith.muli %arg2, %c7_i32_7 : i32
    %c1_i32 = arith.constant 1 : i32
    %14 = arith.addi %13, %c1_i32 : i32
    %15 = arith.index_cast %14 : i32 to index
    %c0_8 = arith.constant 0 : index
    %c0_9 = arith.constant 0 : index
    %16 = vector.load %arg4[%15, %c0_8, %c0_9] : memref<49x3x8xbf16, #tpu.memory_space<vmem>>, vector<1x3x8xbf16>
    %17 = vector.shape_cast %16 : vector<1x3x8xbf16> to vector<3x8xbf16>
    %cst_10 = arith.constant dense<0.000000e+00> : vector<16x8xf32>
    %18 = tpu.matmul %12, %17, %cst_10 {dimension_numbers = #tpu.dot_dimension_numbers<[1], [0], [0], [1], [0, 0, 1, 1], [], []>} : vector<16x3xbf16>, vector<3x8xbf16>, vector<16x8xf32> -> vector<16x8xf32>
    %19 = arith.addf %11, %18 : vector<16x8xf32>
    %20 = vector.extract_strided_slice %4 {offsets = [2, 0], sizes = [16, 3], strides = [1, 1]} : vector<22x3xbf16> to vector<16x3xbf16>
    %c7_i32_11 = arith.constant 7 : i32
    %21 = arith.muli %arg2, %c7_i32_11 : i32
    %c2_i32 = arith.constant 2 : i32
    %22 = arith.addi %21, %c2_i32 : i32
    %23 = arith.index_cast %22 : i32 to index
    %c0_12 = arith.constant 0 : index
    %c0_13 = arith.constant 0 : index
    %24 = vector.load %arg4[%23, %c0_12, %c0_13] : memref<49x3x8xbf16, #tpu.memory_space<vmem>>, vector<1x3x8xbf16>
    %25 = vector.shape_cast %24 : vector<1x3x8xbf16> to vector<3x8xbf16>
    %cst_14 = arith.constant dense<0.000000e+00> : vector<16x8xf32>
    %26 = tpu.matmul %20, %25, %cst_14 {dimension_numbers = #tpu.dot_dimension_numbers<[1], [0], [0], [1], [0, 0, 1, 1], [], []>} : vector<16x3xbf16>, vector<3x8xbf16>, vector<16x8xf32> -> vector<16x8xf32>
    %27 = arith.addf %19, %26 : vector<16x8xf32>
    %28 = vector.extract_strided_slice %4 {offsets = [3, 0], sizes = [16, 3], strides = [1, 1]} : vector<22x3xbf16> to vector<16x3xbf16>
    %c7_i32_15 = arith.constant 7 : i32
    %29 = arith.muli %arg2, %c7_i32_15 : i32
    %c3_i32 = arith.constant 3 : i32
    %30 = arith.addi %29, %c3_i32 : i32
    %31 = arith.index_cast %30 : i32 to index
    %c0_16 = arith.constant 0 : index
    %c0_17 = arith.constant 0 : index
    %32 = vector.load %arg4[%31, %c0_16, %c0_17] : memref<49x3x8xbf16, #tpu.memory_space<vmem>>, vector<1x3x8xbf16>
    %33 = vector.shape_cast %32 : vector<1x3x8xbf16> to vector<3x8xbf16>
    %cst_18 = arith.constant dense<0.000000e+00> : vector<16x8xf32>
    %34 = tpu.matmul %28, %33, %cst_18 {dimension_numbers = #tpu.dot_dimension_numbers<[1], [0], [0], [1], [0, 0, 1, 1], [], []>} : vector<16x3xbf16>, vector<3x8xbf16>, vector<16x8xf32> -> vector<16x8xf32>
    %35 = arith.addf %27, %34 : vector<16x8xf32>
    %36 = vector.extract_strided_slice %4 {offsets = [4, 0], sizes = [16, 3], strides = [1, 1]} : vector<22x3xbf16> to vector<16x3xbf16>
    %c7_i32_19 = arith.constant 7 : i32
    %37 = arith.muli %arg2, %c7_i32_19 : i32
    %c4_i32 = arith.constant 4 : i32
    %38 = arith.addi %37, %c4_i32 : i32
    %39 = arith.index_cast %38 : i32 to index
    %c0_20 = arith.constant 0 : index
    %c0_21 = arith.constant 0 : index
    %40 = vector.load %arg4[%39, %c0_20, %c0_21] : memref<49x3x8xbf16, #tpu.memory_space<vmem>>, vector<1x3x8xbf16>
    %41 = vector.shape_cast %40 : vector<1x3x8xbf16> to vector<3x8xbf16>
    %cst_22 = arith.constant dense<0.000000e+00> : vector<16x8xf32>
    %42 = tpu.matmul %36, %41, %cst_22 {dimension_numbers = #tpu.dot_dimension_numbers<[1], [0], [0], [1], [0, 0, 1, 1], [], []>} : vector<16x3xbf16>, vector<3x8xbf16>, vector<16x8xf32> -> vector<16x8xf32>
    %43 = arith.addf %35, %42 : vector<16x8xf32>
    %44 = vector.extract_strided_slice %4 {offsets = [5, 0], sizes = [16, 3], strides = [1, 1]} : vector<22x3xbf16> to vector<16x3xbf16>
    %c7_i32_23 = arith.constant 7 : i32
    %45 = arith.muli %arg2, %c7_i32_23 : i32
    %c5_i32 = arith.constant 5 : i32
    %46 = arith.addi %45, %c5_i32 : i32
    %47 = arith.index_cast %46 : i32 to index
    %c0_24 = arith.constant 0 : index
    %c0_25 = arith.constant 0 : index
    %48 = vector.load %arg4[%47, %c0_24, %c0_25] : memref<49x3x8xbf16, #tpu.memory_space<vmem>>, vector<1x3x8xbf16>
    %49 = vector.shape_cast %48 : vector<1x3x8xbf16> to vector<3x8xbf16>
    %cst_26 = arith.constant dense<0.000000e+00> : vector<16x8xf32>
    %50 = tpu.matmul %44, %49, %cst_26 {dimension_numbers = #tpu.dot_dimension_numbers<[1], [0], [0], [1], [0, 0, 1, 1], [], []>} : vector<16x3xbf16>, vector<3x8xbf16>, vector<16x8xf32> -> vector<16x8xf32>
    %51 = arith.addf %43, %50 : vector<16x8xf32>
    %52 = vector.extract_strided_slice %4 {offsets = [6, 0], sizes = [16, 3], strides = [1, 1]} : vector<22x3xbf16> to vector<16x3xbf16>
    %c7_i32_27 = arith.constant 7 : i32
    %53 = arith.muli %arg2, %c7_i32_27 : i32
    %c6_i32 = arith.constant 6 : i32
    %54 = arith.addi %53, %c6_i32 : i32
    %55 = arith.index_cast %54 : i32 to index
    %c0_28 = arith.constant 0 : index
    %c0_29 = arith.constant 0 : index
    %56 = vector.load %arg4[%55, %c0_28, %c0_29] : memref<49x3x8xbf16, #tpu.memory_space<vmem>>, vector<1x3x8xbf16>
    %57 = vector.shape_cast %56 : vector<1x3x8xbf16> to vector<3x8xbf16>
    %cst_30 = arith.constant dense<0.000000e+00> : vector<16x8xf32>
    %58 = tpu.matmul %52, %57, %cst_30 {dimension_numbers = #tpu.dot_dimension_numbers<[1], [0], [0], [1], [0, 0, 1, 1], [], []>} : vector<16x3xbf16>, vector<3x8xbf16>, vector<16x8xf32> -> vector<16x8xf32>
    %59 = arith.addf %51, %58 : vector<16x8xf32>
    %c0_31 = arith.constant 0 : index
    %c0_32 = arith.constant 0 : index
    %60 = vector.load %arg7[%c0_31, %c0_32] : memref<16x8xf32, #tpu.memory_space<vmem>>, vector<16x8xf32>
    %61 = arith.addf %60, %59 : vector<16x8xf32>
    %c0_33 = arith.constant 0 : index
    %c0_34 = arith.constant 0 : index
    %62 = vector.load %arg7[%c0_33, %c0_34] : memref<16x8xf32, #tpu.memory_space<vmem>>, vector<16x8xf32>
    tpu.vector_store %arg7[%c0_33, %c0_34], %61 {strides = array<i32>} : memref<16x8xf32, #tpu.memory_space<vmem>>, vector<16x8xf32>,
    %c6_i32_35 = arith.constant 6 : i32
    %63 = arith.cmpi eq, %arg2, %c6_i32_35 : i32
    %64 = arith.extui %63 : i1 to i32
    %c0_i32_36 = arith.constant 0 : i32
    %65 = arith.cmpi ne, %64, %c0_i32_36 : i32
    scf.if %65 {
      %c0_37 = arith.constant 0 : index
      %c0_38 = arith.constant 0 : index
      %66 = vector.load %arg7[%c0_37, %c0_38] : memref<16x8xf32, #tpu.memory_space<vmem>>, vector<16x8xf32>
      %c0_39 = arith.constant 0 : index
      %c0_40 = arith.constant 0 : index
      %67 = vector.load %arg5[%c0_39, %c0_40] : memref<1x8xf32, #tpu.memory_space<vmem>>, vector<1x8xf32>
      %68 = vector.broadcast %67 : vector<1x8xf32> to vector<16x8xf32>
      %69 = arith.addf %66, %68 : vector<16x8xf32>
      %70 = arith.truncf %69 : vector<16x8xf32> to vector<16x8xbf16>
      %c0_41 = arith.constant 0 : index
      %c0_42 = arith.constant 0 : index
      %c0_43 = arith.constant 0 : index
      %c0_44 = arith.constant 0 : index
      %71 = vector.load %arg6[%c0_41, %c0_42, %c0_43, %c0_44] : memref<1x1x16x8xbf16, #tpu.memory_space<vmem>>, vector<1x1x16x8xbf16>
      %72 = vector.shape_cast %71 : vector<1x1x16x8xbf16> to vector<16x8xbf16>
      %73 = vector.shape_cast %70 : vector<16x8xbf16> to vector<1x1x16x8xbf16>
      tpu.vector_store %arg6[%c0_41, %c0_42, %c0_43, %c0_44], %73 {strides = array<i32>} : memref<1x1x16x8xbf16, #tpu.memory_space<vmem>>, vector<1x1x16x8xbf16>,
    } else {
    }
    return
  }
  func.func @transform_0(%arg0: i32, %arg1: i32, %arg2: i32) -> (i32, i32, i32, i32) {
    %0 = arith.addi %arg1, %arg2 : i32
    %c0_i32 = arith.constant 0 : i32
    %c0_i32_0 = arith.constant 0 : i32
    %c0_i32_1 = arith.constant 0 : i32
    return %arg0, %0, %c0_i32, %c0_i32_0 : i32, i32, i32, i32
  }
  func.func @transform_1(%arg0: i32, %arg1: i32, %arg2: i32) -> (i32, i32, i32) {
    %c0_i32 = arith.constant 0 : i32
    %c0_i32_0 = arith.constant 0 : i32
    %c0_i32_1 = arith.constant 0 : i32
    %c0_i32_2 = arith.constant 0 : i32
    return %c0_i32, %c0_i32_0, %c0_i32_1 : i32, i32, i32
  }
  func.func @transform_2(%arg0: i32, %arg1: i32, %arg2: i32) -> (i32, i32) {
    %c0_i32 = arith.constant 0 : i32
    %c0_i32_0 = arith.constant 0 : i32
    %c0_i32_1 = arith.constant 0 : i32
    return %c0_i32, %c0_i32_0 : i32, i32
  }
  func.func @transform_3(%arg0: i32, %arg1: i32, %arg2: i32) -> (i32, i32, i32, i32) {
    %c0_i32 = arith.constant 0 : i32
    %c0_i32_0 = arith.constant 0 : i32
    %c0_i32_1 = arith.constant 0 : i32
    return %arg0, %arg1, %c0_i32, %c0_i32_0 : i32, i32, i32, i32
  }
}

module attributes {stable_mosaic.version = 11 : i64} {
  func.func @bn_stats_kernel(%arg0: i32, %arg1: memref<512x8xbf16, #tpu.memory_space<vmem>>, %arg2: memref<1x8xf32, #tpu.memory_space<vmem>>, %arg3: memref<1x8xf32, #tpu.memory_space<vmem>>) attributes {dimension_semantics = [#tpu.dimension_semantics<arbitrary>], iteration_bounds = array<i64: 1>, scalar_prefetch = 0 : i64, scratch_operands = 0 : i64, tpu.core_type = #tpu.core_type<tc>, window_params = [{transform_indices = @transform_0, window_bounds = array<i64: 512, 8>}, {pipeline_mode = #tpu.pipeline_mode<synchronous>, transform_indices = @transform_1, window_bounds = array<i64: 1, 8>}, {pipeline_mode = #tpu.pipeline_mode<synchronous>, transform_indices = @transform_2, window_bounds = array<i64: 1, 8>}]} {
    %c0_i32 = arith.constant 0 : i32
    %0 = arith.cmpi eq, %arg0, %c0_i32 : i32
    %1 = arith.extui %0 : i1 to i32
    %c0_i32_0 = arith.constant 0 : i32
    %2 = arith.cmpi ne, %1, %c0_i32_0 : i32
    scf.if %2 {
      %cst_11 = arith.constant 0.000000e+00 : f32
      %16 = vector.broadcast %cst_11 : f32 to vector<1x8xf32>
      %c0_12 = arith.constant 0 : index
      %c0_13 = arith.constant 0 : index
      %17 = vector.load %arg2[%c0_12, %c0_13] : memref<1x8xf32, #tpu.memory_space<vmem>>, vector<1x8xf32>
      tpu.vector_store %arg2[%c0_12, %c0_13], %16 {strides = array<i32>} : memref<1x8xf32, #tpu.memory_space<vmem>>, vector<1x8xf32>,
      %cst_14 = arith.constant 0.000000e+00 : f32
      %18 = vector.broadcast %cst_14 : f32 to vector<1x8xf32>
      %c0_15 = arith.constant 0 : index
      %c0_16 = arith.constant 0 : index
      %19 = vector.load %arg3[%c0_15, %c0_16] : memref<1x8xf32, #tpu.memory_space<vmem>>, vector<1x8xf32>
      tpu.vector_store %arg3[%c0_15, %c0_16], %18 {strides = array<i32>} : memref<1x8xf32, #tpu.memory_space<vmem>>, vector<1x8xf32>,
    } else {
    }
    %c0 = arith.constant 0 : index
    %c0_1 = arith.constant 0 : index
    %3 = vector.load %arg1[%c0, %c0_1] : memref<512x8xbf16, #tpu.memory_space<vmem>>, vector<512x8xbf16>
    %4 = arith.extf %3 : vector<512x8xbf16> to vector<512x8xf32>
    %c0_2 = arith.constant 0 : index
    %c0_3 = arith.constant 0 : index
    %5 = vector.load %arg2[%c0_2, %c0_3] : memref<1x8xf32, #tpu.memory_space<vmem>>, vector<1x8xf32>
    %cst = arith.constant dense<0.000000e+00> : vector<8xf32>
    %6 = vector.multi_reduction <add>, %4, %cst [0] : vector<512x8xf32> to vector<8xf32>
    %7 = vector.shape_cast %6 : vector<8xf32> to vector<1x8xf32>
    %8 = arith.addf %5, %7 : vector<1x8xf32>
    %c0_4 = arith.constant 0 : index
    %c0_5 = arith.constant 0 : index
    %9 = vector.load %arg2[%c0_4, %c0_5] : memref<1x8xf32, #tpu.memory_space<vmem>>, vector<1x8xf32>
    tpu.vector_store %arg2[%c0_4, %c0_5], %8 {strides = array<i32>} : memref<1x8xf32, #tpu.memory_space<vmem>>, vector<1x8xf32>,
    %c0_6 = arith.constant 0 : index
    %c0_7 = arith.constant 0 : index
    %10 = vector.load %arg3[%c0_6, %c0_7] : memref<1x8xf32, #tpu.memory_space<vmem>>, vector<1x8xf32>
    %11 = arith.mulf %4, %4 : vector<512x8xf32>
    %cst_8 = arith.constant dense<0.000000e+00> : vector<8xf32>
    %12 = vector.multi_reduction <add>, %11, %cst_8 [0] : vector<512x8xf32> to vector<8xf32>
    %13 = vector.shape_cast %12 : vector<8xf32> to vector<1x8xf32>
    %14 = arith.addf %10, %13 : vector<1x8xf32>
    %c0_9 = arith.constant 0 : index
    %c0_10 = arith.constant 0 : index
    %15 = vector.load %arg3[%c0_9, %c0_10] : memref<1x8xf32, #tpu.memory_space<vmem>>, vector<1x8xf32>
    tpu.vector_store %arg3[%c0_9, %c0_10], %14 {strides = array<i32>} : memref<1x8xf32, #tpu.memory_space<vmem>>, vector<1x8xf32>,
    return
  }
  func.func @transform_0(%arg0: i32) -> (i32, i32) {
    %c0_i32 = arith.constant 0 : i32
    %c0_i32_0 = arith.constant 0 : i32
    return %arg0, %c0_i32 : i32, i32
  }
  func.func @transform_1(%arg0: i32) -> (i32, i32) {
    %c0_i32 = arith.constant 0 : i32
    %c0_i32_0 = arith.constant 0 : i32
    %c0_i32_1 = arith.constant 0 : i32
    return %c0_i32, %c0_i32_0 : i32, i32
  }
  func.func @transform_2(%arg0: i32) -> (i32, i32) {
    %c0_i32 = arith.constant 0 : i32
    %c0_i32_0 = arith.constant 0 : i32
    %c0_i32_1 = arith.constant 0 : i32
    return %c0_i32, %c0_i32_0 : i32, i32
  }
}

module attributes {stable_mosaic.version = 11 : i64} {
  func.func @bn_apply_kernel(%arg0: i32, %arg1: memref<512x8xbf16, #tpu.memory_space<vmem>>, %arg2: memref<1x8xf32, #tpu.memory_space<vmem>>, %arg3: memref<1x8xf32, #tpu.memory_space<vmem>>, %arg4: memref<1x8xf32, #tpu.memory_space<vmem>>, %arg5: memref<1x8xf32, #tpu.memory_space<vmem>>, %arg6: memref<512x8xbf16, #tpu.memory_space<vmem>>) attributes {dimension_semantics = [#tpu.dimension_semantics<parallel>], iteration_bounds = array<i64: 1>, scalar_prefetch = 0 : i64, scratch_operands = 0 : i64, tpu.core_type = #tpu.core_type<tc>, window_params = [{transform_indices = @transform_0, window_bounds = array<i64: 512, 8>}, {pipeline_mode = #tpu.pipeline_mode<synchronous>, transform_indices = @transform_1, window_bounds = array<i64: 1, 8>}, {pipeline_mode = #tpu.pipeline_mode<synchronous>, transform_indices = @transform_2, window_bounds = array<i64: 1, 8>}, {pipeline_mode = #tpu.pipeline_mode<synchronous>, transform_indices = @transform_3, window_bounds = array<i64: 1, 8>}, {pipeline_mode = #tpu.pipeline_mode<synchronous>, transform_indices = @transform_4, window_bounds = array<i64: 1, 8>}, {transform_indices = @transform_5, window_bounds = array<i64: 512, 8>}]} {
    %c0 = arith.constant 0 : index
    %c0_0 = arith.constant 0 : index
    %0 = vector.load %arg2[%c0, %c0_0] : memref<1x8xf32, #tpu.memory_space<vmem>>, vector<1x8xf32>
    %cst = arith.constant 0.001953125 : f32
    %1 = vector.broadcast %cst : f32 to vector<1x8xf32>
    %2 = arith.mulf %0, %1 : vector<1x8xf32>
    %c0_1 = arith.constant 0 : index
    %c0_2 = arith.constant 0 : index
    %3 = vector.load %arg3[%c0_1, %c0_2] : memref<1x8xf32, #tpu.memory_space<vmem>>, vector<1x8xf32>
    %cst_3 = arith.constant 0.001953125 : f32
    %4 = vector.broadcast %cst_3 : f32 to vector<1x8xf32>
    %5 = arith.mulf %3, %4 : vector<1x8xf32>
    %6 = arith.mulf %2, %2 : vector<1x8xf32>
    %7 = arith.subf %5, %6 : vector<1x8xf32>
    %cst_4 = arith.constant 0.000000e+00 : f32
    %8 = vector.broadcast %cst_4 : f32 to vector<1x8xf32>
    %9 = arith.maximumf %7, %8 : vector<1x8xf32>
    %c0_5 = arith.constant 0 : index
    %c0_6 = arith.constant 0 : index
    %10 = vector.load %arg4[%c0_5, %c0_6] : memref<1x8xf32, #tpu.memory_space<vmem>>, vector<1x8xf32>
    %cst_7 = arith.constant 9.99999974E-6 : f32
    %11 = vector.broadcast %cst_7 : f32 to vector<1x8xf32>
    %12 = arith.addf %9, %11 : vector<1x8xf32>
    %13 = math.rsqrt %12 : vector<1x8xf32>
    %14 = arith.mulf %10, %13 : vector<1x8xf32>
    %c0_8 = arith.constant 0 : index
    %c0_9 = arith.constant 0 : index
    %15 = vector.load %arg5[%c0_8, %c0_9] : memref<1x8xf32, #tpu.memory_space<vmem>>, vector<1x8xf32>
    %16 = arith.mulf %2, %14 : vector<1x8xf32>
    %17 = arith.subf %15, %16 : vector<1x8xf32>
    %c0_10 = arith.constant 0 : index
    %c0_11 = arith.constant 0 : index
    %18 = vector.load %arg1[%c0_10, %c0_11] : memref<512x8xbf16, #tpu.memory_space<vmem>>, vector<512x8xbf16>
    %19 = arith.extf %18 : vector<512x8xbf16> to vector<512x8xf32>
    %20 = vector.broadcast %14 : vector<1x8xf32> to vector<512x8xf32>
    %21 = arith.mulf %19, %20 : vector<512x8xf32>
    %22 = vector.broadcast %17 : vector<1x8xf32> to vector<512x8xf32>
    %23 = arith.addf %21, %22 : vector<512x8xf32>
    %cst_12 = arith.constant 0.000000e+00 : f32
    %24 = vector.broadcast %cst_12 : f32 to vector<512x8xf32>
    %25 = arith.maximumf %23, %24 : vector<512x8xf32>
    %26 = arith.truncf %25 : vector<512x8xf32> to vector<512x8xbf16>
    %c0_13 = arith.constant 0 : index
    %c0_14 = arith.constant 0 : index
    %27 = vector.load %arg6[%c0_13, %c0_14] : memref<512x8xbf16, #tpu.memory_space<vmem>>, vector<512x8xbf16>
    tpu.vector_store %arg6[%c0_13, %c0_14], %26 {strides = array<i32>} : memref<512x8xbf16, #tpu.memory_space<vmem>>, vector<512x8xbf16>,
    return
  }
  func.func @transform_0(%arg0: i32) -> (i32, i32) {
    %c0_i32 = arith.constant 0 : i32
    %c0_i32_0 = arith.constant 0 : i32
    return %arg0, %c0_i32 : i32, i32
  }
  func.func @transform_1(%arg0: i32) -> (i32, i32) {
    %c0_i32 = arith.constant 0 : i32
    %c0_i32_0 = arith.constant 0 : i32
    %c0_i32_1 = arith.constant 0 : i32
    return %c0_i32, %c0_i32_0 : i32, i32
  }
  func.func @transform_2(%arg0: i32) -> (i32, i32) {
    %c0_i32 = arith.constant 0 : i32
    %c0_i32_0 = arith.constant 0 : i32
    %c0_i32_1 = arith.constant 0 : i32
    return %c0_i32, %c0_i32_0 : i32, i32
  }
  func.func @transform_3(%arg0: i32) -> (i32, i32) {
    %c0_i32 = arith.constant 0 : i32
    %c0_i32_0 = arith.constant 0 : i32
    %c0_i32_1 = arith.constant 0 : i32
    return %c0_i32, %c0_i32_0 : i32, i32
  }
  func.func @transform_4(%arg0: i32) -> (i32, i32) {
    %c0_i32 = arith.constant 0 : i32
    %c0_i32_0 = arith.constant 0 : i32
    %c0_i32_1 = arith.constant 0 : i32
    return %c0_i32, %c0_i32_0 : i32, i32
  }
  func.func @transform_5(%arg0: i32) -> (i32, i32) {
    %c0_i32 = arith.constant 0 : i32
    %c0_i32_0 = arith.constant 0 : i32
    return %arg0, %c0_i32 : i32, i32
  }
}

module attributes {stable_mosaic.version = 11 : i64} {
  func.func @conv_row_kernel(%arg0: i32, %arg1: i32, %arg2: i32, %arg3: memref<1x1x9x32xbf16, #tpu.memory_space<vmem>>, %arg4: memref<4x32x16xbf16, #tpu.memory_space<vmem>>, %arg5: memref<1x16xf32, #tpu.memory_space<vmem>>, %arg6: memref<1x1x8x16xbf16, #tpu.memory_space<vmem>>, %arg7: memref<8x16xf32, #tpu.memory_space<vmem>>) attributes {dimension_semantics = [#tpu.dimension_semantics<parallel>, #tpu.dimension_semantics<parallel>, #tpu.dimension_semantics<arbitrary>], iteration_bounds = array<i64: 2, 8, 2>, scalar_prefetch = 0 : i64, scratch_operands = 1 : i64, tpu.core_type = #tpu.core_type<tc>, window_params = [{transform_indices = @transform_0, window_bounds = array<i64: 1, 1, 9, 32>}, {pipeline_mode = #tpu.pipeline_mode<synchronous>, transform_indices = @transform_1, window_bounds = array<i64: 4, 32, 16>}, {pipeline_mode = #tpu.pipeline_mode<synchronous>, transform_indices = @transform_2, window_bounds = array<i64: 1, 16>}, {transform_indices = @transform_3, window_bounds = array<i64: 1, 1, 8, 16>}]} {
    %c0_i32 = arith.constant 0 : i32
    %0 = arith.cmpi eq, %arg2, %c0_i32 : i32
    %1 = arith.extui %0 : i1 to i32
    %c0_i32_0 = arith.constant 0 : i32
    %2 = arith.cmpi ne, %1, %c0_i32_0 : i32
    scf.if %2 {
      %cst_17 = arith.constant 0.000000e+00 : f32
      %26 = vector.broadcast %cst_17 : f32 to vector<8x16xf32>
      %c0_18 = arith.constant 0 : index
      %c0_19 = arith.constant 0 : index
      %27 = vector.load %arg7[%c0_18, %c0_19] : memref<8x16xf32, #tpu.memory_space<vmem>>, vector<8x16xf32>
      tpu.vector_store %arg7[%c0_18, %c0_19], %26 {strides = array<i32>} : memref<8x16xf32, #tpu.memory_space<vmem>>, vector<8x16xf32>,
    } else {
    }
    %c0 = arith.constant 0 : index
    %c0_1 = arith.constant 0 : index
    %c0_2 = arith.constant 0 : index
    %c0_3 = arith.constant 0 : index
    %3 = vector.load %arg3[%c0, %c0_1, %c0_2, %c0_3] : memref<1x1x9x32xbf16, #tpu.memory_space<vmem>>, vector<1x1x9x32xbf16>
    %4 = vector.shape_cast %3 : vector<1x1x9x32xbf16> to vector<9x32xbf16>
    %5 = vector.extract_strided_slice %4 {offsets = [0, 0], sizes = [8, 32], strides = [1, 1]} : vector<9x32xbf16> to vector<8x32xbf16>
    %c2_i32 = arith.constant 2 : i32
    %6 = arith.muli %arg2, %c2_i32 : i32
    %c0_i32_4 = arith.constant 0 : i32
    %7 = arith.addi %6, %c0_i32_4 : i32
    %8 = arith.index_cast %7 : i32 to index
    %c0_5 = arith.constant 0 : index
    %c0_6 = arith.constant 0 : index
    %9 = vector.load %arg4[%8, %c0_5, %c0_6] : memref<4x32x16xbf16, #tpu.memory_space<vmem>>, vector<1x32x16xbf16>
    %10 = vector.shape_cast %9 : vector<1x32x16xbf16> to vector<32x16xbf16>
    %cst = arith.constant dense<0.000000e+00> : vector<8x16xf32>
    %11 = tpu.matmul %5, %10, %cst {dimension_numbers = #tpu.dot_dimension_numbers<[1], [0], [0], [1], [0, 0, 1, 1], [], []>} : vector<8x32xbf16>, vector<32x16xbf16>, vector<8x16xf32> -> vector<8x16xf32>
    %12 = vector.extract_strided_slice %4 {offsets = [1, 0], sizes = [8, 32], strides = [1, 1]} : vector<9x32xbf16> to vector<8x32xbf16>
    %c2_i32_7 = arith.constant 2 : i32
    %13 = arith.muli %arg2, %c2_i32_7 : i32
    %c1_i32 = arith.constant 1 : i32
    %14 = arith.addi %13, %c1_i32 : i32
    %15 = arith.index_cast %14 : i32 to index
    %c0_8 = arith.constant 0 : index
    %c0_9 = arith.constant 0 : index
    %16 = vector.load %arg4[%15, %c0_8, %c0_9] : memref<4x32x16xbf16, #tpu.memory_space<vmem>>, vector<1x32x16xbf16>
    %17 = vector.shape_cast %16 : vector<1x32x16xbf16> to vector<32x16xbf16>
    %cst_10 = arith.constant dense<0.000000e+00> : vector<8x16xf32>
    %18 = tpu.matmul %12, %17, %cst_10 {dimension_numbers = #tpu.dot_dimension_numbers<[1], [0], [0], [1], [0, 0, 1, 1], [], []>} : vector<8x32xbf16>, vector<32x16xbf16>, vector<8x16xf32> -> vector<8x16xf32>
    %19 = arith.addf %11, %18 : vector<8x16xf32>
    %c0_11 = arith.constant 0 : index
    %c0_12 = arith.constant 0 : index
    %20 = vector.load %arg7[%c0_11, %c0_12] : memref<8x16xf32, #tpu.memory_space<vmem>>, vector<8x16xf32>
    %21 = arith.addf %20, %19 : vector<8x16xf32>
    %c0_13 = arith.constant 0 : index
    %c0_14 = arith.constant 0 : index
    %22 = vector.load %arg7[%c0_13, %c0_14] : memref<8x16xf32, #tpu.memory_space<vmem>>, vector<8x16xf32>
    tpu.vector_store %arg7[%c0_13, %c0_14], %21 {strides = array<i32>} : memref<8x16xf32, #tpu.memory_space<vmem>>, vector<8x16xf32>,
    %c1_i32_15 = arith.constant 1 : i32
    %23 = arith.cmpi eq, %arg2, %c1_i32_15 : i32
    %24 = arith.extui %23 : i1 to i32
    %c0_i32_16 = arith.constant 0 : i32
    %25 = arith.cmpi ne, %24, %c0_i32_16 : i32
    scf.if %25 {
      %c0_17 = arith.constant 0 : index
      %c0_18 = arith.constant 0 : index
      %26 = vector.load %arg7[%c0_17, %c0_18] : memref<8x16xf32, #tpu.memory_space<vmem>>, vector<8x16xf32>
      %c0_19 = arith.constant 0 : index
      %c0_20 = arith.constant 0 : index
      %27 = vector.load %arg5[%c0_19, %c0_20] : memref<1x16xf32, #tpu.memory_space<vmem>>, vector<1x16xf32>
      %28 = vector.broadcast %27 : vector<1x16xf32> to vector<8x16xf32>
      %29 = arith.addf %26, %28 : vector<8x16xf32>
      %30 = arith.truncf %29 : vector<8x16xf32> to vector<8x16xbf16>
      %c0_21 = arith.constant 0 : index
      %c0_22 = arith.constant 0 : index
      %c0_23 = arith.constant 0 : index
      %c0_24 = arith.constant 0 : index
      %31 = vector.load %arg6[%c0_21, %c0_22, %c0_23, %c0_24] : memref<1x1x8x16xbf16, #tpu.memory_space<vmem>>, vector<1x1x8x16xbf16>
      %32 = vector.shape_cast %31 : vector<1x1x8x16xbf16> to vector<8x16xbf16>
      %33 = vector.shape_cast %30 : vector<8x16xbf16> to vector<1x1x8x16xbf16>
      tpu.vector_store %arg6[%c0_21, %c0_22, %c0_23, %c0_24], %33 {strides = array<i32>} : memref<1x1x8x16xbf16, #tpu.memory_space<vmem>>, vector<1x1x8x16xbf16>,
    } else {
    }
    return
  }
  func.func @transform_0(%arg0: i32, %arg1: i32, %arg2: i32) -> (i32, i32, i32, i32) {
    %0 = arith.addi %arg1, %arg2 : i32
    %c0_i32 = arith.constant 0 : i32
    %c0_i32_0 = arith.constant 0 : i32
    %c0_i32_1 = arith.constant 0 : i32
    return %arg0, %0, %c0_i32, %c0_i32_0 : i32, i32, i32, i32
  }
  func.func @transform_1(%arg0: i32, %arg1: i32, %arg2: i32) -> (i32, i32, i32) {
    %c0_i32 = arith.constant 0 : i32
    %c0_i32_0 = arith.constant 0 : i32
    %c0_i32_1 = arith.constant 0 : i32
    %c0_i32_2 = arith.constant 0 : i32
    return %c0_i32, %c0_i32_0, %c0_i32_1 : i32, i32, i32
  }
  func.func @transform_2(%arg0: i32, %arg1: i32, %arg2: i32) -> (i32, i32) {
    %c0_i32 = arith.constant 0 : i32
    %c0_i32_0 = arith.constant 0 : i32
    %c0_i32_1 = arith.constant 0 : i32
    return %c0_i32, %c0_i32_0 : i32, i32
  }
  func.func @transform_3(%arg0: i32, %arg1: i32, %arg2: i32) -> (i32, i32, i32, i32) {
    %c0_i32 = arith.constant 0 : i32
    %c0_i32_0 = arith.constant 0 : i32
    %c0_i32_1 = arith.constant 0 : i32
    return %arg0, %arg1, %c0_i32, %c0_i32_0 : i32, i32, i32, i32
  }
}

module attributes {stable_mosaic.version = 11 : i64} {
  func.func @bn_stats_kernel(%arg0: i32, %arg1: memref<128x16xbf16, #tpu.memory_space<vmem>>, %arg2: memref<1x16xf32, #tpu.memory_space<vmem>>, %arg3: memref<1x16xf32, #tpu.memory_space<vmem>>) attributes {dimension_semantics = [#tpu.dimension_semantics<arbitrary>], iteration_bounds = array<i64: 1>, scalar_prefetch = 0 : i64, scratch_operands = 0 : i64, tpu.core_type = #tpu.core_type<tc>, window_params = [{transform_indices = @transform_0, window_bounds = array<i64: 128, 16>}, {pipeline_mode = #tpu.pipeline_mode<synchronous>, transform_indices = @transform_1, window_bounds = array<i64: 1, 16>}, {pipeline_mode = #tpu.pipeline_mode<synchronous>, transform_indices = @transform_2, window_bounds = array<i64: 1, 16>}]} {
    %c0_i32 = arith.constant 0 : i32
    %0 = arith.cmpi eq, %arg0, %c0_i32 : i32
    %1 = arith.extui %0 : i1 to i32
    %c0_i32_0 = arith.constant 0 : i32
    %2 = arith.cmpi ne, %1, %c0_i32_0 : i32
    scf.if %2 {
      %cst_11 = arith.constant 0.000000e+00 : f32
      %16 = vector.broadcast %cst_11 : f32 to vector<1x16xf32>
      %c0_12 = arith.constant 0 : index
      %c0_13 = arith.constant 0 : index
      %17 = vector.load %arg2[%c0_12, %c0_13] : memref<1x16xf32, #tpu.memory_space<vmem>>, vector<1x16xf32>
      tpu.vector_store %arg2[%c0_12, %c0_13], %16 {strides = array<i32>} : memref<1x16xf32, #tpu.memory_space<vmem>>, vector<1x16xf32>,
      %cst_14 = arith.constant 0.000000e+00 : f32
      %18 = vector.broadcast %cst_14 : f32 to vector<1x16xf32>
      %c0_15 = arith.constant 0 : index
      %c0_16 = arith.constant 0 : index
      %19 = vector.load %arg3[%c0_15, %c0_16] : memref<1x16xf32, #tpu.memory_space<vmem>>, vector<1x16xf32>
      tpu.vector_store %arg3[%c0_15, %c0_16], %18 {strides = array<i32>} : memref<1x16xf32, #tpu.memory_space<vmem>>, vector<1x16xf32>,
    } else {
    }
    %c0 = arith.constant 0 : index
    %c0_1 = arith.constant 0 : index
    %3 = vector.load %arg1[%c0, %c0_1] : memref<128x16xbf16, #tpu.memory_space<vmem>>, vector<128x16xbf16>
    %4 = arith.extf %3 : vector<128x16xbf16> to vector<128x16xf32>
    %c0_2 = arith.constant 0 : index
    %c0_3 = arith.constant 0 : index
    %5 = vector.load %arg2[%c0_2, %c0_3] : memref<1x16xf32, #tpu.memory_space<vmem>>, vector<1x16xf32>
    %cst = arith.constant dense<0.000000e+00> : vector<16xf32>
    %6 = vector.multi_reduction <add>, %4, %cst [0] : vector<128x16xf32> to vector<16xf32>
    %7 = vector.shape_cast %6 : vector<16xf32> to vector<1x16xf32>
    %8 = arith.addf %5, %7 : vector<1x16xf32>
    %c0_4 = arith.constant 0 : index
    %c0_5 = arith.constant 0 : index
    %9 = vector.load %arg2[%c0_4, %c0_5] : memref<1x16xf32, #tpu.memory_space<vmem>>, vector<1x16xf32>
    tpu.vector_store %arg2[%c0_4, %c0_5], %8 {strides = array<i32>} : memref<1x16xf32, #tpu.memory_space<vmem>>, vector<1x16xf32>,
    %c0_6 = arith.constant 0 : index
    %c0_7 = arith.constant 0 : index
    %10 = vector.load %arg3[%c0_6, %c0_7] : memref<1x16xf32, #tpu.memory_space<vmem>>, vector<1x16xf32>
    %11 = arith.mulf %4, %4 : vector<128x16xf32>
    %cst_8 = arith.constant dense<0.000000e+00> : vector<16xf32>
    %12 = vector.multi_reduction <add>, %11, %cst_8 [0] : vector<128x16xf32> to vector<16xf32>
    %13 = vector.shape_cast %12 : vector<16xf32> to vector<1x16xf32>
    %14 = arith.addf %10, %13 : vector<1x16xf32>
    %c0_9 = arith.constant 0 : index
    %c0_10 = arith.constant 0 : index
    %15 = vector.load %arg3[%c0_9, %c0_10] : memref<1x16xf32, #tpu.memory_space<vmem>>, vector<1x16xf32>
    tpu.vector_store %arg3[%c0_9, %c0_10], %14 {strides = array<i32>} : memref<1x16xf32, #tpu.memory_space<vmem>>, vector<1x16xf32>,
    return
  }
  func.func @transform_0(%arg0: i32) -> (i32, i32) {
    %c0_i32 = arith.constant 0 : i32
    %c0_i32_0 = arith.constant 0 : i32
    return %arg0, %c0_i32 : i32, i32
  }
  func.func @transform_1(%arg0: i32) -> (i32, i32) {
    %c0_i32 = arith.constant 0 : i32
    %c0_i32_0 = arith.constant 0 : i32
    %c0_i32_1 = arith.constant 0 : i32
    return %c0_i32, %c0_i32_0 : i32, i32
  }
  func.func @transform_2(%arg0: i32) -> (i32, i32) {
    %c0_i32 = arith.constant 0 : i32
    %c0_i32_0 = arith.constant 0 : i32
    %c0_i32_1 = arith.constant 0 : i32
    return %c0_i32, %c0_i32_0 : i32, i32
  }
}

module attributes {stable_mosaic.version = 11 : i64} {
  func.func @bn_apply_kernel(%arg0: i32, %arg1: memref<128x16xbf16, #tpu.memory_space<vmem>>, %arg2: memref<1x16xf32, #tpu.memory_space<vmem>>, %arg3: memref<1x16xf32, #tpu.memory_space<vmem>>, %arg4: memref<1x16xf32, #tpu.memory_space<vmem>>, %arg5: memref<1x16xf32, #tpu.memory_space<vmem>>, %arg6: memref<128x16xbf16, #tpu.memory_space<vmem>>) attributes {dimension_semantics = [#tpu.dimension_semantics<parallel>], iteration_bounds = array<i64: 1>, scalar_prefetch = 0 : i64, scratch_operands = 0 : i64, tpu.core_type = #tpu.core_type<tc>, window_params = [{transform_indices = @transform_0, window_bounds = array<i64: 128, 16>}, {pipeline_mode = #tpu.pipeline_mode<synchronous>, transform_indices = @transform_1, window_bounds = array<i64: 1, 16>}, {pipeline_mode = #tpu.pipeline_mode<synchronous>, transform_indices = @transform_2, window_bounds = array<i64: 1, 16>}, {pipeline_mode = #tpu.pipeline_mode<synchronous>, transform_indices = @transform_3, window_bounds = array<i64: 1, 16>}, {pipeline_mode = #tpu.pipeline_mode<synchronous>, transform_indices = @transform_4, window_bounds = array<i64: 1, 16>}, {transform_indices = @transform_5, window_bounds = array<i64: 128, 16>}]} {
    %c0 = arith.constant 0 : index
    %c0_0 = arith.constant 0 : index
    %0 = vector.load %arg2[%c0, %c0_0] : memref<1x16xf32, #tpu.memory_space<vmem>>, vector<1x16xf32>
    %cst = arith.constant 7.812500e-03 : f32
    %1 = vector.broadcast %cst : f32 to vector<1x16xf32>
    %2 = arith.mulf %0, %1 : vector<1x16xf32>
    %c0_1 = arith.constant 0 : index
    %c0_2 = arith.constant 0 : index
    %3 = vector.load %arg3[%c0_1, %c0_2] : memref<1x16xf32, #tpu.memory_space<vmem>>, vector<1x16xf32>
    %cst_3 = arith.constant 7.812500e-03 : f32
    %4 = vector.broadcast %cst_3 : f32 to vector<1x16xf32>
    %5 = arith.mulf %3, %4 : vector<1x16xf32>
    %6 = arith.mulf %2, %2 : vector<1x16xf32>
    %7 = arith.subf %5, %6 : vector<1x16xf32>
    %cst_4 = arith.constant 0.000000e+00 : f32
    %8 = vector.broadcast %cst_4 : f32 to vector<1x16xf32>
    %9 = arith.maximumf %7, %8 : vector<1x16xf32>
    %c0_5 = arith.constant 0 : index
    %c0_6 = arith.constant 0 : index
    %10 = vector.load %arg4[%c0_5, %c0_6] : memref<1x16xf32, #tpu.memory_space<vmem>>, vector<1x16xf32>
    %cst_7 = arith.constant 9.99999974E-6 : f32
    %11 = vector.broadcast %cst_7 : f32 to vector<1x16xf32>
    %12 = arith.addf %9, %11 : vector<1x16xf32>
    %13 = math.rsqrt %12 : vector<1x16xf32>
    %14 = arith.mulf %10, %13 : vector<1x16xf32>
    %c0_8 = arith.constant 0 : index
    %c0_9 = arith.constant 0 : index
    %15 = vector.load %arg5[%c0_8, %c0_9] : memref<1x16xf32, #tpu.memory_space<vmem>>, vector<1x16xf32>
    %16 = arith.mulf %2, %14 : vector<1x16xf32>
    %17 = arith.subf %15, %16 : vector<1x16xf32>
    %c0_10 = arith.constant 0 : index
    %c0_11 = arith.constant 0 : index
    %18 = vector.load %arg1[%c0_10, %c0_11] : memref<128x16xbf16, #tpu.memory_space<vmem>>, vector<128x16xbf16>
    %19 = arith.extf %18 : vector<128x16xbf16> to vector<128x16xf32>
    %20 = vector.broadcast %14 : vector<1x16xf32> to vector<128x16xf32>
    %21 = arith.mulf %19, %20 : vector<128x16xf32>
    %22 = vector.broadcast %17 : vector<1x16xf32> to vector<128x16xf32>
    %23 = arith.addf %21, %22 : vector<128x16xf32>
    %cst_12 = arith.constant 0.000000e+00 : f32
    %24 = vector.broadcast %cst_12 : f32 to vector<128x16xf32>
    %25 = arith.maximumf %23, %24 : vector<128x16xf32>
    %26 = arith.truncf %25 : vector<128x16xf32> to vector<128x16xbf16>
    %c0_13 = arith.constant 0 : index
    %c0_14 = arith.constant 0 : index
    %27 = vector.load %arg6[%c0_13, %c0_14] : memref<128x16xbf16, #tpu.memory_space<vmem>>, vector<128x16xbf16>
    tpu.vector_store %arg6[%c0_13, %c0_14], %26 {strides = array<i32>} : memref<128x16xbf16, #tpu.memory_space<vmem>>, vector<128x16xbf16>,
    return
  }
  func.func @transform_0(%arg0: i32) -> (i32, i32) {
    %c0_i32 = arith.constant 0 : i32
    %c0_i32_0 = arith.constant 0 : i32
    return %arg0, %c0_i32 : i32, i32
  }
  func.func @transform_1(%arg0: i32) -> (i32, i32) {
    %c0_i32 = arith.constant 0 : i32
    %c0_i32_0 = arith.constant 0 : i32
    %c0_i32_1 = arith.constant 0 : i32
    return %c0_i32, %c0_i32_0 : i32, i32
  }
  func.func @transform_2(%arg0: i32) -> (i32, i32) {
    %c0_i32 = arith.constant 0 : i32
    %c0_i32_0 = arith.constant 0 : i32
    %c0_i32_1 = arith.constant 0 : i32
    return %c0_i32, %c0_i32_0 : i32, i32
  }
  func.func @transform_3(%arg0: i32) -> (i32, i32) {
    %c0_i32 = arith.constant 0 : i32
    %c0_i32_0 = arith.constant 0 : i32
    %c0_i32_1 = arith.constant 0 : i32
    return %c0_i32, %c0_i32_0 : i32, i32
  }
  func.func @transform_4(%arg0: i32) -> (i32, i32) {
    %c0_i32 = arith.constant 0 : i32
    %c0_i32_0 = arith.constant 0 : i32
    %c0_i32_1 = arith.constant 0 : i32
    return %c0_i32, %c0_i32_0 : i32, i32
  }
  func.func @transform_5(%arg0: i32) -> (i32, i32) {
    %c0_i32 = arith.constant 0 : i32
    %c0_i32_0 = arith.constant 0 : i32
    return %arg0, %c0_i32 : i32, i32
  }
}

module attributes {stable_mosaic.version = 11 : i64} {
  func.func @conv_row_kernel(%arg0: i32, %arg1: i32, %arg2: i32, %arg3: memref<1x1x5x64xbf16, #tpu.memory_space<vmem>>, %arg4: memref<4x64x32xbf16, #tpu.memory_space<vmem>>, %arg5: memref<1x32xf32, #tpu.memory_space<vmem>>, %arg6: memref<1x1x4x32xbf16, #tpu.memory_space<vmem>>, %arg7: memref<4x32xf32, #tpu.memory_space<vmem>>) attributes {dimension_semantics = [#tpu.dimension_semantics<parallel>, #tpu.dimension_semantics<parallel>, #tpu.dimension_semantics<arbitrary>], iteration_bounds = array<i64: 2, 4, 2>, scalar_prefetch = 0 : i64, scratch_operands = 1 : i64, tpu.core_type = #tpu.core_type<tc>, window_params = [{transform_indices = @transform_0, window_bounds = array<i64: 1, 1, 5, 64>}, {pipeline_mode = #tpu.pipeline_mode<synchronous>, transform_indices = @transform_1, window_bounds = array<i64: 4, 64, 32>}, {pipeline_mode = #tpu.pipeline_mode<synchronous>, transform_indices = @transform_2, window_bounds = array<i64: 1, 32>}, {transform_indices = @transform_3, window_bounds = array<i64: 1, 1, 4, 32>}]} {
    %c0_i32 = arith.constant 0 : i32
    %0 = arith.cmpi eq, %arg2, %c0_i32 : i32
    %1 = arith.extui %0 : i1 to i32
    %c0_i32_0 = arith.constant 0 : i32
    %2 = arith.cmpi ne, %1, %c0_i32_0 : i32
    scf.if %2 {
      %cst_17 = arith.constant 0.000000e+00 : f32
      %26 = vector.broadcast %cst_17 : f32 to vector<4x32xf32>
      %c0_18 = arith.constant 0 : index
      %c0_19 = arith.constant 0 : index
      %27 = vector.load %arg7[%c0_18, %c0_19] : memref<4x32xf32, #tpu.memory_space<vmem>>, vector<4x32xf32>
      tpu.vector_store %arg7[%c0_18, %c0_19], %26 {strides = array<i32>} : memref<4x32xf32, #tpu.memory_space<vmem>>, vector<4x32xf32>,
    } else {
    }
    %c0 = arith.constant 0 : index
    %c0_1 = arith.constant 0 : index
    %c0_2 = arith.constant 0 : index
    %c0_3 = arith.constant 0 : index
    %3 = vector.load %arg3[%c0, %c0_1, %c0_2, %c0_3] : memref<1x1x5x64xbf16, #tpu.memory_space<vmem>>, vector<1x1x5x64xbf16>
    %4 = vector.shape_cast %3 : vector<1x1x5x64xbf16> to vector<5x64xbf16>
    %5 = vector.extract_strided_slice %4 {offsets = [0, 0], sizes = [4, 64], strides = [1, 1]} : vector<5x64xbf16> to vector<4x64xbf16>
    %c2_i32 = arith.constant 2 : i32
    %6 = arith.muli %arg2, %c2_i32 : i32
    %c0_i32_4 = arith.constant 0 : i32
    %7 = arith.addi %6, %c0_i32_4 : i32
    %8 = arith.index_cast %7 : i32 to index
    %c0_5 = arith.constant 0 : index
    %c0_6 = arith.constant 0 : index
    %9 = vector.load %arg4[%8, %c0_5, %c0_6] : memref<4x64x32xbf16, #tpu.memory_space<vmem>>, vector<1x64x32xbf16>
    %10 = vector.shape_cast %9 : vector<1x64x32xbf16> to vector<64x32xbf16>
    %cst = arith.constant dense<0.000000e+00> : vector<4x32xf32>
    %11 = tpu.matmul %5, %10, %cst {dimension_numbers = #tpu.dot_dimension_numbers<[1], [0], [0], [1], [0, 0, 1, 1], [], []>} : vector<4x64xbf16>, vector<64x32xbf16>, vector<4x32xf32> -> vector<4x32xf32>
    %12 = vector.extract_strided_slice %4 {offsets = [1, 0], sizes = [4, 64], strides = [1, 1]} : vector<5x64xbf16> to vector<4x64xbf16>
    %c2_i32_7 = arith.constant 2 : i32
    %13 = arith.muli %arg2, %c2_i32_7 : i32
    %c1_i32 = arith.constant 1 : i32
    %14 = arith.addi %13, %c1_i32 : i32
    %15 = arith.index_cast %14 : i32 to index
    %c0_8 = arith.constant 0 : index
    %c0_9 = arith.constant 0 : index
    %16 = vector.load %arg4[%15, %c0_8, %c0_9] : memref<4x64x32xbf16, #tpu.memory_space<vmem>>, vector<1x64x32xbf16>
    %17 = vector.shape_cast %16 : vector<1x64x32xbf16> to vector<64x32xbf16>
    %cst_10 = arith.constant dense<0.000000e+00> : vector<4x32xf32>
    %18 = tpu.matmul %12, %17, %cst_10 {dimension_numbers = #tpu.dot_dimension_numbers<[1], [0], [0], [1], [0, 0, 1, 1], [], []>} : vector<4x64xbf16>, vector<64x32xbf16>, vector<4x32xf32> -> vector<4x32xf32>
    %19 = arith.addf %11, %18 : vector<4x32xf32>
    %c0_11 = arith.constant 0 : index
    %c0_12 = arith.constant 0 : index
    %20 = vector.load %arg7[%c0_11, %c0_12] : memref<4x32xf32, #tpu.memory_space<vmem>>, vector<4x32xf32>
    %21 = arith.addf %20, %19 : vector<4x32xf32>
    %c0_13 = arith.constant 0 : index
    %c0_14 = arith.constant 0 : index
    %22 = vector.load %arg7[%c0_13, %c0_14] : memref<4x32xf32, #tpu.memory_space<vmem>>, vector<4x32xf32>
    tpu.vector_store %arg7[%c0_13, %c0_14], %21 {strides = array<i32>} : memref<4x32xf32, #tpu.memory_space<vmem>>, vector<4x32xf32>,
    %c1_i32_15 = arith.constant 1 : i32
    %23 = arith.cmpi eq, %arg2, %c1_i32_15 : i32
    %24 = arith.extui %23 : i1 to i32
    %c0_i32_16 = arith.constant 0 : i32
    %25 = arith.cmpi ne, %24, %c0_i32_16 : i32
    scf.if %25 {
      %c0_17 = arith.constant 0 : index
      %c0_18 = arith.constant 0 : index
      %26 = vector.load %arg7[%c0_17, %c0_18] : memref<4x32xf32, #tpu.memory_space<vmem>>, vector<4x32xf32>
      %c0_19 = arith.constant 0 : index
      %c0_20 = arith.constant 0 : index
      %27 = vector.load %arg5[%c0_19, %c0_20] : memref<1x32xf32, #tpu.memory_space<vmem>>, vector<1x32xf32>
      %28 = vector.broadcast %27 : vector<1x32xf32> to vector<4x32xf32>
      %29 = arith.addf %26, %28 : vector<4x32xf32>
      %30 = arith.truncf %29 : vector<4x32xf32> to vector<4x32xbf16>
      %c0_21 = arith.constant 0 : index
      %c0_22 = arith.constant 0 : index
      %c0_23 = arith.constant 0 : index
      %c0_24 = arith.constant 0 : index
      %31 = vector.load %arg6[%c0_21, %c0_22, %c0_23, %c0_24] : memref<1x1x4x32xbf16, #tpu.memory_space<vmem>>, vector<1x1x4x32xbf16>
      %32 = vector.shape_cast %31 : vector<1x1x4x32xbf16> to vector<4x32xbf16>
      %33 = vector.shape_cast %30 : vector<4x32xbf16> to vector<1x1x4x32xbf16>
      tpu.vector_store %arg6[%c0_21, %c0_22, %c0_23, %c0_24], %33 {strides = array<i32>} : memref<1x1x4x32xbf16, #tpu.memory_space<vmem>>, vector<1x1x4x32xbf16>,
    } else {
    }
    return
  }
  func.func @transform_0(%arg0: i32, %arg1: i32, %arg2: i32) -> (i32, i32, i32, i32) {
    %0 = arith.addi %arg1, %arg2 : i32
    %c0_i32 = arith.constant 0 : i32
    %c0_i32_0 = arith.constant 0 : i32
    %c0_i32_1 = arith.constant 0 : i32
    return %arg0, %0, %c0_i32, %c0_i32_0 : i32, i32, i32, i32
  }
  func.func @transform_1(%arg0: i32, %arg1: i32, %arg2: i32) -> (i32, i32, i32) {
    %c0_i32 = arith.constant 0 : i32
    %c0_i32_0 = arith.constant 0 : i32
    %c0_i32_1 = arith.constant 0 : i32
    %c0_i32_2 = arith.constant 0 : i32
    return %c0_i32, %c0_i32_0, %c0_i32_1 : i32, i32, i32
  }
  func.func @transform_2(%arg0: i32, %arg1: i32, %arg2: i32) -> (i32, i32) {
    %c0_i32 = arith.constant 0 : i32
    %c0_i32_0 = arith.constant 0 : i32
    %c0_i32_1 = arith.constant 0 : i32
    return %c0_i32, %c0_i32_0 : i32, i32
  }
  func.func @transform_3(%arg0: i32, %arg1: i32, %arg2: i32) -> (i32, i32, i32, i32) {
    %c0_i32 = arith.constant 0 : i32
    %c0_i32_0 = arith.constant 0 : i32
    %c0_i32_1 = arith.constant 0 : i32
    return %arg0, %arg1, %c0_i32, %c0_i32_0 : i32, i32, i32, i32
  }
}

module attributes {stable_mosaic.version = 11 : i64} {
  func.func @bn_stats_kernel(%arg0: i32, %arg1: memref<32x32xbf16, #tpu.memory_space<vmem>>, %arg2: memref<1x32xf32, #tpu.memory_space<vmem>>, %arg3: memref<1x32xf32, #tpu.memory_space<vmem>>) attributes {dimension_semantics = [#tpu.dimension_semantics<arbitrary>], iteration_bounds = array<i64: 1>, scalar_prefetch = 0 : i64, scratch_operands = 0 : i64, tpu.core_type = #tpu.core_type<tc>, window_params = [{transform_indices = @transform_0, window_bounds = array<i64: 32, 32>}, {pipeline_mode = #tpu.pipeline_mode<synchronous>, transform_indices = @transform_1, window_bounds = array<i64: 1, 32>}, {pipeline_mode = #tpu.pipeline_mode<synchronous>, transform_indices = @transform_2, window_bounds = array<i64: 1, 32>}]} {
    %c0_i32 = arith.constant 0 : i32
    %0 = arith.cmpi eq, %arg0, %c0_i32 : i32
    %1 = arith.extui %0 : i1 to i32
    %c0_i32_0 = arith.constant 0 : i32
    %2 = arith.cmpi ne, %1, %c0_i32_0 : i32
    scf.if %2 {
      %cst_11 = arith.constant 0.000000e+00 : f32
      %16 = vector.broadcast %cst_11 : f32 to vector<1x32xf32>
      %c0_12 = arith.constant 0 : index
      %c0_13 = arith.constant 0 : index
      %17 = vector.load %arg2[%c0_12, %c0_13] : memref<1x32xf32, #tpu.memory_space<vmem>>, vector<1x32xf32>
      tpu.vector_store %arg2[%c0_12, %c0_13], %16 {strides = array<i32>} : memref<1x32xf32, #tpu.memory_space<vmem>>, vector<1x32xf32>,
      %cst_14 = arith.constant 0.000000e+00 : f32
      %18 = vector.broadcast %cst_14 : f32 to vector<1x32xf32>
      %c0_15 = arith.constant 0 : index
      %c0_16 = arith.constant 0 : index
      %19 = vector.load %arg3[%c0_15, %c0_16] : memref<1x32xf32, #tpu.memory_space<vmem>>, vector<1x32xf32>
      tpu.vector_store %arg3[%c0_15, %c0_16], %18 {strides = array<i32>} : memref<1x32xf32, #tpu.memory_space<vmem>>, vector<1x32xf32>,
    } else {
    }
    %c0 = arith.constant 0 : index
    %c0_1 = arith.constant 0 : index
    %3 = vector.load %arg1[%c0, %c0_1] : memref<32x32xbf16, #tpu.memory_space<vmem>>, vector<32x32xbf16>
    %4 = arith.extf %3 : vector<32x32xbf16> to vector<32x32xf32>
    %c0_2 = arith.constant 0 : index
    %c0_3 = arith.constant 0 : index
    %5 = vector.load %arg2[%c0_2, %c0_3] : memref<1x32xf32, #tpu.memory_space<vmem>>, vector<1x32xf32>
    %cst = arith.constant dense<0.000000e+00> : vector<32xf32>
    %6 = vector.multi_reduction <add>, %4, %cst [0] : vector<32x32xf32> to vector<32xf32>
    %7 = vector.shape_cast %6 : vector<32xf32> to vector<1x32xf32>
    %8 = arith.addf %5, %7 : vector<1x32xf32>
    %c0_4 = arith.constant 0 : index
    %c0_5 = arith.constant 0 : index
    %9 = vector.load %arg2[%c0_4, %c0_5] : memref<1x32xf32, #tpu.memory_space<vmem>>, vector<1x32xf32>
    tpu.vector_store %arg2[%c0_4, %c0_5], %8 {strides = array<i32>} : memref<1x32xf32, #tpu.memory_space<vmem>>, vector<1x32xf32>,
    %c0_6 = arith.constant 0 : index
    %c0_7 = arith.constant 0 : index
    %10 = vector.load %arg3[%c0_6, %c0_7] : memref<1x32xf32, #tpu.memory_space<vmem>>, vector<1x32xf32>
    %11 = arith.mulf %4, %4 : vector<32x32xf32>
    %cst_8 = arith.constant dense<0.000000e+00> : vector<32xf32>
    %12 = vector.multi_reduction <add>, %11, %cst_8 [0] : vector<32x32xf32> to vector<32xf32>
    %13 = vector.shape_cast %12 : vector<32xf32> to vector<1x32xf32>
    %14 = arith.addf %10, %13 : vector<1x32xf32>
    %c0_9 = arith.constant 0 : index
    %c0_10 = arith.constant 0 : index
    %15 = vector.load %arg3[%c0_9, %c0_10] : memref<1x32xf32, #tpu.memory_space<vmem>>, vector<1x32xf32>
    tpu.vector_store %arg3[%c0_9, %c0_10], %14 {strides = array<i32>} : memref<1x32xf32, #tpu.memory_space<vmem>>, vector<1x32xf32>,
    return
  }
  func.func @transform_0(%arg0: i32) -> (i32, i32) {
    %c0_i32 = arith.constant 0 : i32
    %c0_i32_0 = arith.constant 0 : i32
    return %arg0, %c0_i32 : i32, i32
  }
  func.func @transform_1(%arg0: i32) -> (i32, i32) {
    %c0_i32 = arith.constant 0 : i32
    %c0_i32_0 = arith.constant 0 : i32
    %c0_i32_1 = arith.constant 0 : i32
    return %c0_i32, %c0_i32_0 : i32, i32
  }
  func.func @transform_2(%arg0: i32) -> (i32, i32) {
    %c0_i32 = arith.constant 0 : i32
    %c0_i32_0 = arith.constant 0 : i32
    %c0_i32_1 = arith.constant 0 : i32
    return %c0_i32, %c0_i32_0 : i32, i32
  }
}

module attributes {stable_mosaic.version = 11 : i64} {
  func.func @bn_apply_kernel(%arg0: i32, %arg1: memref<32x32xbf16, #tpu.memory_space<vmem>>, %arg2: memref<1x32xf32, #tpu.memory_space<vmem>>, %arg3: memref<1x32xf32, #tpu.memory_space<vmem>>, %arg4: memref<1x32xf32, #tpu.memory_space<vmem>>, %arg5: memref<1x32xf32, #tpu.memory_space<vmem>>, %arg6: memref<32x32xbf16, #tpu.memory_space<vmem>>) attributes {dimension_semantics = [#tpu.dimension_semantics<parallel>], iteration_bounds = array<i64: 1>, scalar_prefetch = 0 : i64, scratch_operands = 0 : i64, tpu.core_type = #tpu.core_type<tc>, window_params = [{transform_indices = @transform_0, window_bounds = array<i64: 32, 32>}, {pipeline_mode = #tpu.pipeline_mode<synchronous>, transform_indices = @transform_1, window_bounds = array<i64: 1, 32>}, {pipeline_mode = #tpu.pipeline_mode<synchronous>, transform_indices = @transform_2, window_bounds = array<i64: 1, 32>}, {pipeline_mode = #tpu.pipeline_mode<synchronous>, transform_indices = @transform_3, window_bounds = array<i64: 1, 32>}, {pipeline_mode = #tpu.pipeline_mode<synchronous>, transform_indices = @transform_4, window_bounds = array<i64: 1, 32>}, {transform_indices = @transform_5, window_bounds = array<i64: 32, 32>}]} {
    %c0 = arith.constant 0 : index
    %c0_0 = arith.constant 0 : index
    %0 = vector.load %arg2[%c0, %c0_0] : memref<1x32xf32, #tpu.memory_space<vmem>>, vector<1x32xf32>
    %cst = arith.constant 3.125000e-02 : f32
    %1 = vector.broadcast %cst : f32 to vector<1x32xf32>
    %2 = arith.mulf %0, %1 : vector<1x32xf32>
    %c0_1 = arith.constant 0 : index
    %c0_2 = arith.constant 0 : index
    %3 = vector.load %arg3[%c0_1, %c0_2] : memref<1x32xf32, #tpu.memory_space<vmem>>, vector<1x32xf32>
    %cst_3 = arith.constant 3.125000e-02 : f32
    %4 = vector.broadcast %cst_3 : f32 to vector<1x32xf32>
    %5 = arith.mulf %3, %4 : vector<1x32xf32>
    %6 = arith.mulf %2, %2 : vector<1x32xf32>
    %7 = arith.subf %5, %6 : vector<1x32xf32>
    %cst_4 = arith.constant 0.000000e+00 : f32
    %8 = vector.broadcast %cst_4 : f32 to vector<1x32xf32>
    %9 = arith.maximumf %7, %8 : vector<1x32xf32>
    %c0_5 = arith.constant 0 : index
    %c0_6 = arith.constant 0 : index
    %10 = vector.load %arg4[%c0_5, %c0_6] : memref<1x32xf32, #tpu.memory_space<vmem>>, vector<1x32xf32>
    %cst_7 = arith.constant 9.99999974E-6 : f32
    %11 = vector.broadcast %cst_7 : f32 to vector<1x32xf32>
    %12 = arith.addf %9, %11 : vector<1x32xf32>
    %13 = math.rsqrt %12 : vector<1x32xf32>
    %14 = arith.mulf %10, %13 : vector<1x32xf32>
    %c0_8 = arith.constant 0 : index
    %c0_9 = arith.constant 0 : index
    %15 = vector.load %arg5[%c0_8, %c0_9] : memref<1x32xf32, #tpu.memory_space<vmem>>, vector<1x32xf32>
    %16 = arith.mulf %2, %14 : vector<1x32xf32>
    %17 = arith.subf %15, %16 : vector<1x32xf32>
    %c0_10 = arith.constant 0 : index
    %c0_11 = arith.constant 0 : index
    %18 = vector.load %arg1[%c0_10, %c0_11] : memref<32x32xbf16, #tpu.memory_space<vmem>>, vector<32x32xbf16>
    %19 = arith.extf %18 : vector<32x32xbf16> to vector<32x32xf32>
    %20 = vector.broadcast %14 : vector<1x32xf32> to vector<32x32xf32>
    %21 = arith.mulf %19, %20 : vector<32x32xf32>
    %22 = vector.broadcast %17 : vector<1x32xf32> to vector<32x32xf32>
    %23 = arith.addf %21, %22 : vector<32x32xf32>
    %cst_12 = arith.constant 0.000000e+00 : f32
    %24 = vector.broadcast %cst_12 : f32 to vector<32x32xf32>
    %25 = arith.maximumf %23, %24 : vector<32x32xf32>
    %26 = arith.truncf %25 : vector<32x32xf32> to vector<32x32xbf16>
    %c0_13 = arith.constant 0 : index
    %c0_14 = arith.constant 0 : index
    %27 = vector.load %arg6[%c0_13, %c0_14] : memref<32x32xbf16, #tpu.memory_space<vmem>>, vector<32x32xbf16>
    tpu.vector_store %arg6[%c0_13, %c0_14], %26 {strides = array<i32>} : memref<32x32xbf16, #tpu.memory_space<vmem>>, vector<32x32xbf16>,
    return
  }
  func.func @transform_0(%arg0: i32) -> (i32, i32) {
    %c0_i32 = arith.constant 0 : i32
    %c0_i32_0 = arith.constant 0 : i32
    return %arg0, %c0_i32 : i32, i32
  }
  func.func @transform_1(%arg0: i32) -> (i32, i32) {
    %c0_i32 = arith.constant 0 : i32
    %c0_i32_0 = arith.constant 0 : i32
    %c0_i32_1 = arith.constant 0 : i32
    return %c0_i32, %c0_i32_0 : i32, i32
  }
  func.func @transform_2(%arg0: i32) -> (i32, i32) {
    %c0_i32 = arith.constant 0 : i32
    %c0_i32_0 = arith.constant 0 : i32
    %c0_i32_1 = arith.constant 0 : i32
    return %c0_i32, %c0_i32_0 : i32, i32
  }
  func.func @transform_3(%arg0: i32) -> (i32, i32) {
    %c0_i32 = arith.constant 0 : i32
    %c0_i32_0 = arith.constant 0 : i32
    %c0_i32_1 = arith.constant 0 : i32
    return %c0_i32, %c0_i32_0 : i32, i32
  }
  func.func @transform_4(%arg0: i32) -> (i32, i32) {
    %c0_i32 = arith.constant 0 : i32
    %c0_i32_0 = arith.constant 0 : i32
    %c0_i32_1 = arith.constant 0 : i32
    return %c0_i32, %c0_i32_0 : i32, i32
  }
  func.func @transform_5(%arg0: i32) -> (i32, i32) {
    %c0_i32 = arith.constant 0 : i32
    %c0_i32_0 = arith.constant 0 : i32
    return %arg0, %c0_i32 : i32, i32
  }
}

module attributes {stable_mosaic.version = 11 : i64} {
  func.func @conv_row_kernel(%arg0: i32, %arg1: i32, %arg2: i32, %arg3: memref<1x1x6x32xbf16, #tpu.memory_space<vmem>>, %arg4: memref<9x32x32xbf16, #tpu.memory_space<vmem>>, %arg5: memref<1x32xf32, #tpu.memory_space<vmem>>, %arg6: memref<1x1x4x32xbf16, #tpu.memory_space<vmem>>, %arg7: memref<4x32xf32, #tpu.memory_space<vmem>>) attributes {dimension_semantics = [#tpu.dimension_semantics<parallel>, #tpu.dimension_semantics<parallel>, #tpu.dimension_semantics<arbitrary>], iteration_bounds = array<i64: 2, 4, 3>, scalar_prefetch = 0 : i64, scratch_operands = 1 : i64, tpu.core_type = #tpu.core_type<tc>, window_params = [{transform_indices = @transform_0, window_bounds = array<i64: 1, 1, 6, 32>}, {pipeline_mode = #tpu.pipeline_mode<synchronous>, transform_indices = @transform_1, window_bounds = array<i64: 9, 32, 32>}, {pipeline_mode = #tpu.pipeline_mode<synchronous>, transform_indices = @transform_2, window_bounds = array<i64: 1, 32>}, {transform_indices = @transform_3, window_bounds = array<i64: 1, 1, 4, 32>}]} {
    %c0_i32 = arith.constant 0 : i32
    %0 = arith.cmpi eq, %arg2, %c0_i32 : i32
    %1 = arith.extui %0 : i1 to i32
    %c0_i32_0 = arith.constant 0 : i32
    %2 = arith.cmpi ne, %1, %c0_i32_0 : i32
    scf.if %2 {
      %cst_21 = arith.constant 0.000000e+00 : f32
      %34 = vector.broadcast %cst_21 : f32 to vector<4x32xf32>
      %c0_22 = arith.constant 0 : index
      %c0_23 = arith.constant 0 : index
      %35 = vector.load %arg7[%c0_22, %c0_23] : memref<4x32xf32, #tpu.memory_space<vmem>>, vector<4x32xf32>
      tpu.vector_store %arg7[%c0_22, %c0_23], %34 {strides = array<i32>} : memref<4x32xf32, #tpu.memory_space<vmem>>, vector<4x32xf32>,
    } else {
    }
    %c0 = arith.constant 0 : index
    %c0_1 = arith.constant 0 : index
    %c0_2 = arith.constant 0 : index
    %c0_3 = arith.constant 0 : index
    %3 = vector.load %arg3[%c0, %c0_1, %c0_2, %c0_3] : memref<1x1x6x32xbf16, #tpu.memory_space<vmem>>, vector<1x1x6x32xbf16>
    %4 = vector.shape_cast %3 : vector<1x1x6x32xbf16> to vector<6x32xbf16>
    %5 = vector.extract_strided_slice %4 {offsets = [0, 0], sizes = [4, 32], strides = [1, 1]} : vector<6x32xbf16> to vector<4x32xbf16>
    %c3_i32 = arith.constant 3 : i32
    %6 = arith.muli %arg2, %c3_i32 : i32
    %c0_i32_4 = arith.constant 0 : i32
    %7 = arith.addi %6, %c0_i32_4 : i32
    %8 = arith.index_cast %7 : i32 to index
    %c0_5 = arith.constant 0 : index
    %c0_6 = arith.constant 0 : index
    %9 = vector.load %arg4[%8, %c0_5, %c0_6] : memref<9x32x32xbf16, #tpu.memory_space<vmem>>, vector<1x32x32xbf16>
    %10 = vector.shape_cast %9 : vector<1x32x32xbf16> to vector<32x32xbf16>
    %cst = arith.constant dense<0.000000e+00> : vector<4x32xf32>
    %11 = tpu.matmul %5, %10, %cst {dimension_numbers = #tpu.dot_dimension_numbers<[1], [0], [0], [1], [0, 0, 1, 1], [], []>} : vector<4x32xbf16>, vector<32x32xbf16>, vector<4x32xf32> -> vector<4x32xf32>
    %12 = vector.extract_strided_slice %4 {offsets = [1, 0], sizes = [4, 32], strides = [1, 1]} : vector<6x32xbf16> to vector<4x32xbf16>
    %c3_i32_7 = arith.constant 3 : i32
    %13 = arith.muli %arg2, %c3_i32_7 : i32
    %c1_i32 = arith.constant 1 : i32
    %14 = arith.addi %13, %c1_i32 : i32
    %15 = arith.index_cast %14 : i32 to index
    %c0_8 = arith.constant 0 : index
    %c0_9 = arith.constant 0 : index
    %16 = vector.load %arg4[%15, %c0_8, %c0_9] : memref<9x32x32xbf16, #tpu.memory_space<vmem>>, vector<1x32x32xbf16>
    %17 = vector.shape_cast %16 : vector<1x32x32xbf16> to vector<32x32xbf16>
    %cst_10 = arith.constant dense<0.000000e+00> : vector<4x32xf32>
    %18 = tpu.matmul %12, %17, %cst_10 {dimension_numbers = #tpu.dot_dimension_numbers<[1], [0], [0], [1], [0, 0, 1, 1], [], []>} : vector<4x32xbf16>, vector<32x32xbf16>, vector<4x32xf32> -> vector<4x32xf32>
    %19 = arith.addf %11, %18 : vector<4x32xf32>
    %20 = vector.extract_strided_slice %4 {offsets = [2, 0], sizes = [4, 32], strides = [1, 1]} : vector<6x32xbf16> to vector<4x32xbf16>
    %c3_i32_11 = arith.constant 3 : i32
    %21 = arith.muli %arg2, %c3_i32_11 : i32
    %c2_i32 = arith.constant 2 : i32
    %22 = arith.addi %21, %c2_i32 : i32
    %23 = arith.index_cast %22 : i32 to index
    %c0_12 = arith.constant 0 : index
    %c0_13 = arith.constant 0 : index
    %24 = vector.load %arg4[%23, %c0_12, %c0_13] : memref<9x32x32xbf16, #tpu.memory_space<vmem>>, vector<1x32x32xbf16>
    %25 = vector.shape_cast %24 : vector<1x32x32xbf16> to vector<32x32xbf16>
    %cst_14 = arith.constant dense<0.000000e+00> : vector<4x32xf32>
    %26 = tpu.matmul %20, %25, %cst_14 {dimension_numbers = #tpu.dot_dimension_numbers<[1], [0], [0], [1], [0, 0, 1, 1], [], []>} : vector<4x32xbf16>, vector<32x32xbf16>, vector<4x32xf32> -> vector<4x32xf32>
    %27 = arith.addf %19, %26 : vector<4x32xf32>
    %c0_15 = arith.constant 0 : index
    %c0_16 = arith.constant 0 : index
    %28 = vector.load %arg7[%c0_15, %c0_16] : memref<4x32xf32, #tpu.memory_space<vmem>>, vector<4x32xf32>
    %29 = arith.addf %28, %27 : vector<4x32xf32>
    %c0_17 = arith.constant 0 : index
    %c0_18 = arith.constant 0 : index
    %30 = vector.load %arg7[%c0_17, %c0_18] : memref<4x32xf32, #tpu.memory_space<vmem>>, vector<4x32xf32>
    tpu.vector_store %arg7[%c0_17, %c0_18], %29 {strides = array<i32>} : memref<4x32xf32, #tpu.memory_space<vmem>>, vector<4x32xf32>,
    %c2_i32_19 = arith.constant 2 : i32
    %31 = arith.cmpi eq, %arg2, %c2_i32_19 : i32
    %32 = arith.extui %31 : i1 to i32
    %c0_i32_20 = arith.constant 0 : i32
    %33 = arith.cmpi ne, %32, %c0_i32_20 : i32
    scf.if %33 {
      %c0_21 = arith.constant 0 : index
      %c0_22 = arith.constant 0 : index
      %34 = vector.load %arg7[%c0_21, %c0_22] : memref<4x32xf32, #tpu.memory_space<vmem>>, vector<4x32xf32>
      %c0_23 = arith.constant 0 : index
      %c0_24 = arith.constant 0 : index
      %35 = vector.load %arg5[%c0_23, %c0_24] : memref<1x32xf32, #tpu.memory_space<vmem>>, vector<1x32xf32>
      %36 = vector.broadcast %35 : vector<1x32xf32> to vector<4x32xf32>
      %37 = arith.addf %34, %36 : vector<4x32xf32>
      %38 = arith.truncf %37 : vector<4x32xf32> to vector<4x32xbf16>
      %c0_25 = arith.constant 0 : index
      %c0_26 = arith.constant 0 : index
      %c0_27 = arith.constant 0 : index
      %c0_28 = arith.constant 0 : index
      %39 = vector.load %arg6[%c0_25, %c0_26, %c0_27, %c0_28] : memref<1x1x4x32xbf16, #tpu.memory_space<vmem>>, vector<1x1x4x32xbf16>
      %40 = vector.shape_cast %39 : vector<1x1x4x32xbf16> to vector<4x32xbf16>
      %41 = vector.shape_cast %38 : vector<4x32xbf16> to vector<1x1x4x32xbf16>
      tpu.vector_store %arg6[%c0_25, %c0_26, %c0_27, %c0_28], %41 {strides = array<i32>} : memref<1x1x4x32xbf16, #tpu.memory_space<vmem>>, vector<1x1x4x32xbf16>,
    } else {
    }
    return
  }
  func.func @transform_0(%arg0: i32, %arg1: i32, %arg2: i32) -> (i32, i32, i32, i32) {
    %0 = arith.addi %arg1, %arg2 : i32
    %c0_i32 = arith.constant 0 : i32
    %c0_i32_0 = arith.constant 0 : i32
    %c0_i32_1 = arith.constant 0 : i32
    return %arg0, %0, %c0_i32, %c0_i32_0 : i32, i32, i32, i32
  }
  func.func @transform_1(%arg0: i32, %arg1: i32, %arg2: i32) -> (i32, i32, i32) {
    %c0_i32 = arith.constant 0 : i32
    %c0_i32_0 = arith.constant 0 : i32
    %c0_i32_1 = arith.constant 0 : i32
    %c0_i32_2 = arith.constant 0 : i32
    return %c0_i32, %c0_i32_0, %c0_i32_1 : i32, i32, i32
  }
  func.func @transform_2(%arg0: i32, %arg1: i32, %arg2: i32) -> (i32, i32) {
    %c0_i32 = arith.constant 0 : i32
    %c0_i32_0 = arith.constant 0 : i32
    %c0_i32_1 = arith.constant 0 : i32
    return %c0_i32, %c0_i32_0 : i32, i32
  }
  func.func @transform_3(%arg0: i32, %arg1: i32, %arg2: i32) -> (i32, i32, i32, i32) {
    %c0_i32 = arith.constant 0 : i32
    %c0_i32_0 = arith.constant 0 : i32
    %c0_i32_1 = arith.constant 0 : i32
    return %arg0, %arg1, %c0_i32, %c0_i32_0 : i32, i32, i32, i32
  }
}

module attributes {stable_mosaic.version = 11 : i64} {
  func.func @bn_apply_kernel(%arg0: i32, %arg1: memref<32x32xbf16, #tpu.memory_space<vmem>>, %arg2: memref<1x32xf32, #tpu.memory_space<vmem>>, %arg3: memref<1x32xf32, #tpu.memory_space<vmem>>, %arg4: memref<1x32xf32, #tpu.memory_space<vmem>>, %arg5: memref<1x32xf32, #tpu.memory_space<vmem>>, %arg6: memref<32x32xbf16, #tpu.memory_space<vmem>>, %arg7: memref<32x32xbf16, #tpu.memory_space<vmem>>) attributes {dimension_semantics = [#tpu.dimension_semantics<parallel>], iteration_bounds = array<i64: 1>, scalar_prefetch = 0 : i64, scratch_operands = 0 : i64, tpu.core_type = #tpu.core_type<tc>, window_params = [{transform_indices = @transform_0, window_bounds = array<i64: 32, 32>}, {pipeline_mode = #tpu.pipeline_mode<synchronous>, transform_indices = @transform_1, window_bounds = array<i64: 1, 32>}, {pipeline_mode = #tpu.pipeline_mode<synchronous>, transform_indices = @transform_2, window_bounds = array<i64: 1, 32>}, {pipeline_mode = #tpu.pipeline_mode<synchronous>, transform_indices = @transform_3, window_bounds = array<i64: 1, 32>}, {pipeline_mode = #tpu.pipeline_mode<synchronous>, transform_indices = @transform_4, window_bounds = array<i64: 1, 32>}, {transform_indices = @transform_5, window_bounds = array<i64: 32, 32>}, {transform_indices = @transform_6, window_bounds = array<i64: 32, 32>}]} {
    %c0 = arith.constant 0 : index
    %c0_0 = arith.constant 0 : index
    %0 = vector.load %arg2[%c0, %c0_0] : memref<1x32xf32, #tpu.memory_space<vmem>>, vector<1x32xf32>
    %cst = arith.constant 3.125000e-02 : f32
    %1 = vector.broadcast %cst : f32 to vector<1x32xf32>
    %2 = arith.mulf %0, %1 : vector<1x32xf32>
    %c0_1 = arith.constant 0 : index
    %c0_2 = arith.constant 0 : index
    %3 = vector.load %arg3[%c0_1, %c0_2] : memref<1x32xf32, #tpu.memory_space<vmem>>, vector<1x32xf32>
    %cst_3 = arith.constant 3.125000e-02 : f32
    %4 = vector.broadcast %cst_3 : f32 to vector<1x32xf32>
    %5 = arith.mulf %3, %4 : vector<1x32xf32>
    %6 = arith.mulf %2, %2 : vector<1x32xf32>
    %7 = arith.subf %5, %6 : vector<1x32xf32>
    %cst_4 = arith.constant 0.000000e+00 : f32
    %8 = vector.broadcast %cst_4 : f32 to vector<1x32xf32>
    %9 = arith.maximumf %7, %8 : vector<1x32xf32>
    %c0_5 = arith.constant 0 : index
    %c0_6 = arith.constant 0 : index
    %10 = vector.load %arg4[%c0_5, %c0_6] : memref<1x32xf32, #tpu.memory_space<vmem>>, vector<1x32xf32>
    %cst_7 = arith.constant 9.99999974E-6 : f32
    %11 = vector.broadcast %cst_7 : f32 to vector<1x32xf32>
    %12 = arith.addf %9, %11 : vector<1x32xf32>
    %13 = math.rsqrt %12 : vector<1x32xf32>
    %14 = arith.mulf %10, %13 : vector<1x32xf32>
    %c0_8 = arith.constant 0 : index
    %c0_9 = arith.constant 0 : index
    %15 = vector.load %arg5[%c0_8, %c0_9] : memref<1x32xf32, #tpu.memory_space<vmem>>, vector<1x32xf32>
    %16 = arith.mulf %2, %14 : vector<1x32xf32>
    %17 = arith.subf %15, %16 : vector<1x32xf32>
    %c0_10 = arith.constant 0 : index
    %c0_11 = arith.constant 0 : index
    %18 = vector.load %arg1[%c0_10, %c0_11] : memref<32x32xbf16, #tpu.memory_space<vmem>>, vector<32x32xbf16>
    %19 = arith.extf %18 : vector<32x32xbf16> to vector<32x32xf32>
    %20 = vector.broadcast %14 : vector<1x32xf32> to vector<32x32xf32>
    %21 = arith.mulf %19, %20 : vector<32x32xf32>
    %22 = vector.broadcast %17 : vector<1x32xf32> to vector<32x32xf32>
    %23 = arith.addf %21, %22 : vector<32x32xf32>
    %c0_12 = arith.constant 0 : index
    %c0_13 = arith.constant 0 : index
    %24 = vector.load %arg6[%c0_12, %c0_13] : memref<32x32xbf16, #tpu.memory_space<vmem>>, vector<32x32xbf16>
    %25 = arith.extf %24 : vector<32x32xbf16> to vector<32x32xf32>
    %26 = arith.addf %23, %25 : vector<32x32xf32>
    %27 = arith.truncf %26 : vector<32x32xf32> to vector<32x32xbf16>
    %c0_14 = arith.constant 0 : index
    %c0_15 = arith.constant 0 : index
    %28 = vector.load %arg7[%c0_14, %c0_15] : memref<32x32xbf16, #tpu.memory_space<vmem>>, vector<32x32xbf16>
    tpu.vector_store %arg7[%c0_14, %c0_15], %27 {strides = array<i32>} : memref<32x32xbf16, #tpu.memory_space<vmem>>, vector<32x32xbf16>,
    return
  }
  func.func @transform_0(%arg0: i32) -> (i32, i32) {
    %c0_i32 = arith.constant 0 : i32
    %c0_i32_0 = arith.constant 0 : i32
    return %arg0, %c0_i32 : i32, i32
  }
  func.func @transform_1(%arg0: i32) -> (i32, i32) {
    %c0_i32 = arith.constant 0 : i32
    %c0_i32_0 = arith.constant 0 : i32
    %c0_i32_1 = arith.constant 0 : i32
    return %c0_i32, %c0_i32_0 : i32, i32
  }
  func.func @transform_2(%arg0: i32) -> (i32, i32) {
    %c0_i32 = arith.constant 0 : i32
    %c0_i32_0 = arith.constant 0 : i32
    %c0_i32_1 = arith.constant 0 : i32
    return %c0_i32, %c0_i32_0 : i32, i32
  }
  func.func @transform_3(%arg0: i32) -> (i32, i32) {
    %c0_i32 = arith.constant 0 : i32
    %c0_i32_0 = arith.constant 0 : i32
    %c0_i32_1 = arith.constant 0 : i32
    return %c0_i32, %c0_i32_0 : i32, i32
  }
  func.func @transform_4(%arg0: i32) -> (i32, i32) {
    %c0_i32 = arith.constant 0 : i32
    %c0_i32_0 = arith.constant 0 : i32
    %c0_i32_1 = arith.constant 0 : i32
    return %c0_i32, %c0_i32_0 : i32, i32
  }
  func.func @transform_5(%arg0: i32) -> (i32, i32) {
    %c0_i32 = arith.constant 0 : i32
    %c0_i32_0 = arith.constant 0 : i32
    return %arg0, %c0_i32 : i32, i32
  }
  func.func @transform_6(%arg0: i32) -> (i32, i32) {
    %c0_i32 = arith.constant 0 : i32
    %c0_i32_0 = arith.constant 0 : i32
    return %arg0, %c0_i32 : i32, i32
  }
}

module attributes {stable_mosaic.version = 11 : i64} {
  func.func @conv_row_kernel(%arg0: i32, %arg1: i32, %arg2: i32, %arg3: memref<1x1x5x32xbf16, #tpu.memory_space<vmem>>, %arg4: memref<4x32x64xbf16, #tpu.memory_space<vmem>>, %arg5: memref<1x64xf32, #tpu.memory_space<vmem>>, %arg6: memref<1x1x4x64xbf16, #tpu.memory_space<vmem>>, %arg7: memref<4x64xf32, #tpu.memory_space<vmem>>) attributes {dimension_semantics = [#tpu.dimension_semantics<parallel>, #tpu.dimension_semantics<parallel>, #tpu.dimension_semantics<arbitrary>], iteration_bounds = array<i64: 2, 4, 2>, scalar_prefetch = 0 : i64, scratch_operands = 1 : i64, tpu.core_type = #tpu.core_type<tc>, window_params = [{transform_indices = @transform_0, window_bounds = array<i64: 1, 1, 5, 32>}, {pipeline_mode = #tpu.pipeline_mode<synchronous>, transform_indices = @transform_1, window_bounds = array<i64: 4, 32, 64>}, {pipeline_mode = #tpu.pipeline_mode<synchronous>, transform_indices = @transform_2, window_bounds = array<i64: 1, 64>}, {transform_indices = @transform_3, window_bounds = array<i64: 1, 1, 4, 64>}]} {
    %c0_i32 = arith.constant 0 : i32
    %0 = arith.cmpi eq, %arg2, %c0_i32 : i32
    %1 = arith.extui %0 : i1 to i32
    %c0_i32_0 = arith.constant 0 : i32
    %2 = arith.cmpi ne, %1, %c0_i32_0 : i32
    scf.if %2 {
      %cst_17 = arith.constant 0.000000e+00 : f32
      %26 = vector.broadcast %cst_17 : f32 to vector<4x64xf32>
      %c0_18 = arith.constant 0 : index
      %c0_19 = arith.constant 0 : index
      %27 = vector.load %arg7[%c0_18, %c0_19] : memref<4x64xf32, #tpu.memory_space<vmem>>, vector<4x64xf32>
      tpu.vector_store %arg7[%c0_18, %c0_19], %26 {strides = array<i32>} : memref<4x64xf32, #tpu.memory_space<vmem>>, vector<4x64xf32>,
    } else {
    }
    %c0 = arith.constant 0 : index
    %c0_1 = arith.constant 0 : index
    %c0_2 = arith.constant 0 : index
    %c0_3 = arith.constant 0 : index
    %3 = vector.load %arg3[%c0, %c0_1, %c0_2, %c0_3] : memref<1x1x5x32xbf16, #tpu.memory_space<vmem>>, vector<1x1x5x32xbf16>
    %4 = vector.shape_cast %3 : vector<1x1x5x32xbf16> to vector<5x32xbf16>
    %5 = vector.extract_strided_slice %4 {offsets = [0, 0], sizes = [4, 32], strides = [1, 1]} : vector<5x32xbf16> to vector<4x32xbf16>
    %c2_i32 = arith.constant 2 : i32
    %6 = arith.muli %arg2, %c2_i32 : i32
    %c0_i32_4 = arith.constant 0 : i32
    %7 = arith.addi %6, %c0_i32_4 : i32
    %8 = arith.index_cast %7 : i32 to index
    %c0_5 = arith.constant 0 : index
    %c0_6 = arith.constant 0 : index
    %9 = vector.load %arg4[%8, %c0_5, %c0_6] : memref<4x32x64xbf16, #tpu.memory_space<vmem>>, vector<1x32x64xbf16>
    %10 = vector.shape_cast %9 : vector<1x32x64xbf16> to vector<32x64xbf16>
    %cst = arith.constant dense<0.000000e+00> : vector<4x64xf32>
    %11 = tpu.matmul %5, %10, %cst {dimension_numbers = #tpu.dot_dimension_numbers<[1], [0], [0], [1], [0, 0, 1, 1], [], []>} : vector<4x32xbf16>, vector<32x64xbf16>, vector<4x64xf32> -> vector<4x64xf32>
    %12 = vector.extract_strided_slice %4 {offsets = [1, 0], sizes = [4, 32], strides = [1, 1]} : vector<5x32xbf16> to vector<4x32xbf16>
    %c2_i32_7 = arith.constant 2 : i32
    %13 = arith.muli %arg2, %c2_i32_7 : i32
    %c1_i32 = arith.constant 1 : i32
    %14 = arith.addi %13, %c1_i32 : i32
    %15 = arith.index_cast %14 : i32 to index
    %c0_8 = arith.constant 0 : index
    %c0_9 = arith.constant 0 : index
    %16 = vector.load %arg4[%15, %c0_8, %c0_9] : memref<4x32x64xbf16, #tpu.memory_space<vmem>>, vector<1x32x64xbf16>
    %17 = vector.shape_cast %16 : vector<1x32x64xbf16> to vector<32x64xbf16>
    %cst_10 = arith.constant dense<0.000000e+00> : vector<4x64xf32>
    %18 = tpu.matmul %12, %17, %cst_10 {dimension_numbers = #tpu.dot_dimension_numbers<[1], [0], [0], [1], [0, 0, 1, 1], [], []>} : vector<4x32xbf16>, vector<32x64xbf16>, vector<4x64xf32> -> vector<4x64xf32>
    %19 = arith.addf %11, %18 : vector<4x64xf32>
    %c0_11 = arith.constant 0 : index
    %c0_12 = arith.constant 0 : index
    %20 = vector.load %arg7[%c0_11, %c0_12] : memref<4x64xf32, #tpu.memory_space<vmem>>, vector<4x64xf32>
    %21 = arith.addf %20, %19 : vector<4x64xf32>
    %c0_13 = arith.constant 0 : index
    %c0_14 = arith.constant 0 : index
    %22 = vector.load %arg7[%c0_13, %c0_14] : memref<4x64xf32, #tpu.memory_space<vmem>>, vector<4x64xf32>
    tpu.vector_store %arg7[%c0_13, %c0_14], %21 {strides = array<i32>} : memref<4x64xf32, #tpu.memory_space<vmem>>, vector<4x64xf32>,
    %c1_i32_15 = arith.constant 1 : i32
    %23 = arith.cmpi eq, %arg2, %c1_i32_15 : i32
    %24 = arith.extui %23 : i1 to i32
    %c0_i32_16 = arith.constant 0 : i32
    %25 = arith.cmpi ne, %24, %c0_i32_16 : i32
    scf.if %25 {
      %c0_17 = arith.constant 0 : index
      %c0_18 = arith.constant 0 : index
      %26 = vector.load %arg7[%c0_17, %c0_18] : memref<4x64xf32, #tpu.memory_space<vmem>>, vector<4x64xf32>
      %c0_19 = arith.constant 0 : index
      %c0_20 = arith.constant 0 : index
      %27 = vector.load %arg5[%c0_19, %c0_20] : memref<1x64xf32, #tpu.memory_space<vmem>>, vector<1x64xf32>
      %28 = vector.broadcast %27 : vector<1x64xf32> to vector<4x64xf32>
      %29 = arith.addf %26, %28 : vector<4x64xf32>
      %30 = arith.truncf %29 : vector<4x64xf32> to vector<4x64xbf16>
      %c0_21 = arith.constant 0 : index
      %c0_22 = arith.constant 0 : index
      %c0_23 = arith.constant 0 : index
      %c0_24 = arith.constant 0 : index
      %31 = vector.load %arg6[%c0_21, %c0_22, %c0_23, %c0_24] : memref<1x1x4x64xbf16, #tpu.memory_space<vmem>>, vector<1x1x4x64xbf16>
      %32 = vector.shape_cast %31 : vector<1x1x4x64xbf16> to vector<4x64xbf16>
      %33 = vector.shape_cast %30 : vector<4x64xbf16> to vector<1x1x4x64xbf16>
      tpu.vector_store %arg6[%c0_21, %c0_22, %c0_23, %c0_24], %33 {strides = array<i32>} : memref<1x1x4x64xbf16, #tpu.memory_space<vmem>>, vector<1x1x4x64xbf16>,
    } else {
    }
    return
  }
  func.func @transform_0(%arg0: i32, %arg1: i32, %arg2: i32) -> (i32, i32, i32, i32) {
    %0 = arith.addi %arg1, %arg2 : i32
    %c0_i32 = arith.constant 0 : i32
    %c0_i32_0 = arith.constant 0 : i32
    %c0_i32_1 = arith.constant 0 : i32
    return %arg0, %0, %c0_i32, %c0_i32_0 : i32, i32, i32, i32
  }
  func.func @transform_1(%arg0: i32, %arg1: i32, %arg2: i32) -> (i32, i32, i32) {
    %c0_i32 = arith.constant 0 : i32
    %c0_i32_0 = arith.constant 0 : i32
    %c0_i32_1 = arith.constant 0 : i32
    %c0_i32_2 = arith.constant 0 : i32
    return %c0_i32, %c0_i32_0, %c0_i32_1 : i32, i32, i32
  }
  func.func @transform_2(%arg0: i32, %arg1: i32, %arg2: i32) -> (i32, i32) {
    %c0_i32 = arith.constant 0 : i32
    %c0_i32_0 = arith.constant 0 : i32
    %c0_i32_1 = arith.constant 0 : i32
    return %c0_i32, %c0_i32_0 : i32, i32
  }
  func.func @transform_3(%arg0: i32, %arg1: i32, %arg2: i32) -> (i32, i32, i32, i32) {
    %c0_i32 = arith.constant 0 : i32
    %c0_i32_0 = arith.constant 0 : i32
    %c0_i32_1 = arith.constant 0 : i32
    return %arg0, %arg1, %c0_i32, %c0_i32_0 : i32, i32, i32, i32
  }
}

module attributes {stable_mosaic.version = 11 : i64} {
  func.func @conv_row_kernel(%arg0: i32, %arg1: i32, %arg2: i32, %arg3: memref<1x1x9x16xbf16, #tpu.memory_space<vmem>>, %arg4: memref<4x16x32xbf16, #tpu.memory_space<vmem>>, %arg5: memref<1x32xf32, #tpu.memory_space<vmem>>, %arg6: memref<1x1x8x32xbf16, #tpu.memory_space<vmem>>, %arg7: memref<8x32xf32, #tpu.memory_space<vmem>>) attributes {dimension_semantics = [#tpu.dimension_semantics<parallel>, #tpu.dimension_semantics<parallel>, #tpu.dimension_semantics<arbitrary>], iteration_bounds = array<i64: 2, 8, 2>, scalar_prefetch = 0 : i64, scratch_operands = 1 : i64, tpu.core_type = #tpu.core_type<tc>, window_params = [{transform_indices = @transform_0, window_bounds = array<i64: 1, 1, 9, 16>}, {pipeline_mode = #tpu.pipeline_mode<synchronous>, transform_indices = @transform_1, window_bounds = array<i64: 4, 16, 32>}, {pipeline_mode = #tpu.pipeline_mode<synchronous>, transform_indices = @transform_2, window_bounds = array<i64: 1, 32>}, {transform_indices = @transform_3, window_bounds = array<i64: 1, 1, 8, 32>}]} {
    %c0_i32 = arith.constant 0 : i32
    %0 = arith.cmpi eq, %arg2, %c0_i32 : i32
    %1 = arith.extui %0 : i1 to i32
    %c0_i32_0 = arith.constant 0 : i32
    %2 = arith.cmpi ne, %1, %c0_i32_0 : i32
    scf.if %2 {
      %cst_17 = arith.constant 0.000000e+00 : f32
      %26 = vector.broadcast %cst_17 : f32 to vector<8x32xf32>
      %c0_18 = arith.constant 0 : index
      %c0_19 = arith.constant 0 : index
      %27 = vector.load %arg7[%c0_18, %c0_19] : memref<8x32xf32, #tpu.memory_space<vmem>>, vector<8x32xf32>
      tpu.vector_store %arg7[%c0_18, %c0_19], %26 {strides = array<i32>} : memref<8x32xf32, #tpu.memory_space<vmem>>, vector<8x32xf32>,
    } else {
    }
    %c0 = arith.constant 0 : index
    %c0_1 = arith.constant 0 : index
    %c0_2 = arith.constant 0 : index
    %c0_3 = arith.constant 0 : index
    %3 = vector.load %arg3[%c0, %c0_1, %c0_2, %c0_3] : memref<1x1x9x16xbf16, #tpu.memory_space<vmem>>, vector<1x1x9x16xbf16>
    %4 = vector.shape_cast %3 : vector<1x1x9x16xbf16> to vector<9x16xbf16>
    %5 = vector.extract_strided_slice %4 {offsets = [0, 0], sizes = [8, 16], strides = [1, 1]} : vector<9x16xbf16> to vector<8x16xbf16>
    %c2_i32 = arith.constant 2 : i32
    %6 = arith.muli %arg2, %c2_i32 : i32
    %c0_i32_4 = arith.constant 0 : i32
    %7 = arith.addi %6, %c0_i32_4 : i32
    %8 = arith.index_cast %7 : i32 to index
    %c0_5 = arith.constant 0 : index
    %c0_6 = arith.constant 0 : index
    %9 = vector.load %arg4[%8, %c0_5, %c0_6] : memref<4x16x32xbf16, #tpu.memory_space<vmem>>, vector<1x16x32xbf16>
    %10 = vector.shape_cast %9 : vector<1x16x32xbf16> to vector<16x32xbf16>
    %cst = arith.constant dense<0.000000e+00> : vector<8x32xf32>
    %11 = tpu.matmul %5, %10, %cst {dimension_numbers = #tpu.dot_dimension_numbers<[1], [0], [0], [1], [0, 0, 1, 1], [], []>} : vector<8x16xbf16>, vector<16x32xbf16>, vector<8x32xf32> -> vector<8x32xf32>
    %12 = vector.extract_strided_slice %4 {offsets = [1, 0], sizes = [8, 16], strides = [1, 1]} : vector<9x16xbf16> to vector<8x16xbf16>
    %c2_i32_7 = arith.constant 2 : i32
    %13 = arith.muli %arg2, %c2_i32_7 : i32
    %c1_i32 = arith.constant 1 : i32
    %14 = arith.addi %13, %c1_i32 : i32
    %15 = arith.index_cast %14 : i32 to index
    %c0_8 = arith.constant 0 : index
    %c0_9 = arith.constant 0 : index
    %16 = vector.load %arg4[%15, %c0_8, %c0_9] : memref<4x16x32xbf16, #tpu.memory_space<vmem>>, vector<1x16x32xbf16>
    %17 = vector.shape_cast %16 : vector<1x16x32xbf16> to vector<16x32xbf16>
    %cst_10 = arith.constant dense<0.000000e+00> : vector<8x32xf32>
    %18 = tpu.matmul %12, %17, %cst_10 {dimension_numbers = #tpu.dot_dimension_numbers<[1], [0], [0], [1], [0, 0, 1, 1], [], []>} : vector<8x16xbf16>, vector<16x32xbf16>, vector<8x32xf32> -> vector<8x32xf32>
    %19 = arith.addf %11, %18 : vector<8x32xf32>
    %c0_11 = arith.constant 0 : index
    %c0_12 = arith.constant 0 : index
    %20 = vector.load %arg7[%c0_11, %c0_12] : memref<8x32xf32, #tpu.memory_space<vmem>>, vector<8x32xf32>
    %21 = arith.addf %20, %19 : vector<8x32xf32>
    %c0_13 = arith.constant 0 : index
    %c0_14 = arith.constant 0 : index
    %22 = vector.load %arg7[%c0_13, %c0_14] : memref<8x32xf32, #tpu.memory_space<vmem>>, vector<8x32xf32>
    tpu.vector_store %arg7[%c0_13, %c0_14], %21 {strides = array<i32>} : memref<8x32xf32, #tpu.memory_space<vmem>>, vector<8x32xf32>,
    %c1_i32_15 = arith.constant 1 : i32
    %23 = arith.cmpi eq, %arg2, %c1_i32_15 : i32
    %24 = arith.extui %23 : i1 to i32
    %c0_i32_16 = arith.constant 0 : i32
    %25 = arith.cmpi ne, %24, %c0_i32_16 : i32
    scf.if %25 {
      %c0_17 = arith.constant 0 : index
      %c0_18 = arith.constant 0 : index
      %26 = vector.load %arg7[%c0_17, %c0_18] : memref<8x32xf32, #tpu.memory_space<vmem>>, vector<8x32xf32>
      %c0_19 = arith.constant 0 : index
      %c0_20 = arith.constant 0 : index
      %27 = vector.load %arg5[%c0_19, %c0_20] : memref<1x32xf32, #tpu.memory_space<vmem>>, vector<1x32xf32>
      %28 = vector.broadcast %27 : vector<1x32xf32> to vector<8x32xf32>
      %29 = arith.addf %26, %28 : vector<8x32xf32>
      %30 = arith.truncf %29 : vector<8x32xf32> to vector<8x32xbf16>
      %c0_21 = arith.constant 0 : index
      %c0_22 = arith.constant 0 : index
      %c0_23 = arith.constant 0 : index
      %c0_24 = arith.constant 0 : index
      %31 = vector.load %arg6[%c0_21, %c0_22, %c0_23, %c0_24] : memref<1x1x8x32xbf16, #tpu.memory_space<vmem>>, vector<1x1x8x32xbf16>
      %32 = vector.shape_cast %31 : vector<1x1x8x32xbf16> to vector<8x32xbf16>
      %33 = vector.shape_cast %30 : vector<8x32xbf16> to vector<1x1x8x32xbf16>
      tpu.vector_store %arg6[%c0_21, %c0_22, %c0_23, %c0_24], %33 {strides = array<i32>} : memref<1x1x8x32xbf16, #tpu.memory_space<vmem>>, vector<1x1x8x32xbf16>,
    } else {
    }
    return
  }
  func.func @transform_0(%arg0: i32, %arg1: i32, %arg2: i32) -> (i32, i32, i32, i32) {
    %0 = arith.addi %arg1, %arg2 : i32
    %c0_i32 = arith.constant 0 : i32
    %c0_i32_0 = arith.constant 0 : i32
    %c0_i32_1 = arith.constant 0 : i32
    return %arg0, %0, %c0_i32, %c0_i32_0 : i32, i32, i32, i32
  }
  func.func @transform_1(%arg0: i32, %arg1: i32, %arg2: i32) -> (i32, i32, i32) {
    %c0_i32 = arith.constant 0 : i32
    %c0_i32_0 = arith.constant 0 : i32
    %c0_i32_1 = arith.constant 0 : i32
    %c0_i32_2 = arith.constant 0 : i32
    return %c0_i32, %c0_i32_0, %c0_i32_1 : i32, i32, i32
  }
  func.func @transform_2(%arg0: i32, %arg1: i32, %arg2: i32) -> (i32, i32) {
    %c0_i32 = arith.constant 0 : i32
    %c0_i32_0 = arith.constant 0 : i32
    %c0_i32_1 = arith.constant 0 : i32
    return %c0_i32, %c0_i32_0 : i32, i32
  }
  func.func @transform_3(%arg0: i32, %arg1: i32, %arg2: i32) -> (i32, i32, i32, i32) {
    %c0_i32 = arith.constant 0 : i32
    %c0_i32_0 = arith.constant 0 : i32
    %c0_i32_1 = arith.constant 0 : i32
    return %arg0, %arg1, %c0_i32, %c0_i32_0 : i32, i32, i32, i32
  }
}

module attributes {stable_mosaic.version = 11 : i64} {
  func.func @conv_row_kernel(%arg0: i32, %arg1: i32, %arg2: i32, %arg3: memref<1x1x22x8xbf16, #tpu.memory_space<vmem>>, %arg4: memref<49x8x3xbf16, #tpu.memory_space<vmem>>, %arg5: memref<1x3xf32, #tpu.memory_space<vmem>>, %arg6: memref<1x1x16x3xf32, #tpu.memory_space<vmem>>, %arg7: memref<16x3xf32, #tpu.memory_space<vmem>>) attributes {dimension_semantics = [#tpu.dimension_semantics<parallel>, #tpu.dimension_semantics<parallel>, #tpu.dimension_semantics<arbitrary>], iteration_bounds = array<i64: 2, 16, 7>, scalar_prefetch = 0 : i64, scratch_operands = 1 : i64, tpu.core_type = #tpu.core_type<tc>, window_params = [{transform_indices = @transform_0, window_bounds = array<i64: 1, 1, 22, 8>}, {pipeline_mode = #tpu.pipeline_mode<synchronous>, transform_indices = @transform_1, window_bounds = array<i64: 49, 8, 3>}, {pipeline_mode = #tpu.pipeline_mode<synchronous>, transform_indices = @transform_2, window_bounds = array<i64: 1, 3>}, {transform_indices = @transform_3, window_bounds = array<i64: 1, 1, 16, 3>}]} {
    %c0_i32 = arith.constant 0 : i32
    %0 = arith.cmpi eq, %arg2, %c0_i32 : i32
    %1 = arith.extui %0 : i1 to i32
    %c0_i32_0 = arith.constant 0 : i32
    %2 = arith.cmpi ne, %1, %c0_i32_0 : i32
    scf.if %2 {
      %cst_37 = arith.constant 0.000000e+00 : f32
      %66 = vector.broadcast %cst_37 : f32 to vector<16x3xf32>
      %c0_38 = arith.constant 0 : index
      %c0_39 = arith.constant 0 : index
      %67 = vector.load %arg7[%c0_38, %c0_39] : memref<16x3xf32, #tpu.memory_space<vmem>>, vector<16x3xf32>
      tpu.vector_store %arg7[%c0_38, %c0_39], %66 {strides = array<i32>} : memref<16x3xf32, #tpu.memory_space<vmem>>, vector<16x3xf32>,
    } else {
    }
    %c0 = arith.constant 0 : index
    %c0_1 = arith.constant 0 : index
    %c0_2 = arith.constant 0 : index
    %c0_3 = arith.constant 0 : index
    %3 = vector.load %arg3[%c0, %c0_1, %c0_2, %c0_3] : memref<1x1x22x8xbf16, #tpu.memory_space<vmem>>, vector<1x1x22x8xbf16>
    %4 = vector.shape_cast %3 : vector<1x1x22x8xbf16> to vector<22x8xbf16>
    %5 = vector.extract_strided_slice %4 {offsets = [0, 0], sizes = [16, 8], strides = [1, 1]} : vector<22x8xbf16> to vector<16x8xbf16>
    %c7_i32 = arith.constant 7 : i32
    %6 = arith.muli %arg2, %c7_i32 : i32
    %c0_i32_4 = arith.constant 0 : i32
    %7 = arith.addi %6, %c0_i32_4 : i32
    %8 = arith.index_cast %7 : i32 to index
    %c0_5 = arith.constant 0 : index
    %c0_6 = arith.constant 0 : index
    %9 = vector.load %arg4[%8, %c0_5, %c0_6] : memref<49x8x3xbf16, #tpu.memory_space<vmem>>, vector<1x8x3xbf16>
    %10 = vector.shape_cast %9 : vector<1x8x3xbf16> to vector<8x3xbf16>
    %cst = arith.constant dense<0.000000e+00> : vector<16x3xf32>
    %11 = tpu.matmul %5, %10, %cst {dimension_numbers = #tpu.dot_dimension_numbers<[1], [0], [0], [1], [0, 0, 1, 1], [], []>} : vector<16x8xbf16>, vector<8x3xbf16>, vector<16x3xf32> -> vector<16x3xf32>
    %12 = vector.extract_strided_slice %4 {offsets = [1, 0], sizes = [16, 8], strides = [1, 1]} : vector<22x8xbf16> to vector<16x8xbf16>
    %c7_i32_7 = arith.constant 7 : i32
    %13 = arith.muli %arg2, %c7_i32_7 : i32
    %c1_i32 = arith.constant 1 : i32
    %14 = arith.addi %13, %c1_i32 : i32
    %15 = arith.index_cast %14 : i32 to index
    %c0_8 = arith.constant 0 : index
    %c0_9 = arith.constant 0 : index
    %16 = vector.load %arg4[%15, %c0_8, %c0_9] : memref<49x8x3xbf16, #tpu.memory_space<vmem>>, vector<1x8x3xbf16>
    %17 = vector.shape_cast %16 : vector<1x8x3xbf16> to vector<8x3xbf16>
    %cst_10 = arith.constant dense<0.000000e+00> : vector<16x3xf32>
    %18 = tpu.matmul %12, %17, %cst_10 {dimension_numbers = #tpu.dot_dimension_numbers<[1], [0], [0], [1], [0, 0, 1, 1], [], []>} : vector<16x8xbf16>, vector<8x3xbf16>, vector<16x3xf32> -> vector<16x3xf32>
    %19 = arith.addf %11, %18 : vector<16x3xf32>
    %20 = vector.extract_strided_slice %4 {offsets = [2, 0], sizes = [16, 8], strides = [1, 1]} : vector<22x8xbf16> to vector<16x8xbf16>
    %c7_i32_11 = arith.constant 7 : i32
    %21 = arith.muli %arg2, %c7_i32_11 : i32
    %c2_i32 = arith.constant 2 : i32
    %22 = arith.addi %21, %c2_i32 : i32
    %23 = arith.index_cast %22 : i32 to index
    %c0_12 = arith.constant 0 : index
    %c0_13 = arith.constant 0 : index
    %24 = vector.load %arg4[%23, %c0_12, %c0_13] : memref<49x8x3xbf16, #tpu.memory_space<vmem>>, vector<1x8x3xbf16>
    %25 = vector.shape_cast %24 : vector<1x8x3xbf16> to vector<8x3xbf16>
    %cst_14 = arith.constant dense<0.000000e+00> : vector<16x3xf32>
    %26 = tpu.matmul %20, %25, %cst_14 {dimension_numbers = #tpu.dot_dimension_numbers<[1], [0], [0], [1], [0, 0, 1, 1], [], []>} : vector<16x8xbf16>, vector<8x3xbf16>, vector<16x3xf32> -> vector<16x3xf32>
    %27 = arith.addf %19, %26 : vector<16x3xf32>
    %28 = vector.extract_strided_slice %4 {offsets = [3, 0], sizes = [16, 8], strides = [1, 1]} : vector<22x8xbf16> to vector<16x8xbf16>
    %c7_i32_15 = arith.constant 7 : i32
    %29 = arith.muli %arg2, %c7_i32_15 : i32
    %c3_i32 = arith.constant 3 : i32
    %30 = arith.addi %29, %c3_i32 : i32
    %31 = arith.index_cast %30 : i32 to index
    %c0_16 = arith.constant 0 : index
    %c0_17 = arith.constant 0 : index
    %32 = vector.load %arg4[%31, %c0_16, %c0_17] : memref<49x8x3xbf16, #tpu.memory_space<vmem>>, vector<1x8x3xbf16>
    %33 = vector.shape_cast %32 : vector<1x8x3xbf16> to vector<8x3xbf16>
    %cst_18 = arith.constant dense<0.000000e+00> : vector<16x3xf32>
    %34 = tpu.matmul %28, %33, %cst_18 {dimension_numbers = #tpu.dot_dimension_numbers<[1], [0], [0], [1], [0, 0, 1, 1], [], []>} : vector<16x8xbf16>, vector<8x3xbf16>, vector<16x3xf32> -> vector<16x3xf32>
    %35 = arith.addf %27, %34 : vector<16x3xf32>
    %36 = vector.extract_strided_slice %4 {offsets = [4, 0], sizes = [16, 8], strides = [1, 1]} : vector<22x8xbf16> to vector<16x8xbf16>
    %c7_i32_19 = arith.constant 7 : i32
    %37 = arith.muli %arg2, %c7_i32_19 : i32
    %c4_i32 = arith.constant 4 : i32
    %38 = arith.addi %37, %c4_i32 : i32
    %39 = arith.index_cast %38 : i32 to index
    %c0_20 = arith.constant 0 : index
    %c0_21 = arith.constant 0 : index
    %40 = vector.load %arg4[%39, %c0_20, %c0_21] : memref<49x8x3xbf16, #tpu.memory_space<vmem>>, vector<1x8x3xbf16>
    %41 = vector.shape_cast %40 : vector<1x8x3xbf16> to vector<8x3xbf16>
    %cst_22 = arith.constant dense<0.000000e+00> : vector<16x3xf32>
    %42 = tpu.matmul %36, %41, %cst_22 {dimension_numbers = #tpu.dot_dimension_numbers<[1], [0], [0], [1], [0, 0, 1, 1], [], []>} : vector<16x8xbf16>, vector<8x3xbf16>, vector<16x3xf32> -> vector<16x3xf32>
    %43 = arith.addf %35, %42 : vector<16x3xf32>
    %44 = vector.extract_strided_slice %4 {offsets = [5, 0], sizes = [16, 8], strides = [1, 1]} : vector<22x8xbf16> to vector<16x8xbf16>
    %c7_i32_23 = arith.constant 7 : i32
    %45 = arith.muli %arg2, %c7_i32_23 : i32
    %c5_i32 = arith.constant 5 : i32
    %46 = arith.addi %45, %c5_i32 : i32
    %47 = arith.index_cast %46 : i32 to index
    %c0_24 = arith.constant 0 : index
    %c0_25 = arith.constant 0 : index
    %48 = vector.load %arg4[%47, %c0_24, %c0_25] : memref<49x8x3xbf16, #tpu.memory_space<vmem>>, vector<1x8x3xbf16>
    %49 = vector.shape_cast %48 : vector<1x8x3xbf16> to vector<8x3xbf16>
    %cst_26 = arith.constant dense<0.000000e+00> : vector<16x3xf32>
    %50 = tpu.matmul %44, %49, %cst_26 {dimension_numbers = #tpu.dot_dimension_numbers<[1], [0], [0], [1], [0, 0, 1, 1], [], []>} : vector<16x8xbf16>, vector<8x3xbf16>, vector<16x3xf32> -> vector<16x3xf32>
    %51 = arith.addf %43, %50 : vector<16x3xf32>
    %52 = vector.extract_strided_slice %4 {offsets = [6, 0], sizes = [16, 8], strides = [1, 1]} : vector<22x8xbf16> to vector<16x8xbf16>
    %c7_i32_27 = arith.constant 7 : i32
    %53 = arith.muli %arg2, %c7_i32_27 : i32
    %c6_i32 = arith.constant 6 : i32
    %54 = arith.addi %53, %c6_i32 : i32
    %55 = arith.index_cast %54 : i32 to index
    %c0_28 = arith.constant 0 : index
    %c0_29 = arith.constant 0 : index
    %56 = vector.load %arg4[%55, %c0_28, %c0_29] : memref<49x8x3xbf16, #tpu.memory_space<vmem>>, vector<1x8x3xbf16>
    %57 = vector.shape_cast %56 : vector<1x8x3xbf16> to vector<8x3xbf16>
    %cst_30 = arith.constant dense<0.000000e+00> : vector<16x3xf32>
    %58 = tpu.matmul %52, %57, %cst_30 {dimension_numbers = #tpu.dot_dimension_numbers<[1], [0], [0], [1], [0, 0, 1, 1], [], []>} : vector<16x8xbf16>, vector<8x3xbf16>, vector<16x3xf32> -> vector<16x3xf32>
    %59 = arith.addf %51, %58 : vector<16x3xf32>
    %c0_31 = arith.constant 0 : index
    %c0_32 = arith.constant 0 : index
    %60 = vector.load %arg7[%c0_31, %c0_32] : memref<16x3xf32, #tpu.memory_space<vmem>>, vector<16x3xf32>
    %61 = arith.addf %60, %59 : vector<16x3xf32>
    %c0_33 = arith.constant 0 : index
    %c0_34 = arith.constant 0 : index
    %62 = vector.load %arg7[%c0_33, %c0_34] : memref<16x3xf32, #tpu.memory_space<vmem>>, vector<16x3xf32>
    tpu.vector_store %arg7[%c0_33, %c0_34], %61 {strides = array<i32>} : memref<16x3xf32, #tpu.memory_space<vmem>>, vector<16x3xf32>,
    %c6_i32_35 = arith.constant 6 : i32
    %63 = arith.cmpi eq, %arg2, %c6_i32_35 : i32
    %64 = arith.extui %63 : i1 to i32
    %c0_i32_36 = arith.constant 0 : i32
    %65 = arith.cmpi ne, %64, %c0_i32_36 : i32
    scf.if %65 {
      %c0_37 = arith.constant 0 : index
      %c0_38 = arith.constant 0 : index
      %66 = vector.load %arg7[%c0_37, %c0_38] : memref<16x3xf32, #tpu.memory_space<vmem>>, vector<16x3xf32>
      %c0_39 = arith.constant 0 : index
      %c0_40 = arith.constant 0 : index
      %67 = vector.load %arg5[%c0_39, %c0_40] : memref<1x3xf32, #tpu.memory_space<vmem>>, vector<1x3xf32>
      %68 = vector.broadcast %67 : vector<1x3xf32> to vector<16x3xf32>
      %69 = arith.addf %66, %68 : vector<16x3xf32>
      %70 = math.tanh %69 : vector<16x3xf32>
      %c0_41 = arith.constant 0 : index
      %c0_42 = arith.constant 0 : index
      %c0_43 = arith.constant 0 : index
      %c0_44 = arith.constant 0 : index
      %71 = vector.load %arg6[%c0_41, %c0_42, %c0_43, %c0_44] : memref<1x1x16x3xf32, #tpu.memory_space<vmem>>, vector<1x1x16x3xf32>
      %72 = vector.shape_cast %71 : vector<1x1x16x3xf32> to vector<16x3xf32>
      %73 = vector.shape_cast %70 : vector<16x3xf32> to vector<1x1x16x3xf32>
      tpu.vector_store %arg6[%c0_41, %c0_42, %c0_43, %c0_44], %73 {strides = array<i32>} : memref<1x1x16x3xf32, #tpu.memory_space<vmem>>, vector<1x1x16x3xf32>,
    } else {
    }
    return
  }
  func.func @transform_0(%arg0: i32, %arg1: i32, %arg2: i32) -> (i32, i32, i32, i32) {
    %0 = arith.addi %arg1, %arg2 : i32
    %c0_i32 = arith.constant 0 : i32
    %c0_i32_0 = arith.constant 0 : i32
    %c0_i32_1 = arith.constant 0 : i32
    return %arg0, %0, %c0_i32, %c0_i32_0 : i32, i32, i32, i32
  }
  func.func @transform_1(%arg0: i32, %arg1: i32, %arg2: i32) -> (i32, i32, i32) {
    %c0_i32 = arith.constant 0 : i32
    %c0_i32_0 = arith.constant 0 : i32
    %c0_i32_1 = arith.constant 0 : i32
    %c0_i32_2 = arith.constant 0 : i32
    return %c0_i32, %c0_i32_0, %c0_i32_1 : i32, i32, i32
  }
  func.func @transform_2(%arg0: i32, %arg1: i32, %arg2: i32) -> (i32, i32) {
    %c0_i32 = arith.constant 0 : i32
    %c0_i32_0 = arith.constant 0 : i32
    %c0_i32_1 = arith.constant 0 : i32
    return %c0_i32, %c0_i32_0 : i32, i32
  }
  func.func @transform_3(%arg0: i32, %arg1: i32, %arg2: i32) -> (i32, i32, i32, i32) {
    %c0_i32 = arith.constant 0 : i32
    %c0_i32_0 = arith.constant 0 : i32
    %c0_i32_1 = arith.constant 0 : i32
    return %arg0, %arg1, %c0_i32, %c0_i32_0 : i32, i32, i32, i32
  }
}

</mosaic_0001>

<llo_original>
// kernel: resnet_generator_forward.28
$region0: #{resnet_generator_forward.28}
  #allocation0 [shape = 'u32[]', space=smem, size = 0x4, offset = 0x4, fixed_abs, tag = 'smem constant byte address 0x4 - core index']
  #allocation1 [shape = 'u32[72,128]{1,0:T(1,128)}', space=vmem, size = 0x9000, scoped, tag = 'internal scratch']
  #allocation2 [shape = 'f32[16,8]{1,0:T(8,128)}', space=vmem, size = 0x2000, scoped, tag = 'scratch operand']
  %s0 = inlined_call_operand.vmem [shape: bf16[2,22,22,3], index: 0, kind: input, shape index: {}]
  %s1 = inlined_call_operand.vmem [shape: bf16[49,3,8], index: 1, kind: input, shape index: {}]
  %s2 = inlined_call_operand.vmem [shape: f32[1,8], index: 2, kind: input, shape index: {}]
  %s3 = inlined_call_operand.vmem [shape: bf16[2,16,16,8], index: 3, kind: output, shape index: {}]
  %s4 = sld [smem:[#allocation0]]
  $region53: #{resnet_generator_forward.28} parent=0
    _
  %s6 = ssub.s32 1, %s4
  %s7 = scalar_select 0, %s6, %s4
  loop: start=0, step=1, limit=226
  $region2: #{resnet_generator_forward.28} parent=0 // loop_pre_header
    _
  $region3: #{resnet_generator_forward.28} parent=0 // loop_header
    %s9 = sphi 0, %s13
    %p10 = scmp.ge.s32.totalorder %s9, 226
    %s16 = sphi 0, %s35
    %s17 = sphi 0, %s31
    %s18 = sphi 0, %s27
    %s19 = sphi 0, %s16
    %s20 = sphi 0, %s17
    %s21 = sphi 0, %s18
    %s22 = sphi 0, %s19
    %s23 = sphi 0, %s20
    %s24 = sphi 0, %s21
    %s42 = sphi 0, %s44
    %s45 = sphi 0, %s42
    %s46 = sphi 0, %s45
    %s62 = sphi 0, %s46
    %s66 = sphi 0, %s66
    %s68 = sphi 0, %s66
    %s69 = sphi 0, %s68
    %s83 = sphi 0, %s69
    %s87 = sphi 0, %s87
    %s89 = sphi 0, %s87
    %s90 = sphi 0, %s89
    %s104 = sphi 0, %s90
    %s112 = sphi 0, %s114
    %s115 = sphi 0, %s112
    %s116 = sphi 0, %s115
    %s132 = sphi 0, %s116
  $region4: #{resnet_generator_forward.28} parent=0 // loop_header_branch
    %12 = sbr.rel (%p10) target = $region8
  $region5: #{resnet_generator_forward.28} parent=0 // loop_body
    %s14 = ssub.s32 %s9, 1
    %s15 = ssub.s32 %s9, 2
    %s25 = sadd.s32 1, %s18
    %p26 = scmp.ge.s32.totalorder %s25, 7
    %s27 = scalar_select %p26, 0, %s25
    %s28 = sadd.s32 1, %s17
    %s29 = scalar_select %p26, %s28, %s17
    %p30 = scmp.ge.s32.totalorder %s29, 16
    %s31 = scalar_select %p30, 0, %s29
    %s32 = sadd.s32 1, %s16
    %s33 = scalar_select %p30, %s32, %s16
    %p34 = scmp.ge.s32.totalorder %s33, 2
    %s35 = scalar_select %p34, 0, %s33
    %s36 = sadd.s32 %s17, %s18
    %s37 = sadd.s32 %s31, %s27
    %s38 = ssub.s32 %s16, %s35
    %s39 = ssub.s32 %s36, %s37
    %s40 = sor.u32 %s38, %s39
    %p41 = scmp.eq.s32.totalorder %s40, 0
    %s43 = sadd.s32 %s42, 1
    %s44 = scalar_select %p41, %s42, %s43
    %p47 = pneg %p41
    %p48 = scmp.eq.s32.totalorder %s9, 223
    %p49 = por %p47, %p48
    %p50 = scmp.ne.s32.totalorder %s42, %s45
    %p51 = scmp.eq.s32.totalorder %s9, 0
    %p52 = por %p50, %p51
    %p53 = scmp.ne.s32.totalorder %s42, %s45
    %p54 = scmp.eq.s32.totalorder %s14, 223
    %p55 = por %p53, %p54
    %p56 = scmp.ne.s32.totalorder %s45, %s46
    %p57 = scmp.eq.s32.totalorder %s14, 0
    %p58 = por %p56, %p57
    %p59 = scmp.ne.s32.totalorder %s45, %s46
    %p60 = scmp.eq.s32.totalorder %s15, 223
    %p61 = por %p59, %p60
    %p63 = scmp.ne.s32.totalorder %s46, %s62
    %p64 = scmp.eq.s32.totalorder %s15, 0
    %p65 = por %p63, %p64
    %s67 = sadd.s32 %s66, 1
    %p70 = scmp.eq.s32.totalorder %s9, 223
    %p71 = scmp.ne.s32.totalorder %s66, %s68
    %p72 = scmp.eq.s32.totalorder %s9, 0
    %p73 = por %p71, %p72
    %p74 = scmp.ne.s32.totalorder %s66, %s68
    %p75 = scmp.eq.s32.totalorder %s14, 223
    %p76 = por %p74, %p75
    %p77 = scmp.ne.s32.totalorder %s68, %s69
    %p78 = scmp.eq.s32.totalorder %s14, 0
    %p79 = por %p77, %p78
    %p80 = scmp.ne.s32.totalorder %s68, %s69
    %p81 = scmp.eq.s32.totalorder %s15, 223
    %p82 = por %p80, %p81
    %p84 = scmp.ne.s32.totalorder %s69, %s83
    %p85 = scmp.eq.s32.totalorder %s15, 0
    %p86 = por %p84, %p85
    %s88 = sadd.s32 %s87, 1
    %p91 = scmp.eq.s32.totalorder %s9, 223
    %p92 = scmp.ne.s32.totalorder %s87, %s89
    %p93 = scmp.eq.s32.totalorder %s9, 0
    %p94 = por %p92, %p93
    %p95 = scmp.ne.s32.totalorder %s87, %s89
    %p96 = scmp.eq.s32.totalorder %s14, 223
    %p97 = por %p95, %p96
    %p98 = scmp.ne.s32.totalorder %s89, %s90
    %p99 = scmp.eq.s32.totalorder %s14, 0
    %p100 = por %p98, %p99
    %p101 = scmp.ne.s32.totalorder %s89, %s90
    %p102 = scmp.eq.s32.totalorder %s15, 223
    %p103 = por %p101, %p102
    %p105 = scmp.ne.s32.totalorder %s90, %s104
    %p106 = scmp.eq.s32.totalorder %s15, 0
    %p107 = por %p105, %p106
    %s108 = ssub.s32 %s16, %s35
    %s109 = ssub.s32 %s17, %s31
    %s110 = sor.u32 %s108, %s109
    %p111 = scmp.eq.s32.totalorder %s110, 0
    %s113 = sadd.s32 %s112, 1
    %s114 = scalar_select %p111, %s112, %s113
    %p117 = pneg %p111
    %p118 = scmp.eq.s32.totalorder %s9, 223
    %p119 = por %p117, %p118
    %p120 = scmp.ne.s32.totalorder %s112, %s115
    %p121 = scmp.eq.s32.totalorder %s9, 0
    %p122 = por %p120, %p121
    %p123 = scmp.ne.s32.totalorder %s112, %s115
    %p124 = scmp.eq.s32.totalorder %s14, 223
    %p125 = por %p123, %p124
    %p126 = scmp.ne.s32.totalorder %s115, %s116
    %p127 = scmp.eq.s32.totalorder %s14, 0
    %p128 = por %p126, %p127
    %p129 = scmp.ne.s32.totalorder %s115, %s116
    %p130 = scmp.eq.s32.totalorder %s15, 223
    %p131 = por %p129, %p130
    %p133 = scmp.ne.s32.totalorder %s116, %s132
    %p134 = scmp.eq.s32.totalorder %s15, 0
    %p135 = por %p133, %p134
    %p136 = scmp.le.s32.totalorder 1, %s9
    %p137 = scmp.lt.s32.totalorder %s9, 225
    %p138 = pnand %p136, %p137
    %p139 = pneg %p138
    // Predicated region
    $region9: #{resnet_generator_forward.28} parent=5 // pred_check
      _
    $region10: #{resnet_generator_forward.28} parent=5 // pred_check_branch
      %141 = sbr.rel (%p138) target = $region12
    $region11: #{resnet_generator_forward.28} parent=5 // pred_region
      %s142 = ssub.s32 %s9, 1
      // Predicated region
      $region13: #{resnet_generator_forward.28} parent=11 // pred_check
        %p143 = pneg %p79
      $region14: #{resnet_generator_forward.28} parent=11 // pred_check_branch
        %145 = sbr.rel (%p143) target = $region16
      $region15: #{resnet_generator_forward.28} parent=11 // pred_region
        _
      $region16: #{resnet_generator_forward.28} parent=11 // pred_fallthru
        _
      // Predicated region
      $region17: #{resnet_generator_forward.28} parent=11 // pred_check
        %p146 = pneg %p100
      $region18: #{resnet_generator_forward.28} parent=11 // pred_check_branch
        %148 = sbr.rel (%p146) target = $region20
      $region19: #{resnet_generator_forward.28} parent=11 // pred_region
        _
      $region20: #{resnet_generator_forward.28} parent=11 // pred_fallthru
        _
    $region12: #{resnet_generator_forward.28} parent=5 // pred_fallthru
      _
    %p149 = scmp.lt.s32.totalorder %s9, 224
    // Predicated region
    $region21: #{resnet_generator_forward.28} parent=5 // pred_check
      %p150 = pneg %p149
    $region22: #{resnet_generator_forward.28} parent=5 // pred_check_branch
      %152 = sbr.rel (%p150) target = $region24
    $region23: #{resnet_generator_forward.28} parent=5 // pred_region
      // Predicated region
      $region25: #{resnet_generator_forward.28} parent=23 // pred_check
        %p153 = pneg %p52
      $region26: #{resnet_generator_forward.28} parent=23 // pred_check_branch
        %155 = sbr.rel (%p153) target = $region28
      $region27: #{resnet_generator_forward.28} parent=23 // pred_region
        %s156 = sadd.s32 %s17, %s18
        %p157 = scmp.lt.s32.totalorder %s16, 1
        %s158 = scalar_select %p157, %s16, 1
        %p159 = scmp.lt.s32.totalorder %s156, 21
        %s160 = scalar_select %p159, %s156, 21
        %s161 = smul.addr %s160, 3
        %s162 = smul.addr %s158, 66
        %s163 = sadd.s32 %s161, %s162
        %s164 = smul.addr %s163, 4
        %s165 = scalar_lea.vmem %s0, %s164
        %s166 = sadd.s32 %s17, %s18
      $region28: #{resnet_generator_forward.28} parent=23 // pred_fallthru
        _
    $region24: #{resnet_generator_forward.28} parent=5 // pred_fallthru
      _
    %p167 = scmp.le.s32.totalorder 1, %s9
    %p168 = scmp.lt.s32.totalorder %s9, 225
    %p169 = pnand %p167, %p168
    %p170 = pneg %p169
    // Predicated region
    $region29: #{resnet_generator_forward.28} parent=5 // pred_check
      _
    $region30: #{resnet_generator_forward.28} parent=5 // pred_check_branch
      %172 = sbr.rel (%p169) target = $region32
    $region31: #{resnet_generator_forward.28} parent=5 // pred_region
      %s173 = ssub.s32 %s9, 1
      %s174 = sadd.s32 %s20, %s21
      %p175 = scmp.lt.s32.totalorder %s19, 1
      %s176 = scalar_select %p175, %s19, 1
      %p177 = scmp.lt.s32.totalorder %s174, 21
      %s178 = scalar_select %p177, %s174, 21
      %s179 = smul.addr %s178, 3
      %s180 = smul.addr %s176, 66
      %s181 = sadd.s32 %s179, %s180
      %s182 = smul.addr %s181, 4
      %s183 = scalar_lea.vmem %s0, %s182
      %p184 = pneg %p58
      %p185 = pneg %p55
      %p186 = pneg %p79
      %p187 = pneg %p76
      %p188 = pneg %p100
      %p189 = pneg %p97
      %p190 = pneg %p128
      %p191 = pneg %p125
      %p192 = scmp.lt.s32.totalorder %s19, 1
      %s193 = scalar_select %p192, %s19, 1
      %p194 = scmp.lt.s32.totalorder %s20, 15
      %s195 = scalar_select %p194, %s20, 15
      %s196 = smul.addr %s195, 2
      %s197 = smul.addr %s193, 32
      %s198 = sadd.s32 %s196, %s197
      %s199 = smul.addr %s198, 4
      %s200 = scalar_lea.vmem %s3, %s199
      %s201 = sadd.s32 %s20, %s21
      %p202 = scmp.lt.s32.totalorder %s19, 1
      %s203 = scalar_select %p202, %s19, 1
      %p204 = scmp.lt.s32.totalorder %s201, 21
      %s205 = scalar_select %p204, %s201, 21
      %s206 = smul.addr %s205, 3
      %s207 = smul.addr %s203, 66
      %s208 = sadd.s32 %s206, %s207
      %s209 = smul.addr %s208, 4
      %s210 = scalar_lea.vmem %s0, %s209
      %s211 = sadd.s32 %s20, %s21
      %p212 = scmp.lt.s32.totalorder %s19, 1
      %s213 = scalar_select %p212, %s19, 1
      %p214 = scmp.lt.s32.totalorder %s20, 15
      %s215 = scalar_select %p214, %s20, 15
      %s216 = smul.addr %s215, 2
      %s217 = smul.addr %s213, 32
      %s218 = sadd.s32 %s216, %s217
      %s219 = smul.addr %s218, 4
      %s220 = scalar_lea.vmem %s3, %s219
      %p222 = scmp.eq.s32.totalorder %s21, 0
      // Predicated region
      $region33: #{resnet_generator_forward.28} parent=31 // pred_check
        %p223 = pneg %p222
      $region34: #{resnet_generator_forward.28} parent=31 // pred_check_branch
        %225 = sbr.rel (%p223) target = $region36
      $region35: #{resnet_generator_forward.28} parent=31 // pred_region
        %vm226 = vcmask 64512
        %227 = vst.msk [vmem:[#allocation2] sm:$0xff] %vm226, 0.0
        %228 = vst.msk [vmem:[#allocation2 + $0x8] sm:$0xff] %vm226, 0.0
      $region36: #{resnet_generator_forward.28} parent=31 // pred_fallthru
        _
      %v229 = vld [vmem:[%s210] sm:$0xf]
      %v230 = vld [vmem:[%s210 + $0x4] sm:$0xf]
      %v231 = vld [vmem:[%s210 + $0x8] sm:$0x7]
      %s232 = smul.u32 %s21, 7
      %s233 = smul.addr %s232, 2
      %s234 = scalar_lea.vmem %s1, %s233
      %v235 = vld [vmem:[%s234] sm:$0x3]
      %s236 = sadd.s32 %s232, 1
      %s237 = smul.addr %s236, 2
      %s238 = scalar_lea.vmem %s1, %s237
      %v239 = vld [vmem:[%s238] sm:$0x3]
      %v243 = vunpack.c.l.b16 %v229
      %v244 = vunpack.c.l.b16 %v230
      %v245 = vunpack.c.l.b16 %v231
      %v246 = vpack.c.b16 %v244, %v243
      %v247 = vpack.c.b16 %v245, %v245
      %vm248 = vsmask.f32 7424
      %v250 = vshrl.u32 %v246, 16
      %v252 = vshll.u32 %v246, 16
      %v254 = vrot.slane %v252, 1
      %v255 = vor.u32 %v250, %v254
      %v257 = vshll.u32 %v247, 16
      %v259 = vrot.slane %v257, 1
      %v260 = vsel %vm248, %v255, %v259
      %vm261 = vcmask 23552
      %v263 = vsel %vm261, %v260, 0
      %vm265 = vcmask 1040384
      %vm266 = vcmask 1041408
      %v267 = vsel %vm265, 4294967295, 65535
      %v268 = vsel %vm266, %v267, 0
      %v270 = vand.u32 %v239, %v268
      %272 = vmatpush.bf16.msra.mxu0 0
      %273 = vmatpush.bf16.msra.mxu0 0
      %274 = vmatpush.bf16.msra.mxu0 0
      %275 = vmatpush.bf16.msra.mxu0 0
      %276 = vmatpush.bf16.msra.mxu0 0
      %277 = vmatpush.bf16.msra.mxu0 0
      %278 = vmatpush.bf16.msra.mxu0 0
      %279 = vmatpush.bf16.msra.mxu0 %v270
      %280 = vmatmul.bf16.gmra.mxu0 %v263
      %v281 = vpop.f32.mrf.mxu0
      %v282 = vadd.f32 0.0, %v281
      %v283 = vpop.f32.mrf.mxu0
      %v284 = vadd.f32 0.0, %v283
      %285 = vdwg.mxu0
      %v286 = vsel %vm261, %v246, 0
      %v289 = vand.u32 %v235, %v268
      %291 = vmatpush.bf16.msra.mxu0 0
      %292 = vmatpush.bf16.msra.mxu0 0
      %293 = vmatpush.bf16.msra.mxu0 0
      %294 = vmatpush.bf16.msra.mxu0 0
      %295 = vmatpush.bf16.msra.mxu0 0
      %296 = vmatpush.bf16.msra.mxu0 0
      %297 = vmatpush.bf16.msra.mxu0 0
      %298 = vmatpush.bf16.msra.mxu0 %v289
      %299 = vmatmul.bf16.gmra.mxu0 %v286
      %v300 = vpop.f32.mrf.mxu0
      %v301 = vadd.f32 %v282, %v300
      %v302 = vpop.f32.mrf.mxu0
      %v303 = vadd.f32 %v284, %v302
      %304 = vdwg.mxu0
      %s305 = sadd.s32 %s232, 2
      %s306 = smul.addr %s305, 2
      %s307 = scalar_lea.vmem %s1, %s306
      %v308 = vld [vmem:[%s307] sm:$0x3]
      %vm309 = vcmask 1046528
      %v310 = vrot.slane %v246, 1
      %v311 = vrot.slane %v247, 1
      %v312 = vsel %vm309, %v310, %v311
      %v314 = vsel %vm261, %v312, 0
      %v317 = vand.u32 %v308, %v268
      %319 = vmatpush.bf16.msra.mxu0 0
      %320 = vmatpush.bf16.msra.mxu0 0
      %321 = vmatpush.bf16.msra.mxu0 0
      %322 = vmatpush.bf16.msra.mxu0 0
      %323 = vmatpush.bf16.msra.mxu0 0
      %324 = vmatpush.bf16.msra.mxu0 0
      %325 = vmatpush.bf16.msra.mxu0 0
      %326 = vmatpush.bf16.msra.mxu0 %v317
      %327 = vmatmul.bf16.gmra.mxu0 %v314
      %v328 = vpop.f32.mrf.mxu0
      %v329 = vadd.f32 0.0, %v328
      %v330 = vpop.f32.mrf.mxu0
      %v331 = vadd.f32 0.0, %v330
      %332 = vdwg.mxu0
      %v333 = vadd.f32 %v301, %v329
      %v334 = vadd.f32 %v303, %v331
      %s335 = sadd.s32 %s232, 3
      %s336 = smul.addr %s335, 2
      %s337 = scalar_lea.vmem %s1, %s336
      %v338 = vld [vmem:[%s337] sm:$0x3]
      %vm339 = vsmask.f32 6400
      %v340 = vrot.slane %v250, 1
      %v341 = vrot.slane %v252, 2
      %v342 = vor.u32 %v340, %v341
      %v343 = vshrl.u32 %v247, 16
      %v345 = vrot.slane %v343, 1
      %v346 = vrot.slane %v257, 2
      %v347 = vor.u32 %v345, %v346
      %v348 = vsel %vm339, %v342, %v347
      %v350 = vsel %vm261, %v348, 0
      %v353 = vand.u32 %v338, %v268
      %355 = vmatpush.bf16.msra.mxu0 0
      %356 = vmatpush.bf16.msra.mxu0 0
      %357 = vmatpush.bf16.msra.mxu0 0
      %358 = vmatpush.bf16.msra.mxu0 0
      %359 = vmatpush.bf16.msra.mxu0 0
      %360 = vmatpush.bf16.msra.mxu0 0
      %361 = vmatpush.bf16.msra.mxu0 0
      %362 = vmatpush.bf16.msra.mxu0 %v353
      %363 = vmatmul.bf16.gmra.mxu0 %v350
      %v364 = vpop.f32.mrf.mxu0
      %v365 = vadd.f32 0.0, %v364
      %v366 = vpop.f32.mrf.mxu0
      %v367 = vadd.f32 0.0, %v366
      %368 = vdwg.mxu0
      %v369 = vadd.f32 %v333, %v365
      %v370 = vadd.f32 %v334, %v367
      %s371 = sadd.s32 %s232, 4
      %s372 = smul.addr %s371, 2
      %s373 = scalar_lea.vmem %s1, %s372
      %v374 = vld [vmem:[%s373] sm:$0x3]
      %vm375 = vcmask 1045504
      %v376 = vrot.slane %v246, 2
      %v377 = vrot.slane %v247, 2
      %v378 = vsel %vm375, %v376, %v377
      %v380 = vsel %vm261, %v378, 0
      %v383 = vand.u32 %v374, %v268
      %385 = vmatpush.bf16.msra.mxu0 0
      %386 = vmatpush.bf16.msra.mxu0 0
      %387 = vmatpush.bf16.msra.mxu0 0
      %388 = vmatpush.bf16.msra.mxu0 0
      %389 = vmatpush.bf16.msra.mxu0 0
      %390 = vmatpush.bf16.msra.mxu0 0
      %391 = vmatpush.bf16.msra.mxu0 0
      %392 = vmatpush.bf16.msra.mxu0 %v383
      %393 = vmatmul.bf16.gmra.mxu0 %v380
      %v394 = vpop.f32.mrf.mxu0
      %v395 = vadd.f32 0.0, %v394
      %v396 = vpop.f32.mrf.mxu0
      %v397 = vadd.f32 0.0, %v396
      %398 = vdwg.mxu0
      %v399 = vadd.f32 %v369, %v395
      %v400 = vadd.f32 %v370, %v397
      %s401 = sadd.s32 %s232, 5
      %s402 = smul.addr %s401, 2
      %s403 = scalar_lea.vmem %s1, %s402
      %v404 = vld [vmem:[%s403] sm:$0x3]
      %vm405 = vsmask.f32 5376
      %v406 = vrot.slane %v250, 2
      %v407 = vrot.slane %v252, 3
      %v408 = vor.u32 %v406, %v407
      %v409 = vrot.slane %v343, 2
      %v410 = vrot.slane %v257, 3
      %v411 = vor.u32 %v409, %v410
      %v412 = vsel %vm405, %v408, %v411
      %v414 = vsel %vm261, %v412, 0
      %v417 = vand.u32 %v404, %v268
      %419 = vmatpush.bf16.msra.mxu0 0
      %420 = vmatpush.bf16.msra.mxu0 0
      %421 = vmatpush.bf16.msra.mxu0 0
      %422 = vmatpush.bf16.msra.mxu0 0
      %423 = vmatpush.bf16.msra.mxu0 0
      %424 = vmatpush.bf16.msra.mxu0 0
      %425 = vmatpush.bf16.msra.mxu0 0
      %426 = vmatpush.bf16.msra.mxu0 %v417
      %427 = vmatmul.bf16.gmra.mxu0 %v414
      %v428 = vpop.f32.mrf.mxu0
      %v429 = vadd.f32 0.0, %v428
      %v430 = vpop.f32.mrf.mxu0
      %v431 = vadd.f32 0.0, %v430
      %432 = vdwg.mxu0
      %v433 = vadd.f32 %v399, %v429
      %v434 = vadd.f32 %v400, %v431
      %s435 = sadd.s32 %s232, 6
      %s436 = smul.addr %s435, 2
      %s437 = scalar_lea.vmem %s1, %s436
      %v438 = vld [vmem:[%s437] sm:$0x3]
      %vm439 = vcmask 1044480
      %v440 = vrot.slane %v246, 3
      %v441 = vrot.slane %v247, 3
      %v442 = vsel %vm439, %v440, %v441
      %v444 = vsel %vm261, %v442, 0
      %v447 = vand.u32 %v438, %v268
      %449 = vmatpush.bf16.msra.mxu0 0
      %450 = vmatpush.bf16.msra.mxu0 0
      %451 = vmatpush.bf16.msra.mxu0 0
      %452 = vmatpush.bf16.msra.mxu0 0
      %453 = vmatpush.bf16.msra.mxu0 0
      %454 = vmatpush.bf16.msra.mxu0 0
      %455 = vmatpush.bf16.msra.mxu0 0
      %456 = vmatpush.bf16.msra.mxu0 %v447
      %457 = vmatmul.bf16.gmra.mxu0 %v444
      %v458 = vpop.f32.mrf.mxu0
      %v459 = vadd.f32 0.0, %v458
      %v460 = vpop.f32.mrf.mxu0
      %v461 = vadd.f32 0.0, %v460
      %462 = vdwg.mxu0
      %v463 = vadd.f32 %v433, %v459
      %v464 = vadd.f32 %v434, %v461
      %v465 = vld [vmem:[#allocation2] sm:$0xff]
      %v466 = vld [vmem:[#allocation2 + $0x8] sm:$0xff]
      %v467 = vadd.f32 %v465, %v463
      %v468 = vadd.f32 %v466, %v464
      %vm469 = vcmask 64512
      %470 = vst.msk [vmem:[#allocation2] sm:$0xff] %vm469, %v467
      %471 = vst.msk [vmem:[#allocation2 + $0x8] sm:$0xff] %vm469, %v468
      %p472 = scmp.eq.s32.totalorder %s21, 6
      // Predicated region
      $region37: #{resnet_generator_forward.28} parent=31 // pred_check
        %p473 = pneg %p472
      $region38: #{resnet_generator_forward.28} parent=31 // pred_check_branch
        %475 = sbr.rel (%p473) target = $region40
      $region39: #{resnet_generator_forward.28} parent=31 // pred_region
        %v476 = vld [vmem:[#allocation2] sm:$0xff]
        %v477 = vld [vmem:[#allocation2 + $0x8] sm:$0xff]
        %v478 = vld [vmem:[%s2] sm:$0x1]
        %v480 = vperm.slane %v478, 0
        %v482 = vadd.f32 %v476, %v480
        %v483 = vadd.f32 %v477, %v480
        %v484 = vpack.c.bf16 %v482, %v482
        %v485 = vpack.c.bf16 %v483, %v483
        %vm486 = vcmask 60416
        %487 = vst.msk [vmem:[%s220] sm:$0xf] %vm486, %v484
        %488 = vst.msk [vmem:[%s220 + $0x4] sm:$0xf] %vm486, %v485
      $region40: #{resnet_generator_forward.28} parent=31 // pred_fallthru
        _
      %p489 = scmp.lt.s32.totalorder %s19, 1
      %s490 = scalar_select %p489, %s19, 1
      %p491 = scmp.lt.s32.totalorder %s20, 15
      %s492 = scalar_select %p491, %s20, 15
      %s493 = smul.addr %s492, 2
      %s494 = smul.addr %s490, 32
      %s495 = sadd.s32 %s493, %s494
      %s496 = smul.addr %s495, 4
      %s497 = scalar_lea.vmem %s3, %s496
      // Predicated region
      $region41: #{resnet_generator_forward.28} parent=31 // pred_check
        %p498 = pneg %p125
      $region42: #{resnet_generator_forward.28} parent=31 // pred_check_branch
        %500 = sbr.rel (%p498) target = $region44
      $region43: #{resnet_generator_forward.28} parent=31 // pred_region
        _
      $region44: #{resnet_generator_forward.28} parent=31 // pred_fallthru
        _
    $region32: #{resnet_generator_forward.28} parent=5 // pred_fallthru
      _
    %p501 = scmp.le.s32.totalorder 2, %s9
    // Predicated region
    $region45: #{resnet_generator_forward.28} parent=5 // pred_check
      %p502 = pneg %p501
    $region46: #{resnet_generator_forward.28} parent=5 // pred_check_branch
      %504 = sbr.rel (%p502) target = $region48
    $region47: #{resnet_generator_forward.28} parent=5 // pred_region
      %s505 = ssub.s32 %s9, 2
      // Predicated region
      $region49: #{resnet_generator_forward.28} parent=47 // pred_check
        %p506 = pneg %p131
      $region50: #{resnet_generator_forward.28} parent=47 // pred_check_branch
        %508 = sbr.rel (%p506) target = $region52
      $region51: #{resnet_generator_forward.28} parent=47 // pred_region
        %p509 = scmp.lt.s32.totalorder %s22, 1
        %s510 = scalar_select %p509, %s22, 1
        %p511 = scmp.lt.s32.totalorder %s23, 15
        %s512 = scalar_select %p511, %s23, 15
        %s513 = smul.addr %s512, 2
        %s514 = smul.addr %s510, 32
        %s515 = sadd.s32 %s513, %s514
        %s516 = smul.addr %s515, 4
        %s517 = scalar_lea.vmem %s3, %s516
      $region52: #{resnet_generator_forward.28} parent=47 // pred_fallthru
        _
    $region48: #{resnet_generator_forward.28} parent=5 // pred_fallthru
      _
  $region6: #{resnet_generator_forward.28} parent=0 // loop_footer
    %s13 = sadd.s32 1, %s9
  $region7: #{resnet_generator_forward.28} parent=0 // loop_footer_branch
    %8 = sbr.rel target = $region3
  $region8: #{resnet_generator_forward.28} parent=0 // loop_exit
    _

// kernel: resnet_generator_forward.29
$region0: #{resnet_generator_forward.29}
  #allocation0 [shape = 'u32[]', space=smem, size = 0x4, offset = 0x4, fixed_abs, tag = 'smem constant byte address 0x4 - core index']
  #allocation1 [shape = 'u32[72,128]{1,0:T(1,128)}', space=vmem, size = 0x9000, scoped, tag = 'internal scratch']
  %s0 = inlined_call_operand.vmem [shape: bf16[512,8], index: 0, kind: input, shape index: {}]
  %s1 = inlined_call_operand.vmem [shape: f32[1,8], index: 1, kind: output, shape index: {0}]
  %s2 = inlined_call_operand.vmem [shape: f32[1,8], index: 2, kind: output, shape index: {1}]
  %3 = xla_tuple %s1, %s2
  %s4 = sld [smem:[#allocation0]]
  $region26: #{resnet_generator_forward.29} parent=0
    _
  %s6 = ssub.s32 1, %s4
  %s7 = scalar_select 0, %s6, %s4
  // Predicated region
  $region2: #{resnet_generator_forward.29} parent=0 // pred_check
    _
  $region3: #{resnet_generator_forward.29} parent=0 // pred_check_branch
    %9 = sbr.rel (0) target = $region5
  $region4: #{resnet_generator_forward.29} parent=0 // pred_region
    _
  $region5: #{resnet_generator_forward.29} parent=0 // pred_fallthru
    _
  %p10 = scmp.eq.s32.totalorder 0, 0
  // Predicated region
  $region6: #{resnet_generator_forward.29} parent=0 // pred_check
    %p11 = pneg %p10
  $region7: #{resnet_generator_forward.29} parent=0 // pred_check_branch
    %13 = sbr.rel (%p11) target = $region9
  $region8: #{resnet_generator_forward.29} parent=0 // pred_region
    %vm14 = vcmask 57344
    %15 = vst.msk [vmem:[%s1] sm:$0x1] %vm14, 0.0
    %16 = vst.msk [vmem:[%s2] sm:$0x1] %vm14, 0.0
  $region9: #{resnet_generator_forward.29} parent=0 // pred_fallthru
    _
  %v17 = vld [vmem:[%s0] sm:$0xf]
  %v18 = vld [vmem:[%s0 + $0x4] sm:$0xf]
  %v19 = vld [vmem:[%s0 + $0x8] sm:$0xf]
  %v20 = vld [vmem:[%s0 + $0xc] sm:$0xf]
  %v21 = vld [vmem:[%s0 + $0x10] sm:$0xf]
  %v22 = vld [vmem:[%s0 + $0x14] sm:$0xf]
  %v23 = vld [vmem:[%s0 + $0x18] sm:$0xf]
  %v24 = vld [vmem:[%s0 + $0x1c] sm:$0xf]
  %v25 = vld [vmem:[%s0 + $0x20] sm:$0xf]
  %v26 = vld [vmem:[%s0 + $0x24] sm:$0xf]
  %v27 = vld [vmem:[%s0 + $0x28] sm:$0xf]
  %v28 = vld [vmem:[%s0 + $0x2c] sm:$0xf]
  %v29 = vld [vmem:[%s0 + $0x30] sm:$0xf]
  %v30 = vld [vmem:[%s0 + $0x34] sm:$0xf]
  %v31 = vld [vmem:[%s0 + $0x38] sm:$0xf]
  %v32 = vld [vmem:[%s0 + $0x3c] sm:$0xf]
  %v33 = vld [vmem:[%s0 + $0x40] sm:$0xf]
  %v34 = vld [vmem:[%s0 + $0x44] sm:$0xf]
  %v35 = vld [vmem:[%s0 + $0x48] sm:$0xf]
  %v36 = vld [vmem:[%s0 + $0x4c] sm:$0xf]
  %v37 = vld [vmem:[%s0 + $0x50] sm:$0xf]
  %v38 = vld [vmem:[%s0 + $0x54] sm:$0xf]
  %v39 = vld [vmem:[%s0 + $0x58] sm:$0xf]
  %v40 = vld [vmem:[%s0 + $0x5c] sm:$0xf]
  %v41 = vld [vmem:[%s0 + $0x60] sm:$0xf]
  %v42 = vld [vmem:[%s0 + $0x64] sm:$0xf]
  %v43 = vld [vmem:[%s0 + $0x68] sm:$0xf]
  %v44 = vld [vmem:[%s0 + $0x6c] sm:$0xf]
  %v45 = vld [vmem:[%s0 + $0x70] sm:$0xf]
  %v46 = vld [vmem:[%s0 + $0x74] sm:$0xf]
  %v47 = vld [vmem:[%s0 + $0x78] sm:$0xf]
  %v48 = vld [vmem:[%s0 + $0x7c] sm:$0xf]
  %v49 = vld [vmem:[%s0 + $0x80] sm:$0xf]
  %v50 = vld [vmem:[%s0 + $0x84] sm:$0xf]
  %v51 = vld [vmem:[%s0 + $0x88] sm:$0xf]
  %v52 = vld [vmem:[%s0 + $0x8c] sm:$0xf]
  %v53 = vld [vmem:[%s0 + $0x90] sm:$0xf]
  %v54 = vld [vmem:[%s0 + $0x94] sm:$0xf]
  %v55 = vld [vmem:[%s0 + $0x98] sm:$0xf]
  %v56 = vld [vmem:[%s0 + $0x9c] sm:$0xf]
  %v57 = vld [vmem:[%s0 + $0xa0] sm:$0xf]
  %v58 = vld [vmem:[%s0 + $0xa4] sm:$0xf]
  %v59 = vld [vmem:[%s0 + $0xa8] sm:$0xf]
  %v60 = vld [vmem:[%s0 + $0xac] sm:$0xf]
  %v61 = vld [vmem:[%s0 + $0xb0] sm:$0xf]
  %v62 = vld [vmem:[%s0 + $0xb4] sm:$0xf]
  %v63 = vld [vmem:[%s0 + $0xb8] sm:$0xf]
  %v64 = vld [vmem:[%s0 + $0xbc] sm:$0xf]
  %v65 = vld [vmem:[%s0 + $0xc0] sm:$0xf]
  %v66 = vld [vmem:[%s0 + $0xc4] sm:$0xf]
  %v67 = vld [vmem:[%s0 + $0xc8] sm:$0xf]
  %v68 = vld [vmem:[%s0 + $0xcc] sm:$0xf]
  %v69 = vld [vmem:[%s0 + $0xd0] sm:$0xf]
  %v70 = vld [vmem:[%s0 + $0xd4] sm:$0xf]
  %v71 = vld [vmem:[%s0 + $0xd8] sm:$0xf]
  %v72 = vld [vmem:[%s0 + $0xdc] sm:$0xf]
  %v73 = vld [vmem:[%s0 + $0xe0] sm:$0xf]
  %v74 = vld [vmem:[%s0 + $0xe4] sm:$0xf]
  %v75 = vld [vmem:[%s0 + $0xe8] sm:$0xf]
  %v76 = vld [vmem:[%s0 + $0xec] sm:$0xf]
  %v77 = vld [vmem:[%s0 + $0xf0] sm:$0xf]
  %v78 = vld [vmem:[%s0 + $0xf4] sm:$0xf]
  %v79 = vld [vmem:[%s0 + $0xf8] sm:$0xf]
  %v80 = vld [vmem:[%s0 + $0xfc] sm:$0xf]
  %v81 = vunpack.c.l.bf16 %v17
  %v82 = vunpack.c.l.bf16 %v18
  %v83 = vunpack.c.l.bf16 %v19
  %v84 = vunpack.c.l.bf16 %v20
  %v85 = vunpack.c.l.bf16 %v21
  %v86 = vunpack.c.l.bf16 %v22
  %v87 = vunpack.c.l.bf16 %v23
  %v88 = vunpack.c.l.bf16 %v24
  %v89 = vunpack.c.l.bf16 %v25
  %v90 = vunpack.c.l.bf16 %v26
  %v91 = vunpack.c.l.bf16 %v27
  %v92 = vunpack.c.l.bf16 %v28
  %v93 = vunpack.c.l.bf16 %v29
  %v94 = vunpack.c.l.bf16 %v30
  %v95 = vunpack.c.l.bf16 %v31
  %v96 = vunpack.c.l.bf16 %v32
  %v97 = vunpack.c.l.bf16 %v33
  %v98 = vunpack.c.l.bf16 %v34
  %v99 = vunpack.c.l.bf16 %v35
  %v100 = vunpack.c.l.bf16 %v36
  %v101 = vunpack.c.l.bf16 %v37
  %v102 = vunpack.c.l.bf16 %v38
  %v103 = vunpack.c.l.bf16 %v39
  %v104 = vunpack.c.l.bf16 %v40
  %v105 = vunpack.c.l.bf16 %v41
  %v106 = vunpack.c.l.bf16 %v42
  %v107 = vunpack.c.l.bf16 %v43
  %v108 = vunpack.c.l.bf16 %v44
  %v109 = vunpack.c.l.bf16 %v45
  %v110 = vunpack.c.l.bf16 %v46
  %v111 = vunpack.c.l.bf16 %v47
  %v112 = vunpack.c.l.bf16 %v48
  %v113 = vunpack.c.l.bf16 %v49
  %v114 = vunpack.c.l.bf16 %v50
  %v115 = vunpack.c.l.bf16 %v51
  %v116 = vunpack.c.l.bf16 %v52
  %v117 = vunpack.c.l.bf16 %v53
  %v118 = vunpack.c.l.bf16 %v54
  %v119 = vunpack.c.l.bf16 %v55
  %v120 = vunpack.c.l.bf16 %v56
  %v121 = vunpack.c.l.bf16 %v57
  %v122 = vunpack.c.l.bf16 %v58
  %v123 = vunpack.c.l.bf16 %v59
  %v124 = vunpack.c.l.bf16 %v60
  %v125 = vunpack.c.l.bf16 %v61
  %v126 = vunpack.c.l.bf16 %v62
  %v127 = vunpack.c.l.bf16 %v63
  %v128 = vunpack.c.l.bf16 %v64
  %v129 = vunpack.c.l.bf16 %v65
  %v130 = vunpack.c.l.bf16 %v66
  %v131 = vunpack.c.l.bf16 %v67
  %v132 = vunpack.c.l.bf16 %v68
  %v133 = vunpack.c.l.bf16 %v69
  %v134 = vunpack.c.l.bf16 %v70
  %v135 = vunpack.c.l.bf16 %v71
  %v136 = vunpack.c.l.bf16 %v72
  %v137 = vunpack.c.l.bf16 %v73
  %v138 = vunpack.c.l.bf16 %v74
  %v139 = vunpack.c.l.bf16 %v75
  %v140 = vunpack.c.l.bf16 %v76
  %v141 = vunpack.c.l.bf16 %v77
  %v142 = vunpack.c.l.bf16 %v78
  %v143 = vunpack.c.l.bf16 %v79
  %v144 = vunpack.c.l.bf16 %v80
  %v145 = vld [vmem:[%s1] sm:$0x1]
  %vm146 = vcmask 64512
  %v147 = vsel %vm146, %v81, 0.0
  %v148 = vsel %vm146, %v82, 0.0
  %v149 = vadd.f32 %v147, %v148
  %v150 = vsel %vm146, %v83, 0.0
  %v151 = vadd.f32 %v149, %v150
  %v152 = vsel %vm146, %v84, 0.0
  %v153 = vadd.f32 %v151, %v152
  %v154 = vsel %vm146, %v85, 0.0
  %v155 = vadd.f32 %v153, %v154
  %v156 = vsel %vm146, %v86, 0.0
  %v157 = vadd.f32 %v155, %v156
  %v158 = vsel %vm146, %v87, 0.0
  %v159 = vadd.f32 %v157, %v158
  %v160 = vsel %vm146, %v88, 0.0
  %v161 = vadd.f32 %v159, %v160
  %v162 = vsel %vm146, %v89, 0.0
  %v163 = vadd.f32 %v161, %v162
  %v164 = vsel %vm146, %v90, 0.0
  %v165 = vadd.f32 %v163, %v164
  %v166 = vsel %vm146, %v91, 0.0
  %v167 = vadd.f32 %v165, %v166
  %v168 = vsel %vm146, %v92, 0.0
  %v169 = vadd.f32 %v167, %v168
  %v170 = vsel %vm146, %v93, 0.0
  %v171 = vadd.f32 %v169, %v170
  %v172 = vsel %vm146, %v94, 0.0
  %v173 = vadd.f32 %v171, %v172
  %v174 = vsel %vm146, %v95, 0.0
  %v175 = vadd.f32 %v173, %v174
  %v176 = vsel %vm146, %v96, 0.0
  %v177 = vadd.f32 %v175, %v176
  %v178 = vsel %vm146, %v97, 0.0
  %v179 = vadd.f32 %v177, %v178
  %v180 = vsel %vm146, %v98, 0.0
  %v181 = vadd.f32 %v179, %v180
  %v182 = vsel %vm146, %v99, 0.0
  %v183 = vadd.f32 %v181, %v182
  %v184 = vsel %vm146, %v100, 0.0
  %v185 = vadd.f32 %v183, %v184
  %v186 = vsel %vm146, %v101, 0.0
  %v187 = vadd.f32 %v185, %v186
  %v188 = vsel %vm146, %v102, 0.0
  %v189 = vadd.f32 %v187, %v188
  %v190 = vsel %vm146, %v103, 0.0
  %v191 = vadd.f32 %v189, %v190
  %v192 = vsel %vm146, %v104, 0.0
  %v193 = vadd.f32 %v191, %v192
  %v194 = vsel %vm146, %v105, 0.0
  %v195 = vadd.f32 %v193, %v194
  %v196 = vsel %vm146, %v106, 0.0
  %v197 = vadd.f32 %v195, %v196
  %v198 = vsel %vm146, %v107, 0.0
  %v199 = vadd.f32 %v197, %v198
  %v200 = vsel %vm146, %v108, 0.0
  %v201 = vadd.f32 %v199, %v200
  %v202 = vsel %vm146, %v109, 0.0
  %v203 = vadd.f32 %v201, %v202
  %v204 = vsel %vm146, %v110, 0.0
  %v205 = vadd.f32 %v203, %v204
  %v206 = vsel %vm146, %v111, 0.0
  %v207 = vadd.f32 %v205, %v206
  %v208 = vsel %vm146, %v112, 0.0
  %v209 = vadd.f32 %v207, %v208
  %v210 = vsel %vm146, %v113, 0.0
  %v211 = vadd.f32 %v209, %v210
  %v212 = vsel %vm146, %v114, 0.0
  %v213 = vadd.f32 %v211, %v212
  %v214 = vsel %vm146, %v115, 0.0
  %v215 = vadd.f32 %v213, %v214
  %v216 = vsel %vm146, %v116, 0.0
  %v217 = vadd.f32 %v215, %v216
  %v218 = vsel %vm146, %v117, 0.0
  %v219 = vadd.f32 %v217, %v218
  %v220 = vsel %vm146, %v118, 0.0
  %v221 = vadd.f32 %v219, %v220
  %v222 = vsel %vm146, %v119, 0.0
  %v223 = vadd.f32 %v221, %v222
  %v224 = vsel %vm146, %v120, 0.0
  %v225 = vadd.f32 %v223, %v224
  %v226 = vsel %vm146, %v121, 0.0
  %v227 = vadd.f32 %v225, %v226
  %v228 = vsel %vm146, %v122, 0.0
  %v229 = vadd.f32 %v227, %v228
  %v230 = vsel %vm146, %v123, 0.0
  %v231 = vadd.f32 %v229, %v230
  %v232 = vsel %vm146, %v124, 0.0
  %v233 = vadd.f32 %v231, %v232
  %v234 = vsel %vm146, %v125, 0.0
  %v235 = vadd.f32 %v233, %v234
  %v236 = vsel %vm146, %v126, 0.0
  %v237 = vadd.f32 %v235, %v236
  %v238 = vsel %vm146, %v127, 0.0
  %v239 = vadd.f32 %v237, %v238
  %v240 = vsel %vm146, %v128, 0.0
  %v241 = vadd.f32 %v239, %v240
  %v242 = vsel %vm146, %v129, 0.0
  %v243 = vadd.f32 %v241, %v242
  %v244 = vsel %vm146, %v130, 0.0
  %v245 = vadd.f32 %v243, %v244
  %v246 = vsel %vm146, %v131, 0.0
  %v247 = vadd.f32 %v245, %v246
  %v248 = vsel %vm146, %v132, 0.0
  %v249 = vadd.f32 %v247, %v248
  %v250 = vsel %vm146, %v133, 0.0
  %v251 = vadd.f32 %v249, %v250
  %v252 = vsel %vm146, %v134, 0.0
  %v253 = vadd.f32 %v251, %v252
  %v254 = vsel %vm146, %v135, 0.0
  %v255 = vadd.f32 %v253, %v254
  %v256 = vsel %vm146, %v136, 0.0
  %v257 = vadd.f32 %v255, %v256
  %v258 = vsel %vm146, %v137, 0.0
  %v259 = vadd.f32 %v257, %v258
  %v260 = vsel %vm146, %v138, 0.0
  %v261 = vadd.f32 %v259, %v260
  %v262 = vsel %vm146, %v139, 0.0
  %v263 = vadd.f32 %v261, %v262
  %v264 = vsel %vm146, %v140, 0.0
  %v265 = vadd.f32 %v263, %v264
  %v266 = vsel %vm146, %v141, 0.0
  %v267 = vadd.f32 %v265, %v266
  %v268 = vsel %vm146, %v142, 0.0
  %v269 = vadd.f32 %v267, %v268
  %v270 = vsel %vm146, %v143, 0.0
  %v271 = vadd.f32 %v269, %v270
  %v272 = vsel %vm146, %v144, 0.0
  %v273 = vadd.f32 %v271, %v272
  %v274 = vrot.slane %v273, 4
  %v275 = vadd.f32 %v273, %v274
  %v276 = vrot.slane %v275, 2
  %v277 = vadd.f32 %v275, %v276
  %v278 = vrot.slane %v277, 1
  %v279 = vadd.f32 %v277, %v278
  %v280 = vadd.f32 %v145, %v279
  %vm281 = vcmask 57344
  %282 = vst.msk [vmem:[%s1] sm:$0x1] %vm281, %v280
  %v283 = vld [vmem:[%s2] sm:$0x1]
  %v284 = vmul.f32 %v81, %v81
  %v285 = vmul.f32 %v82, %v82
  %v286 = vmul.f32 %v83, %v83
  %v287 = vmul.f32 %v84, %v84
  %v288 = vmul.f32 %v85, %v85
  %v289 = vmul.f32 %v86, %v86
  %v290 = vmul.f32 %v87, %v87
  %v291 = vmul.f32 %v88, %v88
  %v292 = vmul.f32 %v89, %v89
  %v293 = vmul.f32 %v90, %v90
  %v294 = vmul.f32 %v91, %v91
  %v295 = vmul.f32 %v92, %v92
  %v296 = vmul.f32 %v93, %v93
  %v297 = vmul.f32 %v94, %v94
  %v298 = vmul.f32 %v95, %v95
  %v299 = vmul.f32 %v96, %v96
  %v300 = vmul.f32 %v97, %v97
  %v301 = vmul.f32 %v98, %v98
  %v302 = vmul.f32 %v99, %v99
  %v303 = vmul.f32 %v100, %v100
  %v304 = vmul.f32 %v101, %v101
  %v305 = vmul.f32 %v102, %v102
  %v306 = vmul.f32 %v103, %v103
  %v307 = vmul.f32 %v104, %v104
  %v308 = vmul.f32 %v105, %v105
  %v309 = vmul.f32 %v106, %v106
  %v310 = vmul.f32 %v107, %v107
  %v311 = vmul.f32 %v108, %v108
  %v312 = vmul.f32 %v109, %v109
  %v313 = vmul.f32 %v110, %v110
  %v314 = vmul.f32 %v111, %v111
  %v315 = vmul.f32 %v112, %v112
  %v316 = vmul.f32 %v113, %v113
  %v317 = vmul.f32 %v114, %v114
  %v318 = vmul.f32 %v115, %v115
  %v319 = vmul.f32 %v116, %v116
  %v320 = vmul.f32 %v117, %v117
  %v321 = vmul.f32 %v118, %v118
  %v322 = vmul.f32 %v119, %v119
  %v323 = vmul.f32 %v120, %v120
  %v324 = vmul.f32 %v121, %v121
  %v325 = vmul.f32 %v122, %v122
  %v326 = vmul.f32 %v123, %v123
  %v327 = vmul.f32 %v124, %v124
  %v328 = vmul.f32 %v125, %v125
  %v329 = vmul.f32 %v126, %v126
  %v330 = vmul.f32 %v127, %v127
  %v331 = vmul.f32 %v128, %v128
  %v332 = vmul.f32 %v129, %v129
  %v333 = vmul.f32 %v130, %v130
  %v334 = vmul.f32 %v131, %v131
  %v335 = vmul.f32 %v132, %v132
  %v336 = vmul.f32 %v133, %v133
  %v337 = vmul.f32 %v134, %v134
  %v338 = vmul.f32 %v135, %v135
  %v339 = vmul.f32 %v136, %v136
  %v340 = vmul.f32 %v137, %v137
  %v341 = vmul.f32 %v138, %v138
  %v342 = vmul.f32 %v139, %v139
  %v343 = vmul.f32 %v140, %v140
  %v344 = vmul.f32 %v141, %v141
  %v345 = vmul.f32 %v142, %v142
  %v346 = vmul.f32 %v143, %v143
  %v347 = vmul.f32 %v144, %v144
  %v348 = vsel %vm146, %v284, 0.0
  %v349 = vsel %vm146, %v285, 0.0
  %v350 = vadd.f32 %v348, %v349
  %v351 = vsel %vm146, %v286, 0.0
  %v352 = vadd.f32 %v350, %v351
  %v353 = vsel %vm146, %v287, 0.0
  %v354 = vadd.f32 %v352, %v353
  %v355 = vsel %vm146, %v288, 0.0
  %v356 = vadd.f32 %v354, %v355
  %v357 = vsel %vm146, %v289, 0.0
  %v358 = vadd.f32 %v356, %v357
  %v359 = vsel %vm146, %v290, 0.0
  %v360 = vadd.f32 %v358, %v359
  %v361 = vsel %vm146, %v291, 0.0
  %v362 = vadd.f32 %v360, %v361
  %v363 = vsel %vm146, %v292, 0.0
  %v364 = vadd.f32 %v362, %v363
  %v365 = vsel %vm146, %v293, 0.0
  %v366 = vadd.f32 %v364, %v365
  %v367 = vsel %vm146, %v294, 0.0
  %v368 = vadd.f32 %v366, %v367
  %v369 = vsel %vm146, %v295, 0.0
  %v370 = vadd.f32 %v368, %v369
  %v371 = vsel %vm146, %v296, 0.0
  %v372 = vadd.f32 %v370, %v371
  %v373 = vsel %vm146, %v297, 0.0
  %v374 = vadd.f32 %v372, %v373
  %v375 = vsel %vm146, %v298, 0.0
  %v376 = vadd.f32 %v374, %v375
  %v377 = vsel %vm146, %v299, 0.0
  %v378 = vadd.f32 %v376, %v377
  %v379 = vsel %vm146, %v300, 0.0
  %v380 = vadd.f32 %v378, %v379
  %v381 = vsel %vm146, %v301, 0.0
  %v382 = vadd.f32 %v380, %v381
  %v383 = vsel %vm146, %v302, 0.0
  %v384 = vadd.f32 %v382, %v383
  %v385 = vsel %vm146, %v303, 0.0
  %v386 = vadd.f32 %v384, %v385
  %v387 = vsel %vm146, %v304, 0.0
  %v388 = vadd.f32 %v386, %v387
  %v389 = vsel %vm146, %v305, 0.0
  %v390 = vadd.f32 %v388, %v389
  %v391 = vsel %vm146, %v306, 0.0
  %v392 = vadd.f32 %v390, %v391
  %v393 = vsel %vm146, %v307, 0.0
  %v394 = vadd.f32 %v392, %v393
  %v395 = vsel %vm146, %v308, 0.0
  %v396 = vadd.f32 %v394, %v395
  %v397 = vsel %vm146, %v309, 0.0
  %v398 = vadd.f32 %v396, %v397
  %v399 = vsel %vm146, %v310, 0.0
  %v400 = vadd.f32 %v398, %v399
  %v401 = vsel %vm146, %v311, 0.0
  %v402 = vadd.f32 %v400, %v401
  %v403 = vsel %vm146, %v312, 0.0
  %v404 = vadd.f32 %v402, %v403
  %v405 = vsel %vm146, %v313, 0.0
  %v406 = vadd.f32 %v404, %v405
  %v407 = vsel %vm146, %v314, 0.0
  %v408 = vadd.f32 %v406, %v407
  %v409 = vsel %vm146, %v315, 0.0
  %v410 = vadd.f32 %v408, %v409
  %v411 = vsel %vm146, %v316, 0.0
  %v412 = vadd.f32 %v410, %v411
  %v413 = vsel %vm146, %v317, 0.0
  %v414 = vadd.f32 %v412, %v413
  %v415 = vsel %vm146, %v318, 0.0
  %v416 = vadd.f32 %v414, %v415
  %v417 = vsel %vm146, %v319, 0.0
  %v418 = vadd.f32 %v416, %v417
  %v419 = vsel %vm146, %v320, 0.0
  %v420 = vadd.f32 %v418, %v419
  %v421 = vsel %vm146, %v321, 0.0
  %v422 = vadd.f32 %v420, %v421
  %v423 = vsel %vm146, %v322, 0.0
  %v424 = vadd.f32 %v422, %v423
  %v425 = vsel %vm146, %v323, 0.0
  %v426 = vadd.f32 %v424, %v425
  %v427 = vsel %vm146, %v324, 0.0
  %v428 = vadd.f32 %v426, %v427
  %v429 = vsel %vm146, %v325, 0.0
  %v430 = vadd.f32 %v428, %v429
  %v431 = vsel %vm146, %v326, 0.0
  %v432 = vadd.f32 %v430, %v431
  %v433 = vsel %vm146, %v327, 0.0
  %v434 = vadd.f32 %v432, %v433
  %v435 = vsel %vm146, %v328, 0.0
  %v436 = vadd.f32 %v434, %v435
  %v437 = vsel %vm146, %v329, 0.0
  %v438 = vadd.f32 %v436, %v437
  %v439 = vsel %vm146, %v330, 0.0
  %v440 = vadd.f32 %v438, %v439
  %v441 = vsel %vm146, %v331, 0.0
  %v442 = vadd.f32 %v440, %v441
  %v443 = vsel %vm146, %v332, 0.0
  %v444 = vadd.f32 %v442, %v443
  %v445 = vsel %vm146, %v333, 0.0
  %v446 = vadd.f32 %v444, %v445
  %v447 = vsel %vm146, %v334, 0.0
  %v448 = vadd.f32 %v446, %v447
  %v449 = vsel %vm146, %v335, 0.0
  %v450 = vadd.f32 %v448, %v449
  %v451 = vsel %vm146, %v336, 0.0
  %v452 = vadd.f32 %v450, %v451
  %v453 = vsel %vm146, %v337, 0.0
  %v454 = vadd.f32 %v452, %v453
  %v455 = vsel %vm146, %v338, 0.0
  %v456 = vadd.f32 %v454, %v455
  %v457 = vsel %vm146, %v339, 0.0
  %v458 = vadd.f32 %v456, %v457
  %v459 = vsel %vm146, %v340, 0.0
  %v460 = vadd.f32 %v458, %v459
  %v461 = vsel %vm146, %v341, 0.0
  %v462 = vadd.f32 %v460, %v461
  %v463 = vsel %vm146, %v342, 0.0
  %v464 = vadd.f32 %v462, %v463
  %v465 = vsel %vm146, %v343, 0.0
  %v466 = vadd.f32 %v464, %v465
  %v467 = vsel %vm146, %v344, 0.0
  %v468 = vadd.f32 %v466, %v467
  %v469 = vsel %vm146, %v345, 0.0
  %v470 = vadd.f32 %v468, %v469
  %v471 = vsel %vm146, %v346, 0.0
  %v472 = vadd.f32 %v470, %v471
  %v473 = vsel %vm146, %v347, 0.0
  %v474 = vadd.f32 %v472, %v473
  %v475 = vrot.slane %v474, 4
  %v476 = vadd.f32 %v474, %v475
  %v477 = vrot.slane %v476, 2
  %v478 = vadd.f32 %v476, %v477
  %v479 = vrot.slane %v478, 1
  %v480 = vadd.f32 %v478, %v479
  %v481 = vadd.f32 %v283, %v480
  %482 = vst.msk [vmem:[%s2] sm:$0x1] %vm281, %v481
  // Predicated region
  $region10: #{resnet_generator_forward.29} parent=0 // pred_check
    _
  $region11: #{resnet_generator_forward.29} parent=0 // pred_check_branch
    %484 = sbr.rel (0) target = $region13
  $region12: #{resnet_generator_forward.29} parent=0 // pred_region
    _
  $region13: #{resnet_generator_forward.29} parent=0 // pred_fallthru
    _
  // Predicated region
  $region14: #{resnet_generator_forward.29} parent=0 // pred_check
    _
  $region15: #{resnet_generator_forward.29} parent=0 // pred_check_branch
    %486 = sbr.rel (0) target = $region17
  $region16: #{resnet_generator_forward.29} parent=0 // pred_region
    _
  $region17: #{resnet_generator_forward.29} parent=0 // pred_fallthru
    _
  // Predicated region
  $region18: #{resnet_generator_forward.29} parent=0 // pred_check
    _
  $region19: #{resnet_generator_forward.29} parent=0 // pred_check_branch
    %488 = sbr.rel (0) target = $region21
  $region20: #{resnet_generator_forward.29} parent=0 // pred_region
    _
  $region21: #{resnet_generator_forward.29} parent=0 // pred_fallthru
    _
  // Predicated region
  $region22: #{resnet_generator_forward.29} parent=0 // pred_check
    _
  $region23: #{resnet_generator_forward.29} parent=0 // pred_check_branch
    %490 = sbr.rel (0) target = $region25
  $region24: #{resnet_generator_forward.29} parent=0 // pred_region
    _
  $region25: #{resnet_generator_forward.29} parent=0 // pred_fallthru
    _

// kernel: resnet_generator_forward.30
$region0: #{resnet_generator_forward.30}
  #allocation0 [shape = 'u32[]', space=smem, size = 0x4, offset = 0x4, fixed_abs, tag = 'smem constant byte address 0x4 - core index']
  #allocation1 [shape = 'u32[72,128]{1,0:T(1,128)}', space=vmem, size = 0x9000, scoped, tag = 'internal scratch']
  %s0 = inlined_call_operand.vmem [shape: bf16[512,8], index: 0, kind: input, shape index: {}]
  %s1 = inlined_call_operand.vmem [shape: f32[1,8], index: 1, kind: input, shape index: {}]
  %s2 = inlined_call_operand.vmem [shape: f32[1,8], index: 2, kind: input, shape index: {}]
  %s3 = inlined_call_operand.vmem [shape: f32[1,8], index: 3, kind: input, shape index: {}]
  %s4 = inlined_call_operand.vmem [shape: f32[1,8], index: 4, kind: input, shape index: {}]
  %s5 = inlined_call_operand.vmem [shape: bf16[512,8], index: 5, kind: output, shape index: {}]
  %s6 = sld [smem:[#allocation0]]
  $region30: #{resnet_generator_forward.30} parent=0
    _
  %s8 = ssub.s32 1, %s6
  %s9 = scalar_select 0, %s8, %s6
  // Predicated region
  $region2: #{resnet_generator_forward.30} parent=0 // pred_check
    _
  $region3: #{resnet_generator_forward.30} parent=0 // pred_check_branch
    %11 = sbr.rel (0) target = $region5
  $region4: #{resnet_generator_forward.30} parent=0 // pred_region
    _
  $region5: #{resnet_generator_forward.30} parent=0 // pred_fallthru
    _
  // Predicated region
  $region6: #{resnet_generator_forward.30} parent=0 // pred_check
    _
  $region7: #{resnet_generator_forward.30} parent=0 // pred_check_branch
    %13 = sbr.rel (0) target = $region9
  $region8: #{resnet_generator_forward.30} parent=0 // pred_region
    _
  $region9: #{resnet_generator_forward.30} parent=0 // pred_fallthru
    _
  // Predicated region
  $region10: #{resnet_generator_forward.30} parent=0 // pred_check
    _
  $region11: #{resnet_generator_forward.30} parent=0 // pred_check_branch
    %15 = sbr.rel (0) target = $region13
  $region12: #{resnet_generator_forward.30} parent=0 // pred_region
    _
  $region13: #{resnet_generator_forward.30} parent=0 // pred_fallthru
    _
  // Predicated region
  $region14: #{resnet_generator_forward.30} parent=0 // pred_check
    _
  $region15: #{resnet_generator_forward.30} parent=0 // pred_check_branch
    %17 = sbr.rel (0) target = $region17
  $region16: #{resnet_generator_forward.30} parent=0 // pred_region
    _
  $region17: #{resnet_generator_forward.30} parent=0 // pred_fallthru
    _
  // Predicated region
  $region18: #{resnet_generator_forward.30} parent=0 // pred_check
    _
  $region19: #{resnet_generator_forward.30} parent=0 // pred_check_branch
    %19 = sbr.rel (0) target = $region21
  $region20: #{resnet_generator_forward.30} parent=0 // pred_region
    _
  $region21: #{resnet_generator_forward.30} parent=0 // pred_fallthru
    _
  %v20 = vld [vmem:[%s1] sm:$0x1]
  %v21 = vmul.f32 %v20, 0.001953125
  %v22 = vld [vmem:[%s2] sm:$0x1]
  %v23 = vmul.f32 %v22, 0.001953125
  %v24 = vmul.f32 %v21, %v21
  %v25 = vsub.f32 %v23, %v24
  %v26 = vmax.f32 %v25, 0.0
  %v27 = vld [vmem:[%s3] sm:$0x1]
  %v28 = vadd.f32 %v26, 1e-05
  %v29 = vrsqrt.pop %v28
  %v30 = vmul.f32 %v29, %v28
  %v31 = vmul.f32 %v30, %v29
  %v32 = vmul.f32 0.5, %v31
  %v33 = vsub.f32 1.5, %v32
  %v34 = vmul.f32 %v29, %v33
  %vm35 = vweird.f32 %v28
  %vm36 = vweird.f32 %v29
  %vm37 = vmor %vm35, %vm36
  %v38 = vsel %vm37, %v29, %v34
  %v39 = vmul.f32 %v27, %v38
  %v40 = vld [vmem:[%s4] sm:$0x1]
  %v41 = vmul.f32 %v21, %v39
  %v42 = vsub.f32 %v40, %v41
  %v43 = vld [vmem:[%s0] sm:$0xf]
  %v44 = vld [vmem:[%s0 + $0x4] sm:$0xf]
  %v45 = vld [vmem:[%s0 + $0x8] sm:$0xf]
  %v46 = vld [vmem:[%s0 + $0xc] sm:$0xf]
  %v47 = vld [vmem:[%s0 + $0x10] sm:$0xf]
  %v48 = vld [vmem:[%s0 + $0x14] sm:$0xf]
  %v49 = vld [vmem:[%s0 + $0x18] sm:$0xf]
  %v50 = vld [vmem:[%s0 + $0x1c] sm:$0xf]
  %v51 = vld [vmem:[%s0 + $0x20] sm:$0xf]
  %v52 = vld [vmem:[%s0 + $0x24] sm:$0xf]
  %v53 = vld [vmem:[%s0 + $0x28] sm:$0xf]
  %v54 = vld [vmem:[%s0 + $0x2c] sm:$0xf]
  %v55 = vld [vmem:[%s0 + $0x30] sm:$0xf]
  %v56 = vld [vmem:[%s0 + $0x34] sm:$0xf]
  %v57 = vld [vmem:[%s0 + $0x38] sm:$0xf]
  %v58 = vld [vmem:[%s0 + $0x3c] sm:$0xf]
  %v59 = vld [vmem:[%s0 + $0x40] sm:$0xf]
  %v60 = vld [vmem:[%s0 + $0x44] sm:$0xf]
  %v61 = vld [vmem:[%s0 + $0x48] sm:$0xf]
  %v62 = vld [vmem:[%s0 + $0x4c] sm:$0xf]
  %v63 = vld [vmem:[%s0 + $0x50] sm:$0xf]
  %v64 = vld [vmem:[%s0 + $0x54] sm:$0xf]
  %v65 = vld [vmem:[%s0 + $0x58] sm:$0xf]
  %v66 = vld [vmem:[%s0 + $0x5c] sm:$0xf]
  %v67 = vld [vmem:[%s0 + $0x60] sm:$0xf]
  %v68 = vld [vmem:[%s0 + $0x64] sm:$0xf]
  %v69 = vld [vmem:[%s0 + $0x68] sm:$0xf]
  %v70 = vld [vmem:[%s0 + $0x6c] sm:$0xf]
  %v71 = vld [vmem:[%s0 + $0x70] sm:$0xf]
  %v72 = vld [vmem:[%s0 + $0x74] sm:$0xf]
  %v73 = vld [vmem:[%s0 + $0x78] sm:$0xf]
  %v74 = vld [vmem:[%s0 + $0x7c] sm:$0xf]
  %v75 = vld [vmem:[%s0 + $0x80] sm:$0xf]
  %v76 = vld [vmem:[%s0 + $0x84] sm:$0xf]
  %v77 = vld [vmem:[%s0 + $0x88] sm:$0xf]
  %v78 = vld [vmem:[%s0 + $0x8c] sm:$0xf]
  %v79 = vld [vmem:[%s0 + $0x90] sm:$0xf]
  %v80 = vld [vmem:[%s0 + $0x94] sm:$0xf]
  %v81 = vld [vmem:[%s0 + $0x98] sm:$0xf]
  %v82 = vld [vmem:[%s0 + $0x9c] sm:$0xf]
  %v83 = vld [vmem:[%s0 + $0xa0] sm:$0xf]
  %v84 = vld [vmem:[%s0 + $0xa4] sm:$0xf]
  %v85 = vld [vmem:[%s0 + $0xa8] sm:$0xf]
  %v86 = vld [vmem:[%s0 + $0xac] sm:$0xf]
  %v87 = vld [vmem:[%s0 + $0xb0] sm:$0xf]
  %v88 = vld [vmem:[%s0 + $0xb4] sm:$0xf]
  %v89 = vld [vmem:[%s0 + $0xb8] sm:$0xf]
  %v90 = vld [vmem:[%s0 + $0xbc] sm:$0xf]
  %v91 = vld [vmem:[%s0 + $0xc0] sm:$0xf]
  %v92 = vld [vmem:[%s0 + $0xc4] sm:$0xf]
  %v93 = vld [vmem:[%s0 + $0xc8] sm:$0xf]
  %v94 = vld [vmem:[%s0 + $0xcc] sm:$0xf]
  %v95 = vld [vmem:[%s0 + $0xd0] sm:$0xf]
  %v96 = vld [vmem:[%s0 + $0xd4] sm:$0xf]
  %v97 = vld [vmem:[%s0 + $0xd8] sm:$0xf]
  %v98 = vld [vmem:[%s0 + $0xdc] sm:$0xf]
  %v99 = vld [vmem:[%s0 + $0xe0] sm:$0xf]
  %v100 = vld [vmem:[%s0 + $0xe4] sm:$0xf]
  %v101 = vld [vmem:[%s0 + $0xe8] sm:$0xf]
  %v102 = vld [vmem:[%s0 + $0xec] sm:$0xf]
  %v103 = vld [vmem:[%s0 + $0xf0] sm:$0xf]
  %v104 = vld [vmem:[%s0 + $0xf4] sm:$0xf]
  %v105 = vld [vmem:[%s0 + $0xf8] sm:$0xf]
  %v106 = vld [vmem:[%s0 + $0xfc] sm:$0xf]
  %v107 = vunpack.c.l.bf16 %v43
  %v108 = vunpack.c.l.bf16 %v44
  %v109 = vunpack.c.l.bf16 %v45
  %v110 = vunpack.c.l.bf16 %v46
  %v111 = vunpack.c.l.bf16 %v47
  %v112 = vunpack.c.l.bf16 %v48
  %v113 = vunpack.c.l.bf16 %v49
  %v114 = vunpack.c.l.bf16 %v50
  %v115 = vunpack.c.l.bf16 %v51
  %v116 = vunpack.c.l.bf16 %v52
  %v117 = vunpack.c.l.bf16 %v53
  %v118 = vunpack.c.l.bf16 %v54
  %v119 = vunpack.c.l.bf16 %v55
  %v120 = vunpack.c.l.bf16 %v56
  %v121 = vunpack.c.l.bf16 %v57
  %v122 = vunpack.c.l.bf16 %v58
  %v123 = vunpack.c.l.bf16 %v59
  %v124 = vunpack.c.l.bf16 %v60
  %v125 = vunpack.c.l.bf16 %v61
  %v126 = vunpack.c.l.bf16 %v62
  %v127 = vunpack.c.l.bf16 %v63
  %v128 = vunpack.c.l.bf16 %v64
  %v129 = vunpack.c.l.bf16 %v65
  %v130 = vunpack.c.l.bf16 %v66
  %v131 = vunpack.c.l.bf16 %v67
  %v132 = vunpack.c.l.bf16 %v68
  %v133 = vunpack.c.l.bf16 %v69
  %v134 = vunpack.c.l.bf16 %v70
  %v135 = vunpack.c.l.bf16 %v71
  %v136 = vunpack.c.l.bf16 %v72
  %v137 = vunpack.c.l.bf16 %v73
  %v138 = vunpack.c.l.bf16 %v74
  %v139 = vunpack.c.l.bf16 %v75
  %v140 = vunpack.c.l.bf16 %v76
  %v141 = vunpack.c.l.bf16 %v77
  %v142 = vunpack.c.l.bf16 %v78
  %v143 = vunpack.c.l.bf16 %v79
  %v144 = vunpack.c.l.bf16 %v80
  %v145 = vunpack.c.l.bf16 %v81
  %v146 = vunpack.c.l.bf16 %v82
  %v147 = vunpack.c.l.bf16 %v83
  %v148 = vunpack.c.l.bf16 %v84
  %v149 = vunpack.c.l.bf16 %v85
  %v150 = vunpack.c.l.bf16 %v86
  %v151 = vunpack.c.l.bf16 %v87
  %v152 = vunpack.c.l.bf16 %v88
  %v153 = vunpack.c.l.bf16 %v89
  %v154 = vunpack.c.l.bf16 %v90
  %v155 = vunpack.c.l.bf16 %v91
  %v156 = vunpack.c.l.bf16 %v92
  %v157 = vunpack.c.l.bf16 %v93
  %v158 = vunpack.c.l.bf16 %v94
  %v159 = vunpack.c.l.bf16 %v95
  %v160 = vunpack.c.l.bf16 %v96
  %v161 = vunpack.c.l.bf16 %v97
  %v162 = vunpack.c.l.bf16 %v98
  %v163 = vunpack.c.l.bf16 %v99
  %v164 = vunpack.c.l.bf16 %v100
  %v165 = vunpack.c.l.bf16 %v101
  %v166 = vunpack.c.l.bf16 %v102
  %v167 = vunpack.c.l.bf16 %v103
  %v168 = vunpack.c.l.bf16 %v104
  %v169 = vunpack.c.l.bf16 %v105
  %v170 = vunpack.c.l.bf16 %v106
  %v172 = vperm.slane %v39, 0
  %v174 = vmul.f32 %v107, %v172
  %v175 = vmul.f32 %v108, %v172
  %v176 = vmul.f32 %v109, %v172
  %v177 = vmul.f32 %v110, %v172
  %v178 = vmul.f32 %v111, %v172
  %v179 = vmul.f32 %v112, %v172
  %v180 = vmul.f32 %v113, %v172
  %v181 = vmul.f32 %v114, %v172
  %v182 = vmul.f32 %v115, %v172
  %v183 = vmul.f32 %v116, %v172
  %v184 = vmul.f32 %v117, %v172
  %v185 = vmul.f32 %v118, %v172
  %v186 = vmul.f32 %v119, %v172
  %v187 = vmul.f32 %v120, %v172
  %v188 = vmul.f32 %v121, %v172
  %v189 = vmul.f32 %v122, %v172
  %v190 = vmul.f32 %v123, %v172
  %v191 = vmul.f32 %v124, %v172
  %v192 = vmul.f32 %v125, %v172
  %v193 = vmul.f32 %v126, %v172
  %v194 = vmul.f32 %v127, %v172
  %v195 = vmul.f32 %v128, %v172
  %v196 = vmul.f32 %v129, %v172
  %v197 = vmul.f32 %v130, %v172
  %v198 = vmul.f32 %v131, %v172
  %v199 = vmul.f32 %v132, %v172
  %v200 = vmul.f32 %v133, %v172
  %v201 = vmul.f32 %v134, %v172
  %v202 = vmul.f32 %v135, %v172
  %v203 = vmul.f32 %v136, %v172
  %v204 = vmul.f32 %v137, %v172
  %v205 = vmul.f32 %v138, %v172
  %v206 = vmul.f32 %v139, %v172
  %v207 = vmul.f32 %v140, %v172
  %v208 = vmul.f32 %v141, %v172
  %v209 = vmul.f32 %v142, %v172
  %v210 = vmul.f32 %v143, %v172
  %v211 = vmul.f32 %v144, %v172
  %v212 = vmul.f32 %v145, %v172
  %v213 = vmul.f32 %v146, %v172
  %v214 = vmul.f32 %v147, %v172
  %v215 = vmul.f32 %v148, %v172
  %v216 = vmul.f32 %v149, %v172
  %v217 = vmul.f32 %v150, %v172
  %v218 = vmul.f32 %v151, %v172
  %v219 = vmul.f32 %v152, %v172
  %v220 = vmul.f32 %v153, %v172
  %v221 = vmul.f32 %v154, %v172
  %v222 = vmul.f32 %v155, %v172
  %v223 = vmul.f32 %v156, %v172
  %v224 = vmul.f32 %v157, %v172
  %v225 = vmul.f32 %v158, %v172
  %v226 = vmul.f32 %v159, %v172
  %v227 = vmul.f32 %v160, %v172
  %v228 = vmul.f32 %v161, %v172
  %v229 = vmul.f32 %v162, %v172
  %v230 = vmul.f32 %v163, %v172
  %v231 = vmul.f32 %v164, %v172
  %v232 = vmul.f32 %v165, %v172
  %v233 = vmul.f32 %v166, %v172
  %v234 = vmul.f32 %v167, %v172
  %v235 = vmul.f32 %v168, %v172
  %v236 = vmul.f32 %v169, %v172
  %v237 = vmul.f32 %v170, %v172
  %v239 = vperm.slane %v42, 0
  %v241 = vadd.f32 %v174, %v239
  %v242 = vadd.f32 %v175, %v239
  %v243 = vadd.f32 %v176, %v239
  %v244 = vadd.f32 %v177, %v239
  %v245 = vadd.f32 %v178, %v239
  %v246 = vadd.f32 %v179, %v239
  %v247 = vadd.f32 %v180, %v239
  %v248 = vadd.f32 %v181, %v239
  %v249 = vadd.f32 %v182, %v239
  %v250 = vadd.f32 %v183, %v239
  %v251 = vadd.f32 %v184, %v239
  %v252 = vadd.f32 %v185, %v239
  %v253 = vadd.f32 %v186, %v239
  %v254 = vadd.f32 %v187, %v239
  %v255 = vadd.f32 %v188, %v239
  %v256 = vadd.f32 %v189, %v239
  %v257 = vadd.f32 %v190, %v239
  %v258 = vadd.f32 %v191, %v239
  %v259 = vadd.f32 %v192, %v239
  %v260 = vadd.f32 %v193, %v239
  %v261 = vadd.f32 %v194, %v239
  %v262 = vadd.f32 %v195, %v239
  %v263 = vadd.f32 %v196, %v239
  %v264 = vadd.f32 %v197, %v239
  %v265 = vadd.f32 %v198, %v239
  %v266 = vadd.f32 %v199, %v239
  %v267 = vadd.f32 %v200, %v239
  %v268 = vadd.f32 %v201, %v239
  %v269 = vadd.f32 %v202, %v239
  %v270 = vadd.f32 %v203, %v239
  %v271 = vadd.f32 %v204, %v239
  %v272 = vadd.f32 %v205, %v239
  %v273 = vadd.f32 %v206, %v239
  %v274 = vadd.f32 %v207, %v239
  %v275 = vadd.f32 %v208, %v239
  %v276 = vadd.f32 %v209, %v239
  %v277 = vadd.f32 %v210, %v239
  %v278 = vadd.f32 %v211, %v239
  %v279 = vadd.f32 %v212, %v239
  %v280 = vadd.f32 %v213, %v239
  %v281 = vadd.f32 %v214, %v239
  %v282 = vadd.f32 %v215, %v239
  %v283 = vadd.f32 %v216, %v239
  %v284 = vadd.f32 %v217, %v239
  %v285 = vadd.f32 %v218, %v239
  %v286 = vadd.f32 %v219, %v239
  %v287 = vadd.f32 %v220, %v239
  %v288 = vadd.f32 %v221, %v239
  %v289 = vadd.f32 %v222, %v239
  %v290 = vadd.f32 %v223, %v239
  %v291 = vadd.f32 %v224, %v239
  %v292 = vadd.f32 %v225, %v239
  %v293 = vadd.f32 %v226, %v239
  %v294 = vadd.f32 %v227, %v239
  %v295 = vadd.f32 %v228, %v239
  %v296 = vadd.f32 %v229, %v239
  %v297 = vadd.f32 %v230, %v239
  %v298 = vadd.f32 %v231, %v239
  %v299 = vadd.f32 %v232, %v239
  %v300 = vadd.f32 %v233, %v239
  %v301 = vadd.f32 %v234, %v239
  %v302 = vadd.f32 %v235, %v239
  %v303 = vadd.f32 %v236, %v239
  %v304 = vadd.f32 %v237, %v239
  %v305 = vmax.f32 %v241, 0.0
  %v306 = vmax.f32 %v242, 0.0
  %v307 = vmax.f32 %v243, 0.0
  %v308 = vmax.f32 %v244, 0.0
  %v309 = vmax.f32 %v245, 0.0
  %v310 = vmax.f32 %v246, 0.0
  %v311 = vmax.f32 %v247, 0.0
  %v312 = vmax.f32 %v248, 0.0
  %v313 = vmax.f32 %v249, 0.0
  %v314 = vmax.f32 %v250, 0.0
  %v315 = vmax.f32 %v251, 0.0
  %v316 = vmax.f32 %v252, 0.0
  %v317 = vmax.f32 %v253, 0.0
  %v318 = vmax.f32 %v254, 0.0
  %v319 = vmax.f32 %v255, 0.0
  %v320 = vmax.f32 %v256, 0.0
  %v321 = vmax.f32 %v257, 0.0
  %v322 = vmax.f32 %v258, 0.0
  %v323 = vmax.f32 %v259, 0.0
  %v324 = vmax.f32 %v260, 0.0
  %v325 = vmax.f32 %v261, 0.0
  %v326 = vmax.f32 %v262, 0.0
  %v327 = vmax.f32 %v263, 0.0
  %v328 = vmax.f32 %v264, 0.0
  %v329 = vmax.f32 %v265, 0.0
  %v330 = vmax.f32 %v266, 0.0
  %v331 = vmax.f32 %v267, 0.0
  %v332 = vmax.f32 %v268, 0.0
  %v333 = vmax.f32 %v269, 0.0
  %v334 = vmax.f32 %v270, 0.0
  %v335 = vmax.f32 %v271, 0.0
  %v336 = vmax.f32 %v272, 0.0
  %v337 = vmax.f32 %v273, 0.0
  %v338 = vmax.f32 %v274, 0.0
  %v339 = vmax.f32 %v275, 0.0
  %v340 = vmax.f32 %v276, 0.0
  %v341 = vmax.f32 %v277, 0.0
  %v342 = vmax.f32 %v278, 0.0
  %v343 = vmax.f32 %v279, 0.0
  %v344 = vmax.f32 %v280, 0.0
  %v345 = vmax.f32 %v281, 0.0
  %v346 = vmax.f32 %v282, 0.0
  %v347 = vmax.f32 %v283, 0.0
  %v348 = vmax.f32 %v284, 0.0
  %v349 = vmax.f32 %v285, 0.0
  %v350 = vmax.f32 %v286, 0.0
  %v351 = vmax.f32 %v287, 0.0
  %v352 = vmax.f32 %v288, 0.0
  %v353 = vmax.f32 %v289, 0.0
  %v354 = vmax.f32 %v290, 0.0
  %v355 = vmax.f32 %v291, 0.0
  %v356 = vmax.f32 %v292, 0.0
  %v357 = vmax.f32 %v293, 0.0
  %v358 = vmax.f32 %v294, 0.0
  %v359 = vmax.f32 %v295, 0.0
  %v360 = vmax.f32 %v296, 0.0
  %v361 = vmax.f32 %v297, 0.0
  %v362 = vmax.f32 %v298, 0.0
  %v363 = vmax.f32 %v299, 0.0
  %v364 = vmax.f32 %v300, 0.0
  %v365 = vmax.f32 %v301, 0.0
  %v366 = vmax.f32 %v302, 0.0
  %v367 = vmax.f32 %v303, 0.0
  %v368 = vmax.f32 %v304, 0.0
  %v369 = vpack.c.bf16 %v305, %v305
  %v370 = vpack.c.bf16 %v306, %v306
  %v371 = vpack.c.bf16 %v307, %v307
  %v372 = vpack.c.bf16 %v308, %v308
  %v373 = vpack.c.bf16 %v309, %v309
  %v374 = vpack.c.bf16 %v310, %v310
  %v375 = vpack.c.bf16 %v311, %v311
  %v376 = vpack.c.bf16 %v312, %v312
  %v377 = vpack.c.bf16 %v313, %v313
  %v378 = vpack.c.bf16 %v314, %v314
  %v379 = vpack.c.bf16 %v315, %v315
  %v380 = vpack.c.bf16 %v316, %v316
  %v381 = vpack.c.bf16 %v317, %v317
  %v382 = vpack.c.bf16 %v318, %v318
  %v383 = vpack.c.bf16 %v319, %v319
  %v384 = vpack.c.bf16 %v320, %v320
  %v385 = vpack.c.bf16 %v321, %v321
  %v386 = vpack.c.bf16 %v322, %v322
  %v387 = vpack.c.bf16 %v323, %v323
  %v388 = vpack.c.bf16 %v324, %v324
  %v389 = vpack.c.bf16 %v325, %v325
  %v390 = vpack.c.bf16 %v326, %v326
  %v391 = vpack.c.bf16 %v327, %v327
  %v392 = vpack.c.bf16 %v328, %v328
  %v393 = vpack.c.bf16 %v329, %v329
  %v394 = vpack.c.bf16 %v330, %v330
  %v395 = vpack.c.bf16 %v331, %v331
  %v396 = vpack.c.bf16 %v332, %v332
  %v397 = vpack.c.bf16 %v333, %v333
  %v398 = vpack.c.bf16 %v334, %v334
  %v399 = vpack.c.bf16 %v335, %v335
  %v400 = vpack.c.bf16 %v336, %v336
  %v401 = vpack.c.bf16 %v337, %v337
  %v402 = vpack.c.bf16 %v338, %v338
  %v403 = vpack.c.bf16 %v339, %v339
  %v404 = vpack.c.bf16 %v340, %v340
  %v405 = vpack.c.bf16 %v341, %v341
  %v406 = vpack.c.bf16 %v342, %v342
  %v407 = vpack.c.bf16 %v343, %v343
  %v408 = vpack.c.bf16 %v344, %v344
  %v409 = vpack.c.bf16 %v345, %v345
  %v410 = vpack.c.bf16 %v346, %v346
  %v411 = vpack.c.bf16 %v347, %v347
  %v412 = vpack.c.bf16 %v348, %v348
  %v413 = vpack.c.bf16 %v349, %v349
  %v414 = vpack.c.bf16 %v350, %v350
  %v415 = vpack.c.bf16 %v351, %v351
  %v416 = vpack.c.bf16 %v352, %v352
  %v417 = vpack.c.bf16 %v353, %v353
  %v418 = vpack.c.bf16 %v354, %v354
  %v419 = vpack.c.bf16 %v355, %v355
  %v420 = vpack.c.bf16 %v356, %v356
  %v421 = vpack.c.bf16 %v357, %v357
  %v422 = vpack.c.bf16 %v358, %v358
  %v423 = vpack.c.bf16 %v359, %v359
  %v424 = vpack.c.bf16 %v360, %v360
  %v425 = vpack.c.bf16 %v361, %v361
  %v426 = vpack.c.bf16 %v362, %v362
  %v427 = vpack.c.bf16 %v363, %v363
  %v428 = vpack.c.bf16 %v364, %v364
  %v429 = vpack.c.bf16 %v365, %v365
  %v430 = vpack.c.bf16 %v366, %v366
  %v431 = vpack.c.bf16 %v367, %v367
  %v432 = vpack.c.bf16 %v368, %v368
  %vm433 = vcmask 60416
  %434 = vst.msk [vmem:[%s5] sm:$0xf] %vm433, %v369
  %435 = vst.msk [vmem:[%s5 + $0x4] sm:$0xf] %vm433, %v370
  %436 = vst.msk [vmem:[%s5 + $0x8] sm:$0xf] %vm433, %v371
  %437 = vst.msk [vmem:[%s5 + $0xc] sm:$0xf] %vm433, %v372
  %438 = vst.msk [vmem:[%s5 + $0x10] sm:$0xf] %vm433, %v373
  %439 = vst.msk [vmem:[%s5 + $0x14] sm:$0xf] %vm433, %v374
  %440 = vst.msk [vmem:[%s5 + $0x18] sm:$0xf] %vm433, %v375
  %441 = vst.msk [vmem:[%s5 + $0x1c] sm:$0xf] %vm433, %v376
  %442 = vst.msk [vmem:[%s5 + $0x20] sm:$0xf] %vm433, %v377
  %443 = vst.msk [vmem:[%s5 + $0x24] sm:$0xf] %vm433, %v378
  %444 = vst.msk [vmem:[%s5 + $0x28] sm:$0xf] %vm433, %v379
  %445 = vst.msk [vmem:[%s5 + $0x2c] sm:$0xf] %vm433, %v380
  %446 = vst.msk [vmem:[%s5 + $0x30] sm:$0xf] %vm433, %v381
  %447 = vst.msk [vmem:[%s5 + $0x34] sm:$0xf] %vm433, %v382
  %448 = vst.msk [vmem:[%s5 + $0x38] sm:$0xf] %vm433, %v383
  %449 = vst.msk [vmem:[%s5 + $0x3c] sm:$0xf] %vm433, %v384
  %450 = vst.msk [vmem:[%s5 + $0x40] sm:$0xf] %vm433, %v385
  %451 = vst.msk [vmem:[%s5 + $0x44] sm:$0xf] %vm433, %v386
  %452 = vst.msk [vmem:[%s5 + $0x48] sm:$0xf] %vm433, %v387
  %453 = vst.msk [vmem:[%s5 + $0x4c] sm:$0xf] %vm433, %v388
  %454 = vst.msk [vmem:[%s5 + $0x50] sm:$0xf] %vm433, %v389
  %455 = vst.msk [vmem:[%s5 + $0x54] sm:$0xf] %vm433, %v390
  %456 = vst.msk [vmem:[%s5 + $0x58] sm:$0xf] %vm433, %v391
  %457 = vst.msk [vmem:[%s5 + $0x5c] sm:$0xf] %vm433, %v392
  %458 = vst.msk [vmem:[%s5 + $0x60] sm:$0xf] %vm433, %v393
  %459 = vst.msk [vmem:[%s5 + $0x64] sm:$0xf] %vm433, %v394
  %460 = vst.msk [vmem:[%s5 + $0x68] sm:$0xf] %vm433, %v395
  %461 = vst.msk [vmem:[%s5 + $0x6c] sm:$0xf] %vm433, %v396
  %462 = vst.msk [vmem:[%s5 + $0x70] sm:$0xf] %vm433, %v397
  %463 = vst.msk [vmem:[%s5 + $0x74] sm:$0xf] %vm433, %v398
  %464 = vst.msk [vmem:[%s5 + $0x78] sm:$0xf] %vm433, %v399
  %465 = vst.msk [vmem:[%s5 + $0x7c] sm:$0xf] %vm433, %v400
  %466 = vst.msk [vmem:[%s5 + $0x80] sm:$0xf] %vm433, %v401
  %467 = vst.msk [vmem:[%s5 + $0x84] sm:$0xf] %vm433, %v402
  %468 = vst.msk [vmem:[%s5 + $0x88] sm:$0xf] %vm433, %v403
  %469 = vst.msk [vmem:[%s5 + $0x8c] sm:$0xf] %vm433, %v404
  %470 = vst.msk [vmem:[%s5 + $0x90] sm:$0xf] %vm433, %v405
  %471 = vst.msk [vmem:[%s5 + $0x94] sm:$0xf] %vm433, %v406
  %472 = vst.msk [vmem:[%s5 + $0x98] sm:$0xf] %vm433, %v407
  %473 = vst.msk [vmem:[%s5 + $0x9c] sm:$0xf] %vm433, %v408
  %474 = vst.msk [vmem:[%s5 + $0xa0] sm:$0xf] %vm433, %v409
  %475 = vst.msk [vmem:[%s5 + $0xa4] sm:$0xf] %vm433, %v410
  %476 = vst.msk [vmem:[%s5 + $0xa8] sm:$0xf] %vm433, %v411
  %477 = vst.msk [vmem:[%s5 + $0xac] sm:$0xf] %vm433, %v412
  %478 = vst.msk [vmem:[%s5 + $0xb0] sm:$0xf] %vm433, %v413
  %479 = vst.msk [vmem:[%s5 + $0xb4] sm:$0xf] %vm433, %v414
  %480 = vst.msk [vmem:[%s5 + $0xb8] sm:$0xf] %vm433, %v415
  %481 = vst.msk [vmem:[%s5 + $0xbc] sm:$0xf] %vm433, %v416
  %482 = vst.msk [vmem:[%s5 + $0xc0] sm:$0xf] %vm433, %v417
  %483 = vst.msk [vmem:[%s5 + $0xc4] sm:$0xf] %vm433, %v418
  %484 = vst.msk [vmem:[%s5 + $0xc8] sm:$0xf] %vm433, %v419
  %485 = vst.msk [vmem:[%s5 + $0xcc] sm:$0xf] %vm433, %v420
  %486 = vst.msk [vmem:[%s5 + $0xd0] sm:$0xf] %vm433, %v421
  %487 = vst.msk [vmem:[%s5 + $0xd4] sm:$0xf] %vm433, %v422
  %488 = vst.msk [vmem:[%s5 + $0xd8] sm:$0xf] %vm433, %v423
  %489 = vst.msk [vmem:[%s5 + $0xdc] sm:$0xf] %vm433, %v424
  %490 = vst.msk [vmem:[%s5 + $0xe0] sm:$0xf] %vm433, %v425
  %491 = vst.msk [vmem:[%s5 + $0xe4] sm:$0xf] %vm433, %v426
  %492 = vst.msk [vmem:[%s5 + $0xe8] sm:$0xf] %vm433, %v427
  %493 = vst.msk [vmem:[%s5 + $0xec] sm:$0xf] %vm433, %v428
  %494 = vst.msk [vmem:[%s5 + $0xf0] sm:$0xf] %vm433, %v429
  %495 = vst.msk [vmem:[%s5 + $0xf4] sm:$0xf] %vm433, %v430
  %496 = vst.msk [vmem:[%s5 + $0xf8] sm:$0xf] %vm433, %v431
  %497 = vst.msk [vmem:[%s5 + $0xfc] sm:$0xf] %vm433, %v432
  // Predicated region
  $region22: #{resnet_generator_forward.30} parent=0 // pred_check
    _
  $region23: #{resnet_generator_forward.30} parent=0 // pred_check_branch
    %499 = sbr.rel (0) target = $region25
  $region24: #{resnet_generator_forward.30} parent=0 // pred_region
    _
  $region25: #{resnet_generator_forward.30} parent=0 // pred_fallthru
    _
  // Predicated region
  $region26: #{resnet_generator_forward.30} parent=0 // pred_check
    _
  $region27: #{resnet_generator_forward.30} parent=0 // pred_check_branch
    %501 = sbr.rel (0) target = $region29
  $region28: #{resnet_generator_forward.30} parent=0 // pred_region
    _
  $region29: #{resnet_generator_forward.30} parent=0 // pred_fallthru
    _

// kernel: resnet_generator_forward.31
$region0: #{resnet_generator_forward.31}
  #allocation0 [shape = 'u32[]', space=smem, size = 0x4, offset = 0x4, fixed_abs, tag = 'smem constant byte address 0x4 - core index']
  #allocation1 [shape = 'u32[72,128]{1,0:T(1,128)}', space=vmem, size = 0x9000, scoped, tag = 'internal scratch']
  #allocation2 [shape = 'f32[8,16]{1,0:T(8,128)}', space=vmem, size = 0x1000, scoped, tag = 'scratch operand']
  %s0 = inlined_call_operand.vmem [shape: bf16[2,9,9,32], index: 0, kind: input, shape index: {}]
  %s1 = inlined_call_operand.vmem [shape: bf16[4,32,16], index: 1, kind: input, shape index: {}]
  %s2 = inlined_call_operand.vmem [shape: f32[1,16], index: 2, kind: input, shape index: {}]
  %s3 = inlined_call_operand.vmem [shape: bf16[2,8,8,16], index: 3, kind: output, shape index: {}]
  %s4 = sld [smem:[#allocation0]]
  $region53: #{resnet_generator_forward.31} parent=0
    _
  %s6 = ssub.s32 1, %s4
  %s7 = scalar_select 0, %s6, %s4
  loop: start=0, step=1, limit=34
  $region2: #{resnet_generator_forward.31} parent=0 // loop_pre_header
    _
  $region3: #{resnet_generator_forward.31} parent=0 // loop_header
    %s9 = sphi 0, %s13
    %p10 = scmp.ge.s32.totalorder %s9, 34
    %s16 = sphi 0, %s35
    %s17 = sphi 0, %s31
    %s18 = sphi 0, %s27
    %s19 = sphi 0, %s16
    %s20 = sphi 0, %s17
    %s21 = sphi 0, %s18
    %s22 = sphi 0, %s19
    %s23 = sphi 0, %s20
    %s24 = sphi 0, %s21
    %s42 = sphi 0, %s44
    %s45 = sphi 0, %s42
    %s46 = sphi 0, %s45
    %s62 = sphi 0, %s46
    %s66 = sphi 0, %s66
    %s68 = sphi 0, %s66
    %s69 = sphi 0, %s68
    %s83 = sphi 0, %s69
    %s87 = sphi 0, %s87
    %s89 = sphi 0, %s87
    %s90 = sphi 0, %s89
    %s104 = sphi 0, %s90
    %s112 = sphi 0, %s114
    %s115 = sphi 0, %s112
    %s116 = sphi 0, %s115
    %s132 = sphi 0, %s116
  $region4: #{resnet_generator_forward.31} parent=0 // loop_header_branch
    %12 = sbr.rel (%p10) target = $region8
  $region5: #{resnet_generator_forward.31} parent=0 // loop_body
    %s14 = ssub.s32 %s9, 1
    %s15 = ssub.s32 %s9, 2
    %s25 = sadd.s32 1, %s18
    %p26 = scmp.ge.s32.totalorder %s25, 2
    %s27 = scalar_select %p26, 0, %s25
    %s28 = sadd.s32 1, %s17
    %s29 = scalar_select %p26, %s28, %s17
    %p30 = scmp.ge.s32.totalorder %s29, 8
    %s31 = scalar_select %p30, 0, %s29
    %s32 = sadd.s32 1, %s16
    %s33 = scalar_select %p30, %s32, %s16
    %p34 = scmp.ge.s32.totalorder %s33, 2
    %s35 = scalar_select %p34, 0, %s33
    %s36 = sadd.s32 %s17, %s18
    %s37 = sadd.s32 %s31, %s27
    %s38 = ssub.s32 %s16, %s35
    %s39 = ssub.s32 %s36, %s37
    %s40 = sor.u32 %s38, %s39
    %p41 = scmp.eq.s32.totalorder %s40, 0
    %s43 = sadd.s32 %s42, 1
    %s44 = scalar_select %p41, %s42, %s43
    %p47 = pneg %p41
    %p48 = scmp.eq.s32.totalorder %s9, 31
    %p49 = por %p47, %p48
    %p50 = scmp.ne.s32.totalorder %s42, %s45
    %p51 = scmp.eq.s32.totalorder %s9, 0
    %p52 = por %p50, %p51
    %p53 = scmp.ne.s32.totalorder %s42, %s45
    %p54 = scmp.eq.s32.totalorder %s14, 31
    %p55 = por %p53, %p54
    %p56 = scmp.ne.s32.totalorder %s45, %s46
    %p57 = scmp.eq.s32.totalorder %s14, 0
    %p58 = por %p56, %p57
    %p59 = scmp.ne.s32.totalorder %s45, %s46
    %p60 = scmp.eq.s32.totalorder %s15, 31
    %p61 = por %p59, %p60
    %p63 = scmp.ne.s32.totalorder %s46, %s62
    %p64 = scmp.eq.s32.totalorder %s15, 0
    %p65 = por %p63, %p64
    %s67 = sadd.s32 %s66, 1
    %p70 = scmp.eq.s32.totalorder %s9, 31
    %p71 = scmp.ne.s32.totalorder %s66, %s68
    %p72 = scmp.eq.s32.totalorder %s9, 0
    %p73 = por %p71, %p72
    %p74 = scmp.ne.s32.totalorder %s66, %s68
    %p75 = scmp.eq.s32.totalorder %s14, 31
    %p76 = por %p74, %p75
    %p77 = scmp.ne.s32.totalorder %s68, %s69
    %p78 = scmp.eq.s32.totalorder %s14, 0
    %p79 = por %p77, %p78
    %p80 = scmp.ne.s32.totalorder %s68, %s69
    %p81 = scmp.eq.s32.totalorder %s15, 31
    %p82 = por %p80, %p81
    %p84 = scmp.ne.s32.totalorder %s69, %s83
    %p85 = scmp.eq.s32.totalorder %s15, 0
    %p86 = por %p84, %p85
    %s88 = sadd.s32 %s87, 1
    %p91 = scmp.eq.s32.totalorder %s9, 31
    %p92 = scmp.ne.s32.totalorder %s87, %s89
    %p93 = scmp.eq.s32.totalorder %s9, 0
    %p94 = por %p92, %p93
    %p95 = scmp.ne.s32.totalorder %s87, %s89
    %p96 = scmp.eq.s32.totalorder %s14, 31
    %p97 = por %p95, %p96
    %p98 = scmp.ne.s32.totalorder %s89, %s90
    %p99 = scmp.eq.s32.totalorder %s14, 0
    %p100 = por %p98, %p99
    %p101 = scmp.ne.s32.totalorder %s89, %s90
    %p102 = scmp.eq.s32.totalorder %s15, 31
    %p103 = por %p101, %p102
    %p105 = scmp.ne.s32.totalorder %s90, %s104
    %p106 = scmp.eq.s32.totalorder %s15, 0
    %p107 = por %p105, %p106
    %s108 = ssub.s32 %s16, %s35
    %s109 = ssub.s32 %s17, %s31
    %s110 = sor.u32 %s108, %s109
    %p111 = scmp.eq.s32.totalorder %s110, 0
    %s113 = sadd.s32 %s112, 1
    %s114 = scalar_select %p111, %s112, %s113
    %p117 = pneg %p111
    %p118 = scmp.eq.s32.totalorder %s9, 31
    %p119 = por %p117, %p118
    %p120 = scmp.ne.s32.totalorder %s112, %s115
    %p121 = scmp.eq.s32.totalorder %s9, 0
    %p122 = por %p120, %p121
    %p123 = scmp.ne.s32.totalorder %s112, %s115
    %p124 = scmp.eq.s32.totalorder %s14, 31
    %p125 = por %p123, %p124
    %p126 = scmp.ne.s32.totalorder %s115, %s116
    %p127 = scmp.eq.s32.totalorder %s14, 0
    %p128 = por %p126, %p127
    %p129 = scmp.ne.s32.totalorder %s115, %s116
    %p130 = scmp.eq.s32.totalorder %s15, 31
    %p131 = por %p129, %p130
    %p133 = scmp.ne.s32.totalorder %s116, %s132
    %p134 = scmp.eq.s32.totalorder %s15, 0
    %p135 = por %p133, %p134
    %p136 = scmp.le.s32.totalorder 1, %s9
    %p137 = scmp.lt.s32.totalorder %s9, 33
    %p138 = pnand %p136, %p137
    %p139 = pneg %p138
    // Predicated region
    $region9: #{resnet_generator_forward.31} parent=5 // pred_check
      _
    $region10: #{resnet_generator_forward.31} parent=5 // pred_check_branch
      %141 = sbr.rel (%p138) target = $region12
    $region11: #{resnet_generator_forward.31} parent=5 // pred_region
      %s142 = ssub.s32 %s9, 1
      // Predicated region
      $region13: #{resnet_generator_forward.31} parent=11 // pred_check
        %p143 = pneg %p79
      $region14: #{resnet_generator_forward.31} parent=11 // pred_check_branch
        %145 = sbr.rel (%p143) target = $region16
      $region15: #{resnet_generator_forward.31} parent=11 // pred_region
        _
      $region16: #{resnet_generator_forward.31} parent=11 // pred_fallthru
        _
      // Predicated region
      $region17: #{resnet_generator_forward.31} parent=11 // pred_check
        %p146 = pneg %p100
      $region18: #{resnet_generator_forward.31} parent=11 // pred_check_branch
        %148 = sbr.rel (%p146) target = $region20
      $region19: #{resnet_generator_forward.31} parent=11 // pred_region
        _
      $region20: #{resnet_generator_forward.31} parent=11 // pred_fallthru
        _
    $region12: #{resnet_generator_forward.31} parent=5 // pred_fallthru
      _
    %p149 = scmp.lt.s32.totalorder %s9, 32
    // Predicated region
    $region21: #{resnet_generator_forward.31} parent=5 // pred_check
      %p150 = pneg %p149
    $region22: #{resnet_generator_forward.31} parent=5 // pred_check_branch
      %152 = sbr.rel (%p150) target = $region24
    $region23: #{resnet_generator_forward.31} parent=5 // pred_region
      // Predicated region
      $region25: #{resnet_generator_forward.31} parent=23 // pred_check
        %p153 = pneg %p52
      $region26: #{resnet_generator_forward.31} parent=23 // pred_check_branch
        %155 = sbr.rel (%p153) target = $region28
      $region27: #{resnet_generator_forward.31} parent=23 // pred_region
        %s156 = sadd.s32 %s17, %s18
        %p157 = scmp.lt.s32.totalorder %s16, 1
        %s158 = scalar_select %p157, %s16, 1
        %p159 = scmp.lt.s32.totalorder %s156, 8
        %s160 = scalar_select %p159, %s156, 8
        %s161 = smul.addr %s160, 2
        %s162 = smul.addr %s158, 18
        %s163 = sadd.s32 %s161, %s162
        %s164 = smul.addr %s163, 4
        %s165 = scalar_lea.vmem %s0, %s164
        %s166 = sadd.s32 %s17, %s18
      $region28: #{resnet_generator_forward.31} parent=23 // pred_fallthru
        _
    $region24: #{resnet_generator_forward.31} parent=5 // pred_fallthru
      _
    %p167 = scmp.le.s32.totalorder 1, %s9
    %p168 = scmp.lt.s32.totalorder %s9, 33
    %p169 = pnand %p167, %p168
    %p170 = pneg %p169
    // Predicated region
    $region29: #{resnet_generator_forward.31} parent=5 // pred_check
      _
    $region30: #{resnet_generator_forward.31} parent=5 // pred_check_branch
      %172 = sbr.rel (%p169) target = $region32
    $region31: #{resnet_generator_forward.31} parent=5 // pred_region
      %s173 = ssub.s32 %s9, 1
      %s174 = sadd.s32 %s20, %s21
      %p175 = scmp.lt.s32.totalorder %s19, 1
      %s176 = scalar_select %p175, %s19, 1
      %p177 = scmp.lt.s32.totalorder %s174, 8
      %s178 = scalar_select %p177, %s174, 8
      %s179 = smul.addr %s178, 2
      %s180 = smul.addr %s176, 18
      %s181 = sadd.s32 %s179, %s180
      %s182 = smul.addr %s181, 4
      %s183 = scalar_lea.vmem %s0, %s182
      %p184 = pneg %p58
      %p185 = pneg %p55
      %p186 = pneg %p79
      %p187 = pneg %p76
      %p188 = pneg %p100
      %p189 = pneg %p97
      %p190 = pneg %p128
      %p191 = pneg %p125
      %p192 = scmp.lt.s32.totalorder %s19, 1
      %s193 = scalar_select %p192, %s19, 1
      %p194 = scmp.lt.s32.totalorder %s20, 7
      %s195 = scalar_select %p194, %s20, 7
      %s196 = smul.addr %s193, 8
      %s197 = sadd.s32 %s195, %s196
      %s198 = smul.addr %s197, 4
      %s199 = scalar_lea.vmem %s3, %s198
      %s200 = sadd.s32 %s20, %s21
      %p201 = scmp.lt.s32.totalorder %s19, 1
      %s202 = scalar_select %p201, %s19, 1
      %p203 = scmp.lt.s32.totalorder %s200, 8
      %s204 = scalar_select %p203, %s200, 8
      %s205 = smul.addr %s204, 2
      %s206 = smul.addr %s202, 18
      %s207 = sadd.s32 %s205, %s206
      %s208 = smul.addr %s207, 4
      %s209 = scalar_lea.vmem %s0, %s208
      %s210 = sadd.s32 %s20, %s21
      %p211 = scmp.lt.s32.totalorder %s19, 1
      %s212 = scalar_select %p211, %s19, 1
      %p213 = scmp.lt.s32.totalorder %s20, 7
      %s214 = scalar_select %p213, %s20, 7
      %s215 = smul.addr %s212, 8
      %s216 = sadd.s32 %s214, %s215
      %s217 = smul.addr %s216, 4
      %s218 = scalar_lea.vmem %s3, %s217
      %p220 = scmp.eq.s32.totalorder %s21, 0
      // Predicated region
      $region33: #{resnet_generator_forward.31} parent=31 // pred_check
        %p221 = pneg %p220
      $region34: #{resnet_generator_forward.31} parent=31 // pred_check_branch
        %223 = sbr.rel (%p221) target = $region36
      $region35: #{resnet_generator_forward.31} parent=31 // pred_region
        %vm224 = vcmask 130048
        %225 = vst.msk [vmem:[#allocation2] sm:$0xff] %vm224, 0.0
      $region36: #{resnet_generator_forward.31} parent=31 // pred_fallthru
        _
      %v226 = vld [vmem:[%s209] sm:$0xf]
      %v227 = vld [vmem:[%s209 + $0x4] sm:$0x1]
      %s228 = smul.u32 %s21, 2
      %s229 = smul.u32 %s228, 4
      %s230 = smul.addr %s229, 4
      %s231 = scalar_lea.vmem %s1, %s230
      %v232 = vld [vmem:[%s231] sm:$0xf]
      %v233 = vld [vmem:[%s231 + $0x4] sm:$0xf]
      %v234 = vld [vmem:[%s231 + $0x8] sm:$0xf]
      %v235 = vld [vmem:[%s231 + $0xc] sm:$0xf]
      %s236 = sadd.s32 %s228, 1
      %s237 = smul.u32 %s236, 4
      %s238 = smul.addr %s237, 4
      %s239 = scalar_lea.vmem %s1, %s238
      %v240 = vld [vmem:[%s239] sm:$0xf]
      %v241 = vld [vmem:[%s239 + $0x4] sm:$0xf]
      %v242 = vld [vmem:[%s239 + $0x8] sm:$0xf]
      %v243 = vld [vmem:[%s239 + $0xc] sm:$0xf]
      %v246 = vunpack.c.l.b16 %v226
      %v247 = vunpack.c.l.b16 %v227
      %v248 = vpack.c.b16 %v247, %v246
      %v250 = vshrl.u32 %v248, 16
      %v252 = vshll.u32 %v248, 16
      %v254 = vrot.slane %v252, 1
      %v255 = vor.u32 %v250, %v254
      %v260 = vunpack.c.l.b16 %v240
      %v261 = vunpack.c.l.b16 %v241
      %v262 = vunpack.c.l.b16 %v242
      %v263 = vunpack.c.l.b16 %v243
      %v264 = vpack.c.b16 %v261, %v260
      %v265 = vpack.c.b16 %v263, %v262
      %vm268 = vcmask 261120
      %v270 = vsel %vm268, %v255, 0
      %272 = vmatpush.bf16.msra.mxu0 0
      %273 = vmatpush.bf16.msra.mxu0 0
      %274 = vmatpush.bf16.msra.mxu0 0
      %275 = vmatpush.bf16.msra.mxu0 0
      %276 = vmatpush.bf16.msra.mxu0 0
      %277 = vmatpush.bf16.msra.mxu0 0
      %278 = vmatpush.bf16.msra.mxu0 %v265
      %279 = vmatpush.bf16.msra.mxu0 %v264
      %280 = vmatmul.bf16.gmra.mxu0 %v270
      %v281 = vpop.f32.mrf.mxu0
      %v282 = vadd.f32 0.0, %v281
      %v283 = vpop.f32.mrf.mxu0
      %284 = vdwg.mxu0
      %v289 = vunpack.c.l.b16 %v232
      %v290 = vunpack.c.l.b16 %v233
      %v291 = vunpack.c.l.b16 %v234
      %v292 = vunpack.c.l.b16 %v235
      %v293 = vpack.c.b16 %v290, %v289
      %v294 = vpack.c.b16 %v292, %v291
      %v298 = vsel %vm268, %v226, 0
      %300 = vmatpush.bf16.msra.mxu0 0
      %301 = vmatpush.bf16.msra.mxu0 0
      %302 = vmatpush.bf16.msra.mxu0 0
      %303 = vmatpush.bf16.msra.mxu0 0
      %304 = vmatpush.bf16.msra.mxu0 0
      %305 = vmatpush.bf16.msra.mxu0 0
      %306 = vmatpush.bf16.msra.mxu0 %v294
      %307 = vmatpush.bf16.msra.mxu0 %v293
      %308 = vmatmul.bf16.gmra.mxu0 %v298
      %v309 = vpop.f32.mrf.mxu0
      %v310 = vadd.f32 %v282, %v309
      %v311 = vpop.f32.mrf.mxu0
      %312 = vdwg.mxu0
      %v313 = vld [vmem:[#allocation2] sm:$0xff]
      %v314 = vadd.f32 %v313, %v310
      %vm315 = vcmask 130048
      %316 = vst.msk [vmem:[#allocation2] sm:$0xff] %vm315, %v314
      %p317 = scmp.eq.s32.totalorder %s21, 1
      // Predicated region
      $region37: #{resnet_generator_forward.31} parent=31 // pred_check
        %p318 = pneg %p317
      $region38: #{resnet_generator_forward.31} parent=31 // pred_check_branch
        %320 = sbr.rel (%p318) target = $region40
      $region39: #{resnet_generator_forward.31} parent=31 // pred_region
        %v321 = vld [vmem:[#allocation2] sm:$0xff]
        %v322 = vld [vmem:[%s2] sm:$0x1]
        %v324 = vperm.slane %v322, 0
        %v326 = vadd.f32 %v321, %v324
        %v327 = vpack.c.bf16 %v326, %v326
        %vm328 = vcmask 125952
        %329 = vst.msk [vmem:[%s218] sm:$0xf] %vm328, %v327
      $region40: #{resnet_generator_forward.31} parent=31 // pred_fallthru
        _
      %p330 = scmp.lt.s32.totalorder %s19, 1
      %s331 = scalar_select %p330, %s19, 1
      %p332 = scmp.lt.s32.totalorder %s20, 7
      %s333 = scalar_select %p332, %s20, 7
      %s334 = smul.addr %s331, 8
      %s335 = sadd.s32 %s333, %s334
      %s336 = smul.addr %s335, 4
      %s337 = scalar_lea.vmem %s3, %s336
      // Predicated region
      $region41: #{resnet_generator_forward.31} parent=31 // pred_check
        %p338 = pneg %p125
      $region42: #{resnet_generator_forward.31} parent=31 // pred_check_branch
        %340 = sbr.rel (%p338) target = $region44
      $region43: #{resnet_generator_forward.31} parent=31 // pred_region
        _
      $region44: #{resnet_generator_forward.31} parent=31 // pred_fallthru
        _
    $region32: #{resnet_generator_forward.31} parent=5 // pred_fallthru
      _
    %p341 = scmp.le.s32.totalorder 2, %s9
    // Predicated region
    $region45: #{resnet_generator_forward.31} parent=5 // pred_check
      %p342 = pneg %p341
    $region46: #{resnet_generator_forward.31} parent=5 // pred_check_branch
      %344 = sbr.rel (%p342) target = $region48
    $region47: #{resnet_generator_forward.31} parent=5 // pred_region
      %s345 = ssub.s32 %s9, 2
      // Predicated region
      $region49: #{resnet_generator_forward.31} parent=47 // pred_check
        %p346 = pneg %p131
      $region50: #{resnet_generator_forward.31} parent=47 // pred_check_branch
        %348 = sbr.rel (%p346) target = $region52
      $region51: #{resnet_generator_forward.31} parent=47 // pred_region
        %p349 = scmp.lt.s32.totalorder %s22, 1
        %s350 = scalar_select %p349, %s22, 1
        %p351 = scmp.lt.s32.totalorder %s23, 7
        %s352 = scalar_select %p351, %s23, 7
        %s353 = smul.addr %s350, 8
        %s354 = sadd.s32 %s352, %s353
        %s355 = smul.addr %s354, 4
        %s356 = scalar_lea.vmem %s3, %s355
      $region52: #{resnet_generator_forward.31} parent=47 // pred_fallthru
        _
    $region48: #{resnet_generator_forward.31} parent=5 // pred_fallthru
      _
  $region6: #{resnet_generator_forward.31} parent=0 // loop_footer
    %s13 = sadd.s32 1, %s9
  $region7: #{resnet_generator_forward.31} parent=0 // loop_footer_branch
    %8 = sbr.rel target = $region3
  $region8: #{resnet_generator_forward.31} parent=0 // loop_exit
    _

// kernel: resnet_generator_forward.32
$region0: #{resnet_generator_forward.32}
  #allocation0 [shape = 'u32[]', space=smem, size = 0x4, offset = 0x4, fixed_abs, tag = 'smem constant byte address 0x4 - core index']
  #allocation1 [shape = 'u32[72,128]{1,0:T(1,128)}', space=vmem, size = 0x9000, scoped, tag = 'internal scratch']
  %s0 = inlined_call_operand.vmem [shape: bf16[128,16], index: 0, kind: input, shape index: {}]
  %s1 = inlined_call_operand.vmem [shape: f32[1,16], index: 1, kind: output, shape index: {0}]
  %s2 = inlined_call_operand.vmem [shape: f32[1,16], index: 2, kind: output, shape index: {1}]
  %3 = xla_tuple %s1, %s2
  %s4 = sld [smem:[#allocation0]]
  $region26: #{resnet_generator_forward.32} parent=0
    _
  %s6 = ssub.s32 1, %s4
  %s7 = scalar_select 0, %s6, %s4
  // Predicated region
  $region2: #{resnet_generator_forward.32} parent=0 // pred_check
    _
  $region3: #{resnet_generator_forward.32} parent=0 // pred_check_branch
    %9 = sbr.rel (0) target = $region5
  $region4: #{resnet_generator_forward.32} parent=0 // pred_region
    _
  $region5: #{resnet_generator_forward.32} parent=0 // pred_fallthru
    _
  %p10 = scmp.eq.s32.totalorder 0, 0
  // Predicated region
  $region6: #{resnet_generator_forward.32} parent=0 // pred_check
    %p11 = pneg %p10
  $region7: #{resnet_generator_forward.32} parent=0 // pred_check_branch
    %13 = sbr.rel (%p11) target = $region9
  $region8: #{resnet_generator_forward.32} parent=0 // pred_region
    %vm14 = vcmask 122880
    %15 = vst.msk [vmem:[%s1] sm:$0x1] %vm14, 0.0
    %16 = vst.msk [vmem:[%s2] sm:$0x1] %vm14, 0.0
  $region9: #{resnet_generator_forward.32} parent=0 // pred_fallthru
    _
  %v17 = vld [vmem:[%s0] sm:$0xf]
  %v18 = vld [vmem:[%s0 + $0x4] sm:$0xf]
  %v19 = vld [vmem:[%s0 + $0x8] sm:$0xf]
  %v20 = vld [vmem:[%s0 + $0xc] sm:$0xf]
  %v21 = vld [vmem:[%s0 + $0x10] sm:$0xf]
  %v22 = vld [vmem:[%s0 + $0x14] sm:$0xf]
  %v23 = vld [vmem:[%s0 + $0x18] sm:$0xf]
  %v24 = vld [vmem:[%s0 + $0x1c] sm:$0xf]
  %v25 = vld [vmem:[%s0 + $0x20] sm:$0xf]
  %v26 = vld [vmem:[%s0 + $0x24] sm:$0xf]
  %v27 = vld [vmem:[%s0 + $0x28] sm:$0xf]
  %v28 = vld [vmem:[%s0 + $0x2c] sm:$0xf]
  %v29 = vld [vmem:[%s0 + $0x30] sm:$0xf]
  %v30 = vld [vmem:[%s0 + $0x34] sm:$0xf]
  %v31 = vld [vmem:[%s0 + $0x38] sm:$0xf]
  %v32 = vld [vmem:[%s0 + $0x3c] sm:$0xf]
  %v33 = vunpack.c.l.bf16 %v17
  %v34 = vunpack.c.l.bf16 %v18
  %v35 = vunpack.c.l.bf16 %v19
  %v36 = vunpack.c.l.bf16 %v20
  %v37 = vunpack.c.l.bf16 %v21
  %v38 = vunpack.c.l.bf16 %v22
  %v39 = vunpack.c.l.bf16 %v23
  %v40 = vunpack.c.l.bf16 %v24
  %v41 = vunpack.c.l.bf16 %v25
  %v42 = vunpack.c.l.bf16 %v26
  %v43 = vunpack.c.l.bf16 %v27
  %v44 = vunpack.c.l.bf16 %v28
  %v45 = vunpack.c.l.bf16 %v29
  %v46 = vunpack.c.l.bf16 %v30
  %v47 = vunpack.c.l.bf16 %v31
  %v48 = vunpack.c.l.bf16 %v32
  %v49 = vld [vmem:[%s1] sm:$0x1]
  %vm50 = vcmask 130048
  %v51 = vsel %vm50, %v33, 0.0
  %v52 = vsel %vm50, %v34, 0.0
  %v53 = vadd.f32 %v51, %v52
  %v54 = vsel %vm50, %v35, 0.0
  %v55 = vadd.f32 %v53, %v54
  %v56 = vsel %vm50, %v36, 0.0
  %v57 = vadd.f32 %v55, %v56
  %v58 = vsel %vm50, %v37, 0.0
  %v59 = vadd.f32 %v57, %v58
  %v60 = vsel %vm50, %v38, 0.0
  %v61 = vadd.f32 %v59, %v60
  %v62 = vsel %vm50, %v39, 0.0
  %v63 = vadd.f32 %v61, %v62
  %v64 = vsel %vm50, %v40, 0.0
  %v65 = vadd.f32 %v63, %v64
  %v66 = vsel %vm50, %v41, 0.0
  %v67 = vadd.f32 %v65, %v66
  %v68 = vsel %vm50, %v42, 0.0
  %v69 = vadd.f32 %v67, %v68
  %v70 = vsel %vm50, %v43, 0.0
  %v71 = vadd.f32 %v69, %v70
  %v72 = vsel %vm50, %v44, 0.0
  %v73 = vadd.f32 %v71, %v72
  %v74 = vsel %vm50, %v45, 0.0
  %v75 = vadd.f32 %v73, %v74
  %v76 = vsel %vm50, %v46, 0.0
  %v77 = vadd.f32 %v75, %v76
  %v78 = vsel %vm50, %v47, 0.0
  %v79 = vadd.f32 %v77, %v78
  %v80 = vsel %vm50, %v48, 0.0
  %v81 = vadd.f32 %v79, %v80
  %v82 = vrot.slane %v81, 4
  %v83 = vadd.f32 %v81, %v82
  %v84 = vrot.slane %v83, 2
  %v85 = vadd.f32 %v83, %v84
  %v86 = vrot.slane %v85, 1
  %v87 = vadd.f32 %v85, %v86
  %v88 = vadd.f32 %v49, %v87
  %vm89 = vcmask 122880
  %90 = vst.msk [vmem:[%s1] sm:$0x1] %vm89, %v88
  %v91 = vld [vmem:[%s2] sm:$0x1]
  %v92 = vmul.f32 %v33, %v33
  %v93 = vmul.f32 %v34, %v34
  %v94 = vmul.f32 %v35, %v35
  %v95 = vmul.f32 %v36, %v36
  %v96 = vmul.f32 %v37, %v37
  %v97 = vmul.f32 %v38, %v38
  %v98 = vmul.f32 %v39, %v39
  %v99 = vmul.f32 %v40, %v40
  %v100 = vmul.f32 %v41, %v41
  %v101 = vmul.f32 %v42, %v42
  %v102 = vmul.f32 %v43, %v43
  %v103 = vmul.f32 %v44, %v44
  %v104 = vmul.f32 %v45, %v45
  %v105 = vmul.f32 %v46, %v46
  %v106 = vmul.f32 %v47, %v47
  %v107 = vmul.f32 %v48, %v48
  %v108 = vsel %vm50, %v92, 0.0
  %v109 = vsel %vm50, %v93, 0.0
  %v110 = vadd.f32 %v108, %v109
  %v111 = vsel %vm50, %v94, 0.0
  %v112 = vadd.f32 %v110, %v111
  %v113 = vsel %vm50, %v95, 0.0
  %v114 = vadd.f32 %v112, %v113
  %v115 = vsel %vm50, %v96, 0.0
  %v116 = vadd.f32 %v114, %v115
  %v117 = vsel %vm50, %v97, 0.0
  %v118 = vadd.f32 %v116, %v117
  %v119 = vsel %vm50, %v98, 0.0
  %v120 = vadd.f32 %v118, %v119
  %v121 = vsel %vm50, %v99, 0.0
  %v122 = vadd.f32 %v120, %v121
  %v123 = vsel %vm50, %v100, 0.0
  %v124 = vadd.f32 %v122, %v123
  %v125 = vsel %vm50, %v101, 0.0
  %v126 = vadd.f32 %v124, %v125
  %v127 = vsel %vm50, %v102, 0.0
  %v128 = vadd.f32 %v126, %v127
  %v129 = vsel %vm50, %v103, 0.0
  %v130 = vadd.f32 %v128, %v129
  %v131 = vsel %vm50, %v104, 0.0
  %v132 = vadd.f32 %v130, %v131
  %v133 = vsel %vm50, %v105, 0.0
  %v134 = vadd.f32 %v132, %v133
  %v135 = vsel %vm50, %v106, 0.0
  %v136 = vadd.f32 %v134, %v135
  %v137 = vsel %vm50, %v107, 0.0
  %v138 = vadd.f32 %v136, %v137
  %v139 = vrot.slane %v138, 4
  %v140 = vadd.f32 %v138, %v139
  %v141 = vrot.slane %v140, 2
  %v142 = vadd.f32 %v140, %v141
  %v143 = vrot.slane %v142, 1
  %v144 = vadd.f32 %v142, %v143
  %v145 = vadd.f32 %v91, %v144
  %146 = vst.msk [vmem:[%s2] sm:$0x1] %vm89, %v145
  // Predicated region
  $region10: #{resnet_generator_forward.32} parent=0 // pred_check
    _
  $region11: #{resnet_generator_forward.32} parent=0 // pred_check_branch
    %148 = sbr.rel (0) target = $region13
  $region12: #{resnet_generator_forward.32} parent=0 // pred_region
    _
  $region13: #{resnet_generator_forward.32} parent=0 // pred_fallthru
    _
  // Predicated region
  $region14: #{resnet_generator_forward.32} parent=0 // pred_check
    _
  $region15: #{resnet_generator_forward.32} parent=0 // pred_check_branch
    %150 = sbr.rel (0) target = $region17
  $region16: #{resnet_generator_forward.32} parent=0 // pred_region
    _
  $region17: #{resnet_generator_forward.32} parent=0 // pred_fallthru
    _
  // Predicated region
  $region18: #{resnet_generator_forward.32} parent=0 // pred_check
    _
  $region19: #{resnet_generator_forward.32} parent=0 // pred_check_branch
    %152 = sbr.rel (0) target = $region21
  $region20: #{resnet_generator_forward.32} parent=0 // pred_region
    _
  $region21: #{resnet_generator_forward.32} parent=0 // pred_fallthru
    _
  // Predicated region
  $region22: #{resnet_generator_forward.32} parent=0 // pred_check
    _
  $region23: #{resnet_generator_forward.32} parent=0 // pred_check_branch
    %154 = sbr.rel (0) target = $region25
  $region24: #{resnet_generator_forward.32} parent=0 // pred_region
    _
  $region25: #{resnet_generator_forward.32} parent=0 // pred_fallthru
    _

// kernel: resnet_generator_forward.33
$region0: #{resnet_generator_forward.33}
  #allocation0 [shape = 'u32[]', space=smem, size = 0x4, offset = 0x4, fixed_abs, tag = 'smem constant byte address 0x4 - core index']
  #allocation1 [shape = 'u32[72,128]{1,0:T(1,128)}', space=vmem, size = 0x9000, scoped, tag = 'internal scratch']
  %s0 = inlined_call_operand.vmem [shape: bf16[128,16], index: 0, kind: input, shape index: {}]
  %s1 = inlined_call_operand.vmem [shape: f32[1,16], index: 1, kind: input, shape index: {}]
  %s2 = inlined_call_operand.vmem [shape: f32[1,16], index: 2, kind: input, shape index: {}]
  %s3 = inlined_call_operand.vmem [shape: f32[1,16], index: 3, kind: input, shape index: {}]
  %s4 = inlined_call_operand.vmem [shape: f32[1,16], index: 4, kind: input, shape index: {}]
  %s5 = inlined_call_operand.vmem [shape: bf16[128,16], index: 5, kind: output, shape index: {}]
  %s6 = sld [smem:[#allocation0]]
  $region30: #{resnet_generator_forward.33} parent=0
    _
  %s8 = ssub.s32 1, %s6
  %s9 = scalar_select 0, %s8, %s6
  // Predicated region
  $region2: #{resnet_generator_forward.33} parent=0 // pred_check
    _
  $region3: #{resnet_generator_forward.33} parent=0 // pred_check_branch
    %11 = sbr.rel (0) target = $region5
  $region4: #{resnet_generator_forward.33} parent=0 // pred_region
    _
  $region5: #{resnet_generator_forward.33} parent=0 // pred_fallthru
    _
  // Predicated region
  $region6: #{resnet_generator_forward.33} parent=0 // pred_check
    _
  $region7: #{resnet_generator_forward.33} parent=0 // pred_check_branch
    %13 = sbr.rel (0) target = $region9
  $region8: #{resnet_generator_forward.33} parent=0 // pred_region
    _
  $region9: #{resnet_generator_forward.33} parent=0 // pred_fallthru
    _
  // Predicated region
  $region10: #{resnet_generator_forward.33} parent=0 // pred_check
    _
  $region11: #{resnet_generator_forward.33} parent=0 // pred_check_branch
    %15 = sbr.rel (0) target = $region13
  $region12: #{resnet_generator_forward.33} parent=0 // pred_region
    _
  $region13: #{resnet_generator_forward.33} parent=0 // pred_fallthru
    _
  // Predicated region
  $region14: #{resnet_generator_forward.33} parent=0 // pred_check
    _
  $region15: #{resnet_generator_forward.33} parent=0 // pred_check_branch
    %17 = sbr.rel (0) target = $region17
  $region16: #{resnet_generator_forward.33} parent=0 // pred_region
    _
  $region17: #{resnet_generator_forward.33} parent=0 // pred_fallthru
    _
  // Predicated region
  $region18: #{resnet_generator_forward.33} parent=0 // pred_check
    _
  $region19: #{resnet_generator_forward.33} parent=0 // pred_check_branch
    %19 = sbr.rel (0) target = $region21
  $region20: #{resnet_generator_forward.33} parent=0 // pred_region
    _
  $region21: #{resnet_generator_forward.33} parent=0 // pred_fallthru
    _
  %v20 = vld [vmem:[%s1] sm:$0x1]
  %v21 = vmul.f32 %v20, 0.0078125
  %v22 = vld [vmem:[%s2] sm:$0x1]
  %v23 = vmul.f32 %v22, 0.0078125
  %v24 = vmul.f32 %v21, %v21
  %v25 = vsub.f32 %v23, %v24
  %v26 = vmax.f32 %v25, 0.0
  %v27 = vld [vmem:[%s3] sm:$0x1]
  %v28 = vadd.f32 %v26, 1e-05
  %v29 = vrsqrt.pop %v28
  %v30 = vmul.f32 %v29, %v28
  %v31 = vmul.f32 %v30, %v29
  %v32 = vmul.f32 0.5, %v31
  %v33 = vsub.f32 1.5, %v32
  %v34 = vmul.f32 %v29, %v33
  %vm35 = vweird.f32 %v28
  %vm36 = vweird.f32 %v29
  %vm37 = vmor %vm35, %vm36
  %v38 = vsel %vm37, %v29, %v34
  %v39 = vmul.f32 %v27, %v38
  %v40 = vld [vmem:[%s4] sm:$0x1]
  %v41 = vmul.f32 %v21, %v39
  %v42 = vsub.f32 %v40, %v41
  %v43 = vld [vmem:[%s0] sm:$0xf]
  %v44 = vld [vmem:[%s0 + $0x4] sm:$0xf]
  %v45 = vld [vmem:[%s0 + $0x8] sm:$0xf]
  %v46 = vld [vmem:[%s0 + $0xc] sm:$0xf]
  %v47 = vld [vmem:[%s0 + $0x10] sm:$0xf]
  %v48 = vld [vmem:[%s0 + $0x14] sm:$0xf]
  %v49 = vld [vmem:[%s0 + $0x18] sm:$0xf]
  %v50 = vld [vmem:[%s0 + $0x1c] sm:$0xf]
  %v51 = vld [vmem:[%s0 + $0x20] sm:$0xf]
  %v52 = vld [vmem:[%s0 + $0x24] sm:$0xf]
  %v53 = vld [vmem:[%s0 + $0x28] sm:$0xf]
  %v54 = vld [vmem:[%s0 + $0x2c] sm:$0xf]
  %v55 = vld [vmem:[%s0 + $0x30] sm:$0xf]
  %v56 = vld [vmem:[%s0 + $0x34] sm:$0xf]
  %v57 = vld [vmem:[%s0 + $0x38] sm:$0xf]
  %v58 = vld [vmem:[%s0 + $0x3c] sm:$0xf]
  %v59 = vunpack.c.l.bf16 %v43
  %v60 = vunpack.c.l.bf16 %v44
  %v61 = vunpack.c.l.bf16 %v45
  %v62 = vunpack.c.l.bf16 %v46
  %v63 = vunpack.c.l.bf16 %v47
  %v64 = vunpack.c.l.bf16 %v48
  %v65 = vunpack.c.l.bf16 %v49
  %v66 = vunpack.c.l.bf16 %v50
  %v67 = vunpack.c.l.bf16 %v51
  %v68 = vunpack.c.l.bf16 %v52
  %v69 = vunpack.c.l.bf16 %v53
  %v70 = vunpack.c.l.bf16 %v54
  %v71 = vunpack.c.l.bf16 %v55
  %v72 = vunpack.c.l.bf16 %v56
  %v73 = vunpack.c.l.bf16 %v57
  %v74 = vunpack.c.l.bf16 %v58
  %v76 = vperm.slane %v39, 0
  %v78 = vmul.f32 %v59, %v76
  %v79 = vmul.f32 %v60, %v76
  %v80 = vmul.f32 %v61, %v76
  %v81 = vmul.f32 %v62, %v76
  %v82 = vmul.f32 %v63, %v76
  %v83 = vmul.f32 %v64, %v76
  %v84 = vmul.f32 %v65, %v76
  %v85 = vmul.f32 %v66, %v76
  %v86 = vmul.f32 %v67, %v76
  %v87 = vmul.f32 %v68, %v76
  %v88 = vmul.f32 %v69, %v76
  %v89 = vmul.f32 %v70, %v76
  %v90 = vmul.f32 %v71, %v76
  %v91 = vmul.f32 %v72, %v76
  %v92 = vmul.f32 %v73, %v76
  %v93 = vmul.f32 %v74, %v76
  %v95 = vperm.slane %v42, 0
  %v97 = vadd.f32 %v78, %v95
  %v98 = vadd.f32 %v79, %v95
  %v99 = vadd.f32 %v80, %v95
  %v100 = vadd.f32 %v81, %v95
  %v101 = vadd.f32 %v82, %v95
  %v102 = vadd.f32 %v83, %v95
  %v103 = vadd.f32 %v84, %v95
  %v104 = vadd.f32 %v85, %v95
  %v105 = vadd.f32 %v86, %v95
  %v106 = vadd.f32 %v87, %v95
  %v107 = vadd.f32 %v88, %v95
  %v108 = vadd.f32 %v89, %v95
  %v109 = vadd.f32 %v90, %v95
  %v110 = vadd.f32 %v91, %v95
  %v111 = vadd.f32 %v92, %v95
  %v112 = vadd.f32 %v93, %v95
  %v113 = vmax.f32 %v97, 0.0
  %v114 = vmax.f32 %v98, 0.0
  %v115 = vmax.f32 %v99, 0.0
  %v116 = vmax.f32 %v100, 0.0
  %v117 = vmax.f32 %v101, 0.0
  %v118 = vmax.f32 %v102, 0.0
  %v119 = vmax.f32 %v103, 0.0
  %v120 = vmax.f32 %v104, 0.0
  %v121 = vmax.f32 %v105, 0.0
  %v122 = vmax.f32 %v106, 0.0
  %v123 = vmax.f32 %v107, 0.0
  %v124 = vmax.f32 %v108, 0.0
  %v125 = vmax.f32 %v109, 0.0
  %v126 = vmax.f32 %v110, 0.0
  %v127 = vmax.f32 %v111, 0.0
  %v128 = vmax.f32 %v112, 0.0
  %v129 = vpack.c.bf16 %v113, %v113
  %v130 = vpack.c.bf16 %v114, %v114
  %v131 = vpack.c.bf16 %v115, %v115
  %v132 = vpack.c.bf16 %v116, %v116
  %v133 = vpack.c.bf16 %v117, %v117
  %v134 = vpack.c.bf16 %v118, %v118
  %v135 = vpack.c.bf16 %v119, %v119
  %v136 = vpack.c.bf16 %v120, %v120
  %v137 = vpack.c.bf16 %v121, %v121
  %v138 = vpack.c.bf16 %v122, %v122
  %v139 = vpack.c.bf16 %v123, %v123
  %v140 = vpack.c.bf16 %v124, %v124
  %v141 = vpack.c.bf16 %v125, %v125
  %v142 = vpack.c.bf16 %v126, %v126
  %v143 = vpack.c.bf16 %v127, %v127
  %v144 = vpack.c.bf16 %v128, %v128
  %vm145 = vcmask 125952
  %146 = vst.msk [vmem:[%s5] sm:$0xf] %vm145, %v129
  %147 = vst.msk [vmem:[%s5 + $0x4] sm:$0xf] %vm145, %v130
  %148 = vst.msk [vmem:[%s5 + $0x8] sm:$0xf] %vm145, %v131
  %149 = vst.msk [vmem:[%s5 + $0xc] sm:$0xf] %vm145, %v132
  %150 = vst.msk [vmem:[%s5 + $0x10] sm:$0xf] %vm145, %v133
  %151 = vst.msk [vmem:[%s5 + $0x14] sm:$0xf] %vm145, %v134
  %152 = vst.msk [vmem:[%s5 + $0x18] sm:$0xf] %vm145, %v135
  %153 = vst.msk [vmem:[%s5 + $0x1c] sm:$0xf] %vm145, %v136
  %154 = vst.msk [vmem:[%s5 + $0x20] sm:$0xf] %vm145, %v137
  %155 = vst.msk [vmem:[%s5 + $0x24] sm:$0xf] %vm145, %v138
  %156 = vst.msk [vmem:[%s5 + $0x28] sm:$0xf] %vm145, %v139
  %157 = vst.msk [vmem:[%s5 + $0x2c] sm:$0xf] %vm145, %v140
  %158 = vst.msk [vmem:[%s5 + $0x30] sm:$0xf] %vm145, %v141
  %159 = vst.msk [vmem:[%s5 + $0x34] sm:$0xf] %vm145, %v142
  %160 = vst.msk [vmem:[%s5 + $0x38] sm:$0xf] %vm145, %v143
  %161 = vst.msk [vmem:[%s5 + $0x3c] sm:$0xf] %vm145, %v144
  // Predicated region
  $region22: #{resnet_generator_forward.33} parent=0 // pred_check
    _
  $region23: #{resnet_generator_forward.33} parent=0 // pred_check_branch
    %163 = sbr.rel (0) target = $region25
  $region24: #{resnet_generator_forward.33} parent=0 // pred_region
    _
  $region25: #{resnet_generator_forward.33} parent=0 // pred_fallthru
    _
  // Predicated region
  $region26: #{resnet_generator_forward.33} parent=0 // pred_check
    _
  $region27: #{resnet_generator_forward.33} parent=0 // pred_check_branch
    %165 = sbr.rel (0) target = $region29
  $region28: #{resnet_generator_forward.33} parent=0 // pred_region
    _
  $region29: #{resnet_generator_forward.33} parent=0 // pred_fallthru
    _

// kernel: resnet_generator_forward.34
$region0: #{resnet_generator_forward.34}
  #allocation0 [shape = 'u32[]', space=smem, size = 0x4, offset = 0x4, fixed_abs, tag = 'smem constant byte address 0x4 - core index']
  #allocation1 [shape = 'u32[72,128]{1,0:T(1,128)}', space=vmem, size = 0x9000, scoped, tag = 'internal scratch']
  #allocation2 [shape = 'f32[4,32]{1,0:T(4,128)}', space=vmem, size = 0x800, scoped, tag = 'scratch operand']
  %s0 = inlined_call_operand.vmem [shape: bf16[2,5,5,64], index: 0, kind: input, shape index: {}]
  %s1 = inlined_call_operand.vmem [shape: bf16[4,64,32], index: 1, kind: input, shape index: {}]
  %s2 = inlined_call_operand.vmem [shape: f32[1,32], index: 2, kind: input, shape index: {}]
  %s3 = inlined_call_operand.vmem [shape: bf16[2,4,4,32], index: 3, kind: output, shape index: {}]
  %s4 = sld [smem:[#allocation0]]
  $region53: #{resnet_generator_forward.34} parent=0
    _
  %s6 = ssub.s32 1, %s4
  %s7 = scalar_select 0, %s6, %s4
  loop: start=0, step=1, limit=18
  $region2: #{resnet_generator_forward.34} parent=0 // loop_pre_header
    _
  $region3: #{resnet_generator_forward.34} parent=0 // loop_header
    %s9 = sphi 0, %s13
    %p10 = scmp.ge.s32.totalorder %s9, 18
    %s16 = sphi 0, %s35
    %s17 = sphi 0, %s31
    %s18 = sphi 0, %s27
    %s19 = sphi 0, %s16
    %s20 = sphi 0, %s17
    %s21 = sphi 0, %s18
    %s22 = sphi 0, %s19
    %s23 = sphi 0, %s20
    %s24 = sphi 0, %s21
    %s42 = sphi 0, %s44
    %s45 = sphi 0, %s42
    %s46 = sphi 0, %s45
    %s62 = sphi 0, %s46
    %s66 = sphi 0, %s66
    %s68 = sphi 0, %s66
    %s69 = sphi 0, %s68
    %s83 = sphi 0, %s69
    %s87 = sphi 0, %s87
    %s89 = sphi 0, %s87
    %s90 = sphi 0, %s89
    %s104 = sphi 0, %s90
    %s112 = sphi 0, %s114
    %s115 = sphi 0, %s112
    %s116 = sphi 0, %s115
    %s132 = sphi 0, %s116
  $region4: #{resnet_generator_forward.34} parent=0 // loop_header_branch
    %12 = sbr.rel (%p10) target = $region8
  $region5: #{resnet_generator_forward.34} parent=0 // loop_body
    %s14 = ssub.s32 %s9, 1
    %s15 = ssub.s32 %s9, 2
    %s25 = sadd.s32 1, %s18
    %p26 = scmp.ge.s32.totalorder %s25, 2
    %s27 = scalar_select %p26, 0, %s25
    %s28 = sadd.s32 1, %s17
    %s29 = scalar_select %p26, %s28, %s17
    %p30 = scmp.ge.s32.totalorder %s29, 4
    %s31 = scalar_select %p30, 0, %s29
    %s32 = sadd.s32 1, %s16
    %s33 = scalar_select %p30, %s32, %s16
    %p34 = scmp.ge.s32.totalorder %s33, 2
    %s35 = scalar_select %p34, 0, %s33
    %s36 = sadd.s32 %s17, %s18
    %s37 = sadd.s32 %s31, %s27
    %s38 = ssub.s32 %s16, %s35
    %s39 = ssub.s32 %s36, %s37
    %s40 = sor.u32 %s38, %s39
    %p41 = scmp.eq.s32.totalorder %s40, 0
    %s43 = sadd.s32 %s42, 1
    %s44 = scalar_select %p41, %s42, %s43
    %p47 = pneg %p41
    %p48 = scmp.eq.s32.totalorder %s9, 15
    %p49 = por %p47, %p48
    %p50 = scmp.ne.s32.totalorder %s42, %s45
    %p51 = scmp.eq.s32.totalorder %s9, 0
    %p52 = por %p50, %p51
    %p53 = scmp.ne.s32.totalorder %s42, %s45
    %p54 = scmp.eq.s32.totalorder %s14, 15
    %p55 = por %p53, %p54
    %p56 = scmp.ne.s32.totalorder %s45, %s46
    %p57 = scmp.eq.s32.totalorder %s14, 0
    %p58 = por %p56, %p57
    %p59 = scmp.ne.s32.totalorder %s45, %s46
    %p60 = scmp.eq.s32.totalorder %s15, 15
    %p61 = por %p59, %p60
    %p63 = scmp.ne.s32.totalorder %s46, %s62
    %p64 = scmp.eq.s32.totalorder %s15, 0
    %p65 = por %p63, %p64
    %s67 = sadd.s32 %s66, 1
    %p70 = scmp.eq.s32.totalorder %s9, 15
    %p71 = scmp.ne.s32.totalorder %s66, %s68
    %p72 = scmp.eq.s32.totalorder %s9, 0
    %p73 = por %p71, %p72
    %p74 = scmp.ne.s32.totalorder %s66, %s68
    %p75 = scmp.eq.s32.totalorder %s14, 15
    %p76 = por %p74, %p75
    %p77 = scmp.ne.s32.totalorder %s68, %s69
    %p78 = scmp.eq.s32.totalorder %s14, 0
    %p79 = por %p77, %p78
    %p80 = scmp.ne.s32.totalorder %s68, %s69
    %p81 = scmp.eq.s32.totalorder %s15, 15
    %p82 = por %p80, %p81
    %p84 = scmp.ne.s32.totalorder %s69, %s83
    %p85 = scmp.eq.s32.totalorder %s15, 0
    %p86 = por %p84, %p85
    %s88 = sadd.s32 %s87, 1
    %p91 = scmp.eq.s32.totalorder %s9, 15
    %p92 = scmp.ne.s32.totalorder %s87, %s89
    %p93 = scmp.eq.s32.totalorder %s9, 0
    %p94 = por %p92, %p93
    %p95 = scmp.ne.s32.totalorder %s87, %s89
    %p96 = scmp.eq.s32.totalorder %s14, 15
    %p97 = por %p95, %p96
    %p98 = scmp.ne.s32.totalorder %s89, %s90
    %p99 = scmp.eq.s32.totalorder %s14, 0
    %p100 = por %p98, %p99
    %p101 = scmp.ne.s32.totalorder %s89, %s90
    %p102 = scmp.eq.s32.totalorder %s15, 15
    %p103 = por %p101, %p102
    %p105 = scmp.ne.s32.totalorder %s90, %s104
    %p106 = scmp.eq.s32.totalorder %s15, 0
    %p107 = por %p105, %p106
    %s108 = ssub.s32 %s16, %s35
    %s109 = ssub.s32 %s17, %s31
    %s110 = sor.u32 %s108, %s109
    %p111 = scmp.eq.s32.totalorder %s110, 0
    %s113 = sadd.s32 %s112, 1
    %s114 = scalar_select %p111, %s112, %s113
    %p117 = pneg %p111
    %p118 = scmp.eq.s32.totalorder %s9, 15
    %p119 = por %p117, %p118
    %p120 = scmp.ne.s32.totalorder %s112, %s115
    %p121 = scmp.eq.s32.totalorder %s9, 0
    %p122 = por %p120, %p121
    %p123 = scmp.ne.s32.totalorder %s112, %s115
    %p124 = scmp.eq.s32.totalorder %s14, 15
    %p125 = por %p123, %p124
    %p126 = scmp.ne.s32.totalorder %s115, %s116
    %p127 = scmp.eq.s32.totalorder %s14, 0
    %p128 = por %p126, %p127
    %p129 = scmp.ne.s32.totalorder %s115, %s116
    %p130 = scmp.eq.s32.totalorder %s15, 15
    %p131 = por %p129, %p130
    %p133 = scmp.ne.s32.totalorder %s116, %s132
    %p134 = scmp.eq.s32.totalorder %s15, 0
    %p135 = por %p133, %p134
    %p136 = scmp.le.s32.totalorder 1, %s9
    %p137 = scmp.lt.s32.totalorder %s9, 17
    %p138 = pnand %p136, %p137
    %p139 = pneg %p138
    // Predicated region
    $region9: #{resnet_generator_forward.34} parent=5 // pred_check
      _
    $region10: #{resnet_generator_forward.34} parent=5 // pred_check_branch
      %141 = sbr.rel (%p138) target = $region12
    $region11: #{resnet_generator_forward.34} parent=5 // pred_region
      %s142 = ssub.s32 %s9, 1
      // Predicated region
      $region13: #{resnet_generator_forward.34} parent=11 // pred_check
        %p143 = pneg %p79
      $region14: #{resnet_generator_forward.34} parent=11 // pred_check_branch
        %145 = sbr.rel (%p143) target = $region16
      $region15: #{resnet_generator_forward.34} parent=11 // pred_region
        _
      $region16: #{resnet_generator_forward.34} parent=11 // pred_fallthru
        _
      // Predicated region
      $region17: #{resnet_generator_forward.34} parent=11 // pred_check
        %p146 = pneg %p100
      $region18: #{resnet_generator_forward.34} parent=11 // pred_check_branch
        %148 = sbr.rel (%p146) target = $region20
      $region19: #{resnet_generator_forward.34} parent=11 // pred_region
        _
      $region20: #{resnet_generator_forward.34} parent=11 // pred_fallthru
        _
    $region12: #{resnet_generator_forward.34} parent=5 // pred_fallthru
      _
    %p149 = scmp.lt.s32.totalorder %s9, 16
    // Predicated region
    $region21: #{resnet_generator_forward.34} parent=5 // pred_check
      %p150 = pneg %p149
    $region22: #{resnet_generator_forward.34} parent=5 // pred_check_branch
      %152 = sbr.rel (%p150) target = $region24
    $region23: #{resnet_generator_forward.34} parent=5 // pred_region
      // Predicated region
      $region25: #{resnet_generator_forward.34} parent=23 // pred_check
        %p153 = pneg %p52
      $region26: #{resnet_generator_forward.34} parent=23 // pred_check_branch
        %155 = sbr.rel (%p153) target = $region28
      $region27: #{resnet_generator_forward.34} parent=23 // pred_region
        %s156 = sadd.s32 %s17, %s18
        %p157 = scmp.lt.s32.totalorder %s16, 1
        %s158 = scalar_select %p157, %s16, 1
        %p159 = scmp.lt.s32.totalorder %s156, 4
        %s160 = scalar_select %p159, %s156, 4
        %s161 = smul.addr %s158, 5
        %s162 = sadd.s32 %s160, %s161
        %s163 = smul.addr %s162, 4
        %s164 = scalar_lea.vmem %s0, %s163
        %s165 = sadd.s32 %s17, %s18
      $region28: #{resnet_generator_forward.34} parent=23 // pred_fallthru
        _
    $region24: #{resnet_generator_forward.34} parent=5 // pred_fallthru
      _
    %p166 = scmp.le.s32.totalorder 1, %s9
    %p167 = scmp.lt.s32.totalorder %s9, 17
    %p168 = pnand %p166, %p167
    %p169 = pneg %p168
    // Predicated region
    $region29: #{resnet_generator_forward.34} parent=5 // pred_check
      _
    $region30: #{resnet_generator_forward.34} parent=5 // pred_check_branch
      %171 = sbr.rel (%p168) target = $region32
    $region31: #{resnet_generator_forward.34} parent=5 // pred_region
      %s172 = ssub.s32 %s9, 1
      %s173 = sadd.s32 %s20, %s21
      %p174 = scmp.lt.s32.totalorder %s19, 1
      %s175 = scalar_select %p174, %s19, 1
      %p176 = scmp.lt.s32.totalorder %s173, 4
      %s177 = scalar_select %p176, %s173, 4
      %s178 = smul.addr %s175, 5
      %s179 = sadd.s32 %s177, %s178
      %s180 = smul.addr %s179, 4
      %s181 = scalar_lea.vmem %s0, %s180
      %p182 = pneg %p58
      %p183 = pneg %p55
      %p184 = pneg %p79
      %p185 = pneg %p76
      %p186 = pneg %p100
      %p187 = pneg %p97
      %p188 = pneg %p128
      %p189 = pneg %p125
      %p190 = scmp.lt.s32.totalorder %s19, 1
      %s191 = scalar_select %p190, %s19, 1
      %p192 = scmp.lt.s32.totalorder %s20, 3
      %s193 = scalar_select %p192, %s20, 3
      %s194 = smul.addr %s191, 4
      %s195 = sadd.s32 %s193, %s194
      %s196 = smul.addr %s195, 2
      %s197 = scalar_lea.vmem %s3, %s196
      %s198 = sadd.s32 %s20, %s21
      %p199 = scmp.lt.s32.totalorder %s19, 1
      %s200 = scalar_select %p199, %s19, 1
      %p201 = scmp.lt.s32.totalorder %s198, 4
      %s202 = scalar_select %p201, %s198, 4
      %s203 = smul.addr %s200, 5
      %s204 = sadd.s32 %s202, %s203
      %s205 = smul.addr %s204, 4
      %s206 = scalar_lea.vmem %s0, %s205
      %s207 = sadd.s32 %s20, %s21
      %p208 = scmp.lt.s32.totalorder %s19, 1
      %s209 = scalar_select %p208, %s19, 1
      %p210 = scmp.lt.s32.totalorder %s20, 3
      %s211 = scalar_select %p210, %s20, 3
      %s212 = smul.addr %s209, 4
      %s213 = sadd.s32 %s211, %s212
      %s214 = smul.addr %s213, 2
      %s215 = scalar_lea.vmem %s3, %s214
      %p217 = scmp.eq.s32.totalorder %s21, 0
      // Predicated region
      $region33: #{resnet_generator_forward.34} parent=31 // pred_check
        %p218 = pneg %p217
      $region34: #{resnet_generator_forward.34} parent=31 // pred_check_branch
        %220 = sbr.rel (%p218) target = $region36
      $region35: #{resnet_generator_forward.34} parent=31 // pred_region
        %vm221 = vcmask 257024
        %222 = vst.msk [vmem:[#allocation2] sm:$0xf] %vm221, 0.0
      $region36: #{resnet_generator_forward.34} parent=31 // pred_fallthru
        _
      %v223 = vld [vmem:[%s206] sm:$0x7]
      %s224 = smul.u32 %s21, 2
      %s225 = smul.u32 %s224, 8
      %s226 = smul.addr %s225, 4
      %s227 = scalar_lea.vmem %s1, %s226
      %v228 = vld [vmem:[%s227] sm:$0xf]
      %v229 = vld [vmem:[%s227 + $0x4] sm:$0xf]
      %v230 = vld [vmem:[%s227 + $0x8] sm:$0xf]
      %v231 = vld [vmem:[%s227 + $0xc] sm:$0xf]
      %v232 = vld [vmem:[%s227 + $0x10] sm:$0xf]
      %v233 = vld [vmem:[%s227 + $0x14] sm:$0xf]
      %v234 = vld [vmem:[%s227 + $0x18] sm:$0xf]
      %v235 = vld [vmem:[%s227 + $0x1c] sm:$0xf]
      %s236 = sadd.s32 %s224, 1
      %s237 = smul.u32 %s236, 8
      %s238 = smul.addr %s237, 4
      %s239 = scalar_lea.vmem %s1, %s238
      %v240 = vld [vmem:[%s239] sm:$0xf]
      %v241 = vld [vmem:[%s239 + $0x4] sm:$0xf]
      %v242 = vld [vmem:[%s239 + $0x8] sm:$0xf]
      %v243 = vld [vmem:[%s239 + $0xc] sm:$0xf]
      %v244 = vld [vmem:[%s239 + $0x10] sm:$0xf]
      %v245 = vld [vmem:[%s239 + $0x14] sm:$0xf]
      %v246 = vld [vmem:[%s239 + $0x18] sm:$0xf]
      %v247 = vld [vmem:[%s239 + $0x1c] sm:$0xf]
      %v249 = vunpack.c.l.b16 %v223
      %v250 = vpack.c.b16 %v249, %v249
      %v252 = vshrl.u32 %v250, 16
      %v254 = vshll.u32 %v250, 16
      %v256 = vrot.slane %v254, 1
      %v257 = vor.u32 %v252, %v256
      %v266 = vunpack.c.l.b16 %v240
      %v267 = vunpack.c.l.b16 %v241
      %v268 = vunpack.c.l.b16 %v242
      %v269 = vunpack.c.l.b16 %v243
      %v270 = vunpack.c.l.b16 %v244
      %v271 = vunpack.c.l.b16 %v245
      %v272 = vunpack.c.l.b16 %v246
      %v273 = vunpack.c.l.b16 %v247
      %v274 = vpack.c.b16 %v267, %v266
      %v275 = vpack.c.b16 %v269, %v268
      %v276 = vpack.c.b16 %v271, %v270
      %v277 = vpack.c.b16 %v273, %v272
      %vm282 = vcmask 523264
      %v284 = vsel %vm282, %v257, 0
      %286 = vmatpush.bf16.msra.mxu0 0
      %287 = vmatpush.bf16.msra.mxu0 0
      %288 = vmatpush.bf16.msra.mxu0 0
      %289 = vmatpush.bf16.msra.mxu0 0
      %290 = vmatpush.bf16.msra.mxu0 %v277
      %291 = vmatpush.bf16.msra.mxu0 %v276
      %292 = vmatpush.bf16.msra.mxu0 %v275
      %293 = vmatpush.bf16.msra.mxu0 %v274
      %294 = vmatmul.bf16.gmra.mxu0 %v284
      %v295 = vpop.f32.mrf.mxu0
      %v296 = vadd.f32 0.0, %v295
      %v297 = vpop.f32.mrf.mxu0
      %298 = vdwg.mxu0
      %v307 = vunpack.c.l.b16 %v228
      %v308 = vunpack.c.l.b16 %v229
      %v309 = vunpack.c.l.b16 %v230
      %v310 = vunpack.c.l.b16 %v231
      %v311 = vunpack.c.l.b16 %v232
      %v312 = vunpack.c.l.b16 %v233
      %v313 = vunpack.c.l.b16 %v234
      %v314 = vunpack.c.l.b16 %v235
      %v315 = vpack.c.b16 %v308, %v307
      %v316 = vpack.c.b16 %v310, %v309
      %v317 = vpack.c.b16 %v312, %v311
      %v318 = vpack.c.b16 %v314, %v313
      %v324 = vsel %vm282, %v223, 0
      %326 = vmatpush.bf16.msra.mxu0 0
      %327 = vmatpush.bf16.msra.mxu0 0
      %328 = vmatpush.bf16.msra.mxu0 0
      %329 = vmatpush.bf16.msra.mxu0 0
      %330 = vmatpush.bf16.msra.mxu0 %v318
      %331 = vmatpush.bf16.msra.mxu0 %v317
      %332 = vmatpush.bf16.msra.mxu0 %v316
      %333 = vmatpush.bf16.msra.mxu0 %v315
      %334 = vmatmul.bf16.gmra.mxu0 %v324
      %v335 = vpop.f32.mrf.mxu0
      %v336 = vadd.f32 %v296, %v335
      %v337 = vpop.f32.mrf.mxu0
      %338 = vdwg.mxu0
      %v339 = vld [vmem:[#allocation2] sm:$0xf]
      %v340 = vadd.f32 %v339, %v336
      %vm341 = vcmask 257024
      %342 = vst.msk [vmem:[#allocation2] sm:$0xf] %vm341, %v340
      %p343 = scmp.eq.s32.totalorder %s21, 1
      // Predicated region
      $region37: #{resnet_generator_forward.34} parent=31 // pred_check
        %p344 = pneg %p343
      $region38: #{resnet_generator_forward.34} parent=31 // pred_check_branch
        %346 = sbr.rel (%p344) target = $region40
      $region39: #{resnet_generator_forward.34} parent=31 // pred_region
        %v347 = vld [vmem:[#allocation2] sm:$0xf]
        %v348 = vld [vmem:[%s2] sm:$0x1]
        %v350 = vperm.slane %v348, 0
        %v352 = vadd.f32 %v347, %v350
        %v353 = vpack.c.bf16 %v352, %v352
        %vm354 = vcmask 254976
        %355 = vst.msk [vmem:[%s215] sm:$0x3] %vm354, %v353
      $region40: #{resnet_generator_forward.34} parent=31 // pred_fallthru
        _
      %p356 = scmp.lt.s32.totalorder %s19, 1
      %s357 = scalar_select %p356, %s19, 1
      %p358 = scmp.lt.s32.totalorder %s20, 3
      %s359 = scalar_select %p358, %s20, 3
      %s360 = smul.addr %s357, 4
      %s361 = sadd.s32 %s359, %s360
      %s362 = smul.addr %s361, 2
      %s363 = scalar_lea.vmem %s3, %s362
      // Predicated region
      $region41: #{resnet_generator_forward.34} parent=31 // pred_check
        %p364 = pneg %p125
      $region42: #{resnet_generator_forward.34} parent=31 // pred_check_branch
        %366 = sbr.rel (%p364) target = $region44
      $region43: #{resnet_generator_forward.34} parent=31 // pred_region
        _
      $region44: #{resnet_generator_forward.34} parent=31 // pred_fallthru
        _
    $region32: #{resnet_generator_forward.34} parent=5 // pred_fallthru
      _
    %p367 = scmp.le.s32.totalorder 2, %s9
    // Predicated region
    $region45: #{resnet_generator_forward.34} parent=5 // pred_check
      %p368 = pneg %p367
    $region46: #{resnet_generator_forward.34} parent=5 // pred_check_branch
      %370 = sbr.rel (%p368) target = $region48
    $region47: #{resnet_generator_forward.34} parent=5 // pred_region
      %s371 = ssub.s32 %s9, 2
      // Predicated region
      $region49: #{resnet_generator_forward.34} parent=47 // pred_check
        %p372 = pneg %p131
      $region50: #{resnet_generator_forward.34} parent=47 // pred_check_branch
        %374 = sbr.rel (%p372) target = $region52
      $region51: #{resnet_generator_forward.34} parent=47 // pred_region
        %p375 = scmp.lt.s32.totalorder %s22, 1
        %s376 = scalar_select %p375, %s22, 1
        %p377 = scmp.lt.s32.totalorder %s23, 3
        %s378 = scalar_select %p377, %s23, 3
        %s379 = smul.addr %s376, 4
        %s380 = sadd.s32 %s378, %s379
        %s381 = smul.addr %s380, 2
        %s382 = scalar_lea.vmem %s3, %s381
      $region52: #{resnet_generator_forward.34} parent=47 // pred_fallthru
        _
    $region48: #{resnet_generator_forward.34} parent=5 // pred_fallthru
      _
  $region6: #{resnet_generator_forward.34} parent=0 // loop_footer
    %s13 = sadd.s32 1, %s9
  $region7: #{resnet_generator_forward.34} parent=0 // loop_footer_branch
    %8 = sbr.rel target = $region3
  $region8: #{resnet_generator_forward.34} parent=0 // loop_exit
    _

// kernel: resnet_generator_forward.35
$region0: #{resnet_generator_forward.35}
  #allocation0 [shape = 'u32[]', space=smem, size = 0x4, offset = 0x4, fixed_abs, tag = 'smem constant byte address 0x4 - core index']
  #allocation1 [shape = 'u32[72,128]{1,0:T(1,128)}', space=vmem, size = 0x9000, scoped, tag = 'internal scratch']
  %s0 = inlined_call_operand.vmem [shape: bf16[32,32], index: 0, kind: input, shape index: {}]
  %s1 = inlined_call_operand.vmem [shape: f32[1,32], index: 1, kind: output, shape index: {0}]
  %s2 = inlined_call_operand.vmem [shape: f32[1,32], index: 2, kind: output, shape index: {1}]
  %3 = xla_tuple %s1, %s2
  %s4 = sld [smem:[#allocation0]]
  $region26: #{resnet_generator_forward.35} parent=0
    _
  %s6 = ssub.s32 1, %s4
  %s7 = scalar_select 0, %s6, %s4
  // Predicated region
  $region2: #{resnet_generator_forward.35} parent=0 // pred_check
    _
  $region3: #{resnet_generator_forward.35} parent=0 // pred_check_branch
    %9 = sbr.rel (0) target = $region5
  $region4: #{resnet_generator_forward.35} parent=0 // pred_region
    _
  $region5: #{resnet_generator_forward.35} parent=0 // pred_fallthru
    _
  %p10 = scmp.eq.s32.totalorder 0, 0
  // Predicated region
  $region6: #{resnet_generator_forward.35} parent=0 // pred_check
    %p11 = pneg %p10
  $region7: #{resnet_generator_forward.35} parent=0 // pred_check_branch
    %13 = sbr.rel (%p11) target = $region9
  $region8: #{resnet_generator_forward.35} parent=0 // pred_region
    %vm14 = vcmask 253952
    %15 = vst.msk [vmem:[%s1] sm:$0x1] %vm14, 0.0
    %16 = vst.msk [vmem:[%s2] sm:$0x1] %vm14, 0.0
  $region9: #{resnet_generator_forward.35} parent=0 // pred_fallthru
    _
  %v17 = vld [vmem:[%s0] sm:$0xf]
  %v18 = vld [vmem:[%s0 + $0x4] sm:$0xf]
  %v19 = vld [vmem:[%s0 + $0x8] sm:$0xf]
  %v20 = vld [vmem:[%s0 + $0xc] sm:$0xf]
  %v21 = vunpack.c.l.bf16 %v17
  %v22 = vunpack.c.l.bf16 %v18
  %v23 = vunpack.c.l.bf16 %v19
  %v24 = vunpack.c.l.bf16 %v20
  %v25 = vld [vmem:[%s1] sm:$0x1]
  %vm26 = vcmask 261120
  %v27 = vsel %vm26, %v21, 0.0
  %v28 = vsel %vm26, %v22, 0.0
  %v29 = vadd.f32 %v27, %v28
  %v30 = vsel %vm26, %v23, 0.0
  %v31 = vadd.f32 %v29, %v30
  %v32 = vsel %vm26, %v24, 0.0
  %v33 = vadd.f32 %v31, %v32
  %v34 = vrot.slane %v33, 4
  %v35 = vadd.f32 %v33, %v34
  %v36 = vrot.slane %v35, 2
  %v37 = vadd.f32 %v35, %v36
  %v38 = vrot.slane %v37, 1
  %v39 = vadd.f32 %v37, %v38
  %v40 = vadd.f32 %v25, %v39
  %vm41 = vcmask 253952
  %42 = vst.msk [vmem:[%s1] sm:$0x1] %vm41, %v40
  %v43 = vld [vmem:[%s2] sm:$0x1]
  %v44 = vmul.f32 %v21, %v21
  %v45 = vmul.f32 %v22, %v22
  %v46 = vmul.f32 %v23, %v23
  %v47 = vmul.f32 %v24, %v24
  %v48 = vsel %vm26, %v44, 0.0
  %v49 = vsel %vm26, %v45, 0.0
  %v50 = vadd.f32 %v48, %v49
  %v51 = vsel %vm26, %v46, 0.0
  %v52 = vadd.f32 %v50, %v51
  %v53 = vsel %vm26, %v47, 0.0
  %v54 = vadd.f32 %v52, %v53
  %v55 = vrot.slane %v54, 4
  %v56 = vadd.f32 %v54, %v55
  %v57 = vrot.slane %v56, 2
  %v58 = vadd.f32 %v56, %v57
  %v59 = vrot.slane %v58, 1
  %v60 = vadd.f32 %v58, %v59
  %v61 = vadd.f32 %v43, %v60
  %62 = vst.msk [vmem:[%s2] sm:$0x1] %vm41, %v61
  // Predicated region
  $region10: #{resnet_generator_forward.35} parent=0 // pred_check
    _
  $region11: #{resnet_generator_forward.35} parent=0 // pred_check_branch
    %64 = sbr.rel (0) target = $region13
  $region12: #{resnet_generator_forward.35} parent=0 // pred_region
    _
  $region13: #{resnet_generator_forward.35} parent=0 // pred_fallthru
    _
  // Predicated region
  $region14: #{resnet_generator_forward.35} parent=0 // pred_check
    _
  $region15: #{resnet_generator_forward.35} parent=0 // pred_check_branch
    %66 = sbr.rel (0) target = $region17
  $region16: #{resnet_generator_forward.35} parent=0 // pred_region
    _
  $region17: #{resnet_generator_forward.35} parent=0 // pred_fallthru
    _
  // Predicated region
  $region18: #{resnet_generator_forward.35} parent=0 // pred_check
    _
  $region19: #{resnet_generator_forward.35} parent=0 // pred_check_branch
    %68 = sbr.rel (0) target = $region21
  $region20: #{resnet_generator_forward.35} parent=0 // pred_region
    _
  $region21: #{resnet_generator_forward.35} parent=0 // pred_fallthru
    _
  // Predicated region
  $region22: #{resnet_generator_forward.35} parent=0 // pred_check
    _
  $region23: #{resnet_generator_forward.35} parent=0 // pred_check_branch
    %70 = sbr.rel (0) target = $region25
  $region24: #{resnet_generator_forward.35} parent=0 // pred_region
    _
  $region25: #{resnet_generator_forward.35} parent=0 // pred_fallthru
    _

// kernel: resnet_generator_forward.36
$region0: #{resnet_generator_forward.36}
  #allocation0 [shape = 'u32[]', space=smem, size = 0x4, offset = 0x4, fixed_abs, tag = 'smem constant byte address 0x4 - core index']
  #allocation1 [shape = 'u32[72,128]{1,0:T(1,128)}', space=vmem, size = 0x9000, scoped, tag = 'internal scratch']
  %s0 = inlined_call_operand.vmem [shape: bf16[32,32], index: 0, kind: input, shape index: {}]
  %s1 = inlined_call_operand.vmem [shape: f32[1,32], index: 1, kind: input, shape index: {}]
  %s2 = inlined_call_operand.vmem [shape: f32[1,32], index: 2, kind: input, shape index: {}]
  %s3 = inlined_call_operand.vmem [shape: f32[1,32], index: 3, kind: input, shape index: {}]
  %s4 = inlined_call_operand.vmem [shape: f32[1,32], index: 4, kind: input, shape index: {}]
  %s5 = inlined_call_operand.vmem [shape: bf16[32,32], index: 5, kind: output, shape index: {}]
  %s6 = sld [smem:[#allocation0]]
  $region30: #{resnet_generator_forward.36} parent=0
    _
  %s8 = ssub.s32 1, %s6
  %s9 = scalar_select 0, %s8, %s6
  // Predicated region
  $region2: #{resnet_generator_forward.36} parent=0 // pred_check
    _
  $region3: #{resnet_generator_forward.36} parent=0 // pred_check_branch
    %11 = sbr.rel (0) target = $region5
  $region4: #{resnet_generator_forward.36} parent=0 // pred_region
    _
  $region5: #{resnet_generator_forward.36} parent=0 // pred_fallthru
    _
  // Predicated region
  $region6: #{resnet_generator_forward.36} parent=0 // pred_check
    _
  $region7: #{resnet_generator_forward.36} parent=0 // pred_check_branch
    %13 = sbr.rel (0) target = $region9
  $region8: #{resnet_generator_forward.36} parent=0 // pred_region
    _
  $region9: #{resnet_generator_forward.36} parent=0 // pred_fallthru
    _
  // Predicated region
  $region10: #{resnet_generator_forward.36} parent=0 // pred_check
    _
  $region11: #{resnet_generator_forward.36} parent=0 // pred_check_branch
    %15 = sbr.rel (0) target = $region13
  $region12: #{resnet_generator_forward.36} parent=0 // pred_region
    _
  $region13: #{resnet_generator_forward.36} parent=0 // pred_fallthru
    _
  // Predicated region
  $region14: #{resnet_generator_forward.36} parent=0 // pred_check
    _
  $region15: #{resnet_generator_forward.36} parent=0 // pred_check_branch
    %17 = sbr.rel (0) target = $region17
  $region16: #{resnet_generator_forward.36} parent=0 // pred_region
    _
  $region17: #{resnet_generator_forward.36} parent=0 // pred_fallthru
    _
  // Predicated region
  $region18: #{resnet_generator_forward.36} parent=0 // pred_check
    _
  $region19: #{resnet_generator_forward.36} parent=0 // pred_check_branch
    %19 = sbr.rel (0) target = $region21
  $region20: #{resnet_generator_forward.36} parent=0 // pred_region
    _
  $region21: #{resnet_generator_forward.36} parent=0 // pred_fallthru
    _
  %v20 = vld [vmem:[%s1] sm:$0x1]
  %v21 = vmul.f32 %v20, 0.03125
  %v22 = vld [vmem:[%s2] sm:$0x1]
  %v23 = vmul.f32 %v22, 0.03125
  %v24 = vmul.f32 %v21, %v21
  %v25 = vsub.f32 %v23, %v24
  %v26 = vmax.f32 %v25, 0.0
  %v27 = vld [vmem:[%s3] sm:$0x1]
  %v28 = vadd.f32 %v26, 1e-05
  %v29 = vrsqrt.pop %v28
  %v30 = vmul.f32 %v29, %v28
  %v31 = vmul.f32 %v30, %v29
  %v32 = vmul.f32 0.5, %v31
  %v33 = vsub.f32 1.5, %v32
  %v34 = vmul.f32 %v29, %v33
  %vm35 = vweird.f32 %v28
  %vm36 = vweird.f32 %v29
  %vm37 = vmor %vm35, %vm36
  %v38 = vsel %vm37, %v29, %v34
  %v39 = vmul.f32 %v27, %v38
  %v40 = vld [vmem:[%s4] sm:$0x1]
  %v41 = vmul.f32 %v21, %v39
  %v42 = vsub.f32 %v40, %v41
  %v43 = vld [vmem:[%s0] sm:$0xf]
  %v44 = vld [vmem:[%s0 + $0x4] sm:$0xf]
  %v45 = vld [vmem:[%s0 + $0x8] sm:$0xf]
  %v46 = vld [vmem:[%s0 + $0xc] sm:$0xf]
  %v47 = vunpack.c.l.bf16 %v43
  %v48 = vunpack.c.l.bf16 %v44
  %v49 = vunpack.c.l.bf16 %v45
  %v50 = vunpack.c.l.bf16 %v46
  %v52 = vperm.slane %v39, 0
  %v54 = vmul.f32 %v47, %v52
  %v55 = vmul.f32 %v48, %v52
  %v56 = vmul.f32 %v49, %v52
  %v57 = vmul.f32 %v50, %v52
  %v59 = vperm.slane %v42, 0
  %v61 = vadd.f32 %v54, %v59
  %v62 = vadd.f32 %v55, %v59
  %v63 = vadd.f32 %v56, %v59
  %v64 = vadd.f32 %v57, %v59
  %v65 = vmax.f32 %v61, 0.0
  %v66 = vmax.f32 %v62, 0.0
  %v67 = vmax.f32 %v63, 0.0
  %v68 = vmax.f32 %v64, 0.0
  %v69 = vpack.c.bf16 %v65, %v65
  %v70 = vpack.c.bf16 %v66, %v66
  %v71 = vpack.c.bf16 %v67, %v67
  %v72 = vpack.c.bf16 %v68, %v68
  %vm73 = vcmask 257024
  %74 = vst.msk [vmem:[%s5] sm:$0xf] %vm73, %v69
  %75 = vst.msk [vmem:[%s5 + $0x4] sm:$0xf] %vm73, %v70
  %76 = vst.msk [vmem:[%s5 + $0x8] sm:$0xf] %vm73, %v71
  %77 = vst.msk [vmem:[%s5 + $0xc] sm:$0xf] %vm73, %v72
  // Predicated region
  $region22: #{resnet_generator_forward.36} parent=0 // pred_check
    _
  $region23: #{resnet_generator_forward.36} parent=0 // pred_check_branch
    %79 = sbr.rel (0) target = $region25
  $region24: #{resnet_generator_forward.36} parent=0 // pred_region
    _
  $region25: #{resnet_generator_forward.36} parent=0 // pred_fallthru
    _
  // Predicated region
  $region26: #{resnet_generator_forward.36} parent=0 // pred_check
    _
  $region27: #{resnet_generator_forward.36} parent=0 // pred_check_branch
    %81 = sbr.rel (0) target = $region29
  $region28: #{resnet_generator_forward.36} parent=0 // pred_region
    _
  $region29: #{resnet_generator_forward.36} parent=0 // pred_fallthru
    _

// kernel: resnet_generator_forward.37
$region0: #{resnet_generator_forward.37}
  #allocation0 [shape = 'u32[]', space=smem, size = 0x4, offset = 0x4, fixed_abs, tag = 'smem constant byte address 0x4 - core index']
  #allocation1 [shape = 'u32[72,128]{1,0:T(1,128)}', space=vmem, size = 0x9000, scoped, tag = 'internal scratch']
  #allocation2 [shape = 'f32[4,32]{1,0:T(4,128)}', space=vmem, size = 0x800, scoped, tag = 'scratch operand']
  %s0 = inlined_call_operand.vmem [shape: bf16[2,6,6,32], index: 0, kind: input, shape index: {}]
  %s1 = inlined_call_operand.vmem [shape: bf16[9,32,32], index: 1, kind: input, shape index: {}]
  %s2 = inlined_call_operand.vmem [shape: f32[1,32], index: 2, kind: input, shape index: {}]
  %s3 = inlined_call_operand.vmem [shape: bf16[2,4,4,32], index: 3, kind: output, shape index: {}]
  %s4 = sld [smem:[#allocation0]]
  $region53: #{resnet_generator_forward.37} parent=0
    _
  %s6 = ssub.s32 1, %s4
  %s7 = scalar_select 0, %s6, %s4
  loop: start=0, step=1, limit=26
  $region2: #{resnet_generator_forward.37} parent=0 // loop_pre_header
    _
  $region3: #{resnet_generator_forward.37} parent=0 // loop_header
    %s9 = sphi 0, %s13
    %p10 = scmp.ge.s32.totalorder %s9, 26
    %s16 = sphi 0, %s35
    %s17 = sphi 0, %s31
    %s18 = sphi 0, %s27
    %s19 = sphi 0, %s16
    %s20 = sphi 0, %s17
    %s21 = sphi 0, %s18
    %s22 = sphi 0, %s19
    %s23 = sphi 0, %s20
    %s24 = sphi 0, %s21
    %s42 = sphi 0, %s44
    %s45 = sphi 0, %s42
    %s46 = sphi 0, %s45
    %s62 = sphi 0, %s46
    %s66 = sphi 0, %s66
    %s68 = sphi 0, %s66
    %s69 = sphi 0, %s68
    %s83 = sphi 0, %s69
    %s87 = sphi 0, %s87
    %s89 = sphi 0, %s87
    %s90 = sphi 0, %s89
    %s104 = sphi 0, %s90
    %s112 = sphi 0, %s114
    %s115 = sphi 0, %s112
    %s116 = sphi 0, %s115
    %s132 = sphi 0, %s116
  $region4: #{resnet_generator_forward.37} parent=0 // loop_header_branch
    %12 = sbr.rel (%p10) target = $region8
  $region5: #{resnet_generator_forward.37} parent=0 // loop_body
    %s14 = ssub.s32 %s9, 1
    %s15 = ssub.s32 %s9, 2
    %s25 = sadd.s32 1, %s18
    %p26 = scmp.ge.s32.totalorder %s25, 3
    %s27 = scalar_select %p26, 0, %s25
    %s28 = sadd.s32 1, %s17
    %s29 = scalar_select %p26, %s28, %s17
    %p30 = scmp.ge.s32.totalorder %s29, 4
    %s31 = scalar_select %p30, 0, %s29
    %s32 = sadd.s32 1, %s16
    %s33 = scalar_select %p30, %s32, %s16
    %p34 = scmp.ge.s32.totalorder %s33, 2
    %s35 = scalar_select %p34, 0, %s33
    %s36 = sadd.s32 %s17, %s18
    %s37 = sadd.s32 %s31, %s27
    %s38 = ssub.s32 %s16, %s35
    %s39 = ssub.s32 %s36, %s37
    %s40 = sor.u32 %s38, %s39
    %p41 = scmp.eq.s32.totalorder %s40, 0
    %s43 = sadd.s32 %s42, 1
    %s44 = scalar_select %p41, %s42, %s43
    %p47 = pneg %p41
    %p48 = scmp.eq.s32.totalorder %s9, 23
    %p49 = por %p47, %p48
    %p50 = scmp.ne.s32.totalorder %s42, %s45
    %p51 = scmp.eq.s32.totalorder %s9, 0
    %p52 = por %p50, %p51
    %p53 = scmp.ne.s32.totalorder %s42, %s45
    %p54 = scmp.eq.s32.totalorder %s14, 23
    %p55 = por %p53, %p54
    %p56 = scmp.ne.s32.totalorder %s45, %s46
    %p57 = scmp.eq.s32.totalorder %s14, 0
    %p58 = por %p56, %p57
    %p59 = scmp.ne.s32.totalorder %s45, %s46
    %p60 = scmp.eq.s32.totalorder %s15, 23
    %p61 = por %p59, %p60
    %p63 = scmp.ne.s32.totalorder %s46, %s62
    %p64 = scmp.eq.s32.totalorder %s15, 0
    %p65 = por %p63, %p64
    %s67 = sadd.s32 %s66, 1
    %p70 = scmp.eq.s32.totalorder %s9, 23
    %p71 = scmp.ne.s32.totalorder %s66, %s68
    %p72 = scmp.eq.s32.totalorder %s9, 0
    %p73 = por %p71, %p72
    %p74 = scmp.ne.s32.totalorder %s66, %s68
    %p75 = scmp.eq.s32.totalorder %s14, 23
    %p76 = por %p74, %p75
    %p77 = scmp.ne.s32.totalorder %s68, %s69
    %p78 = scmp.eq.s32.totalorder %s14, 0
    %p79 = por %p77, %p78
    %p80 = scmp.ne.s32.totalorder %s68, %s69
    %p81 = scmp.eq.s32.totalorder %s15, 23
    %p82 = por %p80, %p81
    %p84 = scmp.ne.s32.totalorder %s69, %s83
    %p85 = scmp.eq.s32.totalorder %s15, 0
    %p86 = por %p84, %p85
    %s88 = sadd.s32 %s87, 1
    %p91 = scmp.eq.s32.totalorder %s9, 23
    %p92 = scmp.ne.s32.totalorder %s87, %s89
    %p93 = scmp.eq.s32.totalorder %s9, 0
    %p94 = por %p92, %p93
    %p95 = scmp.ne.s32.totalorder %s87, %s89
    %p96 = scmp.eq.s32.totalorder %s14, 23
    %p97 = por %p95, %p96
    %p98 = scmp.ne.s32.totalorder %s89, %s90
    %p99 = scmp.eq.s32.totalorder %s14, 0
    %p100 = por %p98, %p99
    %p101 = scmp.ne.s32.totalorder %s89, %s90
    %p102 = scmp.eq.s32.totalorder %s15, 23
    %p103 = por %p101, %p102
    %p105 = scmp.ne.s32.totalorder %s90, %s104
    %p106 = scmp.eq.s32.totalorder %s15, 0
    %p107 = por %p105, %p106
    %s108 = ssub.s32 %s16, %s35
    %s109 = ssub.s32 %s17, %s31
    %s110 = sor.u32 %s108, %s109
    %p111 = scmp.eq.s32.totalorder %s110, 0
    %s113 = sadd.s32 %s112, 1
    %s114 = scalar_select %p111, %s112, %s113
    %p117 = pneg %p111
    %p118 = scmp.eq.s32.totalorder %s9, 23
    %p119 = por %p117, %p118
    %p120 = scmp.ne.s32.totalorder %s112, %s115
    %p121 = scmp.eq.s32.totalorder %s9, 0
    %p122 = por %p120, %p121
    %p123 = scmp.ne.s32.totalorder %s112, %s115
    %p124 = scmp.eq.s32.totalorder %s14, 23
    %p125 = por %p123, %p124
    %p126 = scmp.ne.s32.totalorder %s115, %s116
    %p127 = scmp.eq.s32.totalorder %s14, 0
    %p128 = por %p126, %p127
    %p129 = scmp.ne.s32.totalorder %s115, %s116
    %p130 = scmp.eq.s32.totalorder %s15, 23
    %p131 = por %p129, %p130
    %p133 = scmp.ne.s32.totalorder %s116, %s132
    %p134 = scmp.eq.s32.totalorder %s15, 0
    %p135 = por %p133, %p134
    %p136 = scmp.le.s32.totalorder 1, %s9
    %p137 = scmp.lt.s32.totalorder %s9, 25
    %p138 = pnand %p136, %p137
    %p139 = pneg %p138
    // Predicated region
    $region9: #{resnet_generator_forward.37} parent=5 // pred_check
      _
    $region10: #{resnet_generator_forward.37} parent=5 // pred_check_branch
      %141 = sbr.rel (%p138) target = $region12
    $region11: #{resnet_generator_forward.37} parent=5 // pred_region
      %s142 = ssub.s32 %s9, 1
      // Predicated region
      $region13: #{resnet_generator_forward.37} parent=11 // pred_check
        %p143 = pneg %p79
      $region14: #{resnet_generator_forward.37} parent=11 // pred_check_branch
        %145 = sbr.rel (%p143) target = $region16
      $region15: #{resnet_generator_forward.37} parent=11 // pred_region
        _
      $region16: #{resnet_generator_forward.37} parent=11 // pred_fallthru
        _
      // Predicated region
      $region17: #{resnet_generator_forward.37} parent=11 // pred_check
        %p146 = pneg %p100
      $region18: #{resnet_generator_forward.37} parent=11 // pred_check_branch
        %148 = sbr.rel (%p146) target = $region20
      $region19: #{resnet_generator_forward.37} parent=11 // pred_region
        _
      $region20: #{resnet_generator_forward.37} parent=11 // pred_fallthru
        _
    $region12: #{resnet_generator_forward.37} parent=5 // pred_fallthru
      _
    %p149 = scmp.lt.s32.totalorder %s9, 24
    // Predicated region
    $region21: #{resnet_generator_forward.37} parent=5 // pred_check
      %p150 = pneg %p149
    $region22: #{resnet_generator_forward.37} parent=5 // pred_check_branch
      %152 = sbr.rel (%p150) target = $region24
    $region23: #{resnet_generator_forward.37} parent=5 // pred_region
      // Predicated region
      $region25: #{resnet_generator_forward.37} parent=23 // pred_check
        %p153 = pneg %p52
      $region26: #{resnet_generator_forward.37} parent=23 // pred_check_branch
        %155 = sbr.rel (%p153) target = $region28
      $region27: #{resnet_generator_forward.37} parent=23 // pred_region
        %s156 = sadd.s32 %s17, %s18
        %p157 = scmp.lt.s32.totalorder %s16, 1
        %s158 = scalar_select %p157, %s16, 1
        %p159 = scmp.lt.s32.totalorder %s156, 5
        %s160 = scalar_select %p159, %s156, 5
        %s161 = smul.addr %s158, 6
        %s162 = sadd.s32 %s160, %s161
        %s163 = smul.addr %s162, 4
        %s164 = scalar_lea.vmem %s0, %s163
        %s165 = sadd.s32 %s17, %s18
      $region28: #{resnet_generator_forward.37} parent=23 // pred_fallthru
        _
    $region24: #{resnet_generator_forward.37} parent=5 // pred_fallthru
      _
    %p166 = scmp.le.s32.totalorder 1, %s9
    %p167 = scmp.lt.s32.totalorder %s9, 25
    %p168 = pnand %p166, %p167
    %p169 = pneg %p168
    // Predicated region
    $region29: #{resnet_generator_forward.37} parent=5 // pred_check
      _
    $region30: #{resnet_generator_forward.37} parent=5 // pred_check_branch
      %171 = sbr.rel (%p168) target = $region32
    $region31: #{resnet_generator_forward.37} parent=5 // pred_region
      %s172 = ssub.s32 %s9, 1
      %s173 = sadd.s32 %s20, %s21
      %p174 = scmp.lt.s32.totalorder %s19, 1
      %s175 = scalar_select %p174, %s19, 1
      %p176 = scmp.lt.s32.totalorder %s173, 5
      %s177 = scalar_select %p176, %s173, 5
      %s178 = smul.addr %s175, 6
      %s179 = sadd.s32 %s177, %s178
      %s180 = smul.addr %s179, 4
      %s181 = scalar_lea.vmem %s0, %s180
      %p182 = pneg %p58
      %p183 = pneg %p55
      %p184 = pneg %p79
      %p185 = pneg %p76
      %p186 = pneg %p100
      %p187 = pneg %p97
      %p188 = pneg %p128
      %p189 = pneg %p125
      %p190 = scmp.lt.s32.totalorder %s19, 1
      %s191 = scalar_select %p190, %s19, 1
      %p192 = scmp.lt.s32.totalorder %s20, 3
      %s193 = scalar_select %p192, %s20, 3
      %s194 = smul.addr %s191, 4
      %s195 = sadd.s32 %s193, %s194
      %s196 = smul.addr %s195, 2
      %s197 = scalar_lea.vmem %s3, %s196
      %s198 = sadd.s32 %s20, %s21
      %p199 = scmp.lt.s32.totalorder %s19, 1
      %s200 = scalar_select %p199, %s19, 1
      %p201 = scmp.lt.s32.totalorder %s198, 5
      %s202 = scalar_select %p201, %s198, 5
      %s203 = smul.addr %s200, 6
      %s204 = sadd.s32 %s202, %s203
      %s205 = smul.addr %s204, 4
      %s206 = scalar_lea.vmem %s0, %s205
      %s207 = sadd.s32 %s20, %s21
      %p208 = scmp.lt.s32.totalorder %s19, 1
      %s209 = scalar_select %p208, %s19, 1
      %p210 = scmp.lt.s32.totalorder %s20, 3
      %s211 = scalar_select %p210, %s20, 3
      %s212 = smul.addr %s209, 4
      %s213 = sadd.s32 %s211, %s212
      %s214 = smul.addr %s213, 2
      %s215 = scalar_lea.vmem %s3, %s214
      %p217 = scmp.eq.s32.totalorder %s21, 0
      // Predicated region
      $region33: #{resnet_generator_forward.37} parent=31 // pred_check
        %p218 = pneg %p217
      $region34: #{resnet_generator_forward.37} parent=31 // pred_check_branch
        %220 = sbr.rel (%p218) target = $region36
      $region35: #{resnet_generator_forward.37} parent=31 // pred_region
        %vm221 = vcmask 257024
        %222 = vst.msk [vmem:[#allocation2] sm:$0xf] %vm221, 0.0
      $region36: #{resnet_generator_forward.37} parent=31 // pred_fallthru
        _
      %v223 = vld [vmem:[%s206] sm:$0x7]
      %s224 = smul.u32 %s21, 3
      %s225 = smul.u32 %s224, 4
      %s226 = smul.addr %s225, 4
      %s227 = scalar_lea.vmem %s1, %s226
      %v228 = vld [vmem:[%s227] sm:$0xf]
      %v229 = vld [vmem:[%s227 + $0x4] sm:$0xf]
      %v230 = vld [vmem:[%s227 + $0x8] sm:$0xf]
      %v231 = vld [vmem:[%s227 + $0xc] sm:$0xf]
      %s232 = sadd.s32 %s224, 1
      %s233 = smul.u32 %s232, 4
      %s234 = smul.addr %s233, 4
      %s235 = scalar_lea.vmem %s1, %s234
      %v236 = vld [vmem:[%s235] sm:$0xf]
      %v237 = vld [vmem:[%s235 + $0x4] sm:$0xf]
      %v238 = vld [vmem:[%s235 + $0x8] sm:$0xf]
      %v239 = vld [vmem:[%s235 + $0xc] sm:$0xf]
      %v241 = vunpack.c.l.b16 %v223
      %v242 = vpack.c.b16 %v241, %v241
      %v244 = vshrl.u32 %v242, 16
      %v246 = vshll.u32 %v242, 16
      %v248 = vrot.slane %v246, 1
      %v249 = vor.u32 %v244, %v248
      %v254 = vunpack.c.l.b16 %v236
      %v255 = vunpack.c.l.b16 %v237
      %v256 = vunpack.c.l.b16 %v238
      %v257 = vunpack.c.l.b16 %v239
      %v258 = vpack.c.b16 %v255, %v254
      %v259 = vpack.c.b16 %v257, %v256
      %vm262 = vcmask 261120
      %v264 = vsel %vm262, %v249, 0
      %266 = vmatpush.bf16.msra.mxu0 0
      %267 = vmatpush.bf16.msra.mxu0 0
      %268 = vmatpush.bf16.msra.mxu0 0
      %269 = vmatpush.bf16.msra.mxu0 0
      %270 = vmatpush.bf16.msra.mxu0 0
      %271 = vmatpush.bf16.msra.mxu0 0
      %272 = vmatpush.bf16.msra.mxu0 %v259
      %273 = vmatpush.bf16.msra.mxu0 %v258
      %274 = vmatmul.bf16.gmra.mxu0 %v264
      %v275 = vpop.f32.mrf.mxu0
      %v276 = vadd.f32 0.0, %v275
      %v277 = vpop.f32.mrf.mxu0
      %278 = vdwg.mxu0
      %v283 = vunpack.c.l.b16 %v228
      %v284 = vunpack.c.l.b16 %v229
      %v285 = vunpack.c.l.b16 %v230
      %v286 = vunpack.c.l.b16 %v231
      %v287 = vpack.c.b16 %v284, %v283
      %v288 = vpack.c.b16 %v286, %v285
      %v292 = vsel %vm262, %v223, 0
      %294 = vmatpush.bf16.msra.mxu0 0
      %295 = vmatpush.bf16.msra.mxu0 0
      %296 = vmatpush.bf16.msra.mxu0 0
      %297 = vmatpush.bf16.msra.mxu0 0
      %298 = vmatpush.bf16.msra.mxu0 0
      %299 = vmatpush.bf16.msra.mxu0 0
      %300 = vmatpush.bf16.msra.mxu0 %v288
      %301 = vmatpush.bf16.msra.mxu0 %v287
      %302 = vmatmul.bf16.gmra.mxu0 %v292
      %v303 = vpop.f32.mrf.mxu0
      %v304 = vadd.f32 %v276, %v303
      %v305 = vpop.f32.mrf.mxu0
      %306 = vdwg.mxu0
      %s307 = sadd.s32 %s224, 2
      %s308 = smul.u32 %s307, 4
      %s309 = smul.addr %s308, 4
      %s310 = scalar_lea.vmem %s1, %s309
      %v311 = vld [vmem:[%s310] sm:$0xf]
      %v312 = vld [vmem:[%s310 + $0x4] sm:$0xf]
      %v313 = vld [vmem:[%s310 + $0x8] sm:$0xf]
      %v314 = vld [vmem:[%s310 + $0xc] sm:$0xf]
      %v315 = vrot.slane %v242, 1
      %v320 = vunpack.c.l.b16 %v311
      %v321 = vunpack.c.l.b16 %v312
      %v322 = vunpack.c.l.b16 %v313
      %v323 = vunpack.c.l.b16 %v314
      %v324 = vpack.c.b16 %v321, %v320
      %v325 = vpack.c.b16 %v323, %v322
      %v329 = vsel %vm262, %v315, 0
      %331 = vmatpush.bf16.msra.mxu0 0
      %332 = vmatpush.bf16.msra.mxu0 0
      %333 = vmatpush.bf16.msra.mxu0 0
      %334 = vmatpush.bf16.msra.mxu0 0
      %335 = vmatpush.bf16.msra.mxu0 0
      %336 = vmatpush.bf16.msra.mxu0 0
      %337 = vmatpush.bf16.msra.mxu0 %v325
      %338 = vmatpush.bf16.msra.mxu0 %v324
      %339 = vmatmul.bf16.gmra.mxu0 %v329
      %v340 = vpop.f32.mrf.mxu0
      %v341 = vadd.f32 0.0, %v340
      %v342 = vpop.f32.mrf.mxu0
      %343 = vdwg.mxu0
      %v344 = vadd.f32 %v304, %v341
      %v345 = vld [vmem:[#allocation2] sm:$0xf]
      %v346 = vadd.f32 %v345, %v344
      %vm347 = vcmask 257024
      %348 = vst.msk [vmem:[#allocation2] sm:$0xf] %vm347, %v346
      %p349 = scmp.eq.s32.totalorder %s21, 2
      // Predicated region
      $region37: #{resnet_generator_forward.37} parent=31 // pred_check
        %p350 = pneg %p349
      $region38: #{resnet_generator_forward.37} parent=31 // pred_check_branch
        %352 = sbr.rel (%p350) target = $region40
      $region39: #{resnet_generator_forward.37} parent=31 // pred_region
        %v353 = vld [vmem:[#allocation2] sm:$0xf]
        %v354 = vld [vmem:[%s2] sm:$0x1]
        %v356 = vperm.slane %v354, 0
        %v358 = vadd.f32 %v353, %v356
        %v359 = vpack.c.bf16 %v358, %v358
        %vm360 = vcmask 254976
        %361 = vst.msk [vmem:[%s215] sm:$0x3] %vm360, %v359
      $region40: #{resnet_generator_forward.37} parent=31 // pred_fallthru
        _
      %p362 = scmp.lt.s32.totalorder %s19, 1
      %s363 = scalar_select %p362, %s19, 1
      %p364 = scmp.lt.s32.totalorder %s20, 3
      %s365 = scalar_select %p364, %s20, 3
      %s366 = smul.addr %s363, 4
      %s367 = sadd.s32 %s365, %s366
      %s368 = smul.addr %s367, 2
      %s369 = scalar_lea.vmem %s3, %s368
      // Predicated region
      $region41: #{resnet_generator_forward.37} parent=31 // pred_check
        %p370 = pneg %p125
      $region42: #{resnet_generator_forward.37} parent=31 // pred_check_branch
        %372 = sbr.rel (%p370) target = $region44
      $region43: #{resnet_generator_forward.37} parent=31 // pred_region
        _
      $region44: #{resnet_generator_forward.37} parent=31 // pred_fallthru
        _
    $region32: #{resnet_generator_forward.37} parent=5 // pred_fallthru
      _
    %p373 = scmp.le.s32.totalorder 2, %s9
    // Predicated region
    $region45: #{resnet_generator_forward.37} parent=5 // pred_check
      %p374 = pneg %p373
    $region46: #{resnet_generator_forward.37} parent=5 // pred_check_branch
      %376 = sbr.rel (%p374) target = $region48
    $region47: #{resnet_generator_forward.37} parent=5 // pred_region
      %s377 = ssub.s32 %s9, 2
      // Predicated region
      $region49: #{resnet_generator_forward.37} parent=47 // pred_check
        %p378 = pneg %p131
      $region50: #{resnet_generator_forward.37} parent=47 // pred_check_branch
        %380 = sbr.rel (%p378) target = $region52
      $region51: #{resnet_generator_forward.37} parent=47 // pred_region
        %p381 = scmp.lt.s32.totalorder %s22, 1
        %s382 = scalar_select %p381, %s22, 1
        %p383 = scmp.lt.s32.totalorder %s23, 3
        %s384 = scalar_select %p383, %s23, 3
        %s385 = smul.addr %s382, 4
        %s386 = sadd.s32 %s384, %s385
        %s387 = smul.addr %s386, 2
        %s388 = scalar_lea.vmem %s3, %s387
      $region52: #{resnet_generator_forward.37} parent=47 // pred_fallthru
        _
    $region48: #{resnet_generator_forward.37} parent=5 // pred_fallthru
      _
  $region6: #{resnet_generator_forward.37} parent=0 // loop_footer
    %s13 = sadd.s32 1, %s9
  $region7: #{resnet_generator_forward.37} parent=0 // loop_footer_branch
    %8 = sbr.rel target = $region3
  $region8: #{resnet_generator_forward.37} parent=0 // loop_exit
    _

// kernel: resnet_generator_forward.42
$region0: #{resnet_generator_forward.42}
  #allocation0 [shape = 'u32[]', space=smem, size = 0x4, offset = 0x4, fixed_abs, tag = 'smem constant byte address 0x4 - core index']
  #allocation1 [shape = 'u32[72,128]{1,0:T(1,128)}', space=vmem, size = 0x9000, scoped, tag = 'internal scratch']
  %s0 = inlined_call_operand.vmem [shape: bf16[32,32], index: 0, kind: input, shape index: {}]
  %s1 = inlined_call_operand.vmem [shape: f32[1,32], index: 1, kind: input, shape index: {}]
  %s2 = inlined_call_operand.vmem [shape: f32[1,32], index: 2, kind: input, shape index: {}]
  %s3 = inlined_call_operand.vmem [shape: f32[1,32], index: 3, kind: input, shape index: {}]
  %s4 = inlined_call_operand.vmem [shape: f32[1,32], index: 4, kind: input, shape index: {}]
  %s5 = inlined_call_operand.vmem [shape: bf16[32,32], index: 5, kind: input, shape index: {}]
  %s6 = inlined_call_operand.vmem [shape: bf16[32,32], index: 6, kind: output, shape index: {}]
  %s7 = sld [smem:[#allocation0]]
  $region34: #{resnet_generator_forward.42} parent=0
    _
  %s9 = ssub.s32 1, %s7
  %s10 = scalar_select 0, %s9, %s7
  // Predicated region
  $region2: #{resnet_generator_forward.42} parent=0 // pred_check
    _
  $region3: #{resnet_generator_forward.42} parent=0 // pred_check_branch
    %12 = sbr.rel (0) target = $region5
  $region4: #{resnet_generator_forward.42} parent=0 // pred_region
    _
  $region5: #{resnet_generator_forward.42} parent=0 // pred_fallthru
    _
  // Predicated region
  $region6: #{resnet_generator_forward.42} parent=0 // pred_check
    _
  $region7: #{resnet_generator_forward.42} parent=0 // pred_check_branch
    %14 = sbr.rel (0) target = $region9
  $region8: #{resnet_generator_forward.42} parent=0 // pred_region
    _
  $region9: #{resnet_generator_forward.42} parent=0 // pred_fallthru
    _
  // Predicated region
  $region10: #{resnet_generator_forward.42} parent=0 // pred_check
    _
  $region11: #{resnet_generator_forward.42} parent=0 // pred_check_branch
    %16 = sbr.rel (0) target = $region13
  $region12: #{resnet_generator_forward.42} parent=0 // pred_region
    _
  $region13: #{resnet_generator_forward.42} parent=0 // pred_fallthru
    _
  // Predicated region
  $region14: #{resnet_generator_forward.42} parent=0 // pred_check
    _
  $region15: #{resnet_generator_forward.42} parent=0 // pred_check_branch
    %18 = sbr.rel (0) target = $region17
  $region16: #{resnet_generator_forward.42} parent=0 // pred_region
    _
  $region17: #{resnet_generator_forward.42} parent=0 // pred_fallthru
    _
  // Predicated region
  $region18: #{resnet_generator_forward.42} parent=0 // pred_check
    _
  $region19: #{resnet_generator_forward.42} parent=0 // pred_check_branch
    %20 = sbr.rel (0) target = $region21
  $region20: #{resnet_generator_forward.42} parent=0 // pred_region
    _
  $region21: #{resnet_generator_forward.42} parent=0 // pred_fallthru
    _
  // Predicated region
  $region22: #{resnet_generator_forward.42} parent=0 // pred_check
    _
  $region23: #{resnet_generator_forward.42} parent=0 // pred_check_branch
    %22 = sbr.rel (0) target = $region25
  $region24: #{resnet_generator_forward.42} parent=0 // pred_region
    _
  $region25: #{resnet_generator_forward.42} parent=0 // pred_fallthru
    _
  %v23 = vld [vmem:[%s1] sm:$0x1]
  %v24 = vmul.f32 %v23, 0.03125
  %v25 = vld [vmem:[%s2] sm:$0x1]
  %v26 = vmul.f32 %v25, 0.03125
  %v27 = vmul.f32 %v24, %v24
  %v28 = vsub.f32 %v26, %v27
  %v29 = vmax.f32 %v28, 0.0
  %v30 = vld [vmem:[%s3] sm:$0x1]
  %v31 = vadd.f32 %v29, 1e-05
  %v32 = vrsqrt.pop %v31
  %v33 = vmul.f32 %v32, %v31
  %v34 = vmul.f32 %v33, %v32
  %v35 = vmul.f32 0.5, %v34
  %v36 = vsub.f32 1.5, %v35
  %v37 = vmul.f32 %v32, %v36
  %vm38 = vweird.f32 %v31
  %vm39 = vweird.f32 %v32
  %vm40 = vmor %vm38, %vm39
  %v41 = vsel %vm40, %v32, %v37
  %v42 = vmul.f32 %v30, %v41
  %v43 = vld [vmem:[%s4] sm:$0x1]
  %v44 = vmul.f32 %v24, %v42
  %v45 = vsub.f32 %v43, %v44
  %v46 = vld [vmem:[%s0] sm:$0xf]
  %v47 = vld [vmem:[%s0 + $0x4] sm:$0xf]
  %v48 = vld [vmem:[%s0 + $0x8] sm:$0xf]
  %v49 = vld [vmem:[%s0 + $0xc] sm:$0xf]
  %v50 = vunpack.c.l.bf16 %v46
  %v51 = vunpack.c.l.bf16 %v47
  %v52 = vunpack.c.l.bf16 %v48
  %v53 = vunpack.c.l.bf16 %v49
  %v55 = vperm.slane %v42, 0
  %v57 = vmul.f32 %v50, %v55
  %v58 = vmul.f32 %v51, %v55
  %v59 = vmul.f32 %v52, %v55
  %v60 = vmul.f32 %v53, %v55
  %v62 = vperm.slane %v45, 0
  %v64 = vadd.f32 %v57, %v62
  %v65 = vadd.f32 %v58, %v62
  %v66 = vadd.f32 %v59, %v62
  %v67 = vadd.f32 %v60, %v62
  %v68 = vld [vmem:[%s5] sm:$0xf]
  %v69 = vld [vmem:[%s5 + $0x4] sm:$0xf]
  %v70 = vld [vmem:[%s5 + $0x8] sm:$0xf]
  %v71 = vld [vmem:[%s5 + $0xc] sm:$0xf]
  %v72 = vunpack.c.l.bf16 %v68
  %v73 = vunpack.c.l.bf16 %v69
  %v74 = vunpack.c.l.bf16 %v70
  %v75 = vunpack.c.l.bf16 %v71
  %v76 = vadd.f32 %v64, %v72
  %v77 = vadd.f32 %v65, %v73
  %v78 = vadd.f32 %v66, %v74
  %v79 = vadd.f32 %v67, %v75
  %v80 = vpack.c.bf16 %v76, %v76
  %v81 = vpack.c.bf16 %v77, %v77
  %v82 = vpack.c.bf16 %v78, %v78
  %v83 = vpack.c.bf16 %v79, %v79
  %vm84 = vcmask 257024
  %85 = vst.msk [vmem:[%s6] sm:$0xf] %vm84, %v80
  %86 = vst.msk [vmem:[%s6 + $0x4] sm:$0xf] %vm84, %v81
  %87 = vst.msk [vmem:[%s6 + $0x8] sm:$0xf] %vm84, %v82
  %88 = vst.msk [vmem:[%s6 + $0xc] sm:$0xf] %vm84, %v83
  // Predicated region
  $region26: #{resnet_generator_forward.42} parent=0 // pred_check
    _
  $region27: #{resnet_generator_forward.42} parent=0 // pred_check_branch
    %90 = sbr.rel (0) target = $region29
  $region28: #{resnet_generator_forward.42} parent=0 // pred_region
    _
  $region29: #{resnet_generator_forward.42} parent=0 // pred_fallthru
    _
  // Predicated region
  $region30: #{resnet_generator_forward.42} parent=0 // pred_check
    _
  $region31: #{resnet_generator_forward.42} parent=0 // pred_check_branch
    %92 = sbr.rel (0) target = $region33
  $region32: #{resnet_generator_forward.42} parent=0 // pred_region
    _
  $region33: #{resnet_generator_forward.42} parent=0 // pred_fallthru
    _

// kernel: resnet_generator_forward.49
$region0: #{resnet_generator_forward.49}
  #allocation0 [shape = 'u32[]', space=smem, size = 0x4, offset = 0x4, fixed_abs, tag = 'smem constant byte address 0x4 - core index']
  #allocation1 [shape = 'u32[72,128]{1,0:T(1,128)}', space=vmem, size = 0x9000, scoped, tag = 'internal scratch']
  #allocation2 [shape = 'f32[4,64]{1,0:T(4,128)}', space=vmem, size = 0x800, scoped, tag = 'scratch operand']
  %s0 = inlined_call_operand.vmem [shape: bf16[2,5,5,32], index: 0, kind: input, shape index: {}]
  %s1 = inlined_call_operand.vmem [shape: bf16[4,32,64], index: 1, kind: input, shape index: {}]
  %s2 = inlined_call_operand.vmem [shape: f32[1,64], index: 2, kind: input, shape index: {}]
  %s3 = inlined_call_operand.vmem [shape: bf16[2,4,4,64], index: 3, kind: output, shape index: {}]
  %s4 = sld [smem:[#allocation0]]
  $region53: #{resnet_generator_forward.49} parent=0
    _
  %s6 = ssub.s32 1, %s4
  %s7 = scalar_select 0, %s6, %s4
  loop: start=0, step=1, limit=18
  $region2: #{resnet_generator_forward.49} parent=0 // loop_pre_header
    _
  $region3: #{resnet_generator_forward.49} parent=0 // loop_header
    %s9 = sphi 0, %s13
    %p10 = scmp.ge.s32.totalorder %s9, 18
    %s16 = sphi 0, %s35
    %s17 = sphi 0, %s31
    %s18 = sphi 0, %s27
    %s19 = sphi 0, %s16
    %s20 = sphi 0, %s17
    %s21 = sphi 0, %s18
    %s22 = sphi 0, %s19
    %s23 = sphi 0, %s20
    %s24 = sphi 0, %s21
    %s42 = sphi 0, %s44
    %s45 = sphi 0, %s42
    %s46 = sphi 0, %s45
    %s62 = sphi 0, %s46
    %s66 = sphi 0, %s66
    %s68 = sphi 0, %s66
    %s69 = sphi 0, %s68
    %s83 = sphi 0, %s69
    %s87 = sphi 0, %s87
    %s89 = sphi 0, %s87
    %s90 = sphi 0, %s89
    %s104 = sphi 0, %s90
    %s112 = sphi 0, %s114
    %s115 = sphi 0, %s112
    %s116 = sphi 0, %s115
    %s132 = sphi 0, %s116
  $region4: #{resnet_generator_forward.49} parent=0 // loop_header_branch
    %12 = sbr.rel (%p10) target = $region8
  $region5: #{resnet_generator_forward.49} parent=0 // loop_body
    %s14 = ssub.s32 %s9, 1
    %s15 = ssub.s32 %s9, 2
    %s25 = sadd.s32 1, %s18
    %p26 = scmp.ge.s32.totalorder %s25, 2
    %s27 = scalar_select %p26, 0, %s25
    %s28 = sadd.s32 1, %s17
    %s29 = scalar_select %p26, %s28, %s17
    %p30 = scmp.ge.s32.totalorder %s29, 4
    %s31 = scalar_select %p30, 0, %s29
    %s32 = sadd.s32 1, %s16
    %s33 = scalar_select %p30, %s32, %s16
    %p34 = scmp.ge.s32.totalorder %s33, 2
    %s35 = scalar_select %p34, 0, %s33
    %s36 = sadd.s32 %s17, %s18
    %s37 = sadd.s32 %s31, %s27
    %s38 = ssub.s32 %s16, %s35
    %s39 = ssub.s32 %s36, %s37
    %s40 = sor.u32 %s38, %s39
    %p41 = scmp.eq.s32.totalorder %s40, 0
    %s43 = sadd.s32 %s42, 1
    %s44 = scalar_select %p41, %s42, %s43
    %p47 = pneg %p41
    %p48 = scmp.eq.s32.totalorder %s9, 15
    %p49 = por %p47, %p48
    %p50 = scmp.ne.s32.totalorder %s42, %s45
    %p51 = scmp.eq.s32.totalorder %s9, 0
    %p52 = por %p50, %p51
    %p53 = scmp.ne.s32.totalorder %s42, %s45
    %p54 = scmp.eq.s32.totalorder %s14, 15
    %p55 = por %p53, %p54
    %p56 = scmp.ne.s32.totalorder %s45, %s46
    %p57 = scmp.eq.s32.totalorder %s14, 0
    %p58 = por %p56, %p57
    %p59 = scmp.ne.s32.totalorder %s45, %s46
    %p60 = scmp.eq.s32.totalorder %s15, 15
    %p61 = por %p59, %p60
    %p63 = scmp.ne.s32.totalorder %s46, %s62
    %p64 = scmp.eq.s32.totalorder %s15, 0
    %p65 = por %p63, %p64
    %s67 = sadd.s32 %s66, 1
    %p70 = scmp.eq.s32.totalorder %s9, 15
    %p71 = scmp.ne.s32.totalorder %s66, %s68
    %p72 = scmp.eq.s32.totalorder %s9, 0
    %p73 = por %p71, %p72
    %p74 = scmp.ne.s32.totalorder %s66, %s68
    %p75 = scmp.eq.s32.totalorder %s14, 15
    %p76 = por %p74, %p75
    %p77 = scmp.ne.s32.totalorder %s68, %s69
    %p78 = scmp.eq.s32.totalorder %s14, 0
    %p79 = por %p77, %p78
    %p80 = scmp.ne.s32.totalorder %s68, %s69
    %p81 = scmp.eq.s32.totalorder %s15, 15
    %p82 = por %p80, %p81
    %p84 = scmp.ne.s32.totalorder %s69, %s83
    %p85 = scmp.eq.s32.totalorder %s15, 0
    %p86 = por %p84, %p85
    %s88 = sadd.s32 %s87, 1
    %p91 = scmp.eq.s32.totalorder %s9, 15
    %p92 = scmp.ne.s32.totalorder %s87, %s89
    %p93 = scmp.eq.s32.totalorder %s9, 0
    %p94 = por %p92, %p93
    %p95 = scmp.ne.s32.totalorder %s87, %s89
    %p96 = scmp.eq.s32.totalorder %s14, 15
    %p97 = por %p95, %p96
    %p98 = scmp.ne.s32.totalorder %s89, %s90
    %p99 = scmp.eq.s32.totalorder %s14, 0
    %p100 = por %p98, %p99
    %p101 = scmp.ne.s32.totalorder %s89, %s90
    %p102 = scmp.eq.s32.totalorder %s15, 15
    %p103 = por %p101, %p102
    %p105 = scmp.ne.s32.totalorder %s90, %s104
    %p106 = scmp.eq.s32.totalorder %s15, 0
    %p107 = por %p105, %p106
    %s108 = ssub.s32 %s16, %s35
    %s109 = ssub.s32 %s17, %s31
    %s110 = sor.u32 %s108, %s109
    %p111 = scmp.eq.s32.totalorder %s110, 0
    %s113 = sadd.s32 %s112, 1
    %s114 = scalar_select %p111, %s112, %s113
    %p117 = pneg %p111
    %p118 = scmp.eq.s32.totalorder %s9, 15
    %p119 = por %p117, %p118
    %p120 = scmp.ne.s32.totalorder %s112, %s115
    %p121 = scmp.eq.s32.totalorder %s9, 0
    %p122 = por %p120, %p121
    %p123 = scmp.ne.s32.totalorder %s112, %s115
    %p124 = scmp.eq.s32.totalorder %s14, 15
    %p125 = por %p123, %p124
    %p126 = scmp.ne.s32.totalorder %s115, %s116
    %p127 = scmp.eq.s32.totalorder %s14, 0
    %p128 = por %p126, %p127
    %p129 = scmp.ne.s32.totalorder %s115, %s116
    %p130 = scmp.eq.s32.totalorder %s15, 15
    %p131 = por %p129, %p130
    %p133 = scmp.ne.s32.totalorder %s116, %s132
    %p134 = scmp.eq.s32.totalorder %s15, 0
    %p135 = por %p133, %p134
    %p136 = scmp.le.s32.totalorder 1, %s9
    %p137 = scmp.lt.s32.totalorder %s9, 17
    %p138 = pnand %p136, %p137
    %p139 = pneg %p138
    // Predicated region
    $region9: #{resnet_generator_forward.49} parent=5 // pred_check
      _
    $region10: #{resnet_generator_forward.49} parent=5 // pred_check_branch
      %141 = sbr.rel (%p138) target = $region12
    $region11: #{resnet_generator_forward.49} parent=5 // pred_region
      %s142 = ssub.s32 %s9, 1
      // Predicated region
      $region13: #{resnet_generator_forward.49} parent=11 // pred_check
        %p143 = pneg %p79
      $region14: #{resnet_generator_forward.49} parent=11 // pred_check_branch
        %145 = sbr.rel (%p143) target = $region16
      $region15: #{resnet_generator_forward.49} parent=11 // pred_region
        _
      $region16: #{resnet_generator_forward.49} parent=11 // pred_fallthru
        _
      // Predicated region
      $region17: #{resnet_generator_forward.49} parent=11 // pred_check
        %p146 = pneg %p100
      $region18: #{resnet_generator_forward.49} parent=11 // pred_check_branch
        %148 = sbr.rel (%p146) target = $region20
      $region19: #{resnet_generator_forward.49} parent=11 // pred_region
        _
      $region20: #{resnet_generator_forward.49} parent=11 // pred_fallthru
        _
    $region12: #{resnet_generator_forward.49} parent=5 // pred_fallthru
      _
    %p149 = scmp.lt.s32.totalorder %s9, 16
    // Predicated region
    $region21: #{resnet_generator_forward.49} parent=5 // pred_check
      %p150 = pneg %p149
    $region22: #{resnet_generator_forward.49} parent=5 // pred_check_branch
      %152 = sbr.rel (%p150) target = $region24
    $region23: #{resnet_generator_forward.49} parent=5 // pred_region
      // Predicated region
      $region25: #{resnet_generator_forward.49} parent=23 // pred_check
        %p153 = pneg %p52
      $region26: #{resnet_generator_forward.49} parent=23 // pred_check_branch
        %155 = sbr.rel (%p153) target = $region28
      $region27: #{resnet_generator_forward.49} parent=23 // pred_region
        %s156 = sadd.s32 %s17, %s18
        %p157 = scmp.lt.s32.totalorder %s16, 1
        %s158 = scalar_select %p157, %s16, 1
        %p159 = scmp.lt.s32.totalorder %s156, 4
        %s160 = scalar_select %p159, %s156, 4
        %s161 = smul.addr %s158, 5
        %s162 = sadd.s32 %s160, %s161
        %s163 = smul.addr %s162, 4
        %s164 = scalar_lea.vmem %s0, %s163
        %s165 = sadd.s32 %s17, %s18
      $region28: #{resnet_generator_forward.49} parent=23 // pred_fallthru
        _
    $region24: #{resnet_generator_forward.49} parent=5 // pred_fallthru
      _
    %p166 = scmp.le.s32.totalorder 1, %s9
    %p167 = scmp.lt.s32.totalorder %s9, 17
    %p168 = pnand %p166, %p167
    %p169 = pneg %p168
    // Predicated region
    $region29: #{resnet_generator_forward.49} parent=5 // pred_check
      _
    $region30: #{resnet_generator_forward.49} parent=5 // pred_check_branch
      %171 = sbr.rel (%p168) target = $region32
    $region31: #{resnet_generator_forward.49} parent=5 // pred_region
      %s172 = ssub.s32 %s9, 1
      %s173 = sadd.s32 %s20, %s21
      %p174 = scmp.lt.s32.totalorder %s19, 1
      %s175 = scalar_select %p174, %s19, 1
      %p176 = scmp.lt.s32.totalorder %s173, 4
      %s177 = scalar_select %p176, %s173, 4
      %s178 = smul.addr %s175, 5
      %s179 = sadd.s32 %s177, %s178
      %s180 = smul.addr %s179, 4
      %s181 = scalar_lea.vmem %s0, %s180
      %p182 = pneg %p58
      %p183 = pneg %p55
      %p184 = pneg %p79
      %p185 = pneg %p76
      %p186 = pneg %p100
      %p187 = pneg %p97
      %p188 = pneg %p128
      %p189 = pneg %p125
      %p190 = scmp.lt.s32.totalorder %s19, 1
      %s191 = scalar_select %p190, %s19, 1
      %p192 = scmp.lt.s32.totalorder %s20, 3
      %s193 = scalar_select %p192, %s20, 3
      %s194 = smul.addr %s191, 4
      %s195 = sadd.s32 %s193, %s194
      %s196 = smul.addr %s195, 2
      %s197 = scalar_lea.vmem %s3, %s196
      %s198 = sadd.s32 %s20, %s21
      %p199 = scmp.lt.s32.totalorder %s19, 1
      %s200 = scalar_select %p199, %s19, 1
      %p201 = scmp.lt.s32.totalorder %s198, 4
      %s202 = scalar_select %p201, %s198, 4
      %s203 = smul.addr %s200, 5
      %s204 = sadd.s32 %s202, %s203
      %s205 = smul.addr %s204, 4
      %s206 = scalar_lea.vmem %s0, %s205
      %s207 = sadd.s32 %s20, %s21
      %p208 = scmp.lt.s32.totalorder %s19, 1
      %s209 = scalar_select %p208, %s19, 1
      %p210 = scmp.lt.s32.totalorder %s20, 3
      %s211 = scalar_select %p210, %s20, 3
      %s212 = smul.addr %s209, 4
      %s213 = sadd.s32 %s211, %s212
      %s214 = smul.addr %s213, 2
      %s215 = scalar_lea.vmem %s3, %s214
      %p217 = scmp.eq.s32.totalorder %s21, 0
      // Predicated region
      $region33: #{resnet_generator_forward.49} parent=31 // pred_check
        %p218 = pneg %p217
      $region34: #{resnet_generator_forward.49} parent=31 // pred_check_branch
        %220 = sbr.rel (%p218) target = $region36
      $region35: #{resnet_generator_forward.49} parent=31 // pred_region
        %vm221 = vcmask 519168
        %222 = vst.msk [vmem:[#allocation2] sm:$0xf] %vm221, 0.0
      $region36: #{resnet_generator_forward.49} parent=31 // pred_fallthru
        _
      %v223 = vld [vmem:[%s206] sm:$0x7]
      %s224 = smul.u32 %s21, 2
      %s225 = smul.u32 %s224, 4
      %s226 = smul.addr %s225, 4
      %s227 = scalar_lea.vmem %s1, %s226
      %v228 = vld [vmem:[%s227] sm:$0xf]
      %v229 = vld [vmem:[%s227 + $0x4] sm:$0xf]
      %v230 = vld [vmem:[%s227 + $0x8] sm:$0xf]
      %v231 = vld [vmem:[%s227 + $0xc] sm:$0xf]
      %s232 = sadd.s32 %s224, 1
      %s233 = smul.u32 %s232, 4
      %s234 = smul.addr %s233, 4
      %s235 = scalar_lea.vmem %s1, %s234
      %v236 = vld [vmem:[%s235] sm:$0xf]
      %v237 = vld [vmem:[%s235 + $0x4] sm:$0xf]
      %v238 = vld [vmem:[%s235 + $0x8] sm:$0xf]
      %v239 = vld [vmem:[%s235 + $0xc] sm:$0xf]
      %v241 = vunpack.c.l.b16 %v223
      %v242 = vpack.c.b16 %v241, %v241
      %v244 = vshrl.u32 %v242, 16
      %v246 = vshll.u32 %v242, 16
      %v248 = vrot.slane %v246, 1
      %v249 = vor.u32 %v244, %v248
      %v254 = vunpack.c.l.b16 %v236
      %v255 = vunpack.c.l.b16 %v237
      %v256 = vunpack.c.l.b16 %v238
      %v257 = vunpack.c.l.b16 %v239
      %v258 = vpack.c.b16 %v255, %v254
      %v259 = vpack.c.b16 %v257, %v256
      %vm262 = vcmask 261120
      %v264 = vsel %vm262, %v249, 0
      %266 = vmatpush.bf16.msra.mxu0 0
      %267 = vmatpush.bf16.msra.mxu0 0
      %268 = vmatpush.bf16.msra.mxu0 0
      %269 = vmatpush.bf16.msra.mxu0 0
      %270 = vmatpush.bf16.msra.mxu0 0
      %271 = vmatpush.bf16.msra.mxu0 0
      %272 = vmatpush.bf16.msra.mxu0 %v259
      %273 = vmatpush.bf16.msra.mxu0 %v258
      %274 = vmatmul.bf16.gmra.mxu0 %v264
      %v275 = vpop.f32.mrf.mxu0
      %v276 = vadd.f32 0.0, %v275
      %v277 = vpop.f32.mrf.mxu0
      %278 = vdwg.mxu0
      %v283 = vunpack.c.l.b16 %v228
      %v284 = vunpack.c.l.b16 %v229
      %v285 = vunpack.c.l.b16 %v230
      %v286 = vunpack.c.l.b16 %v231
      %v287 = vpack.c.b16 %v284, %v283
      %v288 = vpack.c.b16 %v286, %v285
      %v292 = vsel %vm262, %v223, 0
      %294 = vmatpush.bf16.msra.mxu0 0
      %295 = vmatpush.bf16.msra.mxu0 0
      %296 = vmatpush.bf16.msra.mxu0 0
      %297 = vmatpush.bf16.msra.mxu0 0
      %298 = vmatpush.bf16.msra.mxu0 0
      %299 = vmatpush.bf16.msra.mxu0 0
      %300 = vmatpush.bf16.msra.mxu0 %v288
      %301 = vmatpush.bf16.msra.mxu0 %v287
      %302 = vmatmul.bf16.gmra.mxu0 %v292
      %v303 = vpop.f32.mrf.mxu0
      %v304 = vadd.f32 %v276, %v303
      %v305 = vpop.f32.mrf.mxu0
      %306 = vdwg.mxu0
      %v307 = vld [vmem:[#allocation2] sm:$0xf]
      %v308 = vadd.f32 %v307, %v304
      %vm309 = vcmask 519168
      %310 = vst.msk [vmem:[#allocation2] sm:$0xf] %vm309, %v308
      %p311 = scmp.eq.s32.totalorder %s21, 1
      // Predicated region
      $region37: #{resnet_generator_forward.49} parent=31 // pred_check
        %p312 = pneg %p311
      $region38: #{resnet_generator_forward.49} parent=31 // pred_check_branch
        %314 = sbr.rel (%p312) target = $region40
      $region39: #{resnet_generator_forward.49} parent=31 // pred_region
        %v315 = vld [vmem:[#allocation2] sm:$0xf]
        %v316 = vld [vmem:[%s2] sm:$0x1]
        %v318 = vperm.slane %v316, 0
        %v320 = vadd.f32 %v315, %v318
        %v321 = vpack.c.bf16 %v320, %v320
        %vm322 = vcmask 517120
        %323 = vst.msk [vmem:[%s215] sm:$0x3] %vm322, %v321
      $region40: #{resnet_generator_forward.49} parent=31 // pred_fallthru
        _
      %p324 = scmp.lt.s32.totalorder %s19, 1
      %s325 = scalar_select %p324, %s19, 1
      %p326 = scmp.lt.s32.totalorder %s20, 3
      %s327 = scalar_select %p326, %s20, 3
      %s328 = smul.addr %s325, 4
      %s329 = sadd.s32 %s327, %s328
      %s330 = smul.addr %s329, 2
      %s331 = scalar_lea.vmem %s3, %s330
      // Predicated region
      $region41: #{resnet_generator_forward.49} parent=31 // pred_check
        %p332 = pneg %p125
      $region42: #{resnet_generator_forward.49} parent=31 // pred_check_branch
        %334 = sbr.rel (%p332) target = $region44
      $region43: #{resnet_generator_forward.49} parent=31 // pred_region
        _
      $region44: #{resnet_generator_forward.49} parent=31 // pred_fallthru
        _
    $region32: #{resnet_generator_forward.49} parent=5 // pred_fallthru
      _
    %p335 = scmp.le.s32.totalorder 2, %s9
    // Predicated region
    $region45: #{resnet_generator_forward.49} parent=5 // pred_check
      %p336 = pneg %p335
    $region46: #{resnet_generator_forward.49} parent=5 // pred_check_branch
      %338 = sbr.rel (%p336) target = $region48
    $region47: #{resnet_generator_forward.49} parent=5 // pred_region
      %s339 = ssub.s32 %s9, 2
      // Predicated region
      $region49: #{resnet_generator_forward.49} parent=47 // pred_check
        %p340 = pneg %p131
      $region50: #{resnet_generator_forward.49} parent=47 // pred_check_branch
        %342 = sbr.rel (%p340) target = $region52
      $region51: #{resnet_generator_forward.49} parent=47 // pred_region
        %p343 = scmp.lt.s32.totalorder %s22, 1
        %s344 = scalar_select %p343, %s22, 1
        %p345 = scmp.lt.s32.totalorder %s23, 3
        %s346 = scalar_select %p345, %s23, 3
        %s347 = smul.addr %s344, 4
        %s348 = sadd.s32 %s346, %s347
        %s349 = smul.addr %s348, 2
        %s350 = scalar_lea.vmem %s3, %s349
      $region52: #{resnet_generator_forward.49} parent=47 // pred_fallthru
        _
    $region48: #{resnet_generator_forward.49} parent=5 // pred_fallthru
      _
  $region6: #{resnet_generator_forward.49} parent=0 // loop_footer
    %s13 = sadd.s32 1, %s9
  $region7: #{resnet_generator_forward.49} parent=0 // loop_footer_branch
    %8 = sbr.rel target = $region3
  $region8: #{resnet_generator_forward.49} parent=0 // loop_exit
    _

// kernel: resnet_generator_forward.52
$region0: #{resnet_generator_forward.52}
  #allocation0 [shape = 'u32[]', space=smem, size = 0x4, offset = 0x4, fixed_abs, tag = 'smem constant byte address 0x4 - core index']
  #allocation1 [shape = 'u32[72,128]{1,0:T(1,128)}', space=vmem, size = 0x9000, scoped, tag = 'internal scratch']
  #allocation2 [shape = 'f32[8,32]{1,0:T(8,128)}', space=vmem, size = 0x1000, scoped, tag = 'scratch operand']
  %s0 = inlined_call_operand.vmem [shape: bf16[2,9,9,16], index: 0, kind: input, shape index: {}]
  %s1 = inlined_call_operand.vmem [shape: bf16[4,16,32], index: 1, kind: input, shape index: {}]
  %s2 = inlined_call_operand.vmem [shape: f32[1,32], index: 2, kind: input, shape index: {}]
  %s3 = inlined_call_operand.vmem [shape: bf16[2,8,8,32], index: 3, kind: output, shape index: {}]
  %s4 = sld [smem:[#allocation0]]
  $region53: #{resnet_generator_forward.52} parent=0
    _
  %s6 = ssub.s32 1, %s4
  %s7 = scalar_select 0, %s6, %s4
  loop: start=0, step=1, limit=34
  $region2: #{resnet_generator_forward.52} parent=0 // loop_pre_header
    _
  $region3: #{resnet_generator_forward.52} parent=0 // loop_header
    %s9 = sphi 0, %s13
    %p10 = scmp.ge.s32.totalorder %s9, 34
    %s16 = sphi 0, %s35
    %s17 = sphi 0, %s31
    %s18 = sphi 0, %s27
    %s19 = sphi 0, %s16
    %s20 = sphi 0, %s17
    %s21 = sphi 0, %s18
    %s22 = sphi 0, %s19
    %s23 = sphi 0, %s20
    %s24 = sphi 0, %s21
    %s42 = sphi 0, %s44
    %s45 = sphi 0, %s42
    %s46 = sphi 0, %s45
    %s62 = sphi 0, %s46
    %s66 = sphi 0, %s66
    %s68 = sphi 0, %s66
    %s69 = sphi 0, %s68
    %s83 = sphi 0, %s69
    %s87 = sphi 0, %s87
    %s89 = sphi 0, %s87
    %s90 = sphi 0, %s89
    %s104 = sphi 0, %s90
    %s112 = sphi 0, %s114
    %s115 = sphi 0, %s112
    %s116 = sphi 0, %s115
    %s132 = sphi 0, %s116
  $region4: #{resnet_generator_forward.52} parent=0 // loop_header_branch
    %12 = sbr.rel (%p10) target = $region8
  $region5: #{resnet_generator_forward.52} parent=0 // loop_body
    %s14 = ssub.s32 %s9, 1
    %s15 = ssub.s32 %s9, 2
    %s25 = sadd.s32 1, %s18
    %p26 = scmp.ge.s32.totalorder %s25, 2
    %s27 = scalar_select %p26, 0, %s25
    %s28 = sadd.s32 1, %s17
    %s29 = scalar_select %p26, %s28, %s17
    %p30 = scmp.ge.s32.totalorder %s29, 8
    %s31 = scalar_select %p30, 0, %s29
    %s32 = sadd.s32 1, %s16
    %s33 = scalar_select %p30, %s32, %s16
    %p34 = scmp.ge.s32.totalorder %s33, 2
    %s35 = scalar_select %p34, 0, %s33
    %s36 = sadd.s32 %s17, %s18
    %s37 = sadd.s32 %s31, %s27
    %s38 = ssub.s32 %s16, %s35
    %s39 = ssub.s32 %s36, %s37
    %s40 = sor.u32 %s38, %s39
    %p41 = scmp.eq.s32.totalorder %s40, 0
    %s43 = sadd.s32 %s42, 1
    %s44 = scalar_select %p41, %s42, %s43
    %p47 = pneg %p41
    %p48 = scmp.eq.s32.totalorder %s9, 31
    %p49 = por %p47, %p48
    %p50 = scmp.ne.s32.totalorder %s42, %s45
    %p51 = scmp.eq.s32.totalorder %s9, 0
    %p52 = por %p50, %p51
    %p53 = scmp.ne.s32.totalorder %s42, %s45
    %p54 = scmp.eq.s32.totalorder %s14, 31
    %p55 = por %p53, %p54
    %p56 = scmp.ne.s32.totalorder %s45, %s46
    %p57 = scmp.eq.s32.totalorder %s14, 0
    %p58 = por %p56, %p57
    %p59 = scmp.ne.s32.totalorder %s45, %s46
    %p60 = scmp.eq.s32.totalorder %s15, 31
    %p61 = por %p59, %p60
    %p63 = scmp.ne.s32.totalorder %s46, %s62
    %p64 = scmp.eq.s32.totalorder %s15, 0
    %p65 = por %p63, %p64
    %s67 = sadd.s32 %s66, 1
    %p70 = scmp.eq.s32.totalorder %s9, 31
    %p71 = scmp.ne.s32.totalorder %s66, %s68
    %p72 = scmp.eq.s32.totalorder %s9, 0
    %p73 = por %p71, %p72
    %p74 = scmp.ne.s32.totalorder %s66, %s68
    %p75 = scmp.eq.s32.totalorder %s14, 31
    %p76 = por %p74, %p75
    %p77 = scmp.ne.s32.totalorder %s68, %s69
    %p78 = scmp.eq.s32.totalorder %s14, 0
    %p79 = por %p77, %p78
    %p80 = scmp.ne.s32.totalorder %s68, %s69
    %p81 = scmp.eq.s32.totalorder %s15, 31
    %p82 = por %p80, %p81
    %p84 = scmp.ne.s32.totalorder %s69, %s83
    %p85 = scmp.eq.s32.totalorder %s15, 0
    %p86 = por %p84, %p85
    %s88 = sadd.s32 %s87, 1
    %p91 = scmp.eq.s32.totalorder %s9, 31
    %p92 = scmp.ne.s32.totalorder %s87, %s89
    %p93 = scmp.eq.s32.totalorder %s9, 0
    %p94 = por %p92, %p93
    %p95 = scmp.ne.s32.totalorder %s87, %s89
    %p96 = scmp.eq.s32.totalorder %s14, 31
    %p97 = por %p95, %p96
    %p98 = scmp.ne.s32.totalorder %s89, %s90
    %p99 = scmp.eq.s32.totalorder %s14, 0
    %p100 = por %p98, %p99
    %p101 = scmp.ne.s32.totalorder %s89, %s90
    %p102 = scmp.eq.s32.totalorder %s15, 31
    %p103 = por %p101, %p102
    %p105 = scmp.ne.s32.totalorder %s90, %s104
    %p106 = scmp.eq.s32.totalorder %s15, 0
    %p107 = por %p105, %p106
    %s108 = ssub.s32 %s16, %s35
    %s109 = ssub.s32 %s17, %s31
    %s110 = sor.u32 %s108, %s109
    %p111 = scmp.eq.s32.totalorder %s110, 0
    %s113 = sadd.s32 %s112, 1
    %s114 = scalar_select %p111, %s112, %s113
    %p117 = pneg %p111
    %p118 = scmp.eq.s32.totalorder %s9, 31
    %p119 = por %p117, %p118
    %p120 = scmp.ne.s32.totalorder %s112, %s115
    %p121 = scmp.eq.s32.totalorder %s9, 0
    %p122 = por %p120, %p121
    %p123 = scmp.ne.s32.totalorder %s112, %s115
    %p124 = scmp.eq.s32.totalorder %s14, 31
    %p125 = por %p123, %p124
    %p126 = scmp.ne.s32.totalorder %s115, %s116
    %p127 = scmp.eq.s32.totalorder %s14, 0
    %p128 = por %p126, %p127
    %p129 = scmp.ne.s32.totalorder %s115, %s116
    %p130 = scmp.eq.s32.totalorder %s15, 31
    %p131 = por %p129, %p130
    %p133 = scmp.ne.s32.totalorder %s116, %s132
    %p134 = scmp.eq.s32.totalorder %s15, 0
    %p135 = por %p133, %p134
    %p136 = scmp.le.s32.totalorder 1, %s9
    %p137 = scmp.lt.s32.totalorder %s9, 33
    %p138 = pnand %p136, %p137
    %p139 = pneg %p138
    // Predicated region
    $region9: #{resnet_generator_forward.52} parent=5 // pred_check
      _
    $region10: #{resnet_generator_forward.52} parent=5 // pred_check_branch
      %141 = sbr.rel (%p138) target = $region12
    $region11: #{resnet_generator_forward.52} parent=5 // pred_region
      %s142 = ssub.s32 %s9, 1
      // Predicated region
      $region13: #{resnet_generator_forward.52} parent=11 // pred_check
        %p143 = pneg %p79
      $region14: #{resnet_generator_forward.52} parent=11 // pred_check_branch
        %145 = sbr.rel (%p143) target = $region16
      $region15: #{resnet_generator_forward.52} parent=11 // pred_region
        _
      $region16: #{resnet_generator_forward.52} parent=11 // pred_fallthru
        _
      // Predicated region
      $region17: #{resnet_generator_forward.52} parent=11 // pred_check
        %p146 = pneg %p100
      $region18: #{resnet_generator_forward.52} parent=11 // pred_check_branch
        %148 = sbr.rel (%p146) target = $region20
      $region19: #{resnet_generator_forward.52} parent=11 // pred_region
        _
      $region20: #{resnet_generator_forward.52} parent=11 // pred_fallthru
        _
    $region12: #{resnet_generator_forward.52} parent=5 // pred_fallthru
      _
    %p149 = scmp.lt.s32.totalorder %s9, 32
    // Predicated region
    $region21: #{resnet_generator_forward.52} parent=5 // pred_check
      %p150 = pneg %p149
    $region22: #{resnet_generator_forward.52} parent=5 // pred_check_branch
      %152 = sbr.rel (%p150) target = $region24
    $region23: #{resnet_generator_forward.52} parent=5 // pred_region
      // Predicated region
      $region25: #{resnet_generator_forward.52} parent=23 // pred_check
        %p153 = pneg %p52
      $region26: #{resnet_generator_forward.52} parent=23 // pred_check_branch
        %155 = sbr.rel (%p153) target = $region28
      $region27: #{resnet_generator_forward.52} parent=23 // pred_region
        %s156 = sadd.s32 %s17, %s18
        %p157 = scmp.lt.s32.totalorder %s16, 1
        %s158 = scalar_select %p157, %s16, 1
        %p159 = scmp.lt.s32.totalorder %s156, 8
        %s160 = scalar_select %p159, %s156, 8
        %s161 = smul.addr %s160, 2
        %s162 = smul.addr %s158, 18
        %s163 = sadd.s32 %s161, %s162
        %s164 = smul.addr %s163, 4
        %s165 = scalar_lea.vmem %s0, %s164
        %s166 = sadd.s32 %s17, %s18
      $region28: #{resnet_generator_forward.52} parent=23 // pred_fallthru
        _
    $region24: #{resnet_generator_forward.52} parent=5 // pred_fallthru
      _
    %p167 = scmp.le.s32.totalorder 1, %s9
    %p168 = scmp.lt.s32.totalorder %s9, 33
    %p169 = pnand %p167, %p168
    %p170 = pneg %p169
    // Predicated region
    $region29: #{resnet_generator_forward.52} parent=5 // pred_check
      _
    $region30: #{resnet_generator_forward.52} parent=5 // pred_check_branch
      %172 = sbr.rel (%p169) target = $region32
    $region31: #{resnet_generator_forward.52} parent=5 // pred_region
      %s173 = ssub.s32 %s9, 1
      %s174 = sadd.s32 %s20, %s21
      %p175 = scmp.lt.s32.totalorder %s19, 1
      %s176 = scalar_select %p175, %s19, 1
      %p177 = scmp.lt.s32.totalorder %s174, 8
      %s178 = scalar_select %p177, %s174, 8
      %s179 = smul.addr %s178, 2
      %s180 = smul.addr %s176, 18
      %s181 = sadd.s32 %s179, %s180
      %s182 = smul.addr %s181, 4
      %s183 = scalar_lea.vmem %s0, %s182
      %p184 = pneg %p58
      %p185 = pneg %p55
      %p186 = pneg %p79
      %p187 = pneg %p76
      %p188 = pneg %p100
      %p189 = pneg %p97
      %p190 = pneg %p128
      %p191 = pneg %p125
      %p192 = scmp.lt.s32.totalorder %s19, 1
      %s193 = scalar_select %p192, %s19, 1
      %p194 = scmp.lt.s32.totalorder %s20, 7
      %s195 = scalar_select %p194, %s20, 7
      %s196 = smul.addr %s193, 8
      %s197 = sadd.s32 %s195, %s196
      %s198 = smul.addr %s197, 4
      %s199 = scalar_lea.vmem %s3, %s198
      %s200 = sadd.s32 %s20, %s21
      %p201 = scmp.lt.s32.totalorder %s19, 1
      %s202 = scalar_select %p201, %s19, 1
      %p203 = scmp.lt.s32.totalorder %s200, 8
      %s204 = scalar_select %p203, %s200, 8
      %s205 = smul.addr %s204, 2
      %s206 = smul.addr %s202, 18
      %s207 = sadd.s32 %s205, %s206
      %s208 = smul.addr %s207, 4
      %s209 = scalar_lea.vmem %s0, %s208
      %s210 = sadd.s32 %s20, %s21
      %p211 = scmp.lt.s32.totalorder %s19, 1
      %s212 = scalar_select %p211, %s19, 1
      %p213 = scmp.lt.s32.totalorder %s20, 7
      %s214 = scalar_select %p213, %s20, 7
      %s215 = smul.addr %s212, 8
      %s216 = sadd.s32 %s214, %s215
      %s217 = smul.addr %s216, 4
      %s218 = scalar_lea.vmem %s3, %s217
      %p220 = scmp.eq.s32.totalorder %s21, 0
      // Predicated region
      $region33: #{resnet_generator_forward.52} parent=31 // pred_check
        %p221 = pneg %p220
      $region34: #{resnet_generator_forward.52} parent=31 // pred_check_branch
        %223 = sbr.rel (%p221) target = $region36
      $region35: #{resnet_generator_forward.52} parent=31 // pred_region
        %vm224 = vcmask 261120
        %225 = vst.msk [vmem:[#allocation2] sm:$0xff] %vm224, 0.0
      $region36: #{resnet_generator_forward.52} parent=31 // pred_fallthru
        _
      %v226 = vld [vmem:[%s209] sm:$0xf]
      %v227 = vld [vmem:[%s209 + $0x4] sm:$0x1]
      %s228 = smul.u32 %s21, 2
      %s229 = smul.u32 %s228, 2
      %s230 = smul.addr %s229, 4
      %s231 = scalar_lea.vmem %s1, %s230
      %v232 = vld [vmem:[%s231] sm:$0xf]
      %v233 = vld [vmem:[%s231 + $0x4] sm:$0xf]
      %s234 = sadd.s32 %s228, 1
      %s235 = smul.u32 %s234, 2
      %s236 = smul.addr %s235, 4
      %s237 = scalar_lea.vmem %s1, %s236
      %v238 = vld [vmem:[%s237] sm:$0xf]
      %v239 = vld [vmem:[%s237 + $0x4] sm:$0xf]
      %v242 = vunpack.c.l.b16 %v226
      %v243 = vunpack.c.l.b16 %v227
      %v244 = vpack.c.b16 %v243, %v242
      %v246 = vshrl.u32 %v244, 16
      %v248 = vshll.u32 %v244, 16
      %v250 = vrot.slane %v248, 1
      %v251 = vor.u32 %v246, %v250
      %v254 = vunpack.c.l.b16 %v238
      %v255 = vunpack.c.l.b16 %v239
      %v256 = vpack.c.b16 %v255, %v254
      %vm258 = vcmask 130048
      %v260 = vsel %vm258, %v251, 0
      %262 = vmatpush.bf16.msra.mxu0 0
      %263 = vmatpush.bf16.msra.mxu0 0
      %264 = vmatpush.bf16.msra.mxu0 0
      %265 = vmatpush.bf16.msra.mxu0 0
      %266 = vmatpush.bf16.msra.mxu0 0
      %267 = vmatpush.bf16.msra.mxu0 0
      %268 = vmatpush.bf16.msra.mxu0 0
      %269 = vmatpush.bf16.msra.mxu0 %v256
      %270 = vmatmul.bf16.gmra.mxu0 %v260
      %v271 = vpop.f32.mrf.mxu0
      %v272 = vadd.f32 0.0, %v271
      %v273 = vpop.f32.mrf.mxu0
      %274 = vdwg.mxu0
      %v277 = vunpack.c.l.b16 %v232
      %v278 = vunpack.c.l.b16 %v233
      %v279 = vpack.c.b16 %v278, %v277
      %v282 = vsel %vm258, %v226, 0
      %284 = vmatpush.bf16.msra.mxu0 0
      %285 = vmatpush.bf16.msra.mxu0 0
      %286 = vmatpush.bf16.msra.mxu0 0
      %287 = vmatpush.bf16.msra.mxu0 0
      %288 = vmatpush.bf16.msra.mxu0 0
      %289 = vmatpush.bf16.msra.mxu0 0
      %290 = vmatpush.bf16.msra.mxu0 0
      %291 = vmatpush.bf16.msra.mxu0 %v279
      %292 = vmatmul.bf16.gmra.mxu0 %v282
      %v293 = vpop.f32.mrf.mxu0
      %v294 = vadd.f32 %v272, %v293
      %v295 = vpop.f32.mrf.mxu0
      %296 = vdwg.mxu0
      %v297 = vld [vmem:[#allocation2] sm:$0xff]
      %v298 = vadd.f32 %v297, %v294
      %vm299 = vcmask 261120
      %300 = vst.msk [vmem:[#allocation2] sm:$0xff] %vm299, %v298
      %p301 = scmp.eq.s32.totalorder %s21, 1
      // Predicated region
      $region37: #{resnet_generator_forward.52} parent=31 // pred_check
        %p302 = pneg %p301
      $region38: #{resnet_generator_forward.52} parent=31 // pred_check_branch
        %304 = sbr.rel (%p302) target = $region40
      $region39: #{resnet_generator_forward.52} parent=31 // pred_region
        %v305 = vld [vmem:[#allocation2] sm:$0xff]
        %v306 = vld [vmem:[%s2] sm:$0x1]
        %v308 = vperm.slane %v306, 0
        %v310 = vadd.f32 %v305, %v308
        %v311 = vpack.c.bf16 %v310, %v310
        %vm312 = vcmask 257024
        %313 = vst.msk [vmem:[%s218] sm:$0xf] %vm312, %v311
      $region40: #{resnet_generator_forward.52} parent=31 // pred_fallthru
        _
      %p314 = scmp.lt.s32.totalorder %s19, 1
      %s315 = scalar_select %p314, %s19, 1
      %p316 = scmp.lt.s32.totalorder %s20, 7
      %s317 = scalar_select %p316, %s20, 7
      %s318 = smul.addr %s315, 8
      %s319 = sadd.s32 %s317, %s318
      %s320 = smul.addr %s319, 4
      %s321 = scalar_lea.vmem %s3, %s320
      // Predicated region
      $region41: #{resnet_generator_forward.52} parent=31 // pred_check
        %p322 = pneg %p125
      $region42: #{resnet_generator_forward.52} parent=31 // pred_check_branch
        %324 = sbr.rel (%p322) target = $region44
      $region43: #{resnet_generator_forward.52} parent=31 // pred_region
        _
      $region44: #{resnet_generator_forward.52} parent=31 // pred_fallthru
        _
    $region32: #{resnet_generator_forward.52} parent=5 // pred_fallthru
      _
    %p325 = scmp.le.s32.totalorder 2, %s9
    // Predicated region
    $region45: #{resnet_generator_forward.52} parent=5 // pred_check
      %p326 = pneg %p325
    $region46: #{resnet_generator_forward.52} parent=5 // pred_check_branch
      %328 = sbr.rel (%p326) target = $region48
    $region47: #{resnet_generator_forward.52} parent=5 // pred_region
      %s329 = ssub.s32 %s9, 2
      // Predicated region
      $region49: #{resnet_generator_forward.52} parent=47 // pred_check
        %p330 = pneg %p131
      $region50: #{resnet_generator_forward.52} parent=47 // pred_check_branch
        %332 = sbr.rel (%p330) target = $region52
      $region51: #{resnet_generator_forward.52} parent=47 // pred_region
        %p333 = scmp.lt.s32.totalorder %s22, 1
        %s334 = scalar_select %p333, %s22, 1
        %p335 = scmp.lt.s32.totalorder %s23, 7
        %s336 = scalar_select %p335, %s23, 7
        %s337 = smul.addr %s334, 8
        %s338 = sadd.s32 %s336, %s337
        %s339 = smul.addr %s338, 4
        %s340 = scalar_lea.vmem %s3, %s339
      $region52: #{resnet_generator_forward.52} parent=47 // pred_fallthru
        _
    $region48: #{resnet_generator_forward.52} parent=5 // pred_fallthru
      _
  $region6: #{resnet_generator_forward.52} parent=0 // loop_footer
    %s13 = sadd.s32 1, %s9
  $region7: #{resnet_generator_forward.52} parent=0 // loop_footer_branch
    %8 = sbr.rel target = $region3
  $region8: #{resnet_generator_forward.52} parent=0 // loop_exit
    _

// kernel: resnet_generator_forward.55
$region0: #{resnet_generator_forward.55}
  #allocation0 [shape = 'u32[]', space=smem, size = 0x4, offset = 0x4, fixed_abs, tag = 'smem constant byte address 0x4 - core index']
  #allocation1 [shape = 'u32[72,128]{1,0:T(1,128)}', space=vmem, size = 0x9000, scoped, tag = 'internal scratch']
  #allocation2 [shape = 'f32[16,3]{1,0:T(8,128)}', space=vmem, size = 0x2000, scoped, tag = 'scratch operand']
  %s0 = inlined_call_operand.vmem [shape: bf16[2,22,22,8], index: 0, kind: input, shape index: {}]
  %s1 = inlined_call_operand.vmem [shape: bf16[49,8,3], index: 1, kind: input, shape index: {}]
  %s2 = inlined_call_operand.vmem [shape: f32[1,3], index: 2, kind: input, shape index: {}]
  %s3 = inlined_call_operand.vmem [shape: f32[2,16,16,3], index: 3, kind: output, shape index: {}]
  %s4 = sld [smem:[#allocation0]]
  $region53: #{resnet_generator_forward.55} parent=0
    _
  %s6 = ssub.s32 1, %s4
  %s7 = scalar_select 0, %s6, %s4
  loop: start=0, step=1, limit=226
  $region2: #{resnet_generator_forward.55} parent=0 // loop_pre_header
    _
  $region3: #{resnet_generator_forward.55} parent=0 // loop_header
    %s9 = sphi 0, %s13
    %p10 = scmp.ge.s32.totalorder %s9, 226
    %s16 = sphi 0, %s35
    %s17 = sphi 0, %s31
    %s18 = sphi 0, %s27
    %s19 = sphi 0, %s16
    %s20 = sphi 0, %s17
    %s21 = sphi 0, %s18
    %s22 = sphi 0, %s19
    %s23 = sphi 0, %s20
    %s24 = sphi 0, %s21
    %s42 = sphi 0, %s44
    %s45 = sphi 0, %s42
    %s46 = sphi 0, %s45
    %s62 = sphi 0, %s46
    %s66 = sphi 0, %s66
    %s68 = sphi 0, %s66
    %s69 = sphi 0, %s68
    %s83 = sphi 0, %s69
    %s87 = sphi 0, %s87
    %s89 = sphi 0, %s87
    %s90 = sphi 0, %s89
    %s104 = sphi 0, %s90
    %s112 = sphi 0, %s114
    %s115 = sphi 0, %s112
    %s116 = sphi 0, %s115
    %s132 = sphi 0, %s116
  $region4: #{resnet_generator_forward.55} parent=0 // loop_header_branch
    %12 = sbr.rel (%p10) target = $region8
  $region5: #{resnet_generator_forward.55} parent=0 // loop_body
    %s14 = ssub.s32 %s9, 1
    %s15 = ssub.s32 %s9, 2
    %s25 = sadd.s32 1, %s18
    %p26 = scmp.ge.s32.totalorder %s25, 7
    %s27 = scalar_select %p26, 0, %s25
    %s28 = sadd.s32 1, %s17
    %s29 = scalar_select %p26, %s28, %s17
    %p30 = scmp.ge.s32.totalorder %s29, 16
    %s31 = scalar_select %p30, 0, %s29
    %s32 = sadd.s32 1, %s16
    %s33 = scalar_select %p30, %s32, %s16
    %p34 = scmp.ge.s32.totalorder %s33, 2
    %s35 = scalar_select %p34, 0, %s33
    %s36 = sadd.s32 %s17, %s18
    %s37 = sadd.s32 %s31, %s27
    %s38 = ssub.s32 %s16, %s35
    %s39 = ssub.s32 %s36, %s37
    %s40 = sor.u32 %s38, %s39
    %p41 = scmp.eq.s32.totalorder %s40, 0
    %s43 = sadd.s32 %s42, 1
    %s44 = scalar_select %p41, %s42, %s43
    %p47 = pneg %p41
    %p48 = scmp.eq.s32.totalorder %s9, 223
    %p49 = por %p47, %p48
    %p50 = scmp.ne.s32.totalorder %s42, %s45
    %p51 = scmp.eq.s32.totalorder %s9, 0
    %p52 = por %p50, %p51
    %p53 = scmp.ne.s32.totalorder %s42, %s45
    %p54 = scmp.eq.s32.totalorder %s14, 223
    %p55 = por %p53, %p54
    %p56 = scmp.ne.s32.totalorder %s45, %s46
    %p57 = scmp.eq.s32.totalorder %s14, 0
    %p58 = por %p56, %p57
    %p59 = scmp.ne.s32.totalorder %s45, %s46
    %p60 = scmp.eq.s32.totalorder %s15, 223
    %p61 = por %p59, %p60
    %p63 = scmp.ne.s32.totalorder %s46, %s62
    %p64 = scmp.eq.s32.totalorder %s15, 0
    %p65 = por %p63, %p64
    %s67 = sadd.s32 %s66, 1
    %p70 = scmp.eq.s32.totalorder %s9, 223
    %p71 = scmp.ne.s32.totalorder %s66, %s68
    %p72 = scmp.eq.s32.totalorder %s9, 0
    %p73 = por %p71, %p72
    %p74 = scmp.ne.s32.totalorder %s66, %s68
    %p75 = scmp.eq.s32.totalorder %s14, 223
    %p76 = por %p74, %p75
    %p77 = scmp.ne.s32.totalorder %s68, %s69
    %p78 = scmp.eq.s32.totalorder %s14, 0
    %p79 = por %p77, %p78
    %p80 = scmp.ne.s32.totalorder %s68, %s69
    %p81 = scmp.eq.s32.totalorder %s15, 223
    %p82 = por %p80, %p81
    %p84 = scmp.ne.s32.totalorder %s69, %s83
    %p85 = scmp.eq.s32.totalorder %s15, 0
    %p86 = por %p84, %p85
    %s88 = sadd.s32 %s87, 1
    %p91 = scmp.eq.s32.totalorder %s9, 223
    %p92 = scmp.ne.s32.totalorder %s87, %s89
    %p93 = scmp.eq.s32.totalorder %s9, 0
    %p94 = por %p92, %p93
    %p95 = scmp.ne.s32.totalorder %s87, %s89
    %p96 = scmp.eq.s32.totalorder %s14, 223
    %p97 = por %p95, %p96
    %p98 = scmp.ne.s32.totalorder %s89, %s90
    %p99 = scmp.eq.s32.totalorder %s14, 0
    %p100 = por %p98, %p99
    %p101 = scmp.ne.s32.totalorder %s89, %s90
    %p102 = scmp.eq.s32.totalorder %s15, 223
    %p103 = por %p101, %p102
    %p105 = scmp.ne.s32.totalorder %s90, %s104
    %p106 = scmp.eq.s32.totalorder %s15, 0
    %p107 = por %p105, %p106
    %s108 = ssub.s32 %s16, %s35
    %s109 = ssub.s32 %s17, %s31
    %s110 = sor.u32 %s108, %s109
    %p111 = scmp.eq.s32.totalorder %s110, 0
    %s113 = sadd.s32 %s112, 1
    %s114 = scalar_select %p111, %s112, %s113
    %p117 = pneg %p111
    %p118 = scmp.eq.s32.totalorder %s9, 223
    %p119 = por %p117, %p118
    %p120 = scmp.ne.s32.totalorder %s112, %s115
    %p121 = scmp.eq.s32.totalorder %s9, 0
    %p122 = por %p120, %p121
    %p123 = scmp.ne.s32.totalorder %s112, %s115
    %p124 = scmp.eq.s32.totalorder %s14, 223
    %p125 = por %p123, %p124
    %p126 = scmp.ne.s32.totalorder %s115, %s116
    %p127 = scmp.eq.s32.totalorder %s14, 0
    %p128 = por %p126, %p127
    %p129 = scmp.ne.s32.totalorder %s115, %s116
    %p130 = scmp.eq.s32.totalorder %s15, 223
    %p131 = por %p129, %p130
    %p133 = scmp.ne.s32.totalorder %s116, %s132
    %p134 = scmp.eq.s32.totalorder %s15, 0
    %p135 = por %p133, %p134
    %p136 = scmp.le.s32.totalorder 1, %s9
    %p137 = scmp.lt.s32.totalorder %s9, 225
    %p138 = pnand %p136, %p137
    %p139 = pneg %p138
    // Predicated region
    $region9: #{resnet_generator_forward.55} parent=5 // pred_check
      _
    $region10: #{resnet_generator_forward.55} parent=5 // pred_check_branch
      %141 = sbr.rel (%p138) target = $region12
    $region11: #{resnet_generator_forward.55} parent=5 // pred_region
      %s142 = ssub.s32 %s9, 1
      // Predicated region
      $region13: #{resnet_generator_forward.55} parent=11 // pred_check
        %p143 = pneg %p79
      $region14: #{resnet_generator_forward.55} parent=11 // pred_check_branch
        %145 = sbr.rel (%p143) target = $region16
      $region15: #{resnet_generator_forward.55} parent=11 // pred_region
        _
      $region16: #{resnet_generator_forward.55} parent=11 // pred_fallthru
        _
      // Predicated region
      $region17: #{resnet_generator_forward.55} parent=11 // pred_check
        %p146 = pneg %p100
      $region18: #{resnet_generator_forward.55} parent=11 // pred_check_branch
        %148 = sbr.rel (%p146) target = $region20
      $region19: #{resnet_generator_forward.55} parent=11 // pred_region
        _
      $region20: #{resnet_generator_forward.55} parent=11 // pred_fallthru
        _
    $region12: #{resnet_generator_forward.55} parent=5 // pred_fallthru
      _
    %p149 = scmp.lt.s32.totalorder %s9, 224
    // Predicated region
    $region21: #{resnet_generator_forward.55} parent=5 // pred_check
      %p150 = pneg %p149
    $region22: #{resnet_generator_forward.55} parent=5 // pred_check_branch
      %152 = sbr.rel (%p150) target = $region24
    $region23: #{resnet_generator_forward.55} parent=5 // pred_region
      // Predicated region
      $region25: #{resnet_generator_forward.55} parent=23 // pred_check
        %p153 = pneg %p52
      $region26: #{resnet_generator_forward.55} parent=23 // pred_check_branch
        %155 = sbr.rel (%p153) target = $region28
      $region27: #{resnet_generator_forward.55} parent=23 // pred_region
        %s156 = sadd.s32 %s17, %s18
        %p157 = scmp.lt.s32.totalorder %s16, 1
        %s158 = scalar_select %p157, %s16, 1
        %p159 = scmp.lt.s32.totalorder %s156, 21
        %s160 = scalar_select %p159, %s156, 21
        %s161 = smul.addr %s160, 3
        %s162 = smul.addr %s158, 66
        %s163 = sadd.s32 %s161, %s162
        %s164 = smul.addr %s163, 4
        %s165 = scalar_lea.vmem %s0, %s164
        %s166 = sadd.s32 %s17, %s18
      $region28: #{resnet_generator_forward.55} parent=23 // pred_fallthru
        _
    $region24: #{resnet_generator_forward.55} parent=5 // pred_fallthru
      _
    %p167 = scmp.le.s32.totalorder 1, %s9
    %p168 = scmp.lt.s32.totalorder %s9, 225
    %p169 = pnand %p167, %p168
    %p170 = pneg %p169
    // Predicated region
    $region29: #{resnet_generator_forward.55} parent=5 // pred_check
      _
    $region30: #{resnet_generator_forward.55} parent=5 // pred_check_branch
      %172 = sbr.rel (%p169) target = $region32
    $region31: #{resnet_generator_forward.55} parent=5 // pred_region
      %s173 = ssub.s32 %s9, 1
      %s174 = sadd.s32 %s20, %s21
      %p175 = scmp.lt.s32.totalorder %s19, 1
      %s176 = scalar_select %p175, %s19, 1
      %p177 = scmp.lt.s32.totalorder %s174, 21
      %s178 = scalar_select %p177, %s174, 21
      %s179 = smul.addr %s178, 3
      %s180 = smul.addr %s176, 66
      %s181 = sadd.s32 %s179, %s180
      %s182 = smul.addr %s181, 4
      %s183 = scalar_lea.vmem %s0, %s182
      %p184 = pneg %p58
      %p185 = pneg %p55
      %p186 = pneg %p79
      %p187 = pneg %p76
      %p188 = pneg %p100
      %p189 = pneg %p97
      %p190 = pneg %p128
      %p191 = pneg %p125
      %p192 = scmp.lt.s32.totalorder %s19, 1
      %s193 = scalar_select %p192, %s19, 1
      %p194 = scmp.lt.s32.totalorder %s20, 15
      %s195 = scalar_select %p194, %s20, 15
      %s196 = smul.addr %s195, 2
      %s197 = smul.addr %s193, 32
      %s198 = sadd.s32 %s196, %s197
      %s199 = smul.addr %s198, 8
      %s200 = scalar_lea.vmem %s3, %s199
      %s201 = sadd.s32 %s20, %s21
      %p202 = scmp.lt.s32.totalorder %s19, 1
      %s203 = scalar_select %p202, %s19, 1
      %p204 = scmp.lt.s32.totalorder %s201, 21
      %s205 = scalar_select %p204, %s201, 21
      %s206 = smul.addr %s205, 3
      %s207 = smul.addr %s203, 66
      %s208 = sadd.s32 %s206, %s207
      %s209 = smul.addr %s208, 4
      %s210 = scalar_lea.vmem %s0, %s209
      %s211 = sadd.s32 %s20, %s21
      %p212 = scmp.lt.s32.totalorder %s19, 1
      %s213 = scalar_select %p212, %s19, 1
      %p214 = scmp.lt.s32.totalorder %s20, 15
      %s215 = scalar_select %p214, %s20, 15
      %s216 = smul.addr %s215, 2
      %s217 = smul.addr %s213, 32
      %s218 = sadd.s32 %s216, %s217
      %s219 = smul.addr %s218, 8
      %s220 = scalar_lea.vmem %s3, %s219
      %p222 = scmp.eq.s32.totalorder %s21, 0
      // Predicated region
      $region33: #{resnet_generator_forward.55} parent=31 // pred_check
        %p223 = pneg %p222
      $region34: #{resnet_generator_forward.55} parent=31 // pred_check_branch
        %225 = sbr.rel (%p223) target = $region36
      $region35: #{resnet_generator_forward.55} parent=31 // pred_region
        %vm226 = vcmask 23552
        %227 = vst.msk [vmem:[#allocation2] sm:$0xff] %vm226, 0.0
        %228 = vst.msk [vmem:[#allocation2 + $0x8] sm:$0xff] %vm226, 0.0
      $region36: #{resnet_generator_forward.55} parent=31 // pred_fallthru
        _
      %v229 = vld [vmem:[%s210] sm:$0xf]
      %v230 = vld [vmem:[%s210 + $0x4] sm:$0xf]
      %v231 = vld [vmem:[%s210 + $0x8] sm:$0x7]
      %s232 = smul.u32 %s21, 7
      %s233 = smul.addr %s232, 4
      %s234 = scalar_lea.vmem %s1, %s233
      %v235 = vld [vmem:[%s234] sm:$0xf]
      %s236 = sadd.s32 %s232, 1
      %s237 = smul.addr %s236, 4
      %s238 = scalar_lea.vmem %s1, %s237
      %v239 = vld [vmem:[%s238] sm:$0xf]
      %v243 = vunpack.c.l.b16 %v229
      %v244 = vunpack.c.l.b16 %v230
      %v245 = vunpack.c.l.b16 %v231
      %v246 = vpack.c.b16 %v244, %v243
      %v247 = vpack.c.b16 %v245, %v245
      %vm248 = vsmask.f32 7424
      %v250 = vshrl.u32 %v246, 16
      %v252 = vshll.u32 %v246, 16
      %v254 = vrot.slane %v252, 1
      %v255 = vor.u32 %v250, %v254
      %v257 = vshll.u32 %v247, 16
      %v259 = vrot.slane %v257, 1
      %v260 = vsel %vm248, %v255, %v259
      %vm261 = vcmask 64512
      %v263 = vsel %vm261, %v260, 0
      %vm265 = vcmask 1043456
      %v267 = vsel %vm265, %v239, 0
      %269 = vmatpush.bf16.msra.mxu0 0
      %270 = vmatpush.bf16.msra.mxu0 0
      %271 = vmatpush.bf16.msra.mxu0 0
      %272 = vmatpush.bf16.msra.mxu0 0
      %273 = vmatpush.bf16.msra.mxu0 0
      %274 = vmatpush.bf16.msra.mxu0 0
      %275 = vmatpush.bf16.msra.mxu0 0
      %276 = vmatpush.bf16.msra.mxu0 %v267
      %277 = vmatmul.bf16.gmra.mxu0 %v263
      %v278 = vpop.f32.mrf.mxu0
      %v279 = vadd.f32 0.0, %v278
      %v280 = vpop.f32.mrf.mxu0
      %v281 = vadd.f32 0.0, %v280
      %282 = vdwg.mxu0
      %v283 = vsel %vm261, %v246, 0
      %v286 = vsel %vm265, %v235, 0
      %288 = vmatpush.bf16.msra.mxu0 0
      %289 = vmatpush.bf16.msra.mxu0 0
      %290 = vmatpush.bf16.msra.mxu0 0
      %291 = vmatpush.bf16.msra.mxu0 0
      %292 = vmatpush.bf16.msra.mxu0 0
      %293 = vmatpush.bf16.msra.mxu0 0
      %294 = vmatpush.bf16.msra.mxu0 0
      %295 = vmatpush.bf16.msra.mxu0 %v286
      %296 = vmatmul.bf16.gmra.mxu0 %v283
      %v297 = vpop.f32.mrf.mxu0
      %v298 = vadd.f32 %v279, %v297
      %v299 = vpop.f32.mrf.mxu0
      %v300 = vadd.f32 %v281, %v299
      %301 = vdwg.mxu0
      %s302 = sadd.s32 %s232, 2
      %s303 = smul.addr %s302, 4
      %s304 = scalar_lea.vmem %s1, %s303
      %v305 = vld [vmem:[%s304] sm:$0xf]
      %vm306 = vcmask 1046528
      %v307 = vrot.slane %v246, 1
      %v308 = vrot.slane %v247, 1
      %v309 = vsel %vm306, %v307, %v308
      %v311 = vsel %vm261, %v309, 0
      %v314 = vsel %vm265, %v305, 0
      %316 = vmatpush.bf16.msra.mxu0 0
      %317 = vmatpush.bf16.msra.mxu0 0
      %318 = vmatpush.bf16.msra.mxu0 0
      %319 = vmatpush.bf16.msra.mxu0 0
      %320 = vmatpush.bf16.msra.mxu0 0
      %321 = vmatpush.bf16.msra.mxu0 0
      %322 = vmatpush.bf16.msra.mxu0 0
      %323 = vmatpush.bf16.msra.mxu0 %v314
      %324 = vmatmul.bf16.gmra.mxu0 %v311
      %v325 = vpop.f32.mrf.mxu0
      %v326 = vadd.f32 0.0, %v325
      %v327 = vpop.f32.mrf.mxu0
      %v328 = vadd.f32 0.0, %v327
      %329 = vdwg.mxu0
      %v330 = vadd.f32 %v298, %v326
      %v331 = vadd.f32 %v300, %v328
      %s332 = sadd.s32 %s232, 3
      %s333 = smul.addr %s332, 4
      %s334 = scalar_lea.vmem %s1, %s333
      %v335 = vld [vmem:[%s334] sm:$0xf]
      %vm336 = vsmask.f32 6400
      %v337 = vrot.slane %v250, 1
      %v338 = vrot.slane %v252, 2
      %v339 = vor.u32 %v337, %v338
      %v340 = vshrl.u32 %v247, 16
      %v342 = vrot.slane %v340, 1
      %v343 = vrot.slane %v257, 2
      %v344 = vor.u32 %v342, %v343
      %v345 = vsel %vm336, %v339, %v344
      %v347 = vsel %vm261, %v345, 0
      %v350 = vsel %vm265, %v335, 0
      %352 = vmatpush.bf16.msra.mxu0 0
      %353 = vmatpush.bf16.msra.mxu0 0
      %354 = vmatpush.bf16.msra.mxu0 0
      %355 = vmatpush.bf16.msra.mxu0 0
      %356 = vmatpush.bf16.msra.mxu0 0
      %357 = vmatpush.bf16.msra.mxu0 0
      %358 = vmatpush.bf16.msra.mxu0 0
      %359 = vmatpush.bf16.msra.mxu0 %v350
      %360 = vmatmul.bf16.gmra.mxu0 %v347
      %v361 = vpop.f32.mrf.mxu0
      %v362 = vadd.f32 0.0, %v361
      %v363 = vpop.f32.mrf.mxu0
      %v364 = vadd.f32 0.0, %v363
      %365 = vdwg.mxu0
      %v366 = vadd.f32 %v330, %v362
      %v367 = vadd.f32 %v331, %v364
      %s368 = sadd.s32 %s232, 4
      %s369 = smul.addr %s368, 4
      %s370 = scalar_lea.vmem %s1, %s369
      %v371 = vld [vmem:[%s370] sm:$0xf]
      %vm372 = vcmask 1045504
      %v373 = vrot.slane %v246, 2
      %v374 = vrot.slane %v247, 2
      %v375 = vsel %vm372, %v373, %v374
      %v377 = vsel %vm261, %v375, 0
      %v380 = vsel %vm265, %v371, 0
      %382 = vmatpush.bf16.msra.mxu0 0
      %383 = vmatpush.bf16.msra.mxu0 0
      %384 = vmatpush.bf16.msra.mxu0 0
      %385 = vmatpush.bf16.msra.mxu0 0
      %386 = vmatpush.bf16.msra.mxu0 0
      %387 = vmatpush.bf16.msra.mxu0 0
      %388 = vmatpush.bf16.msra.mxu0 0
      %389 = vmatpush.bf16.msra.mxu0 %v380
      %390 = vmatmul.bf16.gmra.mxu0 %v377
      %v391 = vpop.f32.mrf.mxu0
      %v392 = vadd.f32 0.0, %v391
      %v393 = vpop.f32.mrf.mxu0
      %v394 = vadd.f32 0.0, %v393
      %395 = vdwg.mxu0
      %v396 = vadd.f32 %v366, %v392
      %v397 = vadd.f32 %v367, %v394
      %s398 = sadd.s32 %s232, 5
      %s399 = smul.addr %s398, 4
      %s400 = scalar_lea.vmem %s1, %s399
      %v401 = vld [vmem:[%s400] sm:$0xf]
      %vm402 = vsmask.f32 5376
      %v403 = vrot.slane %v250, 2
      %v404 = vrot.slane %v252, 3
      %v405 = vor.u32 %v403, %v404
      %v406 = vrot.slane %v340, 2
      %v407 = vrot.slane %v257, 3
      %v408 = vor.u32 %v406, %v407
      %v409 = vsel %vm402, %v405, %v408
      %v411 = vsel %vm261, %v409, 0
      %v414 = vsel %vm265, %v401, 0
      %416 = vmatpush.bf16.msra.mxu0 0
      %417 = vmatpush.bf16.msra.mxu0 0
      %418 = vmatpush.bf16.msra.mxu0 0
      %419 = vmatpush.bf16.msra.mxu0 0
      %420 = vmatpush.bf16.msra.mxu0 0
      %421 = vmatpush.bf16.msra.mxu0 0
      %422 = vmatpush.bf16.msra.mxu0 0
      %423 = vmatpush.bf16.msra.mxu0 %v414
      %424 = vmatmul.bf16.gmra.mxu0 %v411
      %v425 = vpop.f32.mrf.mxu0
      %v426 = vadd.f32 0.0, %v425
      %v427 = vpop.f32.mrf.mxu0
      %v428 = vadd.f32 0.0, %v427
      %429 = vdwg.mxu0
      %v430 = vadd.f32 %v396, %v426
      %v431 = vadd.f32 %v397, %v428
      %s432 = sadd.s32 %s232, 6
      %s433 = smul.addr %s432, 4
      %s434 = scalar_lea.vmem %s1, %s433
      %v435 = vld [vmem:[%s434] sm:$0xf]
      %vm436 = vcmask 1044480
      %v437 = vrot.slane %v246, 3
      %v438 = vrot.slane %v247, 3
      %v439 = vsel %vm436, %v437, %v438
      %v441 = vsel %vm261, %v439, 0
      %v444 = vsel %vm265, %v435, 0
      %446 = vmatpush.bf16.msra.mxu0 0
      %447 = vmatpush.bf16.msra.mxu0 0
      %448 = vmatpush.bf16.msra.mxu0 0
      %449 = vmatpush.bf16.msra.mxu0 0
      %450 = vmatpush.bf16.msra.mxu0 0
      %451 = vmatpush.bf16.msra.mxu0 0
      %452 = vmatpush.bf16.msra.mxu0 0
      %453 = vmatpush.bf16.msra.mxu0 %v444
      %454 = vmatmul.bf16.gmra.mxu0 %v441
      %v455 = vpop.f32.mrf.mxu0
      %v456 = vadd.f32 0.0, %v455
      %v457 = vpop.f32.mrf.mxu0
      %v458 = vadd.f32 0.0, %v457
      %459 = vdwg.mxu0
      %v460 = vadd.f32 %v430, %v456
      %v461 = vadd.f32 %v431, %v458
      %v462 = vld [vmem:[#allocation2] sm:$0xff]
      %v463 = vld [vmem:[#allocation2 + $0x8] sm:$0xff]
      %v464 = vadd.f32 %v462, %v460
      %v465 = vadd.f32 %v463, %v461
      %vm466 = vcmask 23552
      %467 = vst.msk [vmem:[#allocation2] sm:$0xff] %vm466, %v464
      %468 = vst.msk [vmem:[#allocation2 + $0x8] sm:$0xff] %vm466, %v465
      %p469 = scmp.eq.s32.totalorder %s21, 6
      // Predicated region
      $region37: #{resnet_generator_forward.55} parent=31 // pred_check
        %p470 = pneg %p469
      $region38: #{resnet_generator_forward.55} parent=31 // pred_check_branch
        %472 = sbr.rel (%p470) target = $region40
      $region39: #{resnet_generator_forward.55} parent=31 // pred_region
        %v473 = vld [vmem:[#allocation2] sm:$0xff]
        %v474 = vld [vmem:[#allocation2 + $0x8] sm:$0xff]
        %v475 = vld [vmem:[%s2] sm:$0x1]
        %v477 = vperm.slane %v475, 0
        %v479 = vadd.f32 %v473, %v477
        %v480 = vadd.f32 %v474, %v477
        %v481 = vtanh.pop %v479
        %v482 = vtanh.pop %v480
        %483 = vst.msk [vmem:[%s220] sm:$0xff] %vm466, %v481
        %484 = vst.msk [vmem:[%s220 + $0x8] sm:$0xff] %vm466, %v482
      $region40: #{resnet_generator_forward.55} parent=31 // pred_fallthru
        _
      %p485 = scmp.lt.s32.totalorder %s19, 1
      %s486 = scalar_select %p485, %s19, 1
      %p487 = scmp.lt.s32.totalorder %s20, 15
      %s488 = scalar_select %p487, %s20, 15
      %s489 = smul.addr %s488, 2
      %s490 = smul.addr %s486, 32
      %s491 = sadd.s32 %s489, %s490
      %s492 = smul.addr %s491, 8
      %s493 = scalar_lea.vmem %s3, %s492
      // Predicated region
      $region41: #{resnet_generator_forward.55} parent=31 // pred_check
        %p494 = pneg %p125
      $region42: #{resnet_generator_forward.55} parent=31 // pred_check_branch
        %496 = sbr.rel (%p494) target = $region44
      $region43: #{resnet_generator_forward.55} parent=31 // pred_region
        _
      $region44: #{resnet_generator_forward.55} parent=31 // pred_fallthru
        _
    $region32: #{resnet_generator_forward.55} parent=5 // pred_fallthru
      _
    %p497 = scmp.le.s32.totalorder 2, %s9
    // Predicated region
    $region45: #{resnet_generator_forward.55} parent=5 // pred_check
      %p498 = pneg %p497
    $region46: #{resnet_generator_forward.55} parent=5 // pred_check_branch
      %500 = sbr.rel (%p498) target = $region48
    $region47: #{resnet_generator_forward.55} parent=5 // pred_region
      %s501 = ssub.s32 %s9, 2
      // Predicated region
      $region49: #{resnet_generator_forward.55} parent=47 // pred_check
        %p502 = pneg %p131
      $region50: #{resnet_generator_forward.55} parent=47 // pred_check_branch
        %504 = sbr.rel (%p502) target = $region52
      $region51: #{resnet_generator_forward.55} parent=47 // pred_region
        %p505 = scmp.lt.s32.totalorder %s22, 1
        %s506 = scalar_select %p505, %s22, 1
        %p507 = scmp.lt.s32.totalorder %s23, 15
        %s508 = scalar_select %p507, %s23, 15
        %s509 = smul.addr %s508, 2
        %s510 = smul.addr %s506, 32
        %s511 = sadd.s32 %s509, %s510
        %s512 = smul.addr %s511, 8
        %s513 = scalar_lea.vmem %s3, %s512
      $region52: #{resnet_generator_forward.55} parent=47 // pred_fallthru
        _
    $region48: #{resnet_generator_forward.55} parent=5 // pred_fallthru
      _
  $region6: #{resnet_generator_forward.55} parent=0 // loop_footer
    %s13 = sadd.s32 1, %s9
  $region7: #{resnet_generator_forward.55} parent=0 // loop_footer_branch
    %8 = sbr.rel target = $region3
  $region8: #{resnet_generator_forward.55} parent=0 // loop_exit
    _

</llo_original>
